<compile_context>
chip_gen: v7x
topology: tpu7x:2x2x1
jax: 0.10.0
libtpu: 0.0.40
codegen_flags: <defaults>
</compile_context>

<pallas_src>
import functools
import math

import jax
import jax.numpy as jnp
from jax.experimental import pallas as pl
from jax.experimental.pallas import tpu as pltpu

NEG_INF = -1e30          # masking value (exp underflows to exactly 0.0)
LN_EPS = 1e-5            # nn.LayerNorm default eps

# MXU operand / stored-weight dtype and inter-layer activation dtype.
# bf16 doubles (v5e) / quadruples-ish (v6e/v7x) MXU throughput and halves
# weight + activation HBM traffic; accumulation stays f32.  Use jnp.float32
# for bit-level parity testing against the PyTorch reference.
MXU_DTYPE = jnp.bfloat16
ACT_DTYPE = jnp.bfloat16

# Scoped VMEM limit with headroom (below v7x's 64 MiB physical VMEM).
VMEM_LIMIT = 48 * 1024 * 1024


# ----------------------------------------------------------------------------
# in-kernel math helpers (operate on values already loaded from VMEM refs)
# ----------------------------------------------------------------------------
def _mm(a, b):
    """a @ b on the MXU with f32 accumulation."""
    return jnp.dot(a.astype(MXU_DTYPE), b.astype(MXU_DTYPE),
                   preferred_element_type=jnp.float32)


def _mm_nt(a, b):
    """a @ b.T (contract last dims of both) without materializing a transpose."""
    return jax.lax.dot_general(
        a.astype(MXU_DTYPE), b.astype(MXU_DTYPE),
        dimension_numbers=(((1,), (1,)), ((), ())),
        preferred_element_type=jnp.float32)


def _layernorm(x, g, b):
    mean = jnp.mean(x, axis=-1, keepdims=True)
    xc = x - mean
    var = jnp.mean(xc * xc, axis=-1, keepdims=True)
    return xc * jax.lax.rsqrt(var + LN_EPS) * g + b


def _recip(x):
    """EUP approx reciprocal + one Newton step (~f32-exact, frees VALU slots)."""
    r = pl.reciprocal(x, approx=True)
    return r * (2.0 - x * r)


def _erf(x):
    """Abramowitz & Stegun 7.1.26 polynomial (|err| < 1.5e-7); division routed
    through the EUP reciprocal so the GELU epilogue stays off the VALU divide."""
    a1, a2, a3, a4, a5 = 0.254829592, -0.284496736, 1.421413741, -1.453152027, 1.061405429
    p = 0.3275911
    sgn = jnp.where(x >= 0.0, 1.0, -1.0)
    z = jnp.abs(x)
    t = _recip(1.0 + p * z)
    poly = ((((a5 * t + a4) * t + a3) * t + a2) * t + a1) * t
    return sgn * (1.0 - poly * jnp.exp(-z * z))


def _gelu_exact(x):
    # exact (erf) GELU, matching PyTorch's default F.gelu / nn.GELU()
    return 0.5 * x * (1.0 + _erf(x * 0.7071067811865476))


def _mha_self_causal(qkv, out_scr, d, seq, n_head):
    """Causal multi-head self-attention for one batch element.

    qkv: (seq, 3d) f32 value; head h lives in lanes [h*Dh, (h+1)*Dh) of each of
    the Q/K/V column groups.  Each head's output is written into the VMEM
    scratch ref `out_scr` via a static lane slice (no concatenate copies).
    TODO(synk): pack 2-4 heads per MXU pass (block-diagonal K packing) to raise
    MXU occupancy when d_head < the MXU width; tile over query rows
    (flash-style) for long sequences.
    """
    d_head = d // n_head
    scale = 1.0 / math.sqrt(d_head)
    row = jax.lax.broadcasted_iota(jnp.int32, (seq, seq), 0)
    col = jax.lax.broadcasted_iota(jnp.int32, (seq, seq), 1)
    banned = col > row                      # causal mask via iota compare, no mask tensor
    for h in range(n_head):
        lo = h * d_head
        q = qkv[:, lo:lo + d_head] * scale            # (S, Dh)
        k = qkv[:, d + lo:d + lo + d_head]             # (S, Dh)
        v = qkv[:, 2 * d + lo:2 * d + lo + d_head]     # (S, Dh)
        s = _mm_nt(q, k)                               # (S, S)
        s = jnp.where(banned, NEG_INF, s)
        s = s - jnp.max(s, axis=-1, keepdims=True)
        p = jnp.exp(s)
        p = p * _recip(jnp.sum(p, axis=-1, keepdims=True))
        out_scr[:, lo:lo + d_head] = _mm(p, v)


# ----------------------------------------------------------------------------
# Pallas kernels (each invocation handles one batch element)
# ----------------------------------------------------------------------------
def _embed_kernel(tok_ref, pos_ref, g_ref, b_ref, o_ref, *, scale):
    """SimpleTextEmbedding tail: token_emb*sqrt(d) + pos_emb, then LayerNorm."""
    emb = tok_ref[0].astype(jnp.float32) * scale + pos_ref[...].astype(jnp.float32)
    o_ref[0] = _layernorm(emb, g_ref[...], b_ref[...]).astype(o_ref.dtype)


def _linear_kernel(x_ref, w_ref, b_ref, o_ref):
    o_ref[...] = (_mm(x_ref[...], w_ref[...]) + b_ref[...]).astype(o_ref.dtype)


def _encoder_layer_kernel(x_ref, wv, bv, wo, bo, n1g, n1b,
                          f1w, f1b, f2w, f2b, n2g, n2b, o_ref):
    """nn.TransformerEncoderLayer (post-norm, gelu, batch_first), eval mode,
    specialized for the length-1 DINO sequence: self-attention over one
    position is an identity softmax, so it collapses to out_proj(V-projection)
    and the Q/K projections are dead."""
    x = x_ref[0].astype(jnp.float32)                          # (1, d)
    attn = _mm(_mm(x, wv[...]) + bv[...], wo[...]) + bo[...]
    x = _layernorm(x + attn, n1g[...], n1b[...])
    h = _gelu_exact(_mm(x, f1w[...]) + f1b[...])
    x = _layernorm(x + _mm(h, f2w[...]) + f2b[...], n2g[...], n2b[...])
    o_ref[0] = x.astype(o_ref.dtype)


def _decoder_layer_img_kernel(x_ref, mem_ref, flag_ref,
                              n1g, n1b, sa_wqkv, sa_bqkv, sa_wo, sa_bo,
                              n2g, n2b, ca_wv, ca_bv, ca_wo, ca_bo,
                              gw1, gw2, gb, glng, glnb,
                              n3g, n3b, f1w, f1b, f2w, f2b,
                              o_ref, attn_scr, *, n_head):
    """MultimodalDecoderLayer with image memory (pre-norm), eval mode.
    Fused: LN1 + causal self-attn + LN2 + (length-1) cross-attn + DynamicGating
    + LN3 + FFN.  `flag_ref` (0/1) reproduces the torch.all(dino==0) guard."""
    d = x_ref.shape[-1]
    seq = x_ref.shape[1]
    x = x_ref[0].astype(jnp.float32)                          # (S, d)
    mem = mem_ref[0].astype(jnp.float32)                      # (1, d)

    # --- masked self-attention ---
    xn = _layernorm(x, n1g[...], n1b[...])
    qkv = _mm(xn, sa_wqkv[...]) + sa_bqkv[...]
    _mha_self_causal(qkv, attn_scr, d, seq, n_head)
    x = x + _mm(attn_scr[...], sa_wo[...]) + sa_bo[...]

    # --- cross-attention to the length-1 image memory + DynamicGating ---
    # softmax over a single key is identically 1, so the attention output is the
    # V-projection of the memory broadcast over all query positions.
    xn2 = _layernorm(x, n2g[...], n2b[...])
    ca = _mm(_mm(mem, ca_wv[...]) + ca_bv[...], ca_wo[...]) + ca_bo[...]      # (1, d)
    gate = jax.nn.sigmoid(_mm(xn2, gw1[...]) + _mm(ca, gw2[...]) + gb[...])   # (S, d)
    fused = gate * xn2 + (1.0 - gate) * ca
    x = x + flag_ref[...] * _layernorm(fused, glng[...], glnb[...])

    # --- feed-forward ---
    # TODO(synk): at large d_model/d_hid on v7x (64 MiB VMEM), tile this FFN
    # over d_hid (arbitrary K axis + f32 accumulator) or split it into its own
    # pallas_call so whole-layer weight residency stays under the VMEM cap.
    xn3 = _layernorm(x, n3g[...], n3b[...])
    h = _gelu_exact(_mm(xn3, f1w[...]) + f1b[...])
    x = x + _mm(h, f2w[...]) + f2b[...]
    o_ref[0] = x.astype(o_ref.dtype)


def _decoder_layer_noimg_kernel(x_ref, n1g, n1b, sa_wqkv, sa_bqkv, sa_wo, sa_bo,
                                n3g, n3b, f1w, f1b, f2w, f2b,
                                o_ref, attn_scr, *, n_head):
    """MultimodalDecoderLayer without image memory (self-attn + FFN only)."""
    d = x_ref.shape[-1]
    seq = x_ref.shape[1]
    x = x_ref[0].astype(jnp.float32)

    xn = _layernorm(x, n1g[...], n1b[...])
    qkv = _mm(xn, sa_wqkv[...]) + sa_bqkv[...]
    _mha_self_causal(qkv, attn_scr, d, seq, n_head)
    x = x + _mm(attn_scr[...], sa_wo[...]) + sa_bo[...]

    xn3 = _layernorm(x, n3g[...], n3b[...])
    h = _gelu_exact(_mm(xn3, f1w[...]) + f1b[...])
    x = x + _mm(h, f2w[...]) + f2b[...]
    o_ref[0] = x.astype(o_ref.dtype)


# ----------------------------------------------------------------------------
# pallas_call wrappers
# ----------------------------------------------------------------------------
def _resident(arr):
    """Full-array block with a constant block index: the operand is DMA'd into
    VMEM once and stays resident across the whole grid (weights / scalars)."""
    nd = arr.ndim
    return pl.BlockSpec(arr.shape, lambda *_: (0,) * nd)


_COMPILER_PARAMS = pltpu.CompilerParams(
    dimension_semantics=("parallel",),          # megacore sharding on v7x
    vmem_limit_bytes=VMEM_LIMIT)


def pallas_embed(tok_bsd, pos_sd, g, b, scale):
    B, S, d = tok_bsd.shape
    row_spec = pl.BlockSpec((1, S, d), lambda i: (i, 0, 0))
    return pl.pallas_call(
        functools.partial(_embed_kernel, scale=scale),
        out_shape=jax.ShapeDtypeStruct((B, S, d), ACT_DTYPE),
        grid=(B,),
        in_specs=[row_spec, _resident(pos_sd), _resident(g), _resident(b)],
        out_specs=row_spec,
        compiler_params=_COMPILER_PARAMS,
    )(tok_bsd, pos_sd, g, b)


def _pick_lane_tile(n):
    for t in (512, 256, 128):
        if n % t == 0:
            return t
    return n          # small output dims: single full-width (lane-dense) tile


def pallas_linear(x2d, w_io, b_1o, out_dtype=jnp.float32):
    """x @ W + b, tiled over the output (lane) dimension; x stays resident."""
    m, k = x2d.shape
    n = w_io.shape[1]
    tn = _pick_lane_tile(n)
    cost = pl.CostEstimate(
        flops=int(2 * m * k * n), transcendentals=0,
        bytes_accessed=int(x2d.size * x2d.dtype.itemsize
                           + w_io.size * w_io.dtype.itemsize
                           + b_1o.size * b_1o.dtype.itemsize
                           + m * n * jnp.dtype(out_dtype).itemsize))
    return pl.pallas_call(
        _linear_kernel,
        out_shape=jax.ShapeDtypeStruct((m, n), out_dtype),
        grid=(n // tn,),
        in_specs=[pl.BlockSpec((m, k), lambda j: (0, 0)),       # resident across N grid
                  pl.BlockSpec((k, tn), lambda j: (0, j)),
                  pl.BlockSpec((1, tn), lambda j: (0, j))],
        out_specs=pl.BlockSpec((m, tn), lambda j: (0, j)),
        compiler_params=_COMPILER_PARAMS,
        cost_estimate=cost,
    )(x2d, w_io, b_1o)


def pallas_encoder_layer(x_b1d, p):
    B, S, d = x_b1d.shape
    # DinoImageEmbedding always produces a length-1 sequence; the kernel is
    # specialized for that (identity softmax).
    assert S == 1, "image encoder kernel is specialized for the length-1 DINO sequence"
    weights = (p["wv"], p["bv"], p["wo"], p["bo"],
               p["norm1_g"], p["norm1_b"],
               p["lin1_w"], p["lin1_b"], p["lin2_w"], p["lin2_b"],
               p["norm2_g"], p["norm2_b"])
    row_spec = pl.BlockSpec((1, S, d), lambda i: (i, 0, 0))
    return pl.pallas_call(
        _encoder_layer_kernel,
        out_shape=jax.ShapeDtypeStruct((B, S, d), ACT_DTYPE),
        grid=(B,),
        in_specs=[row_spec] + [_resident(w) for w in weights],
        out_specs=row_spec,
        compiler_params=_COMPILER_PARAMS,
    )(x_b1d, *weights)


def pallas_decoder_layer(x_bsd, mem_b1d, img_flag, p, n_head):
    B, S, d = x_bsd.shape
    dh = p["ff1_w"].shape[1]
    row_spec = pl.BlockSpec((1, S, d), lambda i: (i, 0, 0))

    if mem_b1d is not None:
        weights = (p["norm1_g"], p["norm1_b"],
                   p["sa_wqkv"], p["sa_bqkv"], p["sa_wo"], p["sa_bo"],
                   p["norm2_g"], p["norm2_b"],
                   p["ca_wv"], p["ca_bv"], p["ca_wo"], p["ca_bo"],
                   p["gate_w1"], p["gate_w2"], p["gate_b"],
                   p["gate_ln_g"], p["gate_ln_b"],
                   p["norm3_g"], p["norm3_b"],
                   p["ff1_w"], p["ff1_b"], p["ff2_w"], p["ff2_b"])
        args = (x_bsd, mem_b1d, img_flag) + weights
        in_specs = ([row_spec,
                     pl.BlockSpec((1, 1, d), lambda i: (i, 0, 0)),
                     _resident(img_flag)]
                    + [_resident(w) for w in weights])
        kernel = functools.partial(_decoder_layer_img_kernel, n_head=n_head)
        flops_b = (2 * S * d * 3 * d + 4 * S * S * d + 2 * S * d * d
                   + 4 * d * d + 4 * S * d * d
                   + 2 * S * d * dh + 2 * S * dh * d)
    else:
        weights = (p["norm1_g"], p["norm1_b"],
                   p["sa_wqkv"], p["sa_bqkv"], p["sa_wo"], p["sa_bo"],
                   p["norm3_g"], p["norm3_b"],
                   p["ff1_w"], p["ff1_b"], p["ff2_w"], p["ff2_b"])
        args = (x_bsd,) + weights
        in_specs = [row_spec] + [_resident(w) for w in weights]
        kernel = functools.partial(_decoder_layer_noimg_kernel, n_head=n_head)
        flops_b = (2 * S * d * 3 * d + 4 * S * S * d + 2 * S * d * d
                   + 2 * S * d * dh + 2 * S * dh * d)

    cost = pl.CostEstimate(
        flops=int(B * flops_b),
        transcendentals=int(B * (n_head * S * S + S * dh + S * d)),
        bytes_accessed=int(sum(a.size * a.dtype.itemsize for a in args)
                           + x_bsd.size * x_bsd.dtype.itemsize))

    return pl.pallas_call(
        kernel,
        out_shape=jax.ShapeDtypeStruct((B, S, d), ACT_DTYPE),
        grid=(B,),
        in_specs=in_specs,
        out_specs=row_spec,
        scratch_shapes=[pltpu.VMEM((S, d), jnp.float32)],       # per-head attn outputs
        compiler_params=_COMPILER_PARAMS,
        cost_estimate=cost,
    )(*args)


# ----------------------------------------------------------------------------
# Forward pass (eval mode, return_embeddings=False path)
# ----------------------------------------------------------------------------
def dual_stream_forward(params, input_ids, dino_embedding, *, use_image, cfg):
    d = cfg["d_model"]
    n_head = cfg["n_head"]
    B, S = input_ids.shape

    # SimpleTextEmbedding: token gather (XLA) + fused [scale + pos-add + LN] kernel.
    # TODO(synk): the embedding gather could be fused as an in-kernel DMA gather.
    tok = jnp.take(params["tok_emb"], input_ids, axis=0)                       # (B, S, d)
    x = pallas_embed(tok, params["pos_emb"][:S],
                     params["text_ln_g"], params["text_ln_b"], math.sqrt(d))   # (B, S, d)

    # Image stream: projection + TransformerEncoder over the length-1 sequence.
    # The torch.all(dino==0) guard is reproduced WITHOUT a host sync: the image
    # stream is always computed (it is tiny, seq=1), and its contribution to the
    # decoder is multiplied by a 0/1 flag inside the decoder kernels.
    image_mem = None
    img_flag = None
    if use_image and dino_embedding is not None:
        img_flag = jnp.any(dino_embedding != 0).astype(jnp.float32).reshape(1, 1)
        img = pallas_linear(dino_embedding, params["img_proj_w"], params["img_proj_b"],
                            out_dtype=ACT_DTYPE)                               # (B, d)
        img = img.reshape(B, 1, d)
        for lp in params["enc_layers"]:
            img = pallas_encoder_layer(img, lp)                                # (B, 1, d)
        image_mem = img

    # Multimodal decoder (causal mask built per-tile inside each fused layer kernel).
    for lp in params["dec_layers"]:
        x = pallas_decoder_layer(x, image_mem, img_flag, lp, n_head)

    logits = pallas_linear(x.reshape(B * S, d), params["out_w"], params["out_b"],
                           out_dtype=jnp.float32)
    return logits.reshape(B, S, cfg["vocab_size"])


# ----------------------------------------------------------------------------
# Deterministic synthetic parameter initialization (fused / pruned weight layout)
# ----------------------------------------------------------------------------
def init_params(key, cfg):
    d, dh = cfg["d_model"], cfg["d_hid"]
    V, dd, ml = cfg["vocab_size"], cfg["dino_dim"], cfg["max_len"]
    keys = iter(jax.random.split(key, 128))

    def w(shape, scale=0.02):
        # matmul weights stored in the MXU operand dtype (halves weight DMA)
        return (jax.random.normal(next(keys), shape, jnp.float32) * scale).astype(MXU_DTYPE)

    def zeros(n):
        return jnp.zeros((1, n), jnp.float32)

    def ones(n):
        return jnp.ones((1, n), jnp.float32)

    def enc_layer():
        # From a real checkpoint: wv = in_proj_weight[2d:3d, :].T, bv = in_proj_bias[2d:3d].
        # Q/K projections are dead for the length-1 DINO sequence (identity softmax).
        return {"wv": w((d, d)), "bv": zeros(d),
                "wo": w((d, d)), "bo": zeros(d),
                "norm1_g": ones(d), "norm1_b": zeros(d),
                "lin1_w": w((d, dh)), "lin1_b": zeros(dh),
                "lin2_w": w((dh, d)), "lin2_b": zeros(d),
                "norm2_g": ones(d), "norm2_b": zeros(d)}

    def dec_layer():
        # sa_wqkv = self_attn.in_proj_weight.T (columns 0:d / d:2d / 2d:3d are Q/K/V).
        # ca_wv   = cross_attn.in_proj_weight[2d:3d].T; the cross-attn Q/K are dead
        # because softmax over the single image-memory key is identically 1.
        return {"norm1_g": ones(d), "norm1_b": zeros(d),
                "sa_wqkv": w((d, 3 * d)), "sa_bqkv": zeros(3 * d),
                "sa_wo": w((d, d)), "sa_bo": zeros(d),
                "norm2_g": ones(d), "norm2_b": zeros(d),
                "ca_wv": w((d, d)), "ca_bv": zeros(d),
                "ca_wo": w((d, d)), "ca_bo": zeros(d),
                "gate_w1": w((d, d)), "gate_w2": w((d, d)), "gate_b": zeros(d),
                "gate_ln_g": ones(d), "gate_ln_b": zeros(d),
                "norm3_g": ones(d), "norm3_b": zeros(d),
                "ff1_w": w((d, dh)), "ff1_b": zeros(dh),
                "ff2_w": w((dh, d)), "ff2_b": zeros(d)}

    return {
        "tok_emb": jax.random.normal(next(keys), (V, d), jnp.float32) * 0.02,
        "pos_emb": jax.random.normal(next(keys), (ml, d), jnp.float32) * 0.02,
        "text_ln_g": ones(d), "text_ln_b": zeros(d),
        "img_proj_w": w((dd, d)), "img_proj_b": zeros(d),
        "enc_layers": [enc_layer() for _ in range(cfg["num_encoder_layers"])],
        "dec_layers": [dec_layer() for _ in range(cfg["num_decoder_layers"])],
        "out_w": w((d, V)), "out_b": zeros(V),
    }


# ----------------------------------------------------------------------------
if __name__ == "__main__":
    cfg = dict(vocab_size=64, d_model=32, n_head=4, d_hid=32,
               num_encoder_layers=2, num_decoder_layers=2,
               dino_dim=16, max_len=128)

    params = init_params(jax.random.PRNGKey(0), cfg)

    k_ids, k_dino = jax.random.split(jax.random.PRNGKey(0))
    B, S = 2, 8
    input_ids = jax.random.randint(k_ids, (B, S), 0, cfg["vocab_size"])
    dino_embedding = jax.random.normal(k_dino, (B, cfg["dino_dim"]), jnp.float32)

    # TODO(synk): generate()/sampling and LCGLoss are not part of forward() and
    # are not implemented here.
    fwd = jax.jit(functools.partial(dual_stream_forward, use_image=True, cfg=cfg))
    logits = jax.block_until_ready(fwd(params, input_ids, dino_embedding))

    assert logits.shape == (B, S, cfg["vocab_size"])
    assert bool(jnp.all(jnp.isfinite(logits)))
    print("KERNEL_OK")
</pallas_src>

<mosaic_0001>
module attributes {stable_mosaic.version = 11 : i64} {
  func.func @_linear_kernel(%arg0: i32, %arg1: memref<2x16xf32, #tpu.memory_space<vmem>>, %arg2: memref<16x32xbf16, #tpu.memory_space<vmem>>, %arg3: memref<1x32xf32, #tpu.memory_space<vmem>>, %arg4: memref<2x32xbf16, #tpu.memory_space<vmem>>) attributes {dimension_semantics = [#tpu.dimension_semantics<parallel>], iteration_bounds = array<i64: 1>, scalar_prefetch = 0 : i64, scratch_operands = 0 : i64, tpu.core_type = #tpu.core_type<tc>, window_params = [{pipeline_mode = #tpu.pipeline_mode<synchronous>, transform_indices = @transform_0, window_bounds = array<i64: 2, 16>}, {transform_indices = @transform_1, window_bounds = array<i64: 16, 32>}, {transform_indices = @transform_2, window_bounds = array<i64: 1, 32>}, {transform_indices = @transform_3, window_bounds = array<i64: 2, 32>}]} {
    %c0 = arith.constant 0 : index
    %c0_0 = arith.constant 0 : index
    %0 = vector.load %arg1[%c0, %c0_0] : memref<2x16xf32, #tpu.memory_space<vmem>>, vector<2x16xf32>
    %c0_1 = arith.constant 0 : index
    %c0_2 = arith.constant 0 : index
    %1 = vector.load %arg2[%c0_1, %c0_2] : memref<16x32xbf16, #tpu.memory_space<vmem>>, vector<16x32xbf16>
    %2 = arith.truncf %0 : vector<2x16xf32> to vector<2x16xbf16>
    %cst = arith.constant dense<0.000000e+00> : vector<2x32xf32>
    %3 = tpu.matmul %2, %1, %cst {dimension_numbers = #tpu.dot_dimension_numbers<[1], [0], [0], [1], [0, 0, 1, 1], [], []>} : vector<2x16xbf16>, vector<16x32xbf16>, vector<2x32xf32> -> vector<2x32xf32>
    %c0_3 = arith.constant 0 : index
    %c0_4 = arith.constant 0 : index
    %4 = vector.load %arg3[%c0_3, %c0_4] : memref<1x32xf32, #tpu.memory_space<vmem>>, vector<1x32xf32>
    %5 = vector.broadcast %4 : vector<1x32xf32> to vector<2x32xf32>
    %6 = arith.addf %3, %5 : vector<2x32xf32>
    %7 = arith.truncf %6 : vector<2x32xf32> to vector<2x32xbf16>
    %c0_5 = arith.constant 0 : index
    %c0_6 = arith.constant 0 : index
    %8 = vector.load %arg4[%c0_5, %c0_6] : memref<2x32xbf16, #tpu.memory_space<vmem>>, vector<2x32xbf16>
    tpu.vector_store %arg4[%c0_5, %c0_6], %7 {strides = array<i32>} : memref<2x32xbf16, #tpu.memory_space<vmem>>, vector<2x32xbf16>,
    return
  }
  func.func @transform_0(%arg0: i32) -> (i32, i32) {
    %c0_i32 = arith.constant 0 : i32
    %c0_i32_0 = arith.constant 0 : i32
    %c0_i32_1 = arith.constant 0 : i32
    return %c0_i32, %c0_i32_0 : i32, i32
  }
  func.func @transform_1(%arg0: i32) -> (i32, i32) {
    %c0_i32 = arith.constant 0 : i32
    %c0_i32_0 = arith.constant 0 : i32
    return %c0_i32, %arg0 : i32, i32
  }
  func.func @transform_2(%arg0: i32) -> (i32, i32) {
    %c0_i32 = arith.constant 0 : i32
    %c0_i32_0 = arith.constant 0 : i32
    return %c0_i32, %arg0 : i32, i32
  }
  func.func @transform_3(%arg0: i32) -> (i32, i32) {
    %c0_i32 = arith.constant 0 : i32
    %c0_i32_0 = arith.constant 0 : i32
    return %c0_i32, %arg0 : i32, i32
  }
}

module attributes {stable_mosaic.version = 11 : i64} {
  func.func @_embed_kernel(%arg0: i32, %arg1: memref<1x8x32xf32, #tpu.memory_space<vmem>>, %arg2: memref<8x32xf32, #tpu.memory_space<vmem>>, %arg3: memref<1x32xf32, #tpu.memory_space<vmem>>, %arg4: memref<1x32xf32, #tpu.memory_space<vmem>>, %arg5: memref<1x8x32xbf16, #tpu.memory_space<vmem>>) attributes {dimension_semantics = [#tpu.dimension_semantics<parallel>], iteration_bounds = array<i64: 2>, scalar_prefetch = 0 : i64, scratch_operands = 0 : i64, tpu.core_type = #tpu.core_type<tc>, window_params = [{transform_indices = @transform_0, window_bounds = array<i64: 1, 8, 32>}, {pipeline_mode = #tpu.pipeline_mode<synchronous>, transform_indices = @transform_1, window_bounds = array<i64: 8, 32>}, {pipeline_mode = #tpu.pipeline_mode<synchronous>, transform_indices = @transform_2, window_bounds = array<i64: 1, 32>}, {pipeline_mode = #tpu.pipeline_mode<synchronous>, transform_indices = @transform_3, window_bounds = array<i64: 1, 32>}, {transform_indices = @transform_4, window_bounds = array<i64: 1, 8, 32>}]} {
    %c0 = arith.constant 0 : index
    %c0_0 = arith.constant 0 : index
    %c0_1 = arith.constant 0 : index
    %0 = vector.load %arg1[%c0, %c0_0, %c0_1] : memref<1x8x32xf32, #tpu.memory_space<vmem>>, vector<1x8x32xf32>
    %1 = vector.shape_cast %0 : vector<1x8x32xf32> to vector<8x32xf32>
    %cst = arith.constant 5.65685415 : f32
    %2 = vector.broadcast %cst : f32 to vector<8x32xf32>
    %3 = arith.mulf %1, %2 : vector<8x32xf32>
    %c0_2 = arith.constant 0 : index
    %c0_3 = arith.constant 0 : index
    %4 = vector.load %arg2[%c0_2, %c0_3] : memref<8x32xf32, #tpu.memory_space<vmem>>, vector<8x32xf32>
    %5 = arith.addf %3, %4 : vector<8x32xf32>
    %c0_4 = arith.constant 0 : index
    %c0_5 = arith.constant 0 : index
    %6 = vector.load %arg3[%c0_4, %c0_5] : memref<1x32xf32, #tpu.memory_space<vmem>>, vector<1x32xf32>
    %c0_6 = arith.constant 0 : index
    %c0_7 = arith.constant 0 : index
    %7 = vector.load %arg4[%c0_6, %c0_7] : memref<1x32xf32, #tpu.memory_space<vmem>>, vector<1x32xf32>
    %cst_8 = arith.constant dense<0.000000e+00> : vector<8xf32>
    %8 = vector.multi_reduction <add>, %5, %cst_8 [1] : vector<8x32xf32> to vector<8xf32>
    %9 = vector.shape_cast %8 : vector<8xf32> to vector<8x1xf32>
    %cst_9 = arith.constant 3.200000e+01 : f32
    %10 = vector.broadcast %cst_9 : f32 to vector<8x1xf32>
    %11 = arith.divf %9, %10 : vector<8x1xf32>
    %12 = vector.broadcast %11 : vector<8x1xf32> to vector<8x32xf32>
    %13 = arith.subf %5, %12 : vector<8x32xf32>
    %14 = arith.mulf %13, %13 : vector<8x32xf32>
    %cst_10 = arith.constant dense<0.000000e+00> : vector<8xf32>
    %15 = vector.multi_reduction <add>, %14, %cst_10 [1] : vector<8x32xf32> to vector<8xf32>
    %16 = vector.shape_cast %15 : vector<8xf32> to vector<8x1xf32>
    %cst_11 = arith.constant 3.200000e+01 : f32
    %17 = vector.broadcast %cst_11 : f32 to vector<8x1xf32>
    %18 = arith.divf %16, %17 : vector<8x1xf32>
    %cst_12 = arith.constant 9.99999974E-6 : f32
    %19 = vector.broadcast %cst_12 : f32 to vector<8x1xf32>
    %20 = arith.addf %18, %19 : vector<8x1xf32>
    %21 = math.rsqrt %20 : vector<8x1xf32>
    %22 = vector.broadcast %21 : vector<8x1xf32> to vector<8x32xf32>
    %23 = arith.mulf %13, %22 : vector<8x32xf32>
    %24 = vector.broadcast %6 : vector<1x32xf32> to vector<8x32xf32>
    %25 = arith.mulf %23, %24 : vector<8x32xf32>
    %26 = vector.broadcast %7 : vector<1x32xf32> to vector<8x32xf32>
    %27 = arith.addf %25, %26 : vector<8x32xf32>
    %28 = arith.truncf %27 : vector<8x32xf32> to vector<8x32xbf16>
    %c0_13 = arith.constant 0 : index
    %c0_14 = arith.constant 0 : index
    %c0_15 = arith.constant 0 : index
    %29 = vector.load %arg5[%c0_13, %c0_14, %c0_15] : memref<1x8x32xbf16, #tpu.memory_space<vmem>>, vector<1x8x32xbf16>
    %30 = vector.shape_cast %29 : vector<1x8x32xbf16> to vector<8x32xbf16>
    %31 = vector.shape_cast %28 : vector<8x32xbf16> to vector<1x8x32xbf16>
    tpu.vector_store %arg5[%c0_13, %c0_14, %c0_15], %31 {strides = array<i32>} : memref<1x8x32xbf16, #tpu.memory_space<vmem>>, vector<1x8x32xbf16>,
    return
  }
  func.func @transform_0(%arg0: i32) -> (i32, i32, i32) {
    %c0_i32 = arith.constant 0 : i32
    %c0_i32_0 = arith.constant 0 : i32
    %c0_i32_1 = arith.constant 0 : i32
    return %arg0, %c0_i32, %c0_i32_0 : i32, i32, i32
  }
  func.func @transform_1(%arg0: i32) -> (i32, i32) {
    %c0_i32 = arith.constant 0 : i32
    %c0_i32_0 = arith.constant 0 : i32
    %c0_i32_1 = arith.constant 0 : i32
    return %c0_i32, %c0_i32_0 : i32, i32
  }
  func.func @transform_2(%arg0: i32) -> (i32, i32) {
    %c0_i32 = arith.constant 0 : i32
    %c0_i32_0 = arith.constant 0 : i32
    %c0_i32_1 = arith.constant 0 : i32
    return %c0_i32, %c0_i32_0 : i32, i32
  }
  func.func @transform_3(%arg0: i32) -> (i32, i32) {
    %c0_i32 = arith.constant 0 : i32
    %c0_i32_0 = arith.constant 0 : i32
    %c0_i32_1 = arith.constant 0 : i32
    return %c0_i32, %c0_i32_0 : i32, i32
  }
  func.func @transform_4(%arg0: i32) -> (i32, i32, i32) {
    %c0_i32 = arith.constant 0 : i32
    %c0_i32_0 = arith.constant 0 : i32
    %c0_i32_1 = arith.constant 0 : i32
    return %arg0, %c0_i32, %c0_i32_0 : i32, i32, i32
  }
}

module attributes {stable_mosaic.version = 11 : i64} {
  func.func @_encoder_layer_kernel(%arg0: i32, %arg1: memref<1x1x32xbf16, #tpu.memory_space<vmem>>, %arg2: memref<32x32xbf16, #tpu.memory_space<vmem>>, %arg3: memref<1x32xf32, #tpu.memory_space<vmem>>, %arg4: memref<32x32xbf16, #tpu.memory_space<vmem>>, %arg5: memref<1x32xf32, #tpu.memory_space<vmem>>, %arg6: memref<1x32xf32, #tpu.memory_space<vmem>>, %arg7: memref<1x32xf32, #tpu.memory_space<vmem>>, %arg8: memref<32x32xbf16, #tpu.memory_space<vmem>>, %arg9: memref<1x32xf32, #tpu.memory_space<vmem>>, %arg10: memref<32x32xbf16, #tpu.memory_space<vmem>>, %arg11: memref<1x32xf32, #tpu.memory_space<vmem>>, %arg12: memref<1x32xf32, #tpu.memory_space<vmem>>, %arg13: memref<1x32xf32, #tpu.memory_space<vmem>>, %arg14: memref<1x1x32xbf16, #tpu.memory_space<vmem>>) attributes {dimension_semantics = [#tpu.dimension_semantics<parallel>], iteration_bounds = array<i64: 2>, scalar_prefetch = 0 : i64, scratch_operands = 0 : i64, tpu.core_type = #tpu.core_type<tc>, window_params = [{transform_indices = @transform_0, window_bounds = array<i64: 1, 1, 32>}, {pipeline_mode = #tpu.pipeline_mode<synchronous>, transform_indices = @transform_1, window_bounds = array<i64: 32, 32>}, {pipeline_mode = #tpu.pipeline_mode<synchronous>, transform_indices = @transform_2, window_bounds = array<i64: 1, 32>}, {pipeline_mode = #tpu.pipeline_mode<synchronous>, transform_indices = @transform_3, window_bounds = array<i64: 32, 32>}, {pipeline_mode = #tpu.pipeline_mode<synchronous>, transform_indices = @transform_4, window_bounds = array<i64: 1, 32>}, {pipeline_mode = #tpu.pipeline_mode<synchronous>, transform_indices = @transform_5, window_bounds = array<i64: 1, 32>}, {pipeline_mode = #tpu.pipeline_mode<synchronous>, transform_indices = @transform_6, window_bounds = array<i64: 1, 32>}, {pipeline_mode = #tpu.pipeline_mode<synchronous>, transform_indices = @transform_7, window_bounds = array<i64: 32, 32>}, {pipeline_mode = #tpu.pipeline_mode<synchronous>, transform_indices = @transform_8, window_bounds = array<i64: 1, 32>}, {pipeline_mode = #tpu.pipeline_mode<synchronous>, transform_indices = @transform_9, window_bounds = array<i64: 32, 32>}, {pipeline_mode = #tpu.pipeline_mode<synchronous>, transform_indices = @transform_10, window_bounds = array<i64: 1, 32>}, {pipeline_mode = #tpu.pipeline_mode<synchronous>, transform_indices = @transform_11, window_bounds = array<i64: 1, 32>}, {pipeline_mode = #tpu.pipeline_mode<synchronous>, transform_indices = @transform_12, window_bounds = array<i64: 1, 32>}, {transform_indices = @transform_13, window_bounds = array<i64: 1, 1, 32>}]} {
    %c0 = arith.constant 0 : index
    %c0_0 = arith.constant 0 : index
    %c0_1 = arith.constant 0 : index
    %0 = vector.load %arg1[%c0, %c0_0, %c0_1] : memref<1x1x32xbf16, #tpu.memory_space<vmem>>, vector<1x1x32xbf16>
    %1 = vector.shape_cast %0 : vector<1x1x32xbf16> to vector<1x32xbf16>
    %2 = arith.extf %1 : vector<1x32xbf16> to vector<1x32xf32>
    %c0_2 = arith.constant 0 : index
    %c0_3 = arith.constant 0 : index
    %3 = vector.load %arg2[%c0_2, %c0_3] : memref<32x32xbf16, #tpu.memory_space<vmem>>, vector<32x32xbf16>
    %4 = arith.truncf %2 : vector<1x32xf32> to vector<1x32xbf16>
    %cst = arith.constant dense<0.000000e+00> : vector<1x32xf32>
    %5 = tpu.matmul %4, %3, %cst {dimension_numbers = #tpu.dot_dimension_numbers<[1], [0], [0], [1], [0, 0, 1, 1], [], []>} : vector<1x32xbf16>, vector<32x32xbf16>, vector<1x32xf32> -> vector<1x32xf32>
    %c0_4 = arith.constant 0 : index
    %c0_5 = arith.constant 0 : index
    %6 = vector.load %arg3[%c0_4, %c0_5] : memref<1x32xf32, #tpu.memory_space<vmem>>, vector<1x32xf32>
    %7 = arith.addf %5, %6 : vector<1x32xf32>
    %c0_6 = arith.constant 0 : index
    %c0_7 = arith.constant 0 : index
    %8 = vector.load %arg4[%c0_6, %c0_7] : memref<32x32xbf16, #tpu.memory_space<vmem>>, vector<32x32xbf16>
    %9 = arith.truncf %7 : vector<1x32xf32> to vector<1x32xbf16>
    %cst_8 = arith.constant dense<0.000000e+00> : vector<1x32xf32>
    %10 = tpu.matmul %9, %8, %cst_8 {dimension_numbers = #tpu.dot_dimension_numbers<[1], [0], [0], [1], [0, 0, 1, 1], [], []>} : vector<1x32xbf16>, vector<32x32xbf16>, vector<1x32xf32> -> vector<1x32xf32>
    %c0_9 = arith.constant 0 : index
    %c0_10 = arith.constant 0 : index
    %11 = vector.load %arg5[%c0_9, %c0_10] : memref<1x32xf32, #tpu.memory_space<vmem>>, vector<1x32xf32>
    %12 = arith.addf %10, %11 : vector<1x32xf32>
    %13 = arith.addf %2, %12 : vector<1x32xf32>
    %c0_11 = arith.constant 0 : index
    %c0_12 = arith.constant 0 : index
    %14 = vector.load %arg6[%c0_11, %c0_12] : memref<1x32xf32, #tpu.memory_space<vmem>>, vector<1x32xf32>
    %c0_13 = arith.constant 0 : index
    %c0_14 = arith.constant 0 : index
    %15 = vector.load %arg7[%c0_13, %c0_14] : memref<1x32xf32, #tpu.memory_space<vmem>>, vector<1x32xf32>
    %cst_15 = arith.constant dense<0.000000e+00> : vector<1xf32>
    %16 = vector.multi_reduction <add>, %13, %cst_15 [1] : vector<1x32xf32> to vector<1xf32>
    %17 = vector.shape_cast %16 : vector<1xf32> to vector<1x1xf32>
    %cst_16 = arith.constant 3.200000e+01 : f32
    %18 = vector.broadcast %cst_16 : f32 to vector<1x1xf32>
    %19 = arith.divf %17, %18 : vector<1x1xf32>
    %20 = vector.broadcast %19 : vector<1x1xf32> to vector<1x32xf32>
    %21 = arith.subf %13, %20 : vector<1x32xf32>
    %22 = arith.mulf %21, %21 : vector<1x32xf32>
    %cst_17 = arith.constant dense<0.000000e+00> : vector<1xf32>
    %23 = vector.multi_reduction <add>, %22, %cst_17 [1] : vector<1x32xf32> to vector<1xf32>
    %24 = vector.shape_cast %23 : vector<1xf32> to vector<1x1xf32>
    %cst_18 = arith.constant 3.200000e+01 : f32
    %25 = vector.broadcast %cst_18 : f32 to vector<1x1xf32>
    %26 = arith.divf %24, %25 : vector<1x1xf32>
    %cst_19 = arith.constant 9.99999974E-6 : f32
    %27 = vector.broadcast %cst_19 : f32 to vector<1x1xf32>
    %28 = arith.addf %26, %27 : vector<1x1xf32>
    %29 = math.rsqrt %28 : vector<1x1xf32>
    %30 = vector.broadcast %29 : vector<1x1xf32> to vector<1x32xf32>
    %31 = arith.mulf %21, %30 : vector<1x32xf32>
    %32 = arith.mulf %31, %14 : vector<1x32xf32>
    %33 = arith.addf %32, %15 : vector<1x32xf32>
    %c0_20 = arith.constant 0 : index
    %c0_21 = arith.constant 0 : index
    %34 = vector.load %arg8[%c0_20, %c0_21] : memref<32x32xbf16, #tpu.memory_space<vmem>>, vector<32x32xbf16>
    %35 = arith.truncf %33 : vector<1x32xf32> to vector<1x32xbf16>
    %cst_22 = arith.constant dense<0.000000e+00> : vector<1x32xf32>
    %36 = tpu.matmul %35, %34, %cst_22 {dimension_numbers = #tpu.dot_dimension_numbers<[1], [0], [0], [1], [0, 0, 1, 1], [], []>} : vector<1x32xbf16>, vector<32x32xbf16>, vector<1x32xf32> -> vector<1x32xf32>
    %c0_23 = arith.constant 0 : index
    %c0_24 = arith.constant 0 : index
    %37 = vector.load %arg9[%c0_23, %c0_24] : memref<1x32xf32, #tpu.memory_space<vmem>>, vector<1x32xf32>
    %38 = arith.addf %36, %37 : vector<1x32xf32>
    %cst_25 = arith.constant 5.000000e-01 : f32
    %39 = vector.broadcast %cst_25 : f32 to vector<1x32xf32>
    %40 = arith.mulf %39, %38 : vector<1x32xf32>
    %cst_26 = arith.constant 0.707106769 : f32
    %41 = vector.broadcast %cst_26 : f32 to vector<1x32xf32>
    %42 = arith.mulf %38, %41 : vector<1x32xf32>
    %cst_27 = arith.constant 0.000000e+00 : f32
    %43 = vector.broadcast %cst_27 : f32 to vector<1x32xf32>
    %44 = arith.cmpf oge, %42, %43 : vector<1x32xf32>
    %cst_28 = arith.constant 1.000000e+00 : f32
    %cst_29 = arith.constant -1.000000e+00 : f32
    %45 = vector.broadcast %cst_28 : f32 to vector<1x32xf32>
    %46 = vector.broadcast %cst_29 : f32 to vector<1x32xf32>
    %47 = arith.select %44, %45, %46 : vector<1x32xi1>, vector<1x32xf32>
    %48 = math.absf %42 : vector<1x32xf32>
    %cst_30 = arith.constant 0.327591091 : f32
    %49 = vector.broadcast %cst_30 : f32 to vector<1x32xf32>
    %50 = arith.mulf %49, %48 : vector<1x32xf32>
    %cst_31 = arith.constant 1.000000e+00 : f32
    %51 = vector.broadcast %cst_31 : f32 to vector<1x32xf32>
    %52 = arith.addf %51, %50 : vector<1x32xf32>
    %53 = tpu.reciprocal %52 {approx = true} : vector<1x32xf32> -> vector<1x32xf32>
    %54 = arith.mulf %52, %53 : vector<1x32xf32>
    %cst_32 = arith.constant 2.000000e+00 : f32
    %55 = vector.broadcast %cst_32 : f32 to vector<1x32xf32>
    %56 = arith.subf %55, %54 : vector<1x32xf32>
    %57 = arith.mulf %53, %56 : vector<1x32xf32>
    %cst_33 = arith.constant 1.06140542 : f32
    %58 = vector.broadcast %cst_33 : f32 to vector<1x32xf32>
    %59 = arith.mulf %58, %57 : vector<1x32xf32>
    %cst_34 = arith.constant -1.45315206 : f32
    %60 = vector.broadcast %cst_34 : f32 to vector<1x32xf32>
    %61 = arith.addf %59, %60 : vector<1x32xf32>
    %62 = arith.mulf %61, %57 : vector<1x32xf32>
    %cst_35 = arith.constant 1.42141378 : f32
    %63 = vector.broadcast %cst_35 : f32 to vector<1x32xf32>
    %64 = arith.addf %62, %63 : vector<1x32xf32>
    %65 = arith.mulf %64, %57 : vector<1x32xf32>
    %cst_36 = arith.constant -0.284496725 : f32
    %66 = vector.broadcast %cst_36 : f32 to vector<1x32xf32>
    %67 = arith.addf %65, %66 : vector<1x32xf32>
    %68 = arith.mulf %67, %57 : vector<1x32xf32>
    %cst_37 = arith.constant 0.254829586 : f32
    %69 = vector.broadcast %cst_37 : f32 to vector<1x32xf32>
    %70 = arith.addf %68, %69 : vector<1x32xf32>
    %71 = arith.mulf %70, %57 : vector<1x32xf32>
    %cst_38 = arith.constant 0.000000e+00 : f32
    %72 = vector.broadcast %cst_38 : f32 to vector<1x32xf32>
    %73 = arith.subf %72, %48 : vector<1x32xf32>
    %74 = arith.mulf %73, %48 : vector<1x32xf32>
    %75 = math.exp %74 : vector<1x32xf32>
    %76 = arith.mulf %71, %75 : vector<1x32xf32>
    %cst_39 = arith.constant 1.000000e+00 : f32
    %77 = vector.broadcast %cst_39 : f32 to vector<1x32xf32>
    %78 = arith.subf %77, %76 : vector<1x32xf32>
    %79 = arith.mulf %47, %78 : vector<1x32xf32>
    %cst_40 = arith.constant 1.000000e+00 : f32
    %80 = vector.broadcast %cst_40 : f32 to vector<1x32xf32>
    %81 = arith.addf %80, %79 : vector<1x32xf32>
    %82 = arith.mulf %40, %81 : vector<1x32xf32>
    %c0_41 = arith.constant 0 : index
    %c0_42 = arith.constant 0 : index
    %83 = vector.load %arg10[%c0_41, %c0_42] : memref<32x32xbf16, #tpu.memory_space<vmem>>, vector<32x32xbf16>
    %84 = arith.truncf %82 : vector<1x32xf32> to vector<1x32xbf16>
    %cst_43 = arith.constant dense<0.000000e+00> : vector<1x32xf32>
    %85 = tpu.matmul %84, %83, %cst_43 {dimension_numbers = #tpu.dot_dimension_numbers<[1], [0], [0], [1], [0, 0, 1, 1], [], []>} : vector<1x32xbf16>, vector<32x32xbf16>, vector<1x32xf32> -> vector<1x32xf32>
    %86 = arith.addf %33, %85 : vector<1x32xf32>
    %c0_44 = arith.constant 0 : index
    %c0_45 = arith.constant 0 : index
    %87 = vector.load %arg11[%c0_44, %c0_45] : memref<1x32xf32, #tpu.memory_space<vmem>>, vector<1x32xf32>
    %88 = arith.addf %86, %87 : vector<1x32xf32>
    %c0_46 = arith.constant 0 : index
    %c0_47 = arith.constant 0 : index
    %89 = vector.load %arg12[%c0_46, %c0_47] : memref<1x32xf32, #tpu.memory_space<vmem>>, vector<1x32xf32>
    %c0_48 = arith.constant 0 : index
    %c0_49 = arith.constant 0 : index
    %90 = vector.load %arg13[%c0_48, %c0_49] : memref<1x32xf32, #tpu.memory_space<vmem>>, vector<1x32xf32>
    %cst_50 = arith.constant dense<0.000000e+00> : vector<1xf32>
    %91 = vector.multi_reduction <add>, %88, %cst_50 [1] : vector<1x32xf32> to vector<1xf32>
    %92 = vector.shape_cast %91 : vector<1xf32> to vector<1x1xf32>
    %cst_51 = arith.constant 3.200000e+01 : f32
    %93 = vector.broadcast %cst_51 : f32 to vector<1x1xf32>
    %94 = arith.divf %92, %93 : vector<1x1xf32>
    %95 = vector.broadcast %94 : vector<1x1xf32> to vector<1x32xf32>
    %96 = arith.subf %88, %95 : vector<1x32xf32>
    %97 = arith.mulf %96, %96 : vector<1x32xf32>
    %cst_52 = arith.constant dense<0.000000e+00> : vector<1xf32>
    %98 = vector.multi_reduction <add>, %97, %cst_52 [1] : vector<1x32xf32> to vector<1xf32>
    %99 = vector.shape_cast %98 : vector<1xf32> to vector<1x1xf32>
    %cst_53 = arith.constant 3.200000e+01 : f32
    %100 = vector.broadcast %cst_53 : f32 to vector<1x1xf32>
    %101 = arith.divf %99, %100 : vector<1x1xf32>
    %cst_54 = arith.constant 9.99999974E-6 : f32
    %102 = vector.broadcast %cst_54 : f32 to vector<1x1xf32>
    %103 = arith.addf %101, %102 : vector<1x1xf32>
    %104 = math.rsqrt %103 : vector<1x1xf32>
    %105 = vector.broadcast %104 : vector<1x1xf32> to vector<1x32xf32>
    %106 = arith.mulf %96, %105 : vector<1x32xf32>
    %107 = arith.mulf %106, %89 : vector<1x32xf32>
    %108 = arith.addf %107, %90 : vector<1x32xf32>
    %109 = arith.truncf %108 : vector<1x32xf32> to vector<1x32xbf16>
    %c0_55 = arith.constant 0 : index
    %c0_56 = arith.constant 0 : index
    %c0_57 = arith.constant 0 : index
    %110 = vector.load %arg14[%c0_55, %c0_56, %c0_57] : memref<1x1x32xbf16, #tpu.memory_space<vmem>>, vector<1x1x32xbf16>
    %111 = vector.shape_cast %110 : vector<1x1x32xbf16> to vector<1x32xbf16>
    %112 = vector.shape_cast %109 : vector<1x32xbf16> to vector<1x1x32xbf16>
    tpu.vector_store %arg14[%c0_55, %c0_56, %c0_57], %112 {strides = array<i32>} : memref<1x1x32xbf16, #tpu.memory_space<vmem>>, vector<1x1x32xbf16>,
    return
  }
  func.func @transform_0(%arg0: i32) -> (i32, i32, i32) {
    %c0_i32 = arith.constant 0 : i32
    %c0_i32_0 = arith.constant 0 : i32
    %c0_i32_1 = arith.constant 0 : i32
    return %arg0, %c0_i32, %c0_i32_0 : i32, i32, i32
  }
  func.func @transform_1(%arg0: i32) -> (i32, i32) {
    %c0_i32 = arith.constant 0 : i32
    %c0_i32_0 = arith.constant 0 : i32
    %c0_i32_1 = arith.constant 0 : i32
    return %c0_i32, %c0_i32_0 : i32, i32
  }
  func.func @transform_2(%arg0: i32) -> (i32, i32) {
    %c0_i32 = arith.constant 0 : i32
    %c0_i32_0 = arith.constant 0 : i32
    %c0_i32_1 = arith.constant 0 : i32
    return %c0_i32, %c0_i32_0 : i32, i32
  }
  func.func @transform_3(%arg0: i32) -> (i32, i32) {
    %c0_i32 = arith.constant 0 : i32
    %c0_i32_0 = arith.constant 0 : i32
    %c0_i32_1 = arith.constant 0 : i32
    return %c0_i32, %c0_i32_0 : i32, i32
  }
  func.func @transform_4(%arg0: i32) -> (i32, i32) {
    %c0_i32 = arith.constant 0 : i32
    %c0_i32_0 = arith.constant 0 : i32
    %c0_i32_1 = arith.constant 0 : i32
    return %c0_i32, %c0_i32_0 : i32, i32
  }
  func.func @transform_5(%arg0: i32) -> (i32, i32) {
    %c0_i32 = arith.constant 0 : i32
    %c0_i32_0 = arith.constant 0 : i32
    %c0_i32_1 = arith.constant 0 : i32
    return %c0_i32, %c0_i32_0 : i32, i32
  }
  func.func @transform_6(%arg0: i32) -> (i32, i32) {
    %c0_i32 = arith.constant 0 : i32
    %c0_i32_0 = arith.constant 0 : i32
    %c0_i32_1 = arith.constant 0 : i32
    return %c0_i32, %c0_i32_0 : i32, i32
  }
  func.func @transform_7(%arg0: i32) -> (i32, i32) {
    %c0_i32 = arith.constant 0 : i32
    %c0_i32_0 = arith.constant 0 : i32
    %c0_i32_1 = arith.constant 0 : i32
    return %c0_i32, %c0_i32_0 : i32, i32
  }
  func.func @transform_8(%arg0: i32) -> (i32, i32) {
    %c0_i32 = arith.constant 0 : i32
    %c0_i32_0 = arith.constant 0 : i32
    %c0_i32_1 = arith.constant 0 : i32
    return %c0_i32, %c0_i32_0 : i32, i32
  }
  func.func @transform_9(%arg0: i32) -> (i32, i32) {
    %c0_i32 = arith.constant 0 : i32
    %c0_i32_0 = arith.constant 0 : i32
    %c0_i32_1 = arith.constant 0 : i32
    return %c0_i32, %c0_i32_0 : i32, i32
  }
  func.func @transform_10(%arg0: i32) -> (i32, i32) {
    %c0_i32 = arith.constant 0 : i32
    %c0_i32_0 = arith.constant 0 : i32
    %c0_i32_1 = arith.constant 0 : i32
    return %c0_i32, %c0_i32_0 : i32, i32
  }
  func.func @transform_11(%arg0: i32) -> (i32, i32) {
    %c0_i32 = arith.constant 0 : i32
    %c0_i32_0 = arith.constant 0 : i32
    %c0_i32_1 = arith.constant 0 : i32
    return %c0_i32, %c0_i32_0 : i32, i32
  }
  func.func @transform_12(%arg0: i32) -> (i32, i32) {
    %c0_i32 = arith.constant 0 : i32
    %c0_i32_0 = arith.constant 0 : i32
    %c0_i32_1 = arith.constant 0 : i32
    return %c0_i32, %c0_i32_0 : i32, i32
  }
  func.func @transform_13(%arg0: i32) -> (i32, i32, i32) {
    %c0_i32 = arith.constant 0 : i32
    %c0_i32_0 = arith.constant 0 : i32
    %c0_i32_1 = arith.constant 0 : i32
    return %arg0, %c0_i32, %c0_i32_0 : i32, i32, i32
  }
}

module attributes {stable_mosaic.version = 11 : i64} {
  func.func @_decoder_layer_img_kernel(%arg0: i32, %arg1: memref<1x8x32xbf16, #tpu.memory_space<vmem>>, %arg2: memref<1x1x32xbf16, #tpu.memory_space<vmem>>, %arg3: memref<1x1xf32, #tpu.memory_space<vmem>>, %arg4: memref<1x32xf32, #tpu.memory_space<vmem>>, %arg5: memref<1x32xf32, #tpu.memory_space<vmem>>, %arg6: memref<32x96xbf16, #tpu.memory_space<vmem>>, %arg7: memref<1x96xf32, #tpu.memory_space<vmem>>, %arg8: memref<32x32xbf16, #tpu.memory_space<vmem>>, %arg9: memref<1x32xf32, #tpu.memory_space<vmem>>, %arg10: memref<1x32xf32, #tpu.memory_space<vmem>>, %arg11: memref<1x32xf32, #tpu.memory_space<vmem>>, %arg12: memref<32x32xbf16, #tpu.memory_space<vmem>>, %arg13: memref<1x32xf32, #tpu.memory_space<vmem>>, %arg14: memref<32x32xbf16, #tpu.memory_space<vmem>>, %arg15: memref<1x32xf32, #tpu.memory_space<vmem>>, %arg16: memref<32x32xbf16, #tpu.memory_space<vmem>>, %arg17: memref<32x32xbf16, #tpu.memory_space<vmem>>, %arg18: memref<1x32xf32, #tpu.memory_space<vmem>>, %arg19: memref<1x32xf32, #tpu.memory_space<vmem>>, %arg20: memref<1x32xf32, #tpu.memory_space<vmem>>, %arg21: memref<1x32xf32, #tpu.memory_space<vmem>>, %arg22: memref<1x32xf32, #tpu.memory_space<vmem>>, %arg23: memref<32x32xbf16, #tpu.memory_space<vmem>>, %arg24: memref<1x32xf32, #tpu.memory_space<vmem>>, %arg25: memref<32x32xbf16, #tpu.memory_space<vmem>>, %arg26: memref<1x32xf32, #tpu.memory_space<vmem>>, %arg27: memref<1x8x32xbf16, #tpu.memory_space<vmem>>, %arg28: memref<8x32xf32, #tpu.memory_space<vmem>>) attributes {dimension_semantics = [#tpu.dimension_semantics<parallel>], iteration_bounds = array<i64: 2>, scalar_prefetch = 0 : i64, scratch_operands = 1 : i64, tpu.core_type = #tpu.core_type<tc>, window_params = [{transform_indices = @transform_0, window_bounds = array<i64: 1, 8, 32>}, {transform_indices = @transform_1, window_bounds = array<i64: 1, 1, 32>}, {pipeline_mode = #tpu.pipeline_mode<synchronous>, transform_indices = @transform_2, window_bounds = array<i64: 1, 1>}, {pipeline_mode = #tpu.pipeline_mode<synchronous>, transform_indices = @transform_3, window_bounds = array<i64: 1, 32>}, {pipeline_mode = #tpu.pipeline_mode<synchronous>, transform_indices = @transform_4, window_bounds = array<i64: 1, 32>}, {pipeline_mode = #tpu.pipeline_mode<synchronous>, transform_indices = @transform_5, window_bounds = array<i64: 32, 96>}, {pipeline_mode = #tpu.pipeline_mode<synchronous>, transform_indices = @transform_6, window_bounds = array<i64: 1, 96>}, {pipeline_mode = #tpu.pipeline_mode<synchronous>, transform_indices = @transform_7, window_bounds = array<i64: 32, 32>}, {pipeline_mode = #tpu.pipeline_mode<synchronous>, transform_indices = @transform_8, window_bounds = array<i64: 1, 32>}, {pipeline_mode = #tpu.pipeline_mode<synchronous>, transform_indices = @transform_9, window_bounds = array<i64: 1, 32>}, {pipeline_mode = #tpu.pipeline_mode<synchronous>, transform_indices = @transform_10, window_bounds = array<i64: 1, 32>}, {pipeline_mode = #tpu.pipeline_mode<synchronous>, transform_indices = @transform_11, window_bounds = array<i64: 32, 32>}, {pipeline_mode = #tpu.pipeline_mode<synchronous>, transform_indices = @transform_12, window_bounds = array<i64: 1, 32>}, {pipeline_mode = #tpu.pipeline_mode<synchronous>, transform_indices = @transform_13, window_bounds = array<i64: 32, 32>}, {pipeline_mode = #tpu.pipeline_mode<synchronous>, transform_indices = @transform_14, window_bounds = array<i64: 1, 32>}, {pipeline_mode = #tpu.pipeline_mode<synchronous>, transform_indices = @transform_15, window_bounds = array<i64: 32, 32>}, {pipeline_mode = #tpu.pipeline_mode<synchronous>, transform_indices = @transform_16, window_bounds = array<i64: 32, 32>}, {pipeline_mode = #tpu.pipeline_mode<synchronous>, transform_indices = @transform_17, window_bounds = array<i64: 1, 32>}, {pipeline_mode = #tpu.pipeline_mode<synchronous>, transform_indices = @transform_18, window_bounds = array<i64: 1, 32>}, {pipeline_mode = #tpu.pipeline_mode<synchronous>, transform_indices = @transform_19, window_bounds = array<i64: 1, 32>}, {pipeline_mode = #tpu.pipeline_mode<synchronous>, transform_indices = @transform_20, window_bounds = array<i64: 1, 32>}, {pipeline_mode = #tpu.pipeline_mode<synchronous>, transform_indices = @transform_21, window_bounds = array<i64: 1, 32>}, {pipeline_mode = #tpu.pipeline_mode<synchronous>, transform_indices = @transform_22, window_bounds = array<i64: 32, 32>}, {pipeline_mode = #tpu.pipeline_mode<synchronous>, transform_indices = @transform_23, window_bounds = array<i64: 1, 32>}, {pipeline_mode = #tpu.pipeline_mode<synchronous>, transform_indices = @transform_24, window_bounds = array<i64: 32, 32>}, {pipeline_mode = #tpu.pipeline_mode<synchronous>, transform_indices = @transform_25, window_bounds = array<i64: 1, 32>}, {transform_indices = @transform_26, window_bounds = array<i64: 1, 8, 32>}]} {
    %c0 = arith.constant 0 : index
    %c0_0 = arith.constant 0 : index
    %c0_1 = arith.constant 0 : index
    %0 = vector.load %arg1[%c0, %c0_0, %c0_1] : memref<1x8x32xbf16, #tpu.memory_space<vmem>>, vector<1x8x32xbf16>
    %1 = vector.shape_cast %0 : vector<1x8x32xbf16> to vector<8x32xbf16>
    %2 = arith.extf %1 : vector<8x32xbf16> to vector<8x32xf32>
    %c0_2 = arith.constant 0 : index
    %c0_3 = arith.constant 0 : index
    %c0_4 = arith.constant 0 : index
    %3 = vector.load %arg2[%c0_2, %c0_3, %c0_4] : memref<1x1x32xbf16, #tpu.memory_space<vmem>>, vector<1x1x32xbf16>
    %4 = vector.shape_cast %3 : vector<1x1x32xbf16> to vector<1x32xbf16>
    %5 = arith.extf %4 : vector<1x32xbf16> to vector<1x32xf32>
    %c0_5 = arith.constant 0 : index
    %c0_6 = arith.constant 0 : index
    %6 = vector.load %arg4[%c0_5, %c0_6] : memref<1x32xf32, #tpu.memory_space<vmem>>, vector<1x32xf32>
    %c0_7 = arith.constant 0 : index
    %c0_8 = arith.constant 0 : index
    %7 = vector.load %arg5[%c0_7, %c0_8] : memref<1x32xf32, #tpu.memory_space<vmem>>, vector<1x32xf32>
    %cst = arith.constant dense<0.000000e+00> : vector<8xf32>
    %8 = vector.multi_reduction <add>, %2, %cst [1] : vector<8x32xf32> to vector<8xf32>
    %9 = vector.shape_cast %8 : vector<8xf32> to vector<8x1xf32>
    %cst_9 = arith.constant 3.200000e+01 : f32
    %10 = vector.broadcast %cst_9 : f32 to vector<8x1xf32>
    %11 = arith.divf %9, %10 : vector<8x1xf32>
    %12 = vector.broadcast %11 : vector<8x1xf32> to vector<8x32xf32>
    %13 = arith.subf %2, %12 : vector<8x32xf32>
    %14 = arith.mulf %13, %13 : vector<8x32xf32>
    %cst_10 = arith.constant dense<0.000000e+00> : vector<8xf32>
    %15 = vector.multi_reduction <add>, %14, %cst_10 [1] : vector<8x32xf32> to vector<8xf32>
    %16 = vector.shape_cast %15 : vector<8xf32> to vector<8x1xf32>
    %cst_11 = arith.constant 3.200000e+01 : f32
    %17 = vector.broadcast %cst_11 : f32 to vector<8x1xf32>
    %18 = arith.divf %16, %17 : vector<8x1xf32>
    %cst_12 = arith.constant 9.99999974E-6 : f32
    %19 = vector.broadcast %cst_12 : f32 to vector<8x1xf32>
    %20 = arith.addf %18, %19 : vector<8x1xf32>
    %21 = math.rsqrt %20 : vector<8x1xf32>
    %22 = vector.broadcast %21 : vector<8x1xf32> to vector<8x32xf32>
    %23 = arith.mulf %13, %22 : vector<8x32xf32>
    %24 = vector.broadcast %6 : vector<1x32xf32> to vector<8x32xf32>
    %25 = arith.mulf %23, %24 : vector<8x32xf32>
    %26 = vector.broadcast %7 : vector<1x32xf32> to vector<8x32xf32>
    %27 = arith.addf %25, %26 : vector<8x32xf32>
    %c0_13 = arith.constant 0 : index
    %c0_14 = arith.constant 0 : index
    %28 = vector.load %arg6[%c0_13, %c0_14] : memref<32x96xbf16, #tpu.memory_space<vmem>>, vector<32x96xbf16>
    %29 = arith.truncf %27 : vector<8x32xf32> to vector<8x32xbf16>
    %cst_15 = arith.constant dense<0.000000e+00> : vector<8x96xf32>
    %30 = tpu.matmul %29, %28, %cst_15 {dimension_numbers = #tpu.dot_dimension_numbers<[1], [0], [0], [1], [0, 0, 1, 1], [], []>} : vector<8x32xbf16>, vector<32x96xbf16>, vector<8x96xf32> -> vector<8x96xf32>
    %c0_16 = arith.constant 0 : index
    %c0_17 = arith.constant 0 : index
    %31 = vector.load %arg7[%c0_16, %c0_17] : memref<1x96xf32, #tpu.memory_space<vmem>>, vector<1x96xf32>
    %32 = vector.broadcast %31 : vector<1x96xf32> to vector<8x96xf32>
    %33 = arith.addf %30, %32 : vector<8x96xf32>
    %34 = tpu.iota {dimensions = array<i32: 0>} : vector<8x8xi32>
    %35 = tpu.iota {dimensions = array<i32: 1>} : vector<8x8xi32>
    %36 = arith.cmpi sgt, %35, %34 : vector<8x8xi32>
    %37 = vector.extract_strided_slice %33 {offsets = [0, 0], sizes = [8, 8], strides = [1, 1]} : vector<8x96xf32> to vector<8x8xf32>
    %cst_18 = arith.constant 0.353553385 : f32
    %38 = vector.broadcast %cst_18 : f32 to vector<8x8xf32>
    %39 = arith.mulf %37, %38 : vector<8x8xf32>
    %40 = vector.extract_strided_slice %33 {offsets = [0, 32], sizes = [8, 8], strides = [1, 1]} : vector<8x96xf32> to vector<8x8xf32>
    %41 = vector.extract_strided_slice %33 {offsets = [0, 64], sizes = [8, 8], strides = [1, 1]} : vector<8x96xf32> to vector<8x8xf32>
    %42 = arith.truncf %39 : vector<8x8xf32> to vector<8x8xbf16>
    %43 = arith.truncf %40 : vector<8x8xf32> to vector<8x8xbf16>
    %cst_19 = arith.constant dense<0.000000e+00> : vector<8x8xf32>
    %44 = tpu.matmul %42, %43, %cst_19 {dimension_numbers = #tpu.dot_dimension_numbers<[1], [1], [0], [0], [0, 0, 1, 0], [], []>} : vector<8x8xbf16>, vector<8x8xbf16>, vector<8x8xf32> -> vector<8x8xf32>
    %cst_20 = arith.constant -1.000000e+30 : f32
    %45 = vector.broadcast %cst_20 : f32 to vector<8x8xf32>
    %46 = arith.select %36, %45, %44 : vector<8x8xi1>, vector<8x8xf32>
    %cst_21 = arith.constant dense<0xFF800000> : vector<8xf32>
    %47 = vector.multi_reduction <maximumf>, %46, %cst_21 [1] : vector<8x8xf32> to vector<8xf32>
    %48 = vector.shape_cast %47 : vector<8xf32> to vector<8x1xf32>
    %49 = vector.broadcast %48 : vector<8x1xf32> to vector<8x8xf32>
    %50 = arith.subf %46, %49 : vector<8x8xf32>
    %51 = math.exp %50 : vector<8x8xf32>
    %cst_22 = arith.constant dense<0.000000e+00> : vector<8xf32>
    %52 = vector.multi_reduction <add>, %51, %cst_22 [1] : vector<8x8xf32> to vector<8xf32>
    %53 = vector.shape_cast %52 : vector<8xf32> to vector<8x1xf32>
    %54 = tpu.reciprocal %53 {approx = true} : vector<8x1xf32> -> vector<8x1xf32>
    %55 = arith.mulf %53, %54 : vector<8x1xf32>
    %cst_23 = arith.constant 2.000000e+00 : f32
    %56 = vector.broadcast %cst_23 : f32 to vector<8x1xf32>
    %57 = arith.subf %56, %55 : vector<8x1xf32>
    %58 = arith.mulf %54, %57 : vector<8x1xf32>
    %59 = vector.broadcast %58 : vector<8x1xf32> to vector<8x8xf32>
    %60 = arith.mulf %51, %59 : vector<8x8xf32>
    %61 = arith.truncf %60 : vector<8x8xf32> to vector<8x8xbf16>
    %62 = arith.truncf %41 : vector<8x8xf32> to vector<8x8xbf16>
    %cst_24 = arith.constant dense<0.000000e+00> : vector<8x8xf32>
    %63 = tpu.matmul %61, %62, %cst_24 {dimension_numbers = #tpu.dot_dimension_numbers<[1], [0], [0], [1], [0, 0, 1, 1], [], []>} : vector<8x8xbf16>, vector<8x8xbf16>, vector<8x8xf32> -> vector<8x8xf32>
    %c0_25 = arith.constant 0 : index
    %c0_26 = arith.constant 0 : index
    %64 = vector.load %arg28[%c0_25, %c0_26] : memref<8x32xf32, #tpu.memory_space<vmem>>, vector<8x8xf32>
    tpu.vector_store %arg28[%c0_25, %c0_26], %63 {strides = array<i32>} : memref<8x32xf32, #tpu.memory_space<vmem>>, vector<8x8xf32>,
    %65 = vector.extract_strided_slice %33 {offsets = [0, 8], sizes = [8, 8], strides = [1, 1]} : vector<8x96xf32> to vector<8x8xf32>
    %cst_27 = arith.constant 0.353553385 : f32
    %66 = vector.broadcast %cst_27 : f32 to vector<8x8xf32>
    %67 = arith.mulf %65, %66 : vector<8x8xf32>
    %68 = vector.extract_strided_slice %33 {offsets = [0, 40], sizes = [8, 8], strides = [1, 1]} : vector<8x96xf32> to vector<8x8xf32>
    %69 = vector.extract_strided_slice %33 {offsets = [0, 72], sizes = [8, 8], strides = [1, 1]} : vector<8x96xf32> to vector<8x8xf32>
    %70 = arith.truncf %67 : vector<8x8xf32> to vector<8x8xbf16>
    %71 = arith.truncf %68 : vector<8x8xf32> to vector<8x8xbf16>
    %cst_28 = arith.constant dense<0.000000e+00> : vector<8x8xf32>
    %72 = tpu.matmul %70, %71, %cst_28 {dimension_numbers = #tpu.dot_dimension_numbers<[1], [1], [0], [0], [0, 0, 1, 0], [], []>} : vector<8x8xbf16>, vector<8x8xbf16>, vector<8x8xf32> -> vector<8x8xf32>
    %cst_29 = arith.constant -1.000000e+30 : f32
    %73 = vector.broadcast %cst_29 : f32 to vector<8x8xf32>
    %74 = arith.select %36, %73, %72 : vector<8x8xi1>, vector<8x8xf32>
    %cst_30 = arith.constant dense<0xFF800000> : vector<8xf32>
    %75 = vector.multi_reduction <maximumf>, %74, %cst_30 [1] : vector<8x8xf32> to vector<8xf32>
    %76 = vector.shape_cast %75 : vector<8xf32> to vector<8x1xf32>
    %77 = vector.broadcast %76 : vector<8x1xf32> to vector<8x8xf32>
    %78 = arith.subf %74, %77 : vector<8x8xf32>
    %79 = math.exp %78 : vector<8x8xf32>
    %cst_31 = arith.constant dense<0.000000e+00> : vector<8xf32>
    %80 = vector.multi_reduction <add>, %79, %cst_31 [1] : vector<8x8xf32> to vector<8xf32>
    %81 = vector.shape_cast %80 : vector<8xf32> to vector<8x1xf32>
    %82 = tpu.reciprocal %81 {approx = true} : vector<8x1xf32> -> vector<8x1xf32>
    %83 = arith.mulf %81, %82 : vector<8x1xf32>
    %cst_32 = arith.constant 2.000000e+00 : f32
    %84 = vector.broadcast %cst_32 : f32 to vector<8x1xf32>
    %85 = arith.subf %84, %83 : vector<8x1xf32>
    %86 = arith.mulf %82, %85 : vector<8x1xf32>
    %87 = vector.broadcast %86 : vector<8x1xf32> to vector<8x8xf32>
    %88 = arith.mulf %79, %87 : vector<8x8xf32>
    %89 = arith.truncf %88 : vector<8x8xf32> to vector<8x8xbf16>
    %90 = arith.truncf %69 : vector<8x8xf32> to vector<8x8xbf16>
    %cst_33 = arith.constant dense<0.000000e+00> : vector<8x8xf32>
    %91 = tpu.matmul %89, %90, %cst_33 {dimension_numbers = #tpu.dot_dimension_numbers<[1], [0], [0], [1], [0, 0, 1, 1], [], []>} : vector<8x8xbf16>, vector<8x8xbf16>, vector<8x8xf32> -> vector<8x8xf32>
    %c0_34 = arith.constant 0 : index
    %c8 = arith.constant 8 : index
    %92 = vector.load %arg28[%c0_34, %c8] : memref<8x32xf32, #tpu.memory_space<vmem>>, vector<8x8xf32>
    tpu.vector_store %arg28[%c0_34, %c8], %91 {strides = array<i32>} : memref<8x32xf32, #tpu.memory_space<vmem>>, vector<8x8xf32>,
    %93 = vector.extract_strided_slice %33 {offsets = [0, 16], sizes = [8, 8], strides = [1, 1]} : vector<8x96xf32> to vector<8x8xf32>
    %cst_35 = arith.constant 0.353553385 : f32
    %94 = vector.broadcast %cst_35 : f32 to vector<8x8xf32>
    %95 = arith.mulf %93, %94 : vector<8x8xf32>
    %96 = vector.extract_strided_slice %33 {offsets = [0, 48], sizes = [8, 8], strides = [1, 1]} : vector<8x96xf32> to vector<8x8xf32>
    %97 = vector.extract_strided_slice %33 {offsets = [0, 80], sizes = [8, 8], strides = [1, 1]} : vector<8x96xf32> to vector<8x8xf32>
    %98 = arith.truncf %95 : vector<8x8xf32> to vector<8x8xbf16>
    %99 = arith.truncf %96 : vector<8x8xf32> to vector<8x8xbf16>
    %cst_36 = arith.constant dense<0.000000e+00> : vector<8x8xf32>
    %100 = tpu.matmul %98, %99, %cst_36 {dimension_numbers = #tpu.dot_dimension_numbers<[1], [1], [0], [0], [0, 0, 1, 0], [], []>} : vector<8x8xbf16>, vector<8x8xbf16>, vector<8x8xf32> -> vector<8x8xf32>
    %cst_37 = arith.constant -1.000000e+30 : f32
    %101 = vector.broadcast %cst_37 : f32 to vector<8x8xf32>
    %102 = arith.select %36, %101, %100 : vector<8x8xi1>, vector<8x8xf32>
    %cst_38 = arith.constant dense<0xFF800000> : vector<8xf32>
    %103 = vector.multi_reduction <maximumf>, %102, %cst_38 [1] : vector<8x8xf32> to vector<8xf32>
    %104 = vector.shape_cast %103 : vector<8xf32> to vector<8x1xf32>
    %105 = vector.broadcast %104 : vector<8x1xf32> to vector<8x8xf32>
    %106 = arith.subf %102, %105 : vector<8x8xf32>
    %107 = math.exp %106 : vector<8x8xf32>
    %cst_39 = arith.constant dense<0.000000e+00> : vector<8xf32>
    %108 = vector.multi_reduction <add>, %107, %cst_39 [1] : vector<8x8xf32> to vector<8xf32>
    %109 = vector.shape_cast %108 : vector<8xf32> to vector<8x1xf32>
    %110 = tpu.reciprocal %109 {approx = true} : vector<8x1xf32> -> vector<8x1xf32>
    %111 = arith.mulf %109, %110 : vector<8x1xf32>
    %cst_40 = arith.constant 2.000000e+00 : f32
    %112 = vector.broadcast %cst_40 : f32 to vector<8x1xf32>
    %113 = arith.subf %112, %111 : vector<8x1xf32>
    %114 = arith.mulf %110, %113 : vector<8x1xf32>
    %115 = vector.broadcast %114 : vector<8x1xf32> to vector<8x8xf32>
    %116 = arith.mulf %107, %115 : vector<8x8xf32>
    %117 = arith.truncf %116 : vector<8x8xf32> to vector<8x8xbf16>
    %118 = arith.truncf %97 : vector<8x8xf32> to vector<8x8xbf16>
    %cst_41 = arith.constant dense<0.000000e+00> : vector<8x8xf32>
    %119 = tpu.matmul %117, %118, %cst_41 {dimension_numbers = #tpu.dot_dimension_numbers<[1], [0], [0], [1], [0, 0, 1, 1], [], []>} : vector<8x8xbf16>, vector<8x8xbf16>, vector<8x8xf32> -> vector<8x8xf32>
    %c0_42 = arith.constant 0 : index
    %c16 = arith.constant 16 : index
    %120 = vector.load %arg28[%c0_42, %c16] : memref<8x32xf32, #tpu.memory_space<vmem>>, vector<8x8xf32>
    tpu.vector_store %arg28[%c0_42, %c16], %119 {strides = array<i32>} : memref<8x32xf32, #tpu.memory_space<vmem>>, vector<8x8xf32>,
    %121 = vector.extract_strided_slice %33 {offsets = [0, 24], sizes = [8, 8], strides = [1, 1]} : vector<8x96xf32> to vector<8x8xf32>
    %cst_43 = arith.constant 0.353553385 : f32
    %122 = vector.broadcast %cst_43 : f32 to vector<8x8xf32>
    %123 = arith.mulf %121, %122 : vector<8x8xf32>
    %124 = vector.extract_strided_slice %33 {offsets = [0, 56], sizes = [8, 8], strides = [1, 1]} : vector<8x96xf32> to vector<8x8xf32>
    %125 = vector.extract_strided_slice %33 {offsets = [0, 88], sizes = [8, 8], strides = [1, 1]} : vector<8x96xf32> to vector<8x8xf32>
    %126 = arith.truncf %123 : vector<8x8xf32> to vector<8x8xbf16>
    %127 = arith.truncf %124 : vector<8x8xf32> to vector<8x8xbf16>
    %cst_44 = arith.constant dense<0.000000e+00> : vector<8x8xf32>
    %128 = tpu.matmul %126, %127, %cst_44 {dimension_numbers = #tpu.dot_dimension_numbers<[1], [1], [0], [0], [0, 0, 1, 0], [], []>} : vector<8x8xbf16>, vector<8x8xbf16>, vector<8x8xf32> -> vector<8x8xf32>
    %cst_45 = arith.constant -1.000000e+30 : f32
    %129 = vector.broadcast %cst_45 : f32 to vector<8x8xf32>
    %130 = arith.select %36, %129, %128 : vector<8x8xi1>, vector<8x8xf32>
    %cst_46 = arith.constant dense<0xFF800000> : vector<8xf32>
    %131 = vector.multi_reduction <maximumf>, %130, %cst_46 [1] : vector<8x8xf32> to vector<8xf32>
    %132 = vector.shape_cast %131 : vector<8xf32> to vector<8x1xf32>
    %133 = vector.broadcast %132 : vector<8x1xf32> to vector<8x8xf32>
    %134 = arith.subf %130, %133 : vector<8x8xf32>
    %135 = math.exp %134 : vector<8x8xf32>
    %cst_47 = arith.constant dense<0.000000e+00> : vector<8xf32>
    %136 = vector.multi_reduction <add>, %135, %cst_47 [1] : vector<8x8xf32> to vector<8xf32>
    %137 = vector.shape_cast %136 : vector<8xf32> to vector<8x1xf32>
    %138 = tpu.reciprocal %137 {approx = true} : vector<8x1xf32> -> vector<8x1xf32>
    %139 = arith.mulf %137, %138 : vector<8x1xf32>
    %cst_48 = arith.constant 2.000000e+00 : f32
    %140 = vector.broadcast %cst_48 : f32 to vector<8x1xf32>
    %141 = arith.subf %140, %139 : vector<8x1xf32>
    %142 = arith.mulf %138, %141 : vector<8x1xf32>
    %143 = vector.broadcast %142 : vector<8x1xf32> to vector<8x8xf32>
    %144 = arith.mulf %135, %143 : vector<8x8xf32>
    %145 = arith.truncf %144 : vector<8x8xf32> to vector<8x8xbf16>
    %146 = arith.truncf %125 : vector<8x8xf32> to vector<8x8xbf16>
    %cst_49 = arith.constant dense<0.000000e+00> : vector<8x8xf32>
    %147 = tpu.matmul %145, %146, %cst_49 {dimension_numbers = #tpu.dot_dimension_numbers<[1], [0], [0], [1], [0, 0, 1, 1], [], []>} : vector<8x8xbf16>, vector<8x8xbf16>, vector<8x8xf32> -> vector<8x8xf32>
    %c0_50 = arith.constant 0 : index
    %c24 = arith.constant 24 : index
    %148 = vector.load %arg28[%c0_50, %c24] : memref<8x32xf32, #tpu.memory_space<vmem>>, vector<8x8xf32>
    tpu.vector_store %arg28[%c0_50, %c24], %147 {strides = array<i32>} : memref<8x32xf32, #tpu.memory_space<vmem>>, vector<8x8xf32>,
    %c0_51 = arith.constant 0 : index
    %c0_52 = arith.constant 0 : index
    %149 = vector.load %arg28[%c0_51, %c0_52] : memref<8x32xf32, #tpu.memory_space<vmem>>, vector<8x32xf32>
    %c0_53 = arith.constant 0 : index
    %c0_54 = arith.constant 0 : index
    %150 = vector.load %arg8[%c0_53, %c0_54] : memref<32x32xbf16, #tpu.memory_space<vmem>>, vector<32x32xbf16>
    %151 = arith.truncf %149 : vector<8x32xf32> to vector<8x32xbf16>
    %cst_55 = arith.constant dense<0.000000e+00> : vector<8x32xf32>
    %152 = tpu.matmul %151, %150, %cst_55 {dimension_numbers = #tpu.dot_dimension_numbers<[1], [0], [0], [1], [0, 0, 1, 1], [], []>} : vector<8x32xbf16>, vector<32x32xbf16>, vector<8x32xf32> -> vector<8x32xf32>
    %153 = arith.addf %2, %152 : vector<8x32xf32>
    %c0_56 = arith.constant 0 : index
    %c0_57 = arith.constant 0 : index
    %154 = vector.load %arg9[%c0_56, %c0_57] : memref<1x32xf32, #tpu.memory_space<vmem>>, vector<1x32xf32>
    %155 = vector.broadcast %154 : vector<1x32xf32> to vector<8x32xf32>
    %156 = arith.addf %153, %155 : vector<8x32xf32>
    %c0_58 = arith.constant 0 : index
    %c0_59 = arith.constant 0 : index
    %157 = vector.load %arg10[%c0_58, %c0_59] : memref<1x32xf32, #tpu.memory_space<vmem>>, vector<1x32xf32>
    %c0_60 = arith.constant 0 : index
    %c0_61 = arith.constant 0 : index
    %158 = vector.load %arg11[%c0_60, %c0_61] : memref<1x32xf32, #tpu.memory_space<vmem>>, vector<1x32xf32>
    %cst_62 = arith.constant dense<0.000000e+00> : vector<8xf32>
    %159 = vector.multi_reduction <add>, %156, %cst_62 [1] : vector<8x32xf32> to vector<8xf32>
    %160 = vector.shape_cast %159 : vector<8xf32> to vector<8x1xf32>
    %cst_63 = arith.constant 3.200000e+01 : f32
    %161 = vector.broadcast %cst_63 : f32 to vector<8x1xf32>
    %162 = arith.divf %160, %161 : vector<8x1xf32>
    %163 = vector.broadcast %162 : vector<8x1xf32> to vector<8x32xf32>
    %164 = arith.subf %156, %163 : vector<8x32xf32>
    %165 = arith.mulf %164, %164 : vector<8x32xf32>
    %cst_64 = arith.constant dense<0.000000e+00> : vector<8xf32>
    %166 = vector.multi_reduction <add>, %165, %cst_64 [1] : vector<8x32xf32> to vector<8xf32>
    %167 = vector.shape_cast %166 : vector<8xf32> to vector<8x1xf32>
    %cst_65 = arith.constant 3.200000e+01 : f32
    %168 = vector.broadcast %cst_65 : f32 to vector<8x1xf32>
    %169 = arith.divf %167, %168 : vector<8x1xf32>
    %cst_66 = arith.constant 9.99999974E-6 : f32
    %170 = vector.broadcast %cst_66 : f32 to vector<8x1xf32>
    %171 = arith.addf %169, %170 : vector<8x1xf32>
    %172 = math.rsqrt %171 : vector<8x1xf32>
    %173 = vector.broadcast %172 : vector<8x1xf32> to vector<8x32xf32>
    %174 = arith.mulf %164, %173 : vector<8x32xf32>
    %175 = vector.broadcast %157 : vector<1x32xf32> to vector<8x32xf32>
    %176 = arith.mulf %174, %175 : vector<8x32xf32>
    %177 = vector.broadcast %158 : vector<1x32xf32> to vector<8x32xf32>
    %178 = arith.addf %176, %177 : vector<8x32xf32>
    %c0_67 = arith.constant 0 : index
    %c0_68 = arith.constant 0 : index
    %179 = vector.load %arg12[%c0_67, %c0_68] : memref<32x32xbf16, #tpu.memory_space<vmem>>, vector<32x32xbf16>
    %180 = arith.truncf %5 : vector<1x32xf32> to vector<1x32xbf16>
    %cst_69 = arith.constant dense<0.000000e+00> : vector<1x32xf32>
    %181 = tpu.matmul %180, %179, %cst_69 {dimension_numbers = #tpu.dot_dimension_numbers<[1], [0], [0], [1], [0, 0, 1, 1], [], []>} : vector<1x32xbf16>, vector<32x32xbf16>, vector<1x32xf32> -> vector<1x32xf32>
    %c0_70 = arith.constant 0 : index
    %c0_71 = arith.constant 0 : index
    %182 = vector.load %arg13[%c0_70, %c0_71] : memref<1x32xf32, #tpu.memory_space<vmem>>, vector<1x32xf32>
    %183 = arith.addf %181, %182 : vector<1x32xf32>
    %c0_72 = arith.constant 0 : index
    %c0_73 = arith.constant 0 : index
    %184 = vector.load %arg14[%c0_72, %c0_73] : memref<32x32xbf16, #tpu.memory_space<vmem>>, vector<32x32xbf16>
    %185 = arith.truncf %183 : vector<1x32xf32> to vector<1x32xbf16>
    %cst_74 = arith.constant dense<0.000000e+00> : vector<1x32xf32>
    %186 = tpu.matmul %185, %184, %cst_74 {dimension_numbers = #tpu.dot_dimension_numbers<[1], [0], [0], [1], [0, 0, 1, 1], [], []>} : vector<1x32xbf16>, vector<32x32xbf16>, vector<1x32xf32> -> vector<1x32xf32>
    %c0_75 = arith.constant 0 : index
    %c0_76 = arith.constant 0 : index
    %187 = vector.load %arg15[%c0_75, %c0_76] : memref<1x32xf32, #tpu.memory_space<vmem>>, vector<1x32xf32>
    %188 = arith.addf %186, %187 : vector<1x32xf32>
    %c0_77 = arith.constant 0 : index
    %c0_78 = arith.constant 0 : index
    %189 = vector.load %arg16[%c0_77, %c0_78] : memref<32x32xbf16, #tpu.memory_space<vmem>>, vector<32x32xbf16>
    %190 = arith.truncf %178 : vector<8x32xf32> to vector<8x32xbf16>
    %cst_79 = arith.constant dense<0.000000e+00> : vector<8x32xf32>
    %191 = tpu.matmul %190, %189, %cst_79 {dimension_numbers = #tpu.dot_dimension_numbers<[1], [0], [0], [1], [0, 0, 1, 1], [], []>} : vector<8x32xbf16>, vector<32x32xbf16>, vector<8x32xf32> -> vector<8x32xf32>
    %c0_80 = arith.constant 0 : index
    %c0_81 = arith.constant 0 : index
    %192 = vector.load %arg17[%c0_80, %c0_81] : memref<32x32xbf16, #tpu.memory_space<vmem>>, vector<32x32xbf16>
    %193 = arith.truncf %188 : vector<1x32xf32> to vector<1x32xbf16>
    %cst_82 = arith.constant dense<0.000000e+00> : vector<1x32xf32>
    %194 = tpu.matmul %193, %192, %cst_82 {dimension_numbers = #tpu.dot_dimension_numbers<[1], [0], [0], [1], [0, 0, 1, 1], [], []>} : vector<1x32xbf16>, vector<32x32xbf16>, vector<1x32xf32> -> vector<1x32xf32>
    %195 = vector.broadcast %194 : vector<1x32xf32> to vector<8x32xf32>
    %196 = arith.addf %191, %195 : vector<8x32xf32>
    %c0_83 = arith.constant 0 : index
    %c0_84 = arith.constant 0 : index
    %197 = vector.load %arg18[%c0_83, %c0_84] : memref<1x32xf32, #tpu.memory_space<vmem>>, vector<1x32xf32>
    %198 = vector.broadcast %197 : vector<1x32xf32> to vector<8x32xf32>
    %199 = arith.addf %196, %198 : vector<8x32xf32>
    %200 = arith.negf %199 : vector<8x32xf32>
    %201 = math.exp %200 : vector<8x32xf32>
    %cst_85 = arith.constant 1.000000e+00 : f32
    %202 = vector.broadcast %cst_85 : f32 to vector<8x32xf32>
    %203 = arith.addf %202, %201 : vector<8x32xf32>
    %204 = arith.divf %202, %203 : vector<8x32xf32>
    %205 = arith.mulf %204, %178 : vector<8x32xf32>
    %cst_86 = arith.constant 1.000000e+00 : f32
    %206 = vector.broadcast %cst_86 : f32 to vector<8x32xf32>
    %207 = arith.subf %206, %204 : vector<8x32xf32>
    %208 = vector.broadcast %188 : vector<1x32xf32> to vector<8x32xf32>
    %209 = arith.mulf %207, %208 : vector<8x32xf32>
    %210 = arith.addf %205, %209 : vector<8x32xf32>
    %c0_87 = arith.constant 0 : index
    %c0_88 = arith.constant 0 : index
    %211 = vector.load %arg3[%c0_87, %c0_88] : memref<1x1xf32, #tpu.memory_space<vmem>>, vector<1x1xf32>
    %c0_89 = arith.constant 0 : index
    %c0_90 = arith.constant 0 : index
    %212 = vector.load %arg19[%c0_89, %c0_90] : memref<1x32xf32, #tpu.memory_space<vmem>>, vector<1x32xf32>
    %c0_91 = arith.constant 0 : index
    %c0_92 = arith.constant 0 : index
    %213 = vector.load %arg20[%c0_91, %c0_92] : memref<1x32xf32, #tpu.memory_space<vmem>>, vector<1x32xf32>
    %cst_93 = arith.constant dense<0.000000e+00> : vector<8xf32>
    %214 = vector.multi_reduction <add>, %210, %cst_93 [1] : vector<8x32xf32> to vector<8xf32>
    %215 = vector.shape_cast %214 : vector<8xf32> to vector<8x1xf32>
    %cst_94 = arith.constant 3.200000e+01 : f32
    %216 = vector.broadcast %cst_94 : f32 to vector<8x1xf32>
    %217 = arith.divf %215, %216 : vector<8x1xf32>
    %218 = vector.broadcast %217 : vector<8x1xf32> to vector<8x32xf32>
    %219 = arith.subf %210, %218 : vector<8x32xf32>
    %220 = arith.mulf %219, %219 : vector<8x32xf32>
    %cst_95 = arith.constant dense<0.000000e+00> : vector<8xf32>
    %221 = vector.multi_reduction <add>, %220, %cst_95 [1] : vector<8x32xf32> to vector<8xf32>
    %222 = vector.shape_cast %221 : vector<8xf32> to vector<8x1xf32>
    %cst_96 = arith.constant 3.200000e+01 : f32
    %223 = vector.broadcast %cst_96 : f32 to vector<8x1xf32>
    %224 = arith.divf %222, %223 : vector<8x1xf32>
    %cst_97 = arith.constant 9.99999974E-6 : f32
    %225 = vector.broadcast %cst_97 : f32 to vector<8x1xf32>
    %226 = arith.addf %224, %225 : vector<8x1xf32>
    %227 = math.rsqrt %226 : vector<8x1xf32>
    %228 = vector.broadcast %227 : vector<8x1xf32> to vector<8x32xf32>
    %229 = arith.mulf %219, %228 : vector<8x32xf32>
    %230 = vector.broadcast %212 : vector<1x32xf32> to vector<8x32xf32>
    %231 = arith.mulf %229, %230 : vector<8x32xf32>
    %232 = vector.broadcast %213 : vector<1x32xf32> to vector<8x32xf32>
    %233 = arith.addf %231, %232 : vector<8x32xf32>
    %234 = vector.broadcast %211 : vector<1x1xf32> to vector<8x32xf32>
    %235 = arith.mulf %234, %233 : vector<8x32xf32>
    %236 = arith.addf %156, %235 : vector<8x32xf32>
    %c0_98 = arith.constant 0 : index
    %c0_99 = arith.constant 0 : index
    %237 = vector.load %arg21[%c0_98, %c0_99] : memref<1x32xf32, #tpu.memory_space<vmem>>, vector<1x32xf32>
    %c0_100 = arith.constant 0 : index
    %c0_101 = arith.constant 0 : index
    %238 = vector.load %arg22[%c0_100, %c0_101] : memref<1x32xf32, #tpu.memory_space<vmem>>, vector<1x32xf32>
    %cst_102 = arith.constant dense<0.000000e+00> : vector<8xf32>
    %239 = vector.multi_reduction <add>, %236, %cst_102 [1] : vector<8x32xf32> to vector<8xf32>
    %240 = vector.shape_cast %239 : vector<8xf32> to vector<8x1xf32>
    %cst_103 = arith.constant 3.200000e+01 : f32
    %241 = vector.broadcast %cst_103 : f32 to vector<8x1xf32>
    %242 = arith.divf %240, %241 : vector<8x1xf32>
    %243 = vector.broadcast %242 : vector<8x1xf32> to vector<8x32xf32>
    %244 = arith.subf %236, %243 : vector<8x32xf32>
    %245 = arith.mulf %244, %244 : vector<8x32xf32>
    %cst_104 = arith.constant dense<0.000000e+00> : vector<8xf32>
    %246 = vector.multi_reduction <add>, %245, %cst_104 [1] : vector<8x32xf32> to vector<8xf32>
    %247 = vector.shape_cast %246 : vector<8xf32> to vector<8x1xf32>
    %cst_105 = arith.constant 3.200000e+01 : f32
    %248 = vector.broadcast %cst_105 : f32 to vector<8x1xf32>
    %249 = arith.divf %247, %248 : vector<8x1xf32>
    %cst_106 = arith.constant 9.99999974E-6 : f32
    %250 = vector.broadcast %cst_106 : f32 to vector<8x1xf32>
    %251 = arith.addf %249, %250 : vector<8x1xf32>
    %252 = math.rsqrt %251 : vector<8x1xf32>
    %253 = vector.broadcast %252 : vector<8x1xf32> to vector<8x32xf32>
    %254 = arith.mulf %244, %253 : vector<8x32xf32>
    %255 = vector.broadcast %237 : vector<1x32xf32> to vector<8x32xf32>
    %256 = arith.mulf %254, %255 : vector<8x32xf32>
    %257 = vector.broadcast %238 : vector<1x32xf32> to vector<8x32xf32>
    %258 = arith.addf %256, %257 : vector<8x32xf32>
    %c0_107 = arith.constant 0 : index
    %c0_108 = arith.constant 0 : index
    %259 = vector.load %arg23[%c0_107, %c0_108] : memref<32x32xbf16, #tpu.memory_space<vmem>>, vector<32x32xbf16>
    %260 = arith.truncf %258 : vector<8x32xf32> to vector<8x32xbf16>
    %cst_109 = arith.constant dense<0.000000e+00> : vector<8x32xf32>
    %261 = tpu.matmul %260, %259, %cst_109 {dimension_numbers = #tpu.dot_dimension_numbers<[1], [0], [0], [1], [0, 0, 1, 1], [], []>} : vector<8x32xbf16>, vector<32x32xbf16>, vector<8x32xf32> -> vector<8x32xf32>
    %c0_110 = arith.constant 0 : index
    %c0_111 = arith.constant 0 : index
    %262 = vector.load %arg24[%c0_110, %c0_111] : memref<1x32xf32, #tpu.memory_space<vmem>>, vector<1x32xf32>
    %263 = vector.broadcast %262 : vector<1x32xf32> to vector<8x32xf32>
    %264 = arith.addf %261, %263 : vector<8x32xf32>
    %cst_112 = arith.constant 5.000000e-01 : f32
    %265 = vector.broadcast %cst_112 : f32 to vector<8x32xf32>
    %266 = arith.mulf %265, %264 : vector<8x32xf32>
    %cst_113 = arith.constant 0.707106769 : f32
    %267 = vector.broadcast %cst_113 : f32 to vector<8x32xf32>
    %268 = arith.mulf %264, %267 : vector<8x32xf32>
    %cst_114 = arith.constant 0.000000e+00 : f32
    %269 = vector.broadcast %cst_114 : f32 to vector<8x32xf32>
    %270 = arith.cmpf oge, %268, %269 : vector<8x32xf32>
    %cst_115 = arith.constant 1.000000e+00 : f32
    %cst_116 = arith.constant -1.000000e+00 : f32
    %271 = vector.broadcast %cst_115 : f32 to vector<8x32xf32>
    %272 = vector.broadcast %cst_116 : f32 to vector<8x32xf32>
    %273 = arith.select %270, %271, %272 : vector<8x32xi1>, vector<8x32xf32>
    %274 = math.absf %268 : vector<8x32xf32>
    %cst_117 = arith.constant 0.327591091 : f32
    %275 = vector.broadcast %cst_117 : f32 to vector<8x32xf32>
    %276 = arith.mulf %275, %274 : vector<8x32xf32>
    %cst_118 = arith.constant 1.000000e+00 : f32
    %277 = vector.broadcast %cst_118 : f32 to vector<8x32xf32>
    %278 = arith.addf %277, %276 : vector<8x32xf32>
    %279 = tpu.reciprocal %278 {approx = true} : vector<8x32xf32> -> vector<8x32xf32>
    %280 = arith.mulf %278, %279 : vector<8x32xf32>
    %cst_119 = arith.constant 2.000000e+00 : f32
    %281 = vector.broadcast %cst_119 : f32 to vector<8x32xf32>
    %282 = arith.subf %281, %280 : vector<8x32xf32>
    %283 = arith.mulf %279, %282 : vector<8x32xf32>
    %cst_120 = arith.constant 1.06140542 : f32
    %284 = vector.broadcast %cst_120 : f32 to vector<8x32xf32>
    %285 = arith.mulf %284, %283 : vector<8x32xf32>
    %cst_121 = arith.constant -1.45315206 : f32
    %286 = vector.broadcast %cst_121 : f32 to vector<8x32xf32>
    %287 = arith.addf %285, %286 : vector<8x32xf32>
    %288 = arith.mulf %287, %283 : vector<8x32xf32>
    %cst_122 = arith.constant 1.42141378 : f32
    %289 = vector.broadcast %cst_122 : f32 to vector<8x32xf32>
    %290 = arith.addf %288, %289 : vector<8x32xf32>
    %291 = arith.mulf %290, %283 : vector<8x32xf32>
    %cst_123 = arith.constant -0.284496725 : f32
    %292 = vector.broadcast %cst_123 : f32 to vector<8x32xf32>
    %293 = arith.addf %291, %292 : vector<8x32xf32>
    %294 = arith.mulf %293, %283 : vector<8x32xf32>
    %cst_124 = arith.constant 0.254829586 : f32
    %295 = vector.broadcast %cst_124 : f32 to vector<8x32xf32>
    %296 = arith.addf %294, %295 : vector<8x32xf32>
    %297 = arith.mulf %296, %283 : vector<8x32xf32>
    %cst_125 = arith.constant 0.000000e+00 : f32
    %298 = vector.broadcast %cst_125 : f32 to vector<8x32xf32>
    %299 = arith.subf %298, %274 : vector<8x32xf32>
    %300 = arith.mulf %299, %274 : vector<8x32xf32>
    %301 = math.exp %300 : vector<8x32xf32>
    %302 = arith.mulf %297, %301 : vector<8x32xf32>
    %cst_126 = arith.constant 1.000000e+00 : f32
    %303 = vector.broadcast %cst_126 : f32 to vector<8x32xf32>
    %304 = arith.subf %303, %302 : vector<8x32xf32>
    %305 = arith.mulf %273, %304 : vector<8x32xf32>
    %cst_127 = arith.constant 1.000000e+00 : f32
    %306 = vector.broadcast %cst_127 : f32 to vector<8x32xf32>
    %307 = arith.addf %306, %305 : vector<8x32xf32>
    %308 = arith.mulf %266, %307 : vector<8x32xf32>
    %c0_128 = arith.constant 0 : index
    %c0_129 = arith.constant 0 : index
    %309 = vector.load %arg25[%c0_128, %c0_129] : memref<32x32xbf16, #tpu.memory_space<vmem>>, vector<32x32xbf16>
    %310 = arith.truncf %308 : vector<8x32xf32> to vector<8x32xbf16>
    %cst_130 = arith.constant dense<0.000000e+00> : vector<8x32xf32>
    %311 = tpu.matmul %310, %309, %cst_130 {dimension_numbers = #tpu.dot_dimension_numbers<[1], [0], [0], [1], [0, 0, 1, 1], [], []>} : vector<8x32xbf16>, vector<32x32xbf16>, vector<8x32xf32> -> vector<8x32xf32>
    %312 = arith.addf %236, %311 : vector<8x32xf32>
    %c0_131 = arith.constant 0 : index
    %c0_132 = arith.constant 0 : index
    %313 = vector.load %arg26[%c0_131, %c0_132] : memref<1x32xf32, #tpu.memory_space<vmem>>, vector<1x32xf32>
    %314 = vector.broadcast %313 : vector<1x32xf32> to vector<8x32xf32>
    %315 = arith.addf %312, %314 : vector<8x32xf32>
    %316 = arith.truncf %315 : vector<8x32xf32> to vector<8x32xbf16>
    %c0_133 = arith.constant 0 : index
    %c0_134 = arith.constant 0 : index
    %c0_135 = arith.constant 0 : index
    %317 = vector.load %arg27[%c0_133, %c0_134, %c0_135] : memref<1x8x32xbf16, #tpu.memory_space<vmem>>, vector<1x8x32xbf16>
    %318 = vector.shape_cast %317 : vector<1x8x32xbf16> to vector<8x32xbf16>
    %319 = vector.shape_cast %316 : vector<8x32xbf16> to vector<1x8x32xbf16>
    tpu.vector_store %arg27[%c0_133, %c0_134, %c0_135], %319 {strides = array<i32>} : memref<1x8x32xbf16, #tpu.memory_space<vmem>>, vector<1x8x32xbf16>,
    return
  }
  func.func @transform_0(%arg0: i32) -> (i32, i32, i32) {
    %c0_i32 = arith.constant 0 : i32
    %c0_i32_0 = arith.constant 0 : i32
    %c0_i32_1 = arith.constant 0 : i32
    return %arg0, %c0_i32, %c0_i32_0 : i32, i32, i32
  }
  func.func @transform_1(%arg0: i32) -> (i32, i32, i32) {
    %c0_i32 = arith.constant 0 : i32
    %c0_i32_0 = arith.constant 0 : i32
    %c0_i32_1 = arith.constant 0 : i32
    return %arg0, %c0_i32, %c0_i32_0 : i32, i32, i32
  }
  func.func @transform_2(%arg0: i32) -> (i32, i32) {
    %c0_i32 = arith.constant 0 : i32
    %c0_i32_0 = arith.constant 0 : i32
    %c0_i32_1 = arith.constant 0 : i32
    return %c0_i32, %c0_i32_0 : i32, i32
  }
  func.func @transform_3(%arg0: i32) -> (i32, i32) {
    %c0_i32 = arith.constant 0 : i32
    %c0_i32_0 = arith.constant 0 : i32
    %c0_i32_1 = arith.constant 0 : i32
    return %c0_i32, %c0_i32_0 : i32, i32
  }
  func.func @transform_4(%arg0: i32) -> (i32, i32) {
    %c0_i32 = arith.constant 0 : i32
    %c0_i32_0 = arith.constant 0 : i32
    %c0_i32_1 = arith.constant 0 : i32
    return %c0_i32, %c0_i32_0 : i32, i32
  }
  func.func @transform_5(%arg0: i32) -> (i32, i32) {
    %c0_i32 = arith.constant 0 : i32
    %c0_i32_0 = arith.constant 0 : i32
    %c0_i32_1 = arith.constant 0 : i32
    return %c0_i32, %c0_i32_0 : i32, i32
  }
  func.func @transform_6(%arg0: i32) -> (i32, i32) {
    %c0_i32 = arith.constant 0 : i32
    %c0_i32_0 = arith.constant 0 : i32
    %c0_i32_1 = arith.constant 0 : i32
    return %c0_i32, %c0_i32_0 : i32, i32
  }
  func.func @transform_7(%arg0: i32) -> (i32, i32) {
    %c0_i32 = arith.constant 0 : i32
    %c0_i32_0 = arith.constant 0 : i32
    %c0_i32_1 = arith.constant 0 : i32
    return %c0_i32, %c0_i32_0 : i32, i32
  }
  func.func @transform_8(%arg0: i32) -> (i32, i32) {
    %c0_i32 = arith.constant 0 : i32
    %c0_i32_0 = arith.constant 0 : i32
    %c0_i32_1 = arith.constant 0 : i32
    return %c0_i32, %c0_i32_0 : i32, i32
  }
  func.func @transform_9(%arg0: i32) -> (i32, i32) {
    %c0_i32 = arith.constant 0 : i32
    %c0_i32_0 = arith.constant 0 : i32
    %c0_i32_1 = arith.constant 0 : i32
    return %c0_i32, %c0_i32_0 : i32, i32
  }
  func.func @transform_10(%arg0: i32) -> (i32, i32) {
    %c0_i32 = arith.constant 0 : i32
    %c0_i32_0 = arith.constant 0 : i32
    %c0_i32_1 = arith.constant 0 : i32
    return %c0_i32, %c0_i32_0 : i32, i32
  }
  func.func @transform_11(%arg0: i32) -> (i32, i32) {
    %c0_i32 = arith.constant 0 : i32
    %c0_i32_0 = arith.constant 0 : i32
    %c0_i32_1 = arith.constant 0 : i32
    return %c0_i32, %c0_i32_0 : i32, i32
  }
  func.func @transform_12(%arg0: i32) -> (i32, i32) {
    %c0_i32 = arith.constant 0 : i32
    %c0_i32_0 = arith.constant 0 : i32
    %c0_i32_1 = arith.constant 0 : i32
    return %c0_i32, %c0_i32_0 : i32, i32
  }
  func.func @transform_13(%arg0: i32) -> (i32, i32) {
    %c0_i32 = arith.constant 0 : i32
    %c0_i32_0 = arith.constant 0 : i32
    %c0_i32_1 = arith.constant 0 : i32
    return %c0_i32, %c0_i32_0 : i32, i32
  }
  func.func @transform_14(%arg0: i32) -> (i32, i32) {
    %c0_i32 = arith.constant 0 : i32
    %c0_i32_0 = arith.constant 0 : i32
    %c0_i32_1 = arith.constant 0 : i32
    return %c0_i32, %c0_i32_0 : i32, i32
  }
  func.func @transform_15(%arg0: i32) -> (i32, i32) {
    %c0_i32 = arith.constant 0 : i32
    %c0_i32_0 = arith.constant 0 : i32
    %c0_i32_1 = arith.constant 0 : i32
    return %c0_i32, %c0_i32_0 : i32, i32
  }
  func.func @transform_16(%arg0: i32) -> (i32, i32) {
    %c0_i32 = arith.constant 0 : i32
    %c0_i32_0 = arith.constant 0 : i32
    %c0_i32_1 = arith.constant 0 : i32
    return %c0_i32, %c0_i32_0 : i32, i32
  }
  func.func @transform_17(%arg0: i32) -> (i32, i32) {
    %c0_i32 = arith.constant 0 : i32
    %c0_i32_0 = arith.constant 0 : i32
    %c0_i32_1 = arith.constant 0 : i32
    return %c0_i32, %c0_i32_0 : i32, i32
  }
  func.func @transform_18(%arg0: i32) -> (i32, i32) {
    %c0_i32 = arith.constant 0 : i32
    %c0_i32_0 = arith.constant 0 : i32
    %c0_i32_1 = arith.constant 0 : i32
    return %c0_i32, %c0_i32_0 : i32, i32
  }
  func.func @transform_19(%arg0: i32) -> (i32, i32) {
    %c0_i32 = arith.constant 0 : i32
    %c0_i32_0 = arith.constant 0 : i32
    %c0_i32_1 = arith.constant 0 : i32
    return %c0_i32, %c0_i32_0 : i32, i32
  }
  func.func @transform_20(%arg0: i32) -> (i32, i32) {
    %c0_i32 = arith.constant 0 : i32
    %c0_i32_0 = arith.constant 0 : i32
    %c0_i32_1 = arith.constant 0 : i32
    return %c0_i32, %c0_i32_0 : i32, i32
  }
  func.func @transform_21(%arg0: i32) -> (i32, i32) {
    %c0_i32 = arith.constant 0 : i32
    %c0_i32_0 = arith.constant 0 : i32
    %c0_i32_1 = arith.constant 0 : i32
    return %c0_i32, %c0_i32_0 : i32, i32
  }
  func.func @transform_22(%arg0: i32) -> (i32, i32) {
    %c0_i32 = arith.constant 0 : i32
    %c0_i32_0 = arith.constant 0 : i32
    %c0_i32_1 = arith.constant 0 : i32
    return %c0_i32, %c0_i32_0 : i32, i32
  }
  func.func @transform_23(%arg0: i32) -> (i32, i32) {
    %c0_i32 = arith.constant 0 : i32
    %c0_i32_0 = arith.constant 0 : i32
    %c0_i32_1 = arith.constant 0 : i32
    return %c0_i32, %c0_i32_0 : i32, i32
  }
  func.func @transform_24(%arg0: i32) -> (i32, i32) {
    %c0_i32 = arith.constant 0 : i32
    %c0_i32_0 = arith.constant 0 : i32
    %c0_i32_1 = arith.constant 0 : i32
    return %c0_i32, %c0_i32_0 : i32, i32
  }
  func.func @transform_25(%arg0: i32) -> (i32, i32) {
    %c0_i32 = arith.constant 0 : i32
    %c0_i32_0 = arith.constant 0 : i32
    %c0_i32_1 = arith.constant 0 : i32
    return %c0_i32, %c0_i32_0 : i32, i32
  }
  func.func @transform_26(%arg0: i32) -> (i32, i32, i32) {
    %c0_i32 = arith.constant 0 : i32
    %c0_i32_0 = arith.constant 0 : i32
    %c0_i32_1 = arith.constant 0 : i32
    return %arg0, %c0_i32, %c0_i32_0 : i32, i32, i32
  }
}

module attributes {stable_mosaic.version = 11 : i64} {
  func.func @_linear_kernel(%arg0: i32, %arg1: memref<16x32xbf16, #tpu.memory_space<vmem>>, %arg2: memref<32x64xbf16, #tpu.memory_space<vmem>>, %arg3: memref<1x64xf32, #tpu.memory_space<vmem>>, %arg4: memref<16x64xf32, #tpu.memory_space<vmem>>) attributes {dimension_semantics = [#tpu.dimension_semantics<parallel>], iteration_bounds = array<i64: 1>, scalar_prefetch = 0 : i64, scratch_operands = 0 : i64, tpu.core_type = #tpu.core_type<tc>, window_params = [{pipeline_mode = #tpu.pipeline_mode<synchronous>, transform_indices = @transform_0, window_bounds = array<i64: 16, 32>}, {transform_indices = @transform_1, window_bounds = array<i64: 32, 64>}, {transform_indices = @transform_2, window_bounds = array<i64: 1, 64>}, {transform_indices = @transform_3, window_bounds = array<i64: 16, 64>}]} {
    %c0 = arith.constant 0 : index
    %c0_0 = arith.constant 0 : index
    %0 = vector.load %arg1[%c0, %c0_0] : memref<16x32xbf16, #tpu.memory_space<vmem>>, vector<16x32xbf16>
    %c0_1 = arith.constant 0 : index
    %c0_2 = arith.constant 0 : index
    %1 = vector.load %arg2[%c0_1, %c0_2] : memref<32x64xbf16, #tpu.memory_space<vmem>>, vector<32x64xbf16>
    %cst = arith.constant dense<0.000000e+00> : vector<16x64xf32>
    %2 = tpu.matmul %0, %1, %cst {dimension_numbers = #tpu.dot_dimension_numbers<[1], [0], [0], [1], [0, 0, 1, 1], [], []>} : vector<16x32xbf16>, vector<32x64xbf16>, vector<16x64xf32> -> vector<16x64xf32>
    %c0_3 = arith.constant 0 : index
    %c0_4 = arith.constant 0 : index
    %3 = vector.load %arg3[%c0_3, %c0_4] : memref<1x64xf32, #tpu.memory_space<vmem>>, vector<1x64xf32>
    %4 = vector.broadcast %3 : vector<1x64xf32> to vector<16x64xf32>
    %5 = arith.addf %2, %4 : vector<16x64xf32>
    %c0_5 = arith.constant 0 : index
    %c0_6 = arith.constant 0 : index
    %6 = vector.load %arg4[%c0_5, %c0_6] : memref<16x64xf32, #tpu.memory_space<vmem>>, vector<16x64xf32>
    tpu.vector_store %arg4[%c0_5, %c0_6], %5 {strides = array<i32>} : memref<16x64xf32, #tpu.memory_space<vmem>>, vector<16x64xf32>,
    return
  }
  func.func @transform_0(%arg0: i32) -> (i32, i32) {
    %c0_i32 = arith.constant 0 : i32
    %c0_i32_0 = arith.constant 0 : i32
    %c0_i32_1 = arith.constant 0 : i32
    return %c0_i32, %c0_i32_0 : i32, i32
  }
  func.func @transform_1(%arg0: i32) -> (i32, i32) {
    %c0_i32 = arith.constant 0 : i32
    %c0_i32_0 = arith.constant 0 : i32
    return %c0_i32, %arg0 : i32, i32
  }
  func.func @transform_2(%arg0: i32) -> (i32, i32) {
    %c0_i32 = arith.constant 0 : i32
    %c0_i32_0 = arith.constant 0 : i32
    return %c0_i32, %arg0 : i32, i32
  }
  func.func @transform_3(%arg0: i32) -> (i32, i32) {
    %c0_i32 = arith.constant 0 : i32
    %c0_i32_0 = arith.constant 0 : i32
    return %c0_i32, %arg0 : i32, i32
  }
}

module attributes {stable_mosaic.version = 11 : i64} {
  func.func @_decoder_layer_img_kernel(%arg0: i32, %arg1: memref<1x8x32xbf16, #tpu.memory_space<vmem>>, %arg2: memref<1x1x32xbf16, #tpu.memory_space<vmem>>, %arg3: memref<1x1xf32, #tpu.memory_space<vmem>>, %arg4: memref<1x32xf32, #tpu.memory_space<vmem>>, %arg5: memref<1x32xf32, #tpu.memory_space<vmem>>, %arg6: memref<32x96xbf16, #tpu.memory_space<vmem>>, %arg7: memref<1x96xf32, #tpu.memory_space<vmem>>, %arg8: memref<32x32xbf16, #tpu.memory_space<vmem>>, %arg9: memref<1x32xf32, #tpu.memory_space<vmem>>, %arg10: memref<1x32xf32, #tpu.memory_space<vmem>>, %arg11: memref<1x32xf32, #tpu.memory_space<vmem>>, %arg12: memref<32x32xbf16, #tpu.memory_space<vmem>>, %arg13: memref<1x32xf32, #tpu.memory_space<vmem>>, %arg14: memref<32x32xbf16, #tpu.memory_space<vmem>>, %arg15: memref<1x32xf32, #tpu.memory_space<vmem>>, %arg16: memref<32x32xbf16, #tpu.memory_space<vmem>>, %arg17: memref<32x32xbf16, #tpu.memory_space<vmem>>, %arg18: memref<1x32xf32, #tpu.memory_space<vmem>>, %arg19: memref<1x32xf32, #tpu.memory_space<vmem>>, %arg20: memref<1x32xf32, #tpu.memory_space<vmem>>, %arg21: memref<1x32xf32, #tpu.memory_space<vmem>>, %arg22: memref<1x32xf32, #tpu.memory_space<vmem>>, %arg23: memref<32x32xbf16, #tpu.memory_space<vmem>>, %arg24: memref<1x32xf32, #tpu.memory_space<vmem>>, %arg25: memref<32x32xbf16, #tpu.memory_space<vmem>>, %arg26: memref<1x32xf32, #tpu.memory_space<vmem>>, %arg27: memref<1x8x32xbf16, #tpu.memory_space<vmem>>, %arg28: memref<8x32xf32, #tpu.memory_space<vmem>>) attributes {dimension_semantics = [#tpu.dimension_semantics<parallel>], iteration_bounds = array<i64: 2>, scalar_prefetch = 0 : i64, scratch_operands = 1 : i64, tpu.core_type = #tpu.core_type<tc>, window_params = [{transform_indices = @transform_0, window_bounds = array<i64: 1, 8, 32>}, {transform_indices = @transform_1, window_bounds = array<i64: 1, 1, 32>}, {pipeline_mode = #tpu.pipeline_mode<synchronous>, transform_indices = @transform_2, window_bounds = array<i64: 1, 1>}, {pipeline_mode = #tpu.pipeline_mode<synchronous>, transform_indices = @transform_3, window_bounds = array<i64: 1, 32>}, {pipeline_mode = #tpu.pipeline_mode<synchronous>, transform_indices = @transform_4, window_bounds = array<i64: 1, 32>}, {pipeline_mode = #tpu.pipeline_mode<synchronous>, transform_indices = @transform_5, window_bounds = array<i64: 32, 96>}, {pipeline_mode = #tpu.pipeline_mode<synchronous>, transform_indices = @transform_6, window_bounds = array<i64: 1, 96>}, {pipeline_mode = #tpu.pipeline_mode<synchronous>, transform_indices = @transform_7, window_bounds = array<i64: 32, 32>}, {pipeline_mode = #tpu.pipeline_mode<synchronous>, transform_indices = @transform_8, window_bounds = array<i64: 1, 32>}, {pipeline_mode = #tpu.pipeline_mode<synchronous>, transform_indices = @transform_9, window_bounds = array<i64: 1, 32>}, {pipeline_mode = #tpu.pipeline_mode<synchronous>, transform_indices = @transform_10, window_bounds = array<i64: 1, 32>}, {pipeline_mode = #tpu.pipeline_mode<synchronous>, transform_indices = @transform_11, window_bounds = array<i64: 32, 32>}, {pipeline_mode = #tpu.pipeline_mode<synchronous>, transform_indices = @transform_12, window_bounds = array<i64: 1, 32>}, {pipeline_mode = #tpu.pipeline_mode<synchronous>, transform_indices = @transform_13, window_bounds = array<i64: 32, 32>}, {pipeline_mode = #tpu.pipeline_mode<synchronous>, transform_indices = @transform_14, window_bounds = array<i64: 1, 32>}, {pipeline_mode = #tpu.pipeline_mode<synchronous>, transform_indices = @transform_15, window_bounds = array<i64: 32, 32>}, {pipeline_mode = #tpu.pipeline_mode<synchronous>, transform_indices = @transform_16, window_bounds = array<i64: 32, 32>}, {pipeline_mode = #tpu.pipeline_mode<synchronous>, transform_indices = @transform_17, window_bounds = array<i64: 1, 32>}, {pipeline_mode = #tpu.pipeline_mode<synchronous>, transform_indices = @transform_18, window_bounds = array<i64: 1, 32>}, {pipeline_mode = #tpu.pipeline_mode<synchronous>, transform_indices = @transform_19, window_bounds = array<i64: 1, 32>}, {pipeline_mode = #tpu.pipeline_mode<synchronous>, transform_indices = @transform_20, window_bounds = array<i64: 1, 32>}, {pipeline_mode = #tpu.pipeline_mode<synchronous>, transform_indices = @transform_21, window_bounds = array<i64: 1, 32>}, {pipeline_mode = #tpu.pipeline_mode<synchronous>, transform_indices = @transform_22, window_bounds = array<i64: 32, 32>}, {pipeline_mode = #tpu.pipeline_mode<synchronous>, transform_indices = @transform_23, window_bounds = array<i64: 1, 32>}, {pipeline_mode = #tpu.pipeline_mode<synchronous>, transform_indices = @transform_24, window_bounds = array<i64: 32, 32>}, {pipeline_mode = #tpu.pipeline_mode<synchronous>, transform_indices = @transform_25, window_bounds = array<i64: 1, 32>}, {transform_indices = @transform_26, window_bounds = array<i64: 1, 8, 32>}]} {
    %c0 = arith.constant 0 : index
    %c0_0 = arith.constant 0 : index
    %c0_1 = arith.constant 0 : index
    %0 = vector.load %arg1[%c0, %c0_0, %c0_1] : memref<1x8x32xbf16, #tpu.memory_space<vmem>>, vector<1x8x32xbf16>
    %1 = vector.shape_cast %0 : vector<1x8x32xbf16> to vector<8x32xbf16>
    %2 = arith.extf %1 : vector<8x32xbf16> to vector<8x32xf32>
    %c0_2 = arith.constant 0 : index
    %c0_3 = arith.constant 0 : index
    %c0_4 = arith.constant 0 : index
    %3 = vector.load %arg2[%c0_2, %c0_3, %c0_4] : memref<1x1x32xbf16, #tpu.memory_space<vmem>>, vector<1x1x32xbf16>
    %4 = vector.shape_cast %3 : vector<1x1x32xbf16> to vector<1x32xbf16>
    %5 = arith.extf %4 : vector<1x32xbf16> to vector<1x32xf32>
    %c0_5 = arith.constant 0 : index
    %c0_6 = arith.constant 0 : index
    %6 = vector.load %arg4[%c0_5, %c0_6] : memref<1x32xf32, #tpu.memory_space<vmem>>, vector<1x32xf32>
    %c0_7 = arith.constant 0 : index
    %c0_8 = arith.constant 0 : index
    %7 = vector.load %arg5[%c0_7, %c0_8] : memref<1x32xf32, #tpu.memory_space<vmem>>, vector<1x32xf32>
    %cst = arith.constant dense<0.000000e+00> : vector<8xf32>
    %8 = vector.multi_reduction <add>, %2, %cst [1] : vector<8x32xf32> to vector<8xf32>
    %9 = vector.shape_cast %8 : vector<8xf32> to vector<8x1xf32>
    %cst_9 = arith.constant 3.200000e+01 : f32
    %10 = vector.broadcast %cst_9 : f32 to vector<8x1xf32>
    %11 = arith.divf %9, %10 : vector<8x1xf32>
    %12 = vector.broadcast %11 : vector<8x1xf32> to vector<8x32xf32>
    %13 = arith.subf %2, %12 : vector<8x32xf32>
    %14 = arith.mulf %13, %13 : vector<8x32xf32>
    %cst_10 = arith.constant dense<0.000000e+00> : vector<8xf32>
    %15 = vector.multi_reduction <add>, %14, %cst_10 [1] : vector<8x32xf32> to vector<8xf32>
    %16 = vector.shape_cast %15 : vector<8xf32> to vector<8x1xf32>
    %cst_11 = arith.constant 3.200000e+01 : f32
    %17 = vector.broadcast %cst_11 : f32 to vector<8x1xf32>
    %18 = arith.divf %16, %17 : vector<8x1xf32>
    %cst_12 = arith.constant 9.99999974E-6 : f32
    %19 = vector.broadcast %cst_12 : f32 to vector<8x1xf32>
    %20 = arith.addf %18, %19 : vector<8x1xf32>
    %21 = math.rsqrt %20 : vector<8x1xf32>
    %22 = vector.broadcast %21 : vector<8x1xf32> to vector<8x32xf32>
    %23 = arith.mulf %13, %22 : vector<8x32xf32>
    %24 = vector.broadcast %6 : vector<1x32xf32> to vector<8x32xf32>
    %25 = arith.mulf %23, %24 : vector<8x32xf32>
    %26 = vector.broadcast %7 : vector<1x32xf32> to vector<8x32xf32>
    %27 = arith.addf %25, %26 : vector<8x32xf32>
    %c0_13 = arith.constant 0 : index
    %c0_14 = arith.constant 0 : index
    %28 = vector.load %arg6[%c0_13, %c0_14] : memref<32x96xbf16, #tpu.memory_space<vmem>>, vector<32x96xbf16>
    %29 = arith.truncf %27 : vector<8x32xf32> to vector<8x32xbf16>
    %cst_15 = arith.constant dense<0.000000e+00> : vector<8x96xf32>
    %30 = tpu.matmul %29, %28, %cst_15 {dimension_numbers = #tpu.dot_dimension_numbers<[1], [0], [0], [1], [0, 0, 1, 1], [], []>} : vector<8x32xbf16>, vector<32x96xbf16>, vector<8x96xf32> -> vector<8x96xf32>
    %c0_16 = arith.constant 0 : index
    %c0_17 = arith.constant 0 : index
    %31 = vector.load %arg7[%c0_16, %c0_17] : memref<1x96xf32, #tpu.memory_space<vmem>>, vector<1x96xf32>
    %32 = vector.broadcast %31 : vector<1x96xf32> to vector<8x96xf32>
    %33 = arith.addf %30, %32 : vector<8x96xf32>
    %34 = tpu.iota {dimensions = array<i32: 0>} : vector<8x8xi32>
    %35 = tpu.iota {dimensions = array<i32: 1>} : vector<8x8xi32>
    %36 = arith.cmpi sgt, %35, %34 : vector<8x8xi32>
    %37 = vector.extract_strided_slice %33 {offsets = [0, 0], sizes = [8, 8], strides = [1, 1]} : vector<8x96xf32> to vector<8x8xf32>
    %cst_18 = arith.constant 0.353553385 : f32
    %38 = vector.broadcast %cst_18 : f32 to vector<8x8xf32>
    %39 = arith.mulf %37, %38 : vector<8x8xf32>
    %40 = vector.extract_strided_slice %33 {offsets = [0, 32], sizes = [8, 8], strides = [1, 1]} : vector<8x96xf32> to vector<8x8xf32>
    %41 = vector.extract_strided_slice %33 {offsets = [0, 64], sizes = [8, 8], strides = [1, 1]} : vector<8x96xf32> to vector<8x8xf32>
    %42 = arith.truncf %39 : vector<8x8xf32> to vector<8x8xbf16>
    %43 = arith.truncf %40 : vector<8x8xf32> to vector<8x8xbf16>
    %cst_19 = arith.constant dense<0.000000e+00> : vector<8x8xf32>
    %44 = tpu.matmul %42, %43, %cst_19 {dimension_numbers = #tpu.dot_dimension_numbers<[1], [1], [0], [0], [0, 0, 1, 0], [], []>} : vector<8x8xbf16>, vector<8x8xbf16>, vector<8x8xf32> -> vector<8x8xf32>
    %cst_20 = arith.constant -1.000000e+30 : f32
    %45 = vector.broadcast %cst_20 : f32 to vector<8x8xf32>
    %46 = arith.select %36, %45, %44 : vector<8x8xi1>, vector<8x8xf32>
    %cst_21 = arith.constant dense<0xFF800000> : vector<8xf32>
    %47 = vector.multi_reduction <maximumf>, %46, %cst_21 [1] : vector<8x8xf32> to vector<8xf32>
    %48 = vector.shape_cast %47 : vector<8xf32> to vector<8x1xf32>
    %49 = vector.broadcast %48 : vector<8x1xf32> to vector<8x8xf32>
    %50 = arith.subf %46, %49 : vector<8x8xf32>
    %51 = math.exp %50 : vector<8x8xf32>
    %cst_22 = arith.constant dense<0.000000e+00> : vector<8xf32>
    %52 = vector.multi_reduction <add>, %51, %cst_22 [1] : vector<8x8xf32> to vector<8xf32>
    %53 = vector.shape_cast %52 : vector<8xf32> to vector<8x1xf32>
    %54 = tpu.reciprocal %53 {approx = true} : vector<8x1xf32> -> vector<8x1xf32>
    %55 = arith.mulf %53, %54 : vector<8x1xf32>
    %cst_23 = arith.constant 2.000000e+00 : f32
    %56 = vector.broadcast %cst_23 : f32 to vector<8x1xf32>
    %57 = arith.subf %56, %55 : vector<8x1xf32>
    %58 = arith.mulf %54, %57 : vector<8x1xf32>
    %59 = vector.broadcast %58 : vector<8x1xf32> to vector<8x8xf32>
    %60 = arith.mulf %51, %59 : vector<8x8xf32>
    %61 = arith.truncf %60 : vector<8x8xf32> to vector<8x8xbf16>
    %62 = arith.truncf %41 : vector<8x8xf32> to vector<8x8xbf16>
    %cst_24 = arith.constant dense<0.000000e+00> : vector<8x8xf32>
    %63 = tpu.matmul %61, %62, %cst_24 {dimension_numbers = #tpu.dot_dimension_numbers<[1], [0], [0], [1], [0, 0, 1, 1], [], []>} : vector<8x8xbf16>, vector<8x8xbf16>, vector<8x8xf32> -> vector<8x8xf32>
    %c0_25 = arith.constant 0 : index
    %c0_26 = arith.constant 0 : index
    %64 = vector.load %arg28[%c0_25, %c0_26] : memref<8x32xf32, #tpu.memory_space<vmem>>, vector<8x8xf32>
    tpu.vector_store %arg28[%c0_25, %c0_26], %63 {strides = array<i32>} : memref<8x32xf32, #tpu.memory_space<vmem>>, vector<8x8xf32>,
    %65 = vector.extract_strided_slice %33 {offsets = [0, 8], sizes = [8, 8], strides = [1, 1]} : vector<8x96xf32> to vector<8x8xf32>
    %cst_27 = arith.constant 0.353553385 : f32
    %66 = vector.broadcast %cst_27 : f32 to vector<8x8xf32>
    %67 = arith.mulf %65, %66 : vector<8x8xf32>
    %68 = vector.extract_strided_slice %33 {offsets = [0, 40], sizes = [8, 8], strides = [1, 1]} : vector<8x96xf32> to vector<8x8xf32>
    %69 = vector.extract_strided_slice %33 {offsets = [0, 72], sizes = [8, 8], strides = [1, 1]} : vector<8x96xf32> to vector<8x8xf32>
    %70 = arith.truncf %67 : vector<8x8xf32> to vector<8x8xbf16>
    %71 = arith.truncf %68 : vector<8x8xf32> to vector<8x8xbf16>
    %cst_28 = arith.constant dense<0.000000e+00> : vector<8x8xf32>
    %72 = tpu.matmul %70, %71, %cst_28 {dimension_numbers = #tpu.dot_dimension_numbers<[1], [1], [0], [0], [0, 0, 1, 0], [], []>} : vector<8x8xbf16>, vector<8x8xbf16>, vector<8x8xf32> -> vector<8x8xf32>
    %cst_29 = arith.constant -1.000000e+30 : f32
    %73 = vector.broadcast %cst_29 : f32 to vector<8x8xf32>
    %74 = arith.select %36, %73, %72 : vector<8x8xi1>, vector<8x8xf32>
    %cst_30 = arith.constant dense<0xFF800000> : vector<8xf32>
    %75 = vector.multi_reduction <maximumf>, %74, %cst_30 [1] : vector<8x8xf32> to vector<8xf32>
    %76 = vector.shape_cast %75 : vector<8xf32> to vector<8x1xf32>
    %77 = vector.broadcast %76 : vector<8x1xf32> to vector<8x8xf32>
    %78 = arith.subf %74, %77 : vector<8x8xf32>
    %79 = math.exp %78 : vector<8x8xf32>
    %cst_31 = arith.constant dense<0.000000e+00> : vector<8xf32>
    %80 = vector.multi_reduction <add>, %79, %cst_31 [1] : vector<8x8xf32> to vector<8xf32>
    %81 = vector.shape_cast %80 : vector<8xf32> to vector<8x1xf32>
    %82 = tpu.reciprocal %81 {approx = true} : vector<8x1xf32> -> vector<8x1xf32>
    %83 = arith.mulf %81, %82 : vector<8x1xf32>
    %cst_32 = arith.constant 2.000000e+00 : f32
    %84 = vector.broadcast %cst_32 : f32 to vector<8x1xf32>
    %85 = arith.subf %84, %83 : vector<8x1xf32>
    %86 = arith.mulf %82, %85 : vector<8x1xf32>
    %87 = vector.broadcast %86 : vector<8x1xf32> to vector<8x8xf32>
    %88 = arith.mulf %79, %87 : vector<8x8xf32>
    %89 = arith.truncf %88 : vector<8x8xf32> to vector<8x8xbf16>
    %90 = arith.truncf %69 : vector<8x8xf32> to vector<8x8xbf16>
    %cst_33 = arith.constant dense<0.000000e+00> : vector<8x8xf32>
    %91 = tpu.matmul %89, %90, %cst_33 {dimension_numbers = #tpu.dot_dimension_numbers<[1], [0], [0], [1], [0, 0, 1, 1], [], []>} : vector<8x8xbf16>, vector<8x8xbf16>, vector<8x8xf32> -> vector<8x8xf32>
    %c0_34 = arith.constant 0 : index
    %c8 = arith.constant 8 : index
    %92 = vector.load %arg28[%c0_34, %c8] : memref<8x32xf32, #tpu.memory_space<vmem>>, vector<8x8xf32>
    tpu.vector_store %arg28[%c0_34, %c8], %91 {strides = array<i32>} : memref<8x32xf32, #tpu.memory_space<vmem>>, vector<8x8xf32>,
    %93 = vector.extract_strided_slice %33 {offsets = [0, 16], sizes = [8, 8], strides = [1, 1]} : vector<8x96xf32> to vector<8x8xf32>
    %cst_35 = arith.constant 0.353553385 : f32
    %94 = vector.broadcast %cst_35 : f32 to vector<8x8xf32>
    %95 = arith.mulf %93, %94 : vector<8x8xf32>
    %96 = vector.extract_strided_slice %33 {offsets = [0, 48], sizes = [8, 8], strides = [1, 1]} : vector<8x96xf32> to vector<8x8xf32>
    %97 = vector.extract_strided_slice %33 {offsets = [0, 80], sizes = [8, 8], strides = [1, 1]} : vector<8x96xf32> to vector<8x8xf32>
    %98 = arith.truncf %95 : vector<8x8xf32> to vector<8x8xbf16>
    %99 = arith.truncf %96 : vector<8x8xf32> to vector<8x8xbf16>
    %cst_36 = arith.constant dense<0.000000e+00> : vector<8x8xf32>
    %100 = tpu.matmul %98, %99, %cst_36 {dimension_numbers = #tpu.dot_dimension_numbers<[1], [1], [0], [0], [0, 0, 1, 0], [], []>} : vector<8x8xbf16>, vector<8x8xbf16>, vector<8x8xf32> -> vector<8x8xf32>
    %cst_37 = arith.constant -1.000000e+30 : f32
    %101 = vector.broadcast %cst_37 : f32 to vector<8x8xf32>
    %102 = arith.select %36, %101, %100 : vector<8x8xi1>, vector<8x8xf32>
    %cst_38 = arith.constant dense<0xFF800000> : vector<8xf32>
    %103 = vector.multi_reduction <maximumf>, %102, %cst_38 [1] : vector<8x8xf32> to vector<8xf32>
    %104 = vector.shape_cast %103 : vector<8xf32> to vector<8x1xf32>
    %105 = vector.broadcast %104 : vector<8x1xf32> to vector<8x8xf32>
    %106 = arith.subf %102, %105 : vector<8x8xf32>
    %107 = math.exp %106 : vector<8x8xf32>
    %cst_39 = arith.constant dense<0.000000e+00> : vector<8xf32>
    %108 = vector.multi_reduction <add>, %107, %cst_39 [1] : vector<8x8xf32> to vector<8xf32>
    %109 = vector.shape_cast %108 : vector<8xf32> to vector<8x1xf32>
    %110 = tpu.reciprocal %109 {approx = true} : vector<8x1xf32> -> vector<8x1xf32>
    %111 = arith.mulf %109, %110 : vector<8x1xf32>
    %cst_40 = arith.constant 2.000000e+00 : f32
    %112 = vector.broadcast %cst_40 : f32 to vector<8x1xf32>
    %113 = arith.subf %112, %111 : vector<8x1xf32>
    %114 = arith.mulf %110, %113 : vector<8x1xf32>
    %115 = vector.broadcast %114 : vector<8x1xf32> to vector<8x8xf32>
    %116 = arith.mulf %107, %115 : vector<8x8xf32>
    %117 = arith.truncf %116 : vector<8x8xf32> to vector<8x8xbf16>
    %118 = arith.truncf %97 : vector<8x8xf32> to vector<8x8xbf16>
    %cst_41 = arith.constant dense<0.000000e+00> : vector<8x8xf32>
    %119 = tpu.matmul %117, %118, %cst_41 {dimension_numbers = #tpu.dot_dimension_numbers<[1], [0], [0], [1], [0, 0, 1, 1], [], []>} : vector<8x8xbf16>, vector<8x8xbf16>, vector<8x8xf32> -> vector<8x8xf32>
    %c0_42 = arith.constant 0 : index
    %c16 = arith.constant 16 : index
    %120 = vector.load %arg28[%c0_42, %c16] : memref<8x32xf32, #tpu.memory_space<vmem>>, vector<8x8xf32>
    tpu.vector_store %arg28[%c0_42, %c16], %119 {strides = array<i32>} : memref<8x32xf32, #tpu.memory_space<vmem>>, vector<8x8xf32>,
    %121 = vector.extract_strided_slice %33 {offsets = [0, 24], sizes = [8, 8], strides = [1, 1]} : vector<8x96xf32> to vector<8x8xf32>
    %cst_43 = arith.constant 0.353553385 : f32
    %122 = vector.broadcast %cst_43 : f32 to vector<8x8xf32>
    %123 = arith.mulf %121, %122 : vector<8x8xf32>
    %124 = vector.extract_strided_slice %33 {offsets = [0, 56], sizes = [8, 8], strides = [1, 1]} : vector<8x96xf32> to vector<8x8xf32>
    %125 = vector.extract_strided_slice %33 {offsets = [0, 88], sizes = [8, 8], strides = [1, 1]} : vector<8x96xf32> to vector<8x8xf32>
    %126 = arith.truncf %123 : vector<8x8xf32> to vector<8x8xbf16>
    %127 = arith.truncf %124 : vector<8x8xf32> to vector<8x8xbf16>
    %cst_44 = arith.constant dense<0.000000e+00> : vector<8x8xf32>
    %128 = tpu.matmul %126, %127, %cst_44 {dimension_numbers = #tpu.dot_dimension_numbers<[1], [1], [0], [0], [0, 0, 1, 0], [], []>} : vector<8x8xbf16>, vector<8x8xbf16>, vector<8x8xf32> -> vector<8x8xf32>
    %cst_45 = arith.constant -1.000000e+30 : f32
    %129 = vector.broadcast %cst_45 : f32 to vector<8x8xf32>
    %130 = arith.select %36, %129, %128 : vector<8x8xi1>, vector<8x8xf32>
    %cst_46 = arith.constant dense<0xFF800000> : vector<8xf32>
    %131 = vector.multi_reduction <maximumf>, %130, %cst_46 [1] : vector<8x8xf32> to vector<8xf32>
    %132 = vector.shape_cast %131 : vector<8xf32> to vector<8x1xf32>
    %133 = vector.broadcast %132 : vector<8x1xf32> to vector<8x8xf32>
    %134 = arith.subf %130, %133 : vector<8x8xf32>
    %135 = math.exp %134 : vector<8x8xf32>
    %cst_47 = arith.constant dense<0.000000e+00> : vector<8xf32>
    %136 = vector.multi_reduction <add>, %135, %cst_47 [1] : vector<8x8xf32> to vector<8xf32>
    %137 = vector.shape_cast %136 : vector<8xf32> to vector<8x1xf32>
    %138 = tpu.reciprocal %137 {approx = true} : vector<8x1xf32> -> vector<8x1xf32>
    %139 = arith.mulf %137, %138 : vector<8x1xf32>
    %cst_48 = arith.constant 2.000000e+00 : f32
    %140 = vector.broadcast %cst_48 : f32 to vector<8x1xf32>
    %141 = arith.subf %140, %139 : vector<8x1xf32>
    %142 = arith.mulf %138, %141 : vector<8x1xf32>
    %143 = vector.broadcast %142 : vector<8x1xf32> to vector<8x8xf32>
    %144 = arith.mulf %135, %143 : vector<8x8xf32>
    %145 = arith.truncf %144 : vector<8x8xf32> to vector<8x8xbf16>
    %146 = arith.truncf %125 : vector<8x8xf32> to vector<8x8xbf16>
    %cst_49 = arith.constant dense<0.000000e+00> : vector<8x8xf32>
    %147 = tpu.matmul %145, %146, %cst_49 {dimension_numbers = #tpu.dot_dimension_numbers<[1], [0], [0], [1], [0, 0, 1, 1], [], []>} : vector<8x8xbf16>, vector<8x8xbf16>, vector<8x8xf32> -> vector<8x8xf32>
    %c0_50 = arith.constant 0 : index
    %c24 = arith.constant 24 : index
    %148 = vector.load %arg28[%c0_50, %c24] : memref<8x32xf32, #tpu.memory_space<vmem>>, vector<8x8xf32>
    tpu.vector_store %arg28[%c0_50, %c24], %147 {strides = array<i32>} : memref<8x32xf32, #tpu.memory_space<vmem>>, vector<8x8xf32>,
    %c0_51 = arith.constant 0 : index
    %c0_52 = arith.constant 0 : index
    %149 = vector.load %arg28[%c0_51, %c0_52] : memref<8x32xf32, #tpu.memory_space<vmem>>, vector<8x32xf32>
    %c0_53 = arith.constant 0 : index
    %c0_54 = arith.constant 0 : index
    %150 = vector.load %arg8[%c0_53, %c0_54] : memref<32x32xbf16, #tpu.memory_space<vmem>>, vector<32x32xbf16>
    %151 = arith.truncf %149 : vector<8x32xf32> to vector<8x32xbf16>
    %cst_55 = arith.constant dense<0.000000e+00> : vector<8x32xf32>
    %152 = tpu.matmul %151, %150, %cst_55 {dimension_numbers = #tpu.dot_dimension_numbers<[1], [0], [0], [1], [0, 0, 1, 1], [], []>} : vector<8x32xbf16>, vector<32x32xbf16>, vector<8x32xf32> -> vector<8x32xf32>
    %153 = arith.addf %2, %152 : vector<8x32xf32>
    %c0_56 = arith.constant 0 : index
    %c0_57 = arith.constant 0 : index
    %154 = vector.load %arg9[%c0_56, %c0_57] : memref<1x32xf32, #tpu.memory_space<vmem>>, vector<1x32xf32>
    %155 = vector.broadcast %154 : vector<1x32xf32> to vector<8x32xf32>
    %156 = arith.addf %153, %155 : vector<8x32xf32>
    %c0_58 = arith.constant 0 : index
    %c0_59 = arith.constant 0 : index
    %157 = vector.load %arg10[%c0_58, %c0_59] : memref<1x32xf32, #tpu.memory_space<vmem>>, vector<1x32xf32>
    %c0_60 = arith.constant 0 : index
    %c0_61 = arith.constant 0 : index
    %158 = vector.load %arg11[%c0_60, %c0_61] : memref<1x32xf32, #tpu.memory_space<vmem>>, vector<1x32xf32>
    %cst_62 = arith.constant dense<0.000000e+00> : vector<8xf32>
    %159 = vector.multi_reduction <add>, %156, %cst_62 [1] : vector<8x32xf32> to vector<8xf32>
    %160 = vector.shape_cast %159 : vector<8xf32> to vector<8x1xf32>
    %cst_63 = arith.constant 3.200000e+01 : f32
    %161 = vector.broadcast %cst_63 : f32 to vector<8x1xf32>
    %162 = arith.divf %160, %161 : vector<8x1xf32>
    %163 = vector.broadcast %162 : vector<8x1xf32> to vector<8x32xf32>
    %164 = arith.subf %156, %163 : vector<8x32xf32>
    %165 = arith.mulf %164, %164 : vector<8x32xf32>
    %cst_64 = arith.constant dense<0.000000e+00> : vector<8xf32>
    %166 = vector.multi_reduction <add>, %165, %cst_64 [1] : vector<8x32xf32> to vector<8xf32>
    %167 = vector.shape_cast %166 : vector<8xf32> to vector<8x1xf32>
    %cst_65 = arith.constant 3.200000e+01 : f32
    %168 = vector.broadcast %cst_65 : f32 to vector<8x1xf32>
    %169 = arith.divf %167, %168 : vector<8x1xf32>
    %cst_66 = arith.constant 9.99999974E-6 : f32
    %170 = vector.broadcast %cst_66 : f32 to vector<8x1xf32>
    %171 = arith.addf %169, %170 : vector<8x1xf32>
    %172 = math.rsqrt %171 : vector<8x1xf32>
    %173 = vector.broadcast %172 : vector<8x1xf32> to vector<8x32xf32>
    %174 = arith.mulf %164, %173 : vector<8x32xf32>
    %175 = vector.broadcast %157 : vector<1x32xf32> to vector<8x32xf32>
    %176 = arith.mulf %174, %175 : vector<8x32xf32>
    %177 = vector.broadcast %158 : vector<1x32xf32> to vector<8x32xf32>
    %178 = arith.addf %176, %177 : vector<8x32xf32>
    %c0_67 = arith.constant 0 : index
    %c0_68 = arith.constant 0 : index
    %179 = vector.load %arg12[%c0_67, %c0_68] : memref<32x32xbf16, #tpu.memory_space<vmem>>, vector<32x32xbf16>
    %180 = arith.truncf %5 : vector<1x32xf32> to vector<1x32xbf16>
    %cst_69 = arith.constant dense<0.000000e+00> : vector<1x32xf32>
    %181 = tpu.matmul %180, %179, %cst_69 {dimension_numbers = #tpu.dot_dimension_numbers<[1], [0], [0], [1], [0, 0, 1, 1], [], []>} : vector<1x32xbf16>, vector<32x32xbf16>, vector<1x32xf32> -> vector<1x32xf32>
    %c0_70 = arith.constant 0 : index
    %c0_71 = arith.constant 0 : index
    %182 = vector.load %arg13[%c0_70, %c0_71] : memref<1x32xf32, #tpu.memory_space<vmem>>, vector<1x32xf32>
    %183 = arith.addf %181, %182 : vector<1x32xf32>
    %c0_72 = arith.constant 0 : index
    %c0_73 = arith.constant 0 : index
    %184 = vector.load %arg14[%c0_72, %c0_73] : memref<32x32xbf16, #tpu.memory_space<vmem>>, vector<32x32xbf16>
    %185 = arith.truncf %183 : vector<1x32xf32> to vector<1x32xbf16>
    %cst_74 = arith.constant dense<0.000000e+00> : vector<1x32xf32>
    %186 = tpu.matmul %185, %184, %cst_74 {dimension_numbers = #tpu.dot_dimension_numbers<[1], [0], [0], [1], [0, 0, 1, 1], [], []>} : vector<1x32xbf16>, vector<32x32xbf16>, vector<1x32xf32> -> vector<1x32xf32>
    %c0_75 = arith.constant 0 : index
    %c0_76 = arith.constant 0 : index
    %187 = vector.load %arg15[%c0_75, %c0_76] : memref<1x32xf32, #tpu.memory_space<vmem>>, vector<1x32xf32>
    %188 = arith.addf %186, %187 : vector<1x32xf32>
    %c0_77 = arith.constant 0 : index
    %c0_78 = arith.constant 0 : index
    %189 = vector.load %arg16[%c0_77, %c0_78] : memref<32x32xbf16, #tpu.memory_space<vmem>>, vector<32x32xbf16>
    %190 = arith.truncf %178 : vector<8x32xf32> to vector<8x32xbf16>
    %cst_79 = arith.constant dense<0.000000e+00> : vector<8x32xf32>
    %191 = tpu.matmul %190, %189, %cst_79 {dimension_numbers = #tpu.dot_dimension_numbers<[1], [0], [0], [1], [0, 0, 1, 1], [], []>} : vector<8x32xbf16>, vector<32x32xbf16>, vector<8x32xf32> -> vector<8x32xf32>
    %c0_80 = arith.constant 0 : index
    %c0_81 = arith.constant 0 : index
    %192 = vector.load %arg17[%c0_80, %c0_81] : memref<32x32xbf16, #tpu.memory_space<vmem>>, vector<32x32xbf16>
    %193 = arith.truncf %188 : vector<1x32xf32> to vector<1x32xbf16>
    %cst_82 = arith.constant dense<0.000000e+00> : vector<1x32xf32>
    %194 = tpu.matmul %193, %192, %cst_82 {dimension_numbers = #tpu.dot_dimension_numbers<[1], [0], [0], [1], [0, 0, 1, 1], [], []>} : vector<1x32xbf16>, vector<32x32xbf16>, vector<1x32xf32> -> vector<1x32xf32>
    %195 = vector.broadcast %194 : vector<1x32xf32> to vector<8x32xf32>
    %196 = arith.addf %191, %195 : vector<8x32xf32>
    %c0_83 = arith.constant 0 : index
    %c0_84 = arith.constant 0 : index
    %197 = vector.load %arg18[%c0_83, %c0_84] : memref<1x32xf32, #tpu.memory_space<vmem>>, vector<1x32xf32>
    %198 = vector.broadcast %197 : vector<1x32xf32> to vector<8x32xf32>
    %199 = arith.addf %196, %198 : vector<8x32xf32>
    %200 = arith.negf %199 : vector<8x32xf32>
    %201 = math.exp %200 : vector<8x32xf32>
    %cst_85 = arith.constant 1.000000e+00 : f32
    %202 = vector.broadcast %cst_85 : f32 to vector<8x32xf32>
    %203 = arith.addf %202, %201 : vector<8x32xf32>
    %204 = arith.divf %202, %203 : vector<8x32xf32>
    %205 = arith.mulf %204, %178 : vector<8x32xf32>
    %cst_86 = arith.constant 1.000000e+00 : f32
    %206 = vector.broadcast %cst_86 : f32 to vector<8x32xf32>
    %207 = arith.subf %206, %204 : vector<8x32xf32>
    %208 = vector.broadcast %188 : vector<1x32xf32> to vector<8x32xf32>
    %209 = arith.mulf %207, %208 : vector<8x32xf32>
    %210 = arith.addf %205, %209 : vector<8x32xf32>
    %c0_87 = arith.constant 0 : index
    %c0_88 = arith.constant 0 : index
    %211 = vector.load %arg3[%c0_87, %c0_88] : memref<1x1xf32, #tpu.memory_space<vmem>>, vector<1x1xf32>
    %c0_89 = arith.constant 0 : index
    %c0_90 = arith.constant 0 : index
    %212 = vector.load %arg19[%c0_89, %c0_90] : memref<1x32xf32, #tpu.memory_space<vmem>>, vector<1x32xf32>
    %c0_91 = arith.constant 0 : index
    %c0_92 = arith.constant 0 : index
    %213 = vector.load %arg20[%c0_91, %c0_92] : memref<1x32xf32, #tpu.memory_space<vmem>>, vector<1x32xf32>
    %cst_93 = arith.constant dense<0.000000e+00> : vector<8xf32>
    %214 = vector.multi_reduction <add>, %210, %cst_93 [1] : vector<8x32xf32> to vector<8xf32>
    %215 = vector.shape_cast %214 : vector<8xf32> to vector<8x1xf32>
    %cst_94 = arith.constant 3.200000e+01 : f32
    %216 = vector.broadcast %cst_94 : f32 to vector<8x1xf32>
    %217 = arith.divf %215, %216 : vector<8x1xf32>
    %218 = vector.broadcast %217 : vector<8x1xf32> to vector<8x32xf32>
    %219 = arith.subf %210, %218 : vector<8x32xf32>
    %220 = arith.mulf %219, %219 : vector<8x32xf32>
    %cst_95 = arith.constant dense<0.000000e+00> : vector<8xf32>
    %221 = vector.multi_reduction <add>, %220, %cst_95 [1] : vector<8x32xf32> to vector<8xf32>
    %222 = vector.shape_cast %221 : vector<8xf32> to vector<8x1xf32>
    %cst_96 = arith.constant 3.200000e+01 : f32
    %223 = vector.broadcast %cst_96 : f32 to vector<8x1xf32>
    %224 = arith.divf %222, %223 : vector<8x1xf32>
    %cst_97 = arith.constant 9.99999974E-6 : f32
    %225 = vector.broadcast %cst_97 : f32 to vector<8x1xf32>
    %226 = arith.addf %224, %225 : vector<8x1xf32>
    %227 = math.rsqrt %226 : vector<8x1xf32>
    %228 = vector.broadcast %227 : vector<8x1xf32> to vector<8x32xf32>
    %229 = arith.mulf %219, %228 : vector<8x32xf32>
    %230 = vector.broadcast %212 : vector<1x32xf32> to vector<8x32xf32>
    %231 = arith.mulf %229, %230 : vector<8x32xf32>
    %232 = vector.broadcast %213 : vector<1x32xf32> to vector<8x32xf32>
    %233 = arith.addf %231, %232 : vector<8x32xf32>
    %234 = vector.broadcast %211 : vector<1x1xf32> to vector<8x32xf32>
    %235 = arith.mulf %234, %233 : vector<8x32xf32>
    %236 = arith.addf %156, %235 : vector<8x32xf32>
    %c0_98 = arith.constant 0 : index
    %c0_99 = arith.constant 0 : index
    %237 = vector.load %arg21[%c0_98, %c0_99] : memref<1x32xf32, #tpu.memory_space<vmem>>, vector<1x32xf32>
    %c0_100 = arith.constant 0 : index
    %c0_101 = arith.constant 0 : index
    %238 = vector.load %arg22[%c0_100, %c0_101] : memref<1x32xf32, #tpu.memory_space<vmem>>, vector<1x32xf32>
    %cst_102 = arith.constant dense<0.000000e+00> : vector<8xf32>
    %239 = vector.multi_reduction <add>, %236, %cst_102 [1] : vector<8x32xf32> to vector<8xf32>
    %240 = vector.shape_cast %239 : vector<8xf32> to vector<8x1xf32>
    %cst_103 = arith.constant 3.200000e+01 : f32
    %241 = vector.broadcast %cst_103 : f32 to vector<8x1xf32>
    %242 = arith.divf %240, %241 : vector<8x1xf32>
    %243 = vector.broadcast %242 : vector<8x1xf32> to vector<8x32xf32>
    %244 = arith.subf %236, %243 : vector<8x32xf32>
    %245 = arith.mulf %244, %244 : vector<8x32xf32>
    %cst_104 = arith.constant dense<0.000000e+00> : vector<8xf32>
    %246 = vector.multi_reduction <add>, %245, %cst_104 [1] : vector<8x32xf32> to vector<8xf32>
    %247 = vector.shape_cast %246 : vector<8xf32> to vector<8x1xf32>
    %cst_105 = arith.constant 3.200000e+01 : f32
    %248 = vector.broadcast %cst_105 : f32 to vector<8x1xf32>
    %249 = arith.divf %247, %248 : vector<8x1xf32>
    %cst_106 = arith.constant 9.99999974E-6 : f32
    %250 = vector.broadcast %cst_106 : f32 to vector<8x1xf32>
    %251 = arith.addf %249, %250 : vector<8x1xf32>
    %252 = math.rsqrt %251 : vector<8x1xf32>
    %253 = vector.broadcast %252 : vector<8x1xf32> to vector<8x32xf32>
    %254 = arith.mulf %244, %253 : vector<8x32xf32>
    %255 = vector.broadcast %237 : vector<1x32xf32> to vector<8x32xf32>
    %256 = arith.mulf %254, %255 : vector<8x32xf32>
    %257 = vector.broadcast %238 : vector<1x32xf32> to vector<8x32xf32>
    %258 = arith.addf %256, %257 : vector<8x32xf32>
    %c0_107 = arith.constant 0 : index
    %c0_108 = arith.constant 0 : index
    %259 = vector.load %arg23[%c0_107, %c0_108] : memref<32x32xbf16, #tpu.memory_space<vmem>>, vector<32x32xbf16>
    %260 = arith.truncf %258 : vector<8x32xf32> to vector<8x32xbf16>
    %cst_109 = arith.constant dense<0.000000e+00> : vector<8x32xf32>
    %261 = tpu.matmul %260, %259, %cst_109 {dimension_numbers = #tpu.dot_dimension_numbers<[1], [0], [0], [1], [0, 0, 1, 1], [], []>} : vector<8x32xbf16>, vector<32x32xbf16>, vector<8x32xf32> -> vector<8x32xf32>
    %c0_110 = arith.constant 0 : index
    %c0_111 = arith.constant 0 : index
    %262 = vector.load %arg24[%c0_110, %c0_111] : memref<1x32xf32, #tpu.memory_space<vmem>>, vector<1x32xf32>
    %263 = vector.broadcast %262 : vector<1x32xf32> to vector<8x32xf32>
    %264 = arith.addf %261, %263 : vector<8x32xf32>
    %cst_112 = arith.constant 5.000000e-01 : f32
    %265 = vector.broadcast %cst_112 : f32 to vector<8x32xf32>
    %266 = arith.mulf %265, %264 : vector<8x32xf32>
    %cst_113 = arith.constant 0.707106769 : f32
    %267 = vector.broadcast %cst_113 : f32 to vector<8x32xf32>
    %268 = arith.mulf %264, %267 : vector<8x32xf32>
    %cst_114 = arith.constant 0.000000e+00 : f32
    %269 = vector.broadcast %cst_114 : f32 to vector<8x32xf32>
    %270 = arith.cmpf oge, %268, %269 : vector<8x32xf32>
    %cst_115 = arith.constant 1.000000e+00 : f32
    %cst_116 = arith.constant -1.000000e+00 : f32
    %271 = vector.broadcast %cst_115 : f32 to vector<8x32xf32>
    %272 = vector.broadcast %cst_116 : f32 to vector<8x32xf32>
    %273 = arith.select %270, %271, %272 : vector<8x32xi1>, vector<8x32xf32>
    %274 = math.absf %268 : vector<8x32xf32>
    %cst_117 = arith.constant 0.327591091 : f32
    %275 = vector.broadcast %cst_117 : f32 to vector<8x32xf32>
    %276 = arith.mulf %275, %274 : vector<8x32xf32>
    %cst_118 = arith.constant 1.000000e+00 : f32
    %277 = vector.broadcast %cst_118 : f32 to vector<8x32xf32>
    %278 = arith.addf %277, %276 : vector<8x32xf32>
    %279 = tpu.reciprocal %278 {approx = true} : vector<8x32xf32> -> vector<8x32xf32>
    %280 = arith.mulf %278, %279 : vector<8x32xf32>
    %cst_119 = arith.constant 2.000000e+00 : f32
    %281 = vector.broadcast %cst_119 : f32 to vector<8x32xf32>
    %282 = arith.subf %281, %280 : vector<8x32xf32>
    %283 = arith.mulf %279, %282 : vector<8x32xf32>
    %cst_120 = arith.constant 1.06140542 : f32
    %284 = vector.broadcast %cst_120 : f32 to vector<8x32xf32>
    %285 = arith.mulf %284, %283 : vector<8x32xf32>
    %cst_121 = arith.constant -1.45315206 : f32
    %286 = vector.broadcast %cst_121 : f32 to vector<8x32xf32>
    %287 = arith.addf %285, %286 : vector<8x32xf32>
    %288 = arith.mulf %287, %283 : vector<8x32xf32>
    %cst_122 = arith.constant 1.42141378 : f32
    %289 = vector.broadcast %cst_122 : f32 to vector<8x32xf32>
    %290 = arith.addf %288, %289 : vector<8x32xf32>
    %291 = arith.mulf %290, %283 : vector<8x32xf32>
    %cst_123 = arith.constant -0.284496725 : f32
    %292 = vector.broadcast %cst_123 : f32 to vector<8x32xf32>
    %293 = arith.addf %291, %292 : vector<8x32xf32>
    %294 = arith.mulf %293, %283 : vector<8x32xf32>
    %cst_124 = arith.constant 0.254829586 : f32
    %295 = vector.broadcast %cst_124 : f32 to vector<8x32xf32>
    %296 = arith.addf %294, %295 : vector<8x32xf32>
    %297 = arith.mulf %296, %283 : vector<8x32xf32>
    %cst_125 = arith.constant 0.000000e+00 : f32
    %298 = vector.broadcast %cst_125 : f32 to vector<8x32xf32>
    %299 = arith.subf %298, %274 : vector<8x32xf32>
    %300 = arith.mulf %299, %274 : vector<8x32xf32>
    %301 = math.exp %300 : vector<8x32xf32>
    %302 = arith.mulf %297, %301 : vector<8x32xf32>
    %cst_126 = arith.constant 1.000000e+00 : f32
    %303 = vector.broadcast %cst_126 : f32 to vector<8x32xf32>
    %304 = arith.subf %303, %302 : vector<8x32xf32>
    %305 = arith.mulf %273, %304 : vector<8x32xf32>
    %cst_127 = arith.constant 1.000000e+00 : f32
    %306 = vector.broadcast %cst_127 : f32 to vector<8x32xf32>
    %307 = arith.addf %306, %305 : vector<8x32xf32>
    %308 = arith.mulf %266, %307 : vector<8x32xf32>
    %c0_128 = arith.constant 0 : index
    %c0_129 = arith.constant 0 : index
    %309 = vector.load %arg25[%c0_128, %c0_129] : memref<32x32xbf16, #tpu.memory_space<vmem>>, vector<32x32xbf16>
    %310 = arith.truncf %308 : vector<8x32xf32> to vector<8x32xbf16>
    %cst_130 = arith.constant dense<0.000000e+00> : vector<8x32xf32>
    %311 = tpu.matmul %310, %309, %cst_130 {dimension_numbers = #tpu.dot_dimension_numbers<[1], [0], [0], [1], [0, 0, 1, 1], [], []>} : vector<8x32xbf16>, vector<32x32xbf16>, vector<8x32xf32> -> vector<8x32xf32>
    %312 = arith.addf %236, %311 : vector<8x32xf32>
    %c0_131 = arith.constant 0 : index
    %c0_132 = arith.constant 0 : index
    %313 = vector.load %arg26[%c0_131, %c0_132] : memref<1x32xf32, #tpu.memory_space<vmem>>, vector<1x32xf32>
    %314 = vector.broadcast %313 : vector<1x32xf32> to vector<8x32xf32>
    %315 = arith.addf %312, %314 : vector<8x32xf32>
    %316 = arith.truncf %315 : vector<8x32xf32> to vector<8x32xbf16>
    %c0_133 = arith.constant 0 : index
    %c0_134 = arith.constant 0 : index
    %c0_135 = arith.constant 0 : index
    %317 = vector.load %arg27[%c0_133, %c0_134, %c0_135] : memref<1x8x32xbf16, #tpu.memory_space<vmem>>, vector<1x8x32xbf16>
    %318 = vector.shape_cast %317 : vector<1x8x32xbf16> to vector<8x32xbf16>
    %319 = vector.shape_cast %316 : vector<8x32xbf16> to vector<1x8x32xbf16>
    tpu.vector_store %arg27[%c0_133, %c0_134, %c0_135], %319 {strides = array<i32>} : memref<1x8x32xbf16, #tpu.memory_space<vmem>>, vector<1x8x32xbf16>,
    return
  }
  func.func @transform_0(%arg0: i32) -> (i32, i32, i32) {
    %c0_i32 = arith.constant 0 : i32
    %c0_i32_0 = arith.constant 0 : i32
    %c0_i32_1 = arith.constant 0 : i32
    return %arg0, %c0_i32, %c0_i32_0 : i32, i32, i32
  }
  func.func @transform_1(%arg0: i32) -> (i32, i32, i32) {
    %c0_i32 = arith.constant 0 : i32
    %c0_i32_0 = arith.constant 0 : i32
    %c0_i32_1 = arith.constant 0 : i32
    return %arg0, %c0_i32, %c0_i32_0 : i32, i32, i32
  }
  func.func @transform_2(%arg0: i32) -> (i32, i32) {
    %c0_i32 = arith.constant 0 : i32
    %c0_i32_0 = arith.constant 0 : i32
    %c0_i32_1 = arith.constant 0 : i32
    return %c0_i32, %c0_i32_0 : i32, i32
  }
  func.func @transform_3(%arg0: i32) -> (i32, i32) {
    %c0_i32 = arith.constant 0 : i32
    %c0_i32_0 = arith.constant 0 : i32
    %c0_i32_1 = arith.constant 0 : i32
    return %c0_i32, %c0_i32_0 : i32, i32
  }
  func.func @transform_4(%arg0: i32) -> (i32, i32) {
    %c0_i32 = arith.constant 0 : i32
    %c0_i32_0 = arith.constant 0 : i32
    %c0_i32_1 = arith.constant 0 : i32
    return %c0_i32, %c0_i32_0 : i32, i32
  }
  func.func @transform_5(%arg0: i32) -> (i32, i32) {
    %c0_i32 = arith.constant 0 : i32
    %c0_i32_0 = arith.constant 0 : i32
    %c0_i32_1 = arith.constant 0 : i32
    return %c0_i32, %c0_i32_0 : i32, i32
  }
  func.func @transform_6(%arg0: i32) -> (i32, i32) {
    %c0_i32 = arith.constant 0 : i32
    %c0_i32_0 = arith.constant 0 : i32
    %c0_i32_1 = arith.constant 0 : i32
    return %c0_i32, %c0_i32_0 : i32, i32
  }
  func.func @transform_7(%arg0: i32) -> (i32, i32) {
    %c0_i32 = arith.constant 0 : i32
    %c0_i32_0 = arith.constant 0 : i32
    %c0_i32_1 = arith.constant 0 : i32
    return %c0_i32, %c0_i32_0 : i32, i32
  }
  func.func @transform_8(%arg0: i32) -> (i32, i32) {
    %c0_i32 = arith.constant 0 : i32
    %c0_i32_0 = arith.constant 0 : i32
    %c0_i32_1 = arith.constant 0 : i32
    return %c0_i32, %c0_i32_0 : i32, i32
  }
  func.func @transform_9(%arg0: i32) -> (i32, i32) {
    %c0_i32 = arith.constant 0 : i32
    %c0_i32_0 = arith.constant 0 : i32
    %c0_i32_1 = arith.constant 0 : i32
    return %c0_i32, %c0_i32_0 : i32, i32
  }
  func.func @transform_10(%arg0: i32) -> (i32, i32) {
    %c0_i32 = arith.constant 0 : i32
    %c0_i32_0 = arith.constant 0 : i32
    %c0_i32_1 = arith.constant 0 : i32
    return %c0_i32, %c0_i32_0 : i32, i32
  }
  func.func @transform_11(%arg0: i32) -> (i32, i32) {
    %c0_i32 = arith.constant 0 : i32
    %c0_i32_0 = arith.constant 0 : i32
    %c0_i32_1 = arith.constant 0 : i32
    return %c0_i32, %c0_i32_0 : i32, i32
  }
  func.func @transform_12(%arg0: i32) -> (i32, i32) {
    %c0_i32 = arith.constant 0 : i32
    %c0_i32_0 = arith.constant 0 : i32
    %c0_i32_1 = arith.constant 0 : i32
    return %c0_i32, %c0_i32_0 : i32, i32
  }
  func.func @transform_13(%arg0: i32) -> (i32, i32) {
    %c0_i32 = arith.constant 0 : i32
    %c0_i32_0 = arith.constant 0 : i32
    %c0_i32_1 = arith.constant 0 : i32
    return %c0_i32, %c0_i32_0 : i32, i32
  }
  func.func @transform_14(%arg0: i32) -> (i32, i32) {
    %c0_i32 = arith.constant 0 : i32
    %c0_i32_0 = arith.constant 0 : i32
    %c0_i32_1 = arith.constant 0 : i32
    return %c0_i32, %c0_i32_0 : i32, i32
  }
  func.func @transform_15(%arg0: i32) -> (i32, i32) {
    %c0_i32 = arith.constant 0 : i32
    %c0_i32_0 = arith.constant 0 : i32
    %c0_i32_1 = arith.constant 0 : i32
    return %c0_i32, %c0_i32_0 : i32, i32
  }
  func.func @transform_16(%arg0: i32) -> (i32, i32) {
    %c0_i32 = arith.constant 0 : i32
    %c0_i32_0 = arith.constant 0 : i32
    %c0_i32_1 = arith.constant 0 : i32
    return %c0_i32, %c0_i32_0 : i32, i32
  }
  func.func @transform_17(%arg0: i32) -> (i32, i32) {
    %c0_i32 = arith.constant 0 : i32
    %c0_i32_0 = arith.constant 0 : i32
    %c0_i32_1 = arith.constant 0 : i32
    return %c0_i32, %c0_i32_0 : i32, i32
  }
  func.func @transform_18(%arg0: i32) -> (i32, i32) {
    %c0_i32 = arith.constant 0 : i32
    %c0_i32_0 = arith.constant 0 : i32
    %c0_i32_1 = arith.constant 0 : i32
    return %c0_i32, %c0_i32_0 : i32, i32
  }
  func.func @transform_19(%arg0: i32) -> (i32, i32) {
    %c0_i32 = arith.constant 0 : i32
    %c0_i32_0 = arith.constant 0 : i32
    %c0_i32_1 = arith.constant 0 : i32
    return %c0_i32, %c0_i32_0 : i32, i32
  }
  func.func @transform_20(%arg0: i32) -> (i32, i32) {
    %c0_i32 = arith.constant 0 : i32
    %c0_i32_0 = arith.constant 0 : i32
    %c0_i32_1 = arith.constant 0 : i32
    return %c0_i32, %c0_i32_0 : i32, i32
  }
  func.func @transform_21(%arg0: i32) -> (i32, i32) {
    %c0_i32 = arith.constant 0 : i32
    %c0_i32_0 = arith.constant 0 : i32
    %c0_i32_1 = arith.constant 0 : i32
    return %c0_i32, %c0_i32_0 : i32, i32
  }
  func.func @transform_22(%arg0: i32) -> (i32, i32) {
    %c0_i32 = arith.constant 0 : i32
    %c0_i32_0 = arith.constant 0 : i32
    %c0_i32_1 = arith.constant 0 : i32
    return %c0_i32, %c0_i32_0 : i32, i32
  }
  func.func @transform_23(%arg0: i32) -> (i32, i32) {
    %c0_i32 = arith.constant 0 : i32
    %c0_i32_0 = arith.constant 0 : i32
    %c0_i32_1 = arith.constant 0 : i32
    return %c0_i32, %c0_i32_0 : i32, i32
  }
  func.func @transform_24(%arg0: i32) -> (i32, i32) {
    %c0_i32 = arith.constant 0 : i32
    %c0_i32_0 = arith.constant 0 : i32
    %c0_i32_1 = arith.constant 0 : i32
    return %c0_i32, %c0_i32_0 : i32, i32
  }
  func.func @transform_25(%arg0: i32) -> (i32, i32) {
    %c0_i32 = arith.constant 0 : i32
    %c0_i32_0 = arith.constant 0 : i32
    %c0_i32_1 = arith.constant 0 : i32
    return %c0_i32, %c0_i32_0 : i32, i32
  }
  func.func @transform_26(%arg0: i32) -> (i32, i32, i32) {
    %c0_i32 = arith.constant 0 : i32
    %c0_i32_0 = arith.constant 0 : i32
    %c0_i32_1 = arith.constant 0 : i32
    return %arg0, %c0_i32, %c0_i32_0 : i32, i32, i32
  }
}

</mosaic_0001>

<llo_original>
// kernel: dual_stream_forward.7
$region0: #{dual_stream_forward.7}
  #allocation0 [shape = 'u32[]', space=smem, size = 0x4, offset = 0x4, fixed_abs, tag = 'smem constant byte address 0x4 - core index']
  #allocation1 [shape = 'u32[144,128]{1,0:T(1,128)}', space=vmem, size = 0x12000, scoped, tag = 'internal scratch']
  %s0 = inlined_call_operand.vmem [shape: f32[2,8,32], index: 0, kind: input, shape index: {}]
  %s1 = inlined_call_operand.vmem [shape: f32[8,32], index: 1, kind: input, shape index: {}]
  %s2 = inlined_call_operand.vmem [shape: f32[1,32], index: 2, kind: input, shape index: {}]
  %s3 = inlined_call_operand.vmem [shape: f32[1,32], index: 3, kind: input, shape index: {}]
  %s4 = inlined_call_operand.vmem [shape: bf16[2,8,32], index: 4, kind: output, shape index: {}]
  %s5 = sld [smem:[#allocation0]]
  $region49: #{dual_stream_forward.7} parent=0
    _
  %s7 = ssub.s32 1, %s5
  %s8 = scalar_select 0, %s7, %s5
  loop: start=0, step=1, limit=4
  $region2: #{dual_stream_forward.7} parent=0 // loop_pre_header
    _
  $region3: #{dual_stream_forward.7} parent=0 // loop_header
    %s10 = sphi 0, %s14
    %p11 = scmp.ge.s32.totalorder %s10, 4
    %s20 = sphi 0, %s22
    %s23 = sphi 0, %s20
    %s24 = sphi 0, %s23
    %s40 = sphi 0, %s24
    %s44 = sphi 0, %s44
    %s46 = sphi 0, %s44
    %s47 = sphi 0, %s46
    %s61 = sphi 0, %s47
    %s65 = sphi 0, %s65
    %s67 = sphi 0, %s65
    %s68 = sphi 0, %s67
    %s82 = sphi 0, %s68
    %s86 = sphi 0, %s86
    %s88 = sphi 0, %s86
    %s89 = sphi 0, %s88
    %s103 = sphi 0, %s89
    %s109 = sphi 0, %s111
    %s112 = sphi 0, %s109
    %s113 = sphi 0, %s112
    %s129 = sphi 0, %s113
  $region4: #{dual_stream_forward.7} parent=0 // loop_header_branch
    %13 = sbr.rel (%p11) target = $region8
  $region5: #{dual_stream_forward.7} parent=0 // loop_body
    %s15 = ssub.s32 %s10, 1
    %s16 = ssub.s32 %s10, 2
    %s17 = sadd.s32 %s10, 1
    %s18 = ssub.s32 %s10, %s17
    %p19 = scmp.eq.s32.totalorder %s18, 0
    %s21 = sadd.s32 %s20, 1
    %s22 = scalar_select %p19, %s20, %s21
    %p25 = pneg %p19
    %p26 = scmp.eq.s32.totalorder %s10, 1
    %p27 = por %p25, %p26
    %p28 = scmp.ne.s32.totalorder %s20, %s23
    %p29 = scmp.eq.s32.totalorder %s10, 0
    %p30 = por %p28, %p29
    %p31 = scmp.ne.s32.totalorder %s20, %s23
    %p32 = scmp.eq.s32.totalorder %s15, 1
    %p33 = por %p31, %p32
    %p34 = scmp.ne.s32.totalorder %s23, %s24
    %p35 = scmp.eq.s32.totalorder %s15, 0
    %p36 = por %p34, %p35
    %p37 = scmp.ne.s32.totalorder %s23, %s24
    %p38 = scmp.eq.s32.totalorder %s16, 1
    %p39 = por %p37, %p38
    %p41 = scmp.ne.s32.totalorder %s24, %s40
    %p42 = scmp.eq.s32.totalorder %s16, 0
    %p43 = por %p41, %p42
    %s45 = sadd.s32 %s44, 1
    %p48 = scmp.eq.s32.totalorder %s10, 1
    %p49 = scmp.ne.s32.totalorder %s44, %s46
    %p50 = scmp.eq.s32.totalorder %s10, 0
    %p51 = por %p49, %p50
    %p52 = scmp.ne.s32.totalorder %s44, %s46
    %p53 = scmp.eq.s32.totalorder %s15, 1
    %p54 = por %p52, %p53
    %p55 = scmp.ne.s32.totalorder %s46, %s47
    %p56 = scmp.eq.s32.totalorder %s15, 0
    %p57 = por %p55, %p56
    %p58 = scmp.ne.s32.totalorder %s46, %s47
    %p59 = scmp.eq.s32.totalorder %s16, 1
    %p60 = por %p58, %p59
    %p62 = scmp.ne.s32.totalorder %s47, %s61
    %p63 = scmp.eq.s32.totalorder %s16, 0
    %p64 = por %p62, %p63
    %s66 = sadd.s32 %s65, 1
    %p69 = scmp.eq.s32.totalorder %s10, 1
    %p70 = scmp.ne.s32.totalorder %s65, %s67
    %p71 = scmp.eq.s32.totalorder %s10, 0
    %p72 = por %p70, %p71
    %p73 = scmp.ne.s32.totalorder %s65, %s67
    %p74 = scmp.eq.s32.totalorder %s15, 1
    %p75 = por %p73, %p74
    %p76 = scmp.ne.s32.totalorder %s67, %s68
    %p77 = scmp.eq.s32.totalorder %s15, 0
    %p78 = por %p76, %p77
    %p79 = scmp.ne.s32.totalorder %s67, %s68
    %p80 = scmp.eq.s32.totalorder %s16, 1
    %p81 = por %p79, %p80
    %p83 = scmp.ne.s32.totalorder %s68, %s82
    %p84 = scmp.eq.s32.totalorder %s16, 0
    %p85 = por %p83, %p84
    %s87 = sadd.s32 %s86, 1
    %p90 = scmp.eq.s32.totalorder %s10, 1
    %p91 = scmp.ne.s32.totalorder %s86, %s88
    %p92 = scmp.eq.s32.totalorder %s10, 0
    %p93 = por %p91, %p92
    %p94 = scmp.ne.s32.totalorder %s86, %s88
    %p95 = scmp.eq.s32.totalorder %s15, 1
    %p96 = por %p94, %p95
    %p97 = scmp.ne.s32.totalorder %s88, %s89
    %p98 = scmp.eq.s32.totalorder %s15, 0
    %p99 = por %p97, %p98
    %p100 = scmp.ne.s32.totalorder %s88, %s89
    %p101 = scmp.eq.s32.totalorder %s16, 1
    %p102 = por %p100, %p101
    %p104 = scmp.ne.s32.totalorder %s89, %s103
    %p105 = scmp.eq.s32.totalorder %s16, 0
    %p106 = por %p104, %p105
    %s107 = ssub.s32 %s10, %s17
    %p108 = scmp.eq.s32.totalorder %s107, 0
    %s110 = sadd.s32 %s109, 1
    %s111 = scalar_select %p108, %s109, %s110
    %p114 = pneg %p108
    %p115 = scmp.eq.s32.totalorder %s10, 1
    %p116 = por %p114, %p115
    %p117 = scmp.ne.s32.totalorder %s109, %s112
    %p118 = scmp.eq.s32.totalorder %s10, 0
    %p119 = por %p117, %p118
    %p120 = scmp.ne.s32.totalorder %s109, %s112
    %p121 = scmp.eq.s32.totalorder %s15, 1
    %p122 = por %p120, %p121
    %p123 = scmp.ne.s32.totalorder %s112, %s113
    %p124 = scmp.eq.s32.totalorder %s15, 0
    %p125 = por %p123, %p124
    %p126 = scmp.ne.s32.totalorder %s112, %s113
    %p127 = scmp.eq.s32.totalorder %s16, 1
    %p128 = por %p126, %p127
    %p130 = scmp.ne.s32.totalorder %s113, %s129
    %p131 = scmp.eq.s32.totalorder %s16, 0
    %p132 = por %p130, %p131
    %p133 = scmp.le.s32.totalorder 1, %s10
    %p134 = scmp.lt.s32.totalorder %s10, 3
    %p135 = pnand %p133, %p134
    %p136 = pneg %p135
    // Predicated region
    $region9: #{dual_stream_forward.7} parent=5 // pred_check
      _
    $region10: #{dual_stream_forward.7} parent=5 // pred_check_branch
      %138 = sbr.rel (%p135) target = $region12
    $region11: #{dual_stream_forward.7} parent=5 // pred_region
      %s139 = ssub.s32 %s10, 1
      // Predicated region
      $region13: #{dual_stream_forward.7} parent=11 // pred_check
        %p140 = pneg %p57
      $region14: #{dual_stream_forward.7} parent=11 // pred_check_branch
        %142 = sbr.rel (%p140) target = $region16
      $region15: #{dual_stream_forward.7} parent=11 // pred_region
        _
      $region16: #{dual_stream_forward.7} parent=11 // pred_fallthru
        _
      // Predicated region
      $region17: #{dual_stream_forward.7} parent=11 // pred_check
        %p143 = pneg %p78
      $region18: #{dual_stream_forward.7} parent=11 // pred_check_branch
        %145 = sbr.rel (%p143) target = $region20
      $region19: #{dual_stream_forward.7} parent=11 // pred_region
        _
      $region20: #{dual_stream_forward.7} parent=11 // pred_fallthru
        _
      // Predicated region
      $region21: #{dual_stream_forward.7} parent=11 // pred_check
        %p146 = pneg %p99
      $region22: #{dual_stream_forward.7} parent=11 // pred_check_branch
        %148 = sbr.rel (%p146) target = $region24
      $region23: #{dual_stream_forward.7} parent=11 // pred_region
        _
      $region24: #{dual_stream_forward.7} parent=11 // pred_fallthru
        _
    $region12: #{dual_stream_forward.7} parent=5 // pred_fallthru
      _
    %p149 = scmp.lt.s32.totalorder %s10, 2
    // Predicated region
    $region25: #{dual_stream_forward.7} parent=5 // pred_check
      %p150 = pneg %p149
    $region26: #{dual_stream_forward.7} parent=5 // pred_check_branch
      %152 = sbr.rel (%p150) target = $region28
    $region27: #{dual_stream_forward.7} parent=5 // pred_region
      // Predicated region
      $region29: #{dual_stream_forward.7} parent=27 // pred_check
        %p153 = pneg %p30
      $region30: #{dual_stream_forward.7} parent=27 // pred_check_branch
        %155 = sbr.rel (%p153) target = $region32
      $region31: #{dual_stream_forward.7} parent=27 // pred_region
        %p156 = scmp.lt.s32.totalorder %s10, 1
        %s157 = scalar_select %p156, %s10, 1
        %s158 = smul.addr %s157, 8
        %s159 = scalar_lea.vmem %s0, %s158
      $region32: #{dual_stream_forward.7} parent=27 // pred_fallthru
        _
    $region28: #{dual_stream_forward.7} parent=5 // pred_fallthru
      _
    %p160 = scmp.le.s32.totalorder 1, %s10
    %p161 = scmp.lt.s32.totalorder %s10, 3
    %p162 = pnand %p160, %p161
    %p163 = pneg %p162
    // Predicated region
    $region33: #{dual_stream_forward.7} parent=5 // pred_check
      _
    $region34: #{dual_stream_forward.7} parent=5 // pred_check_branch
      %165 = sbr.rel (%p162) target = $region36
    $region35: #{dual_stream_forward.7} parent=5 // pred_region
      %s166 = ssub.s32 %s10, 1
      %p167 = scmp.lt.s32.totalorder %s15, 1
      %s168 = scalar_select %p167, %s15, 1
      %s169 = smul.addr %s168, 8
      %s170 = scalar_lea.vmem %s0, %s169
      %p171 = pneg %p36
      %p172 = pneg %p33
      %p173 = pneg %p57
      %p174 = pneg %p54
      %p175 = pneg %p78
      %p176 = pneg %p75
      %p177 = pneg %p99
      %p178 = pneg %p96
      %p179 = pneg %p125
      %p180 = pneg %p122
      %p181 = scmp.lt.s32.totalorder %s15, 1
      %s182 = scalar_select %p181, %s15, 1
      %s183 = smul.addr %s182, 4
      %s184 = scalar_lea.vmem %s4, %s183
      %p185 = scmp.lt.s32.totalorder %s15, 1
      %s186 = scalar_select %p185, %s15, 1
      %s187 = smul.addr %s186, 8
      %s188 = scalar_lea.vmem %s0, %s187
      %p189 = scmp.lt.s32.totalorder %s15, 1
      %s190 = scalar_select %p189, %s15, 1
      %s191 = smul.addr %s190, 4
      %s192 = scalar_lea.vmem %s4, %s191
      %v193 = vld [vmem:[%s188] sm:$0xff]
      %v194 = vmul.f32 %v193, 5.656854
      %v195 = vld [vmem:[%s1] sm:$0xff]
      %v196 = vadd.f32 %v194, %v195
      %v197 = vld [vmem:[%s2] sm:$0x1]
      %v198 = vld [vmem:[%s3] sm:$0x1]
      %vm199 = vcmask 261120
      %v200 = vsel %vm199, %v196, 0.0
      %201 = vadd.xlane.f32.xlu0 %v200
      %v202 = vpop.xlane.xlu0 %201
      %v203 = vrcp.pop 32.0
      %v204 = vmul.f32 %v202, %v203
      %v205 = vsub.f32 %v196, %v204
      %v206 = vmul.f32 %v205, %v205
      %v207 = vsel %vm199, %v206, 0.0
      %208 = vadd.xlane.f32.xlu0 %v207
      %v209 = vpop.xlane.xlu0 %208
      %v210 = vmul.f32 %v209, %v203
      %v211 = vadd.f32 %v210, 1e-05
      %v212 = vrsqrt.pop %v211
      %v213 = vmul.f32 %v205, %v212
      %v215 = vlaneseq
      %v216 = vshrl.u32 %v215, 7
      %v217 = vsub.s32 0, %v216
      %v218 = vrot.slane %v197, %v217
      %v220 = vmul.f32 %v213, %v218
      %v222 = vlaneseq
      %v223 = vshrl.u32 %v222, 7
      %v224 = vsub.s32 0, %v223
      %v225 = vrot.slane %v198, %v224
      %v227 = vadd.f32 %v220, %v225
      %v228 = vpack.c.bf16 %v227, %v227
      %vm229 = vcmask 257024
      %230 = vst.msk [vmem:[%s192] sm:$0xf] %vm229, %v228
      %p231 = scmp.lt.s32.totalorder %s15, 1
      %s232 = scalar_select %p231, %s15, 1
      %s233 = smul.addr %s232, 4
      %s234 = scalar_lea.vmem %s4, %s233
      // Predicated region
      $region37: #{dual_stream_forward.7} parent=35 // pred_check
        %p235 = pneg %p122
      $region38: #{dual_stream_forward.7} parent=35 // pred_check_branch
        %237 = sbr.rel (%p235) target = $region40
      $region39: #{dual_stream_forward.7} parent=35 // pred_region
        _
      $region40: #{dual_stream_forward.7} parent=35 // pred_fallthru
        _
    $region36: #{dual_stream_forward.7} parent=5 // pred_fallthru
      _
    %p238 = scmp.le.s32.totalorder 2, %s10
    // Predicated region
    $region41: #{dual_stream_forward.7} parent=5 // pred_check
      %p239 = pneg %p238
    $region42: #{dual_stream_forward.7} parent=5 // pred_check_branch
      %241 = sbr.rel (%p239) target = $region44
    $region43: #{dual_stream_forward.7} parent=5 // pred_region
      %s242 = ssub.s32 %s10, 2
      // Predicated region
      $region45: #{dual_stream_forward.7} parent=43 // pred_check
        %p243 = pneg %p128
      $region46: #{dual_stream_forward.7} parent=43 // pred_check_branch
        %245 = sbr.rel (%p243) target = $region48
      $region47: #{dual_stream_forward.7} parent=43 // pred_region
        %p246 = scmp.lt.s32.totalorder %s16, 1
        %s247 = scalar_select %p246, %s16, 1
        %s248 = smul.addr %s247, 4
        %s249 = scalar_lea.vmem %s4, %s248
      $region48: #{dual_stream_forward.7} parent=43 // pred_fallthru
        _
    $region44: #{dual_stream_forward.7} parent=5 // pred_fallthru
      _
  $region6: #{dual_stream_forward.7} parent=0 // loop_footer
    %s14 = sadd.s32 1, %s10
  $region7: #{dual_stream_forward.7} parent=0 // loop_footer_branch
    %9 = sbr.rel target = $region3
  $region8: #{dual_stream_forward.7} parent=0 // loop_exit
    _

// kernel: dual_stream_forward.8
$region0: #{dual_stream_forward.8}
  #allocation0 [shape = 'u32[]', space=smem, size = 0x4, offset = 0x4, fixed_abs, tag = 'smem constant byte address 0x4 - core index']
  #allocation1 [shape = 'u32[144,128]{1,0:T(1,128)}', space=vmem, size = 0x12000, scoped, tag = 'internal scratch']
  %s0 = inlined_call_operand.vmem [shape: f32[2,16], index: 0, kind: input, shape index: {}]
  %s1 = inlined_call_operand.vmem [shape: bf16[16,32], index: 1, kind: input, shape index: {}]
  %s2 = inlined_call_operand.vmem [shape: f32[1,32], index: 2, kind: input, shape index: {}]
  %s3 = inlined_call_operand.vmem [shape: bf16[2,32], index: 3, kind: output, shape index: {}]
  %s4 = sld [smem:[#allocation0]]
  $region22: #{dual_stream_forward.8} parent=0
    _
  %s6 = ssub.s32 1, %s4
  %s7 = scalar_select 0, %s6, %s4
  // Predicated region
  $region2: #{dual_stream_forward.8} parent=0 // pred_check
    _
  $region3: #{dual_stream_forward.8} parent=0 // pred_check_branch
    %9 = sbr.rel (0) target = $region5
  $region4: #{dual_stream_forward.8} parent=0 // pred_region
    _
  $region5: #{dual_stream_forward.8} parent=0 // pred_fallthru
    _
  // Predicated region
  $region6: #{dual_stream_forward.8} parent=0 // pred_check
    _
  $region7: #{dual_stream_forward.8} parent=0 // pred_check_branch
    %11 = sbr.rel (0) target = $region9
  $region8: #{dual_stream_forward.8} parent=0 // pred_region
    _
  $region9: #{dual_stream_forward.8} parent=0 // pred_fallthru
    _
  // Predicated region
  $region10: #{dual_stream_forward.8} parent=0 // pred_check
    _
  $region11: #{dual_stream_forward.8} parent=0 // pred_check_branch
    %13 = sbr.rel (0) target = $region13
  $region12: #{dual_stream_forward.8} parent=0 // pred_region
    _
  $region13: #{dual_stream_forward.8} parent=0 // pred_fallthru
    _
  %v15 = vld [vmem:[%s0] sm:$0x3]
  %v16 = vld [vmem:[%s1] sm:$0xf]
  %v17 = vld [vmem:[%s1 + $0x4] sm:$0xf]
  %v18 = vpack.c.bf16 %v15, %v15
  %v19 = vld [vmem:[%s2] sm:$0x1]
  %v21 = vlaneseq
  %v22 = vshrl.u32 %v21, 7
  %v23 = vsub.s32 0, %v22
  %v24 = vrot.slane %v19, %v23
  %v28 = vunpack.c.l.b16 %v16
  %v29 = vunpack.c.l.b16 %v17
  %v30 = vpack.c.b16 %v29, %v28
  %vm32 = vcmask 130048
  %v34 = vsel %vm32, %v18, 0
  %36 = vmatprep.subr.bf16.mxu0 0
  %37 = vmatpush1.bf16.msra.mxu0 %v30
  %38 = vmatprep.subr.bf16.mxu0 0
  %39 = vmatpush1.bf16.msra.mxu0 0
  %40 = vmatprep.subr.bf16.mxu0 0
  %41 = vmatpush1.bf16.msra.mxu0 0
  %42 = vmatprep.subr.bf16.mxu0 0
  %43 = vmatpush1.bf16.msra.mxu0 0
  %44 = vmatprep.subr.bf16.mxu0 0
  %45 = vmatpush1.bf16.msra.mxu0 0
  %46 = vmatprep.subr.bf16.mxu0 0
  %47 = vmatpush1.bf16.msra.mxu0 0
  %48 = vmatprep.subr.bf16.mxu0 0
  %49 = vmatpush1.bf16.msra.mxu0 0
  %50 = vmatprep.subr.bf16.mxu0 0
  %51 = vmatpush1.bf16.msra.mxu0 0
  %52 = vmatprep.subr.bf16.mxu0 0
  %53 = vmatpush1.bf16.msra.mxu0 0
  %54 = vmatprep.subr.bf16.mxu0 0
  %55 = vmatpush1.bf16.msra.mxu0 0
  %56 = vmatprep.subr.bf16.mxu0 0
  %57 = vmatpush1.bf16.msra.mxu0 0
  %58 = vmatprep.subr.bf16.mxu0 0
  %59 = vmatpush1.bf16.msra.mxu0 0
  %60 = vmatprep.subr.bf16.mxu0 0
  %61 = vmatpush1.bf16.msra.mxu0 0
  %62 = vmatprep.subr.bf16.mxu0 0
  %63 = vmatpush1.bf16.msra.mxu0 0
  %64 = vmatprep.subr.bf16.mxu0 0
  %65 = vmatpush1.bf16.msra.mxu0 0
  %66 = vmatprep.subr.bf16.mxu0 0
  %67 = vmatpush1.bf16.msra.mxu0 0
  %68 = vmatprep.mubr.bf16.mxu0 0
  %69 = vmatmul.mubr.bf16.gmra.mrb[0].mxu0 %v34
  %v70 = vpop.f32.mrb[0].mxu0
  %v71 = vadd.f32 %v24, %v70
  %v72 = vpop.f32.mrb[0].mxu0
  %v73 = vpop.f32.mrb[0].mxu0
  %v74 = vpop.f32.mrb[0].mxu0
  %75 = vdwg.mxu0
  %v76 = vpack.c.bf16 %v71, %v71
  %vm77 = vcmask 253952
  %78 = vst.msk [vmem:[%s3] sm:$0x1] %vm77, %v76
  // Predicated region
  $region14: #{dual_stream_forward.8} parent=0 // pred_check
    _
  $region15: #{dual_stream_forward.8} parent=0 // pred_check_branch
    %80 = sbr.rel (0) target = $region17
  $region16: #{dual_stream_forward.8} parent=0 // pred_region
    _
  $region17: #{dual_stream_forward.8} parent=0 // pred_fallthru
    _
  // Predicated region
  $region18: #{dual_stream_forward.8} parent=0 // pred_check
    _
  $region19: #{dual_stream_forward.8} parent=0 // pred_check_branch
    %82 = sbr.rel (0) target = $region21
  $region20: #{dual_stream_forward.8} parent=0 // pred_region
    _
  $region21: #{dual_stream_forward.8} parent=0 // pred_fallthru
    _

// kernel: dual_stream_forward.9
$region0: #{dual_stream_forward.9}
  #allocation0 [shape = 'u32[]', space=smem, size = 0x4, offset = 0x4, fixed_abs, tag = 'smem constant byte address 0x4 - core index']
  #allocation1 [shape = 'u32[144,128]{1,0:T(1,128)}', space=vmem, size = 0x12000, scoped, tag = 'internal scratch']
  %s0 = inlined_call_operand.vmem [shape: bf16[2,1,32], index: 0, kind: input, shape index: {}]
  %s1 = inlined_call_operand.vmem [shape: bf16[32,32], index: 1, kind: input, shape index: {}]
  %s2 = inlined_call_operand.vmem [shape: f32[1,32], index: 2, kind: input, shape index: {}]
  %s3 = inlined_call_operand.vmem [shape: bf16[32,32], index: 3, kind: input, shape index: {}]
  %s4 = inlined_call_operand.vmem [shape: f32[1,32], index: 4, kind: input, shape index: {}]
  %s5 = inlined_call_operand.vmem [shape: f32[1,32], index: 5, kind: input, shape index: {}]
  %s6 = inlined_call_operand.vmem [shape: f32[1,32], index: 6, kind: input, shape index: {}]
  %s7 = inlined_call_operand.vmem [shape: bf16[32,32], index: 7, kind: input, shape index: {}]
  %s8 = inlined_call_operand.vmem [shape: f32[1,32], index: 8, kind: input, shape index: {}]
  %s9 = inlined_call_operand.vmem [shape: bf16[32,32], index: 9, kind: input, shape index: {}]
  %s10 = inlined_call_operand.vmem [shape: f32[1,32], index: 10, kind: input, shape index: {}]
  %s11 = inlined_call_operand.vmem [shape: f32[1,32], index: 11, kind: input, shape index: {}]
  %s12 = inlined_call_operand.vmem [shape: f32[1,32], index: 12, kind: input, shape index: {}]
  %s13 = inlined_call_operand.vmem [shape: bf16[2,1,32], index: 13, kind: output, shape index: {}]
  %s14 = sld [smem:[#allocation0]]
  $region85: #{dual_stream_forward.9} parent=0
    _
  %s16 = ssub.s32 1, %s14
  %s17 = scalar_select 0, %s16, %s14
  loop: start=0, step=1, limit=4
  $region2: #{dual_stream_forward.9} parent=0 // loop_pre_header
    _
  $region3: #{dual_stream_forward.9} parent=0 // loop_header
    %s19 = sphi 0, %s23
    %p20 = scmp.ge.s32.totalorder %s19, 4
    %s29 = sphi 0, %s31
    %s32 = sphi 0, %s29
    %s33 = sphi 0, %s32
    %s49 = sphi 0, %s33
    %s53 = sphi 0, %s53
    %s55 = sphi 0, %s53
    %s56 = sphi 0, %s55
    %s70 = sphi 0, %s56
    %s74 = sphi 0, %s74
    %s76 = sphi 0, %s74
    %s77 = sphi 0, %s76
    %s91 = sphi 0, %s77
    %s95 = sphi 0, %s95
    %s97 = sphi 0, %s95
    %s98 = sphi 0, %s97
    %s112 = sphi 0, %s98
    %s116 = sphi 0, %s116
    %s118 = sphi 0, %s116
    %s119 = sphi 0, %s118
    %s133 = sphi 0, %s119
    %s137 = sphi 0, %s137
    %s139 = sphi 0, %s137
    %s140 = sphi 0, %s139
    %s154 = sphi 0, %s140
    %s158 = sphi 0, %s158
    %s160 = sphi 0, %s158
    %s161 = sphi 0, %s160
    %s175 = sphi 0, %s161
    %s179 = sphi 0, %s179
    %s181 = sphi 0, %s179
    %s182 = sphi 0, %s181
    %s196 = sphi 0, %s182
    %s200 = sphi 0, %s200
    %s202 = sphi 0, %s200
    %s203 = sphi 0, %s202
    %s217 = sphi 0, %s203
    %s221 = sphi 0, %s221
    %s223 = sphi 0, %s221
    %s224 = sphi 0, %s223
    %s238 = sphi 0, %s224
    %s242 = sphi 0, %s242
    %s244 = sphi 0, %s242
    %s245 = sphi 0, %s244
    %s259 = sphi 0, %s245
    %s263 = sphi 0, %s263
    %s265 = sphi 0, %s263
    %s266 = sphi 0, %s265
    %s280 = sphi 0, %s266
    %s284 = sphi 0, %s284
    %s286 = sphi 0, %s284
    %s287 = sphi 0, %s286
    %s301 = sphi 0, %s287
    %s307 = sphi 0, %s309
    %s310 = sphi 0, %s307
    %s311 = sphi 0, %s310
    %s327 = sphi 0, %s311
  $region4: #{dual_stream_forward.9} parent=0 // loop_header_branch
    %22 = sbr.rel (%p20) target = $region8
  $region5: #{dual_stream_forward.9} parent=0 // loop_body
    %s24 = ssub.s32 %s19, 1
    %s25 = ssub.s32 %s19, 2
    %s26 = sadd.s32 %s19, 1
    %s27 = ssub.s32 %s19, %s26
    %p28 = scmp.eq.s32.totalorder %s27, 0
    %s30 = sadd.s32 %s29, 1
    %s31 = scalar_select %p28, %s29, %s30
    %p34 = pneg %p28
    %p35 = scmp.eq.s32.totalorder %s19, 1
    %p36 = por %p34, %p35
    %p37 = scmp.ne.s32.totalorder %s29, %s32
    %p38 = scmp.eq.s32.totalorder %s19, 0
    %p39 = por %p37, %p38
    %p40 = scmp.ne.s32.totalorder %s29, %s32
    %p41 = scmp.eq.s32.totalorder %s24, 1
    %p42 = por %p40, %p41
    %p43 = scmp.ne.s32.totalorder %s32, %s33
    %p44 = scmp.eq.s32.totalorder %s24, 0
    %p45 = por %p43, %p44
    %p46 = scmp.ne.s32.totalorder %s32, %s33
    %p47 = scmp.eq.s32.totalorder %s25, 1
    %p48 = por %p46, %p47
    %p50 = scmp.ne.s32.totalorder %s33, %s49
    %p51 = scmp.eq.s32.totalorder %s25, 0
    %p52 = por %p50, %p51
    %s54 = sadd.s32 %s53, 1
    %p57 = scmp.eq.s32.totalorder %s19, 1
    %p58 = scmp.ne.s32.totalorder %s53, %s55
    %p59 = scmp.eq.s32.totalorder %s19, 0
    %p60 = por %p58, %p59
    %p61 = scmp.ne.s32.totalorder %s53, %s55
    %p62 = scmp.eq.s32.totalorder %s24, 1
    %p63 = por %p61, %p62
    %p64 = scmp.ne.s32.totalorder %s55, %s56
    %p65 = scmp.eq.s32.totalorder %s24, 0
    %p66 = por %p64, %p65
    %p67 = scmp.ne.s32.totalorder %s55, %s56
    %p68 = scmp.eq.s32.totalorder %s25, 1
    %p69 = por %p67, %p68
    %p71 = scmp.ne.s32.totalorder %s56, %s70
    %p72 = scmp.eq.s32.totalorder %s25, 0
    %p73 = por %p71, %p72
    %s75 = sadd.s32 %s74, 1
    %p78 = scmp.eq.s32.totalorder %s19, 1
    %p79 = scmp.ne.s32.totalorder %s74, %s76
    %p80 = scmp.eq.s32.totalorder %s19, 0
    %p81 = por %p79, %p80
    %p82 = scmp.ne.s32.totalorder %s74, %s76
    %p83 = scmp.eq.s32.totalorder %s24, 1
    %p84 = por %p82, %p83
    %p85 = scmp.ne.s32.totalorder %s76, %s77
    %p86 = scmp.eq.s32.totalorder %s24, 0
    %p87 = por %p85, %p86
    %p88 = scmp.ne.s32.totalorder %s76, %s77
    %p89 = scmp.eq.s32.totalorder %s25, 1
    %p90 = por %p88, %p89
    %p92 = scmp.ne.s32.totalorder %s77, %s91
    %p93 = scmp.eq.s32.totalorder %s25, 0
    %p94 = por %p92, %p93
    %s96 = sadd.s32 %s95, 1
    %p99 = scmp.eq.s32.totalorder %s19, 1
    %p100 = scmp.ne.s32.totalorder %s95, %s97
    %p101 = scmp.eq.s32.totalorder %s19, 0
    %p102 = por %p100, %p101
    %p103 = scmp.ne.s32.totalorder %s95, %s97
    %p104 = scmp.eq.s32.totalorder %s24, 1
    %p105 = por %p103, %p104
    %p106 = scmp.ne.s32.totalorder %s97, %s98
    %p107 = scmp.eq.s32.totalorder %s24, 0
    %p108 = por %p106, %p107
    %p109 = scmp.ne.s32.totalorder %s97, %s98
    %p110 = scmp.eq.s32.totalorder %s25, 1
    %p111 = por %p109, %p110
    %p113 = scmp.ne.s32.totalorder %s98, %s112
    %p114 = scmp.eq.s32.totalorder %s25, 0
    %p115 = por %p113, %p114
    %s117 = sadd.s32 %s116, 1
    %p120 = scmp.eq.s32.totalorder %s19, 1
    %p121 = scmp.ne.s32.totalorder %s116, %s118
    %p122 = scmp.eq.s32.totalorder %s19, 0
    %p123 = por %p121, %p122
    %p124 = scmp.ne.s32.totalorder %s116, %s118
    %p125 = scmp.eq.s32.totalorder %s24, 1
    %p126 = por %p124, %p125
    %p127 = scmp.ne.s32.totalorder %s118, %s119
    %p128 = scmp.eq.s32.totalorder %s24, 0
    %p129 = por %p127, %p128
    %p130 = scmp.ne.s32.totalorder %s118, %s119
    %p131 = scmp.eq.s32.totalorder %s25, 1
    %p132 = por %p130, %p131
    %p134 = scmp.ne.s32.totalorder %s119, %s133
    %p135 = scmp.eq.s32.totalorder %s25, 0
    %p136 = por %p134, %p135
    %s138 = sadd.s32 %s137, 1
    %p141 = scmp.eq.s32.totalorder %s19, 1
    %p142 = scmp.ne.s32.totalorder %s137, %s139
    %p143 = scmp.eq.s32.totalorder %s19, 0
    %p144 = por %p142, %p143
    %p145 = scmp.ne.s32.totalorder %s137, %s139
    %p146 = scmp.eq.s32.totalorder %s24, 1
    %p147 = por %p145, %p146
    %p148 = scmp.ne.s32.totalorder %s139, %s140
    %p149 = scmp.eq.s32.totalorder %s24, 0
    %p150 = por %p148, %p149
    %p151 = scmp.ne.s32.totalorder %s139, %s140
    %p152 = scmp.eq.s32.totalorder %s25, 1
    %p153 = por %p151, %p152
    %p155 = scmp.ne.s32.totalorder %s140, %s154
    %p156 = scmp.eq.s32.totalorder %s25, 0
    %p157 = por %p155, %p156
    %s159 = sadd.s32 %s158, 1
    %p162 = scmp.eq.s32.totalorder %s19, 1
    %p163 = scmp.ne.s32.totalorder %s158, %s160
    %p164 = scmp.eq.s32.totalorder %s19, 0
    %p165 = por %p163, %p164
    %p166 = scmp.ne.s32.totalorder %s158, %s160
    %p167 = scmp.eq.s32.totalorder %s24, 1
    %p168 = por %p166, %p167
    %p169 = scmp.ne.s32.totalorder %s160, %s161
    %p170 = scmp.eq.s32.totalorder %s24, 0
    %p171 = por %p169, %p170
    %p172 = scmp.ne.s32.totalorder %s160, %s161
    %p173 = scmp.eq.s32.totalorder %s25, 1
    %p174 = por %p172, %p173
    %p176 = scmp.ne.s32.totalorder %s161, %s175
    %p177 = scmp.eq.s32.totalorder %s25, 0
    %p178 = por %p176, %p177
    %s180 = sadd.s32 %s179, 1
    %p183 = scmp.eq.s32.totalorder %s19, 1
    %p184 = scmp.ne.s32.totalorder %s179, %s181
    %p185 = scmp.eq.s32.totalorder %s19, 0
    %p186 = por %p184, %p185
    %p187 = scmp.ne.s32.totalorder %s179, %s181
    %p188 = scmp.eq.s32.totalorder %s24, 1
    %p189 = por %p187, %p188
    %p190 = scmp.ne.s32.totalorder %s181, %s182
    %p191 = scmp.eq.s32.totalorder %s24, 0
    %p192 = por %p190, %p191
    %p193 = scmp.ne.s32.totalorder %s181, %s182
    %p194 = scmp.eq.s32.totalorder %s25, 1
    %p195 = por %p193, %p194
    %p197 = scmp.ne.s32.totalorder %s182, %s196
    %p198 = scmp.eq.s32.totalorder %s25, 0
    %p199 = por %p197, %p198
    %s201 = sadd.s32 %s200, 1
    %p204 = scmp.eq.s32.totalorder %s19, 1
    %p205 = scmp.ne.s32.totalorder %s200, %s202
    %p206 = scmp.eq.s32.totalorder %s19, 0
    %p207 = por %p205, %p206
    %p208 = scmp.ne.s32.totalorder %s200, %s202
    %p209 = scmp.eq.s32.totalorder %s24, 1
    %p210 = por %p208, %p209
    %p211 = scmp.ne.s32.totalorder %s202, %s203
    %p212 = scmp.eq.s32.totalorder %s24, 0
    %p213 = por %p211, %p212
    %p214 = scmp.ne.s32.totalorder %s202, %s203
    %p215 = scmp.eq.s32.totalorder %s25, 1
    %p216 = por %p214, %p215
    %p218 = scmp.ne.s32.totalorder %s203, %s217
    %p219 = scmp.eq.s32.totalorder %s25, 0
    %p220 = por %p218, %p219
    %s222 = sadd.s32 %s221, 1
    %p225 = scmp.eq.s32.totalorder %s19, 1
    %p226 = scmp.ne.s32.totalorder %s221, %s223
    %p227 = scmp.eq.s32.totalorder %s19, 0
    %p228 = por %p226, %p227
    %p229 = scmp.ne.s32.totalorder %s221, %s223
    %p230 = scmp.eq.s32.totalorder %s24, 1
    %p231 = por %p229, %p230
    %p232 = scmp.ne.s32.totalorder %s223, %s224
    %p233 = scmp.eq.s32.totalorder %s24, 0
    %p234 = por %p232, %p233
    %p235 = scmp.ne.s32.totalorder %s223, %s224
    %p236 = scmp.eq.s32.totalorder %s25, 1
    %p237 = por %p235, %p236
    %p239 = scmp.ne.s32.totalorder %s224, %s238
    %p240 = scmp.eq.s32.totalorder %s25, 0
    %p241 = por %p239, %p240
    %s243 = sadd.s32 %s242, 1
    %p246 = scmp.eq.s32.totalorder %s19, 1
    %p247 = scmp.ne.s32.totalorder %s242, %s244
    %p248 = scmp.eq.s32.totalorder %s19, 0
    %p249 = por %p247, %p248
    %p250 = scmp.ne.s32.totalorder %s242, %s244
    %p251 = scmp.eq.s32.totalorder %s24, 1
    %p252 = por %p250, %p251
    %p253 = scmp.ne.s32.totalorder %s244, %s245
    %p254 = scmp.eq.s32.totalorder %s24, 0
    %p255 = por %p253, %p254
    %p256 = scmp.ne.s32.totalorder %s244, %s245
    %p257 = scmp.eq.s32.totalorder %s25, 1
    %p258 = por %p256, %p257
    %p260 = scmp.ne.s32.totalorder %s245, %s259
    %p261 = scmp.eq.s32.totalorder %s25, 0
    %p262 = por %p260, %p261
    %s264 = sadd.s32 %s263, 1
    %p267 = scmp.eq.s32.totalorder %s19, 1
    %p268 = scmp.ne.s32.totalorder %s263, %s265
    %p269 = scmp.eq.s32.totalorder %s19, 0
    %p270 = por %p268, %p269
    %p271 = scmp.ne.s32.totalorder %s263, %s265
    %p272 = scmp.eq.s32.totalorder %s24, 1
    %p273 = por %p271, %p272
    %p274 = scmp.ne.s32.totalorder %s265, %s266
    %p275 = scmp.eq.s32.totalorder %s24, 0
    %p276 = por %p274, %p275
    %p277 = scmp.ne.s32.totalorder %s265, %s266
    %p278 = scmp.eq.s32.totalorder %s25, 1
    %p279 = por %p277, %p278
    %p281 = scmp.ne.s32.totalorder %s266, %s280
    %p282 = scmp.eq.s32.totalorder %s25, 0
    %p283 = por %p281, %p282
    %s285 = sadd.s32 %s284, 1
    %p288 = scmp.eq.s32.totalorder %s19, 1
    %p289 = scmp.ne.s32.totalorder %s284, %s286
    %p290 = scmp.eq.s32.totalorder %s19, 0
    %p291 = por %p289, %p290
    %p292 = scmp.ne.s32.totalorder %s284, %s286
    %p293 = scmp.eq.s32.totalorder %s24, 1
    %p294 = por %p292, %p293
    %p295 = scmp.ne.s32.totalorder %s286, %s287
    %p296 = scmp.eq.s32.totalorder %s24, 0
    %p297 = por %p295, %p296
    %p298 = scmp.ne.s32.totalorder %s286, %s287
    %p299 = scmp.eq.s32.totalorder %s25, 1
    %p300 = por %p298, %p299
    %p302 = scmp.ne.s32.totalorder %s287, %s301
    %p303 = scmp.eq.s32.totalorder %s25, 0
    %p304 = por %p302, %p303
    %s305 = ssub.s32 %s19, %s26
    %p306 = scmp.eq.s32.totalorder %s305, 0
    %s308 = sadd.s32 %s307, 1
    %s309 = scalar_select %p306, %s307, %s308
    %p312 = pneg %p306
    %p313 = scmp.eq.s32.totalorder %s19, 1
    %p314 = por %p312, %p313
    %p315 = scmp.ne.s32.totalorder %s307, %s310
    %p316 = scmp.eq.s32.totalorder %s19, 0
    %p317 = por %p315, %p316
    %p318 = scmp.ne.s32.totalorder %s307, %s310
    %p319 = scmp.eq.s32.totalorder %s24, 1
    %p320 = por %p318, %p319
    %p321 = scmp.ne.s32.totalorder %s310, %s311
    %p322 = scmp.eq.s32.totalorder %s24, 0
    %p323 = por %p321, %p322
    %p324 = scmp.ne.s32.totalorder %s310, %s311
    %p325 = scmp.eq.s32.totalorder %s25, 1
    %p326 = por %p324, %p325
    %p328 = scmp.ne.s32.totalorder %s311, %s327
    %p329 = scmp.eq.s32.totalorder %s25, 0
    %p330 = por %p328, %p329
    %p331 = scmp.le.s32.totalorder 1, %s19
    %p332 = scmp.lt.s32.totalorder %s19, 3
    %p333 = pnand %p331, %p332
    %p334 = pneg %p333
    // Predicated region
    $region9: #{dual_stream_forward.9} parent=5 // pred_check
      _
    $region10: #{dual_stream_forward.9} parent=5 // pred_check_branch
      %336 = sbr.rel (%p333) target = $region12
    $region11: #{dual_stream_forward.9} parent=5 // pred_region
      %s337 = ssub.s32 %s19, 1
      // Predicated region
      $region13: #{dual_stream_forward.9} parent=11 // pred_check
        %p338 = pneg %p66
      $region14: #{dual_stream_forward.9} parent=11 // pred_check_branch
        %340 = sbr.rel (%p338) target = $region16
      $region15: #{dual_stream_forward.9} parent=11 // pred_region
        _
      $region16: #{dual_stream_forward.9} parent=11 // pred_fallthru
        _
      // Predicated region
      $region17: #{dual_stream_forward.9} parent=11 // pred_check
        %p341 = pneg %p87
      $region18: #{dual_stream_forward.9} parent=11 // pred_check_branch
        %343 = sbr.rel (%p341) target = $region20
      $region19: #{dual_stream_forward.9} parent=11 // pred_region
        _
      $region20: #{dual_stream_forward.9} parent=11 // pred_fallthru
        _
      // Predicated region
      $region21: #{dual_stream_forward.9} parent=11 // pred_check
        %p344 = pneg %p108
      $region22: #{dual_stream_forward.9} parent=11 // pred_check_branch
        %346 = sbr.rel (%p344) target = $region24
      $region23: #{dual_stream_forward.9} parent=11 // pred_region
        _
      $region24: #{dual_stream_forward.9} parent=11 // pred_fallthru
        _
      // Predicated region
      $region25: #{dual_stream_forward.9} parent=11 // pred_check
        %p347 = pneg %p129
      $region26: #{dual_stream_forward.9} parent=11 // pred_check_branch
        %349 = sbr.rel (%p347) target = $region28
      $region27: #{dual_stream_forward.9} parent=11 // pred_region
        _
      $region28: #{dual_stream_forward.9} parent=11 // pred_fallthru
        _
      // Predicated region
      $region29: #{dual_stream_forward.9} parent=11 // pred_check
        %p350 = pneg %p150
      $region30: #{dual_stream_forward.9} parent=11 // pred_check_branch
        %352 = sbr.rel (%p350) target = $region32
      $region31: #{dual_stream_forward.9} parent=11 // pred_region
        _
      $region32: #{dual_stream_forward.9} parent=11 // pred_fallthru
        _
      // Predicated region
      $region33: #{dual_stream_forward.9} parent=11 // pred_check
        %p353 = pneg %p171
      $region34: #{dual_stream_forward.9} parent=11 // pred_check_branch
        %355 = sbr.rel (%p353) target = $region36
      $region35: #{dual_stream_forward.9} parent=11 // pred_region
        _
      $region36: #{dual_stream_forward.9} parent=11 // pred_fallthru
        _
      // Predicated region
      $region37: #{dual_stream_forward.9} parent=11 // pred_check
        %p356 = pneg %p192
      $region38: #{dual_stream_forward.9} parent=11 // pred_check_branch
        %358 = sbr.rel (%p356) target = $region40
      $region39: #{dual_stream_forward.9} parent=11 // pred_region
        _
      $region40: #{dual_stream_forward.9} parent=11 // pred_fallthru
        _
      // Predicated region
      $region41: #{dual_stream_forward.9} parent=11 // pred_check
        %p359 = pneg %p213
      $region42: #{dual_stream_forward.9} parent=11 // pred_check_branch
        %361 = sbr.rel (%p359) target = $region44
      $region43: #{dual_stream_forward.9} parent=11 // pred_region
        _
      $region44: #{dual_stream_forward.9} parent=11 // pred_fallthru
        _
      // Predicated region
      $region45: #{dual_stream_forward.9} parent=11 // pred_check
        %p362 = pneg %p234
      $region46: #{dual_stream_forward.9} parent=11 // pred_check_branch
        %364 = sbr.rel (%p362) target = $region48
      $region47: #{dual_stream_forward.9} parent=11 // pred_region
        _
      $region48: #{dual_stream_forward.9} parent=11 // pred_fallthru
        _
      // Predicated region
      $region49: #{dual_stream_forward.9} parent=11 // pred_check
        %p365 = pneg %p255
      $region50: #{dual_stream_forward.9} parent=11 // pred_check_branch
        %367 = sbr.rel (%p365) target = $region52
      $region51: #{dual_stream_forward.9} parent=11 // pred_region
        _
      $region52: #{dual_stream_forward.9} parent=11 // pred_fallthru
        _
      // Predicated region
      $region53: #{dual_stream_forward.9} parent=11 // pred_check
        %p368 = pneg %p276
      $region54: #{dual_stream_forward.9} parent=11 // pred_check_branch
        %370 = sbr.rel (%p368) target = $region56
      $region55: #{dual_stream_forward.9} parent=11 // pred_region
        _
      $region56: #{dual_stream_forward.9} parent=11 // pred_fallthru
        _
      // Predicated region
      $region57: #{dual_stream_forward.9} parent=11 // pred_check
        %p371 = pneg %p297
      $region58: #{dual_stream_forward.9} parent=11 // pred_check_branch
        %373 = sbr.rel (%p371) target = $region60
      $region59: #{dual_stream_forward.9} parent=11 // pred_region
        _
      $region60: #{dual_stream_forward.9} parent=11 // pred_fallthru
        _
    $region12: #{dual_stream_forward.9} parent=5 // pred_fallthru
      _
    %p374 = scmp.lt.s32.totalorder %s19, 2
    // Predicated region
    $region61: #{dual_stream_forward.9} parent=5 // pred_check
      %p375 = pneg %p374
    $region62: #{dual_stream_forward.9} parent=5 // pred_check_branch
      %377 = sbr.rel (%p375) target = $region64
    $region63: #{dual_stream_forward.9} parent=5 // pred_region
      // Predicated region
      $region65: #{dual_stream_forward.9} parent=63 // pred_check
        %p378 = pneg %p39
      $region66: #{dual_stream_forward.9} parent=63 // pred_check_branch
        %380 = sbr.rel (%p378) target = $region68
      $region67: #{dual_stream_forward.9} parent=63 // pred_region
        %p381 = scmp.lt.s32.totalorder %s19, 1
        %s382 = scalar_select %p381, %s19, 1
        %s383 = scalar_lea.vmem %s0, %s382
      $region68: #{dual_stream_forward.9} parent=63 // pred_fallthru
        _
    $region64: #{dual_stream_forward.9} parent=5 // pred_fallthru
      _
    %p384 = scmp.le.s32.totalorder 1, %s19
    %p385 = scmp.lt.s32.totalorder %s19, 3
    %p386 = pnand %p384, %p385
    %p387 = pneg %p386
    // Predicated region
    $region69: #{dual_stream_forward.9} parent=5 // pred_check
      _
    $region70: #{dual_stream_forward.9} parent=5 // pred_check_branch
      %389 = sbr.rel (%p386) target = $region72
    $region71: #{dual_stream_forward.9} parent=5 // pred_region
      %s390 = ssub.s32 %s19, 1
      %p391 = scmp.lt.s32.totalorder %s24, 1
      %s392 = scalar_select %p391, %s24, 1
      %s393 = scalar_lea.vmem %s0, %s392
      %p394 = pneg %p45
      %p395 = pneg %p42
      %p396 = pneg %p66
      %p397 = pneg %p63
      %p398 = pneg %p87
      %p399 = pneg %p84
      %p400 = pneg %p108
      %p401 = pneg %p105
      %p402 = pneg %p129
      %p403 = pneg %p126
      %p404 = pneg %p150
      %p405 = pneg %p147
      %p406 = pneg %p171
      %p407 = pneg %p168
      %p408 = pneg %p192
      %p409 = pneg %p189
      %p410 = pneg %p213
      %p411 = pneg %p210
      %p412 = pneg %p234
      %p413 = pneg %p231
      %p414 = pneg %p255
      %p415 = pneg %p252
      %p416 = pneg %p276
      %p417 = pneg %p273
      %p418 = pneg %p297
      %p419 = pneg %p294
      %p420 = pneg %p323
      %p421 = pneg %p320
      %p422 = scmp.lt.s32.totalorder %s24, 1
      %s423 = scalar_select %p422, %s24, 1
      %s424 = scalar_lea.vmem %s13, %s423
      %p425 = scmp.lt.s32.totalorder %s24, 1
      %s426 = scalar_select %p425, %s24, 1
      %s427 = scalar_lea.vmem %s0, %s426
      %p428 = scmp.lt.s32.totalorder %s24, 1
      %s429 = scalar_select %p428, %s24, 1
      %s430 = scalar_lea.vmem %s13, %s429
      %v432 = vld [vmem:[%s427] sm:$0x1]
      %v433 = vunpack.c.l.bf16 %v432
      %v434 = vld [vmem:[%s1] sm:$0xf]
      %v435 = vld [vmem:[%s1 + $0x4] sm:$0xf]
      %v436 = vld [vmem:[%s1 + $0x8] sm:$0xf]
      %v437 = vld [vmem:[%s1 + $0xc] sm:$0xf]
      %v438 = vld [vmem:[%s2] sm:$0x1]
      %v443 = vunpack.c.l.b16 %v434
      %v444 = vunpack.c.l.b16 %v435
      %v445 = vunpack.c.l.b16 %v436
      %v446 = vunpack.c.l.b16 %v437
      %v447 = vpack.c.b16 %v444, %v443
      %v448 = vpack.c.b16 %v446, %v445
      %vm451 = vcmask 261120
      %v453 = vsel %vm451, %v432, 0
      %455 = vmatprep.subr.bf16.mxu0 0
      %456 = vmatpush1.bf16.msra.mxu0 %v447
      %457 = vmatprep.subr.bf16.mxu0 0
      %458 = vmatpush1.bf16.msra.mxu0 %v448
      %459 = vmatprep.subr.bf16.mxu0 0
      %460 = vmatpush1.bf16.msra.mxu0 0
      %461 = vmatprep.subr.bf16.mxu0 0
      %462 = vmatpush1.bf16.msra.mxu0 0
      %463 = vmatprep.subr.bf16.mxu0 0
      %464 = vmatpush1.bf16.msra.mxu0 0
      %465 = vmatprep.subr.bf16.mxu0 0
      %466 = vmatpush1.bf16.msra.mxu0 0
      %467 = vmatprep.subr.bf16.mxu0 0
      %468 = vmatpush1.bf16.msra.mxu0 0
      %469 = vmatprep.subr.bf16.mxu0 0
      %470 = vmatpush1.bf16.msra.mxu0 0
      %471 = vmatprep.subr.bf16.mxu0 0
      %472 = vmatpush1.bf16.msra.mxu0 0
      %473 = vmatprep.subr.bf16.mxu0 0
      %474 = vmatpush1.bf16.msra.mxu0 0
      %475 = vmatprep.subr.bf16.mxu0 0
      %476 = vmatpush1.bf16.msra.mxu0 0
      %477 = vmatprep.subr.bf16.mxu0 0
      %478 = vmatpush1.bf16.msra.mxu0 0
      %479 = vmatprep.subr.bf16.mxu0 0
      %480 = vmatpush1.bf16.msra.mxu0 0
      %481 = vmatprep.subr.bf16.mxu0 0
      %482 = vmatpush1.bf16.msra.mxu0 0
      %483 = vmatprep.subr.bf16.mxu0 0
      %484 = vmatpush1.bf16.msra.mxu0 0
      %485 = vmatprep.subr.bf16.mxu0 0
      %486 = vmatpush1.bf16.msra.mxu0 0
      %487 = vmatprep.mubr.bf16.mxu0 0
      %488 = vmatmul.mubr.bf16.gmra.mrb[0].mxu0 %v453
      %v489 = vpop.f32.mrb[0].mxu0
      %v490 = vadd.f32 %v438, %v489
      %v491 = vpop.f32.mrb[0].mxu0
      %v492 = vpop.f32.mrb[0].mxu0
      %v493 = vpop.f32.mrb[0].mxu0
      %494 = vdwg.mxu0
      %v495 = vld [vmem:[%s3] sm:$0xf]
      %v496 = vld [vmem:[%s3 + $0x4] sm:$0xf]
      %v497 = vld [vmem:[%s3 + $0x8] sm:$0xf]
      %v498 = vld [vmem:[%s3 + $0xc] sm:$0xf]
      %v499 = vpack.c.bf16 %v490, %v490
      %v500 = vld [vmem:[%s4] sm:$0x1]
      %v505 = vunpack.c.l.b16 %v495
      %v506 = vunpack.c.l.b16 %v496
      %v507 = vunpack.c.l.b16 %v497
      %v508 = vunpack.c.l.b16 %v498
      %v509 = vpack.c.b16 %v506, %v505
      %v510 = vpack.c.b16 %v508, %v507
      %v514 = vsel %vm451, %v499, 0
      %516 = vmatprep.subr.bf16.mxu0 0
      %517 = vmatpush1.bf16.msra.mxu0 %v509
      %518 = vmatprep.subr.bf16.mxu0 0
      %519 = vmatpush1.bf16.msra.mxu0 %v510
      %520 = vmatprep.subr.bf16.mxu0 0
      %521 = vmatpush1.bf16.msra.mxu0 0
      %522 = vmatprep.subr.bf16.mxu0 0
      %523 = vmatpush1.bf16.msra.mxu0 0
      %524 = vmatprep.subr.bf16.mxu0 0
      %525 = vmatpush1.bf16.msra.mxu0 0
      %526 = vmatprep.subr.bf16.mxu0 0
      %527 = vmatpush1.bf16.msra.mxu0 0
      %528 = vmatprep.subr.bf16.mxu0 0
      %529 = vmatpush1.bf16.msra.mxu0 0
      %530 = vmatprep.subr.bf16.mxu0 0
      %531 = vmatpush1.bf16.msra.mxu0 0
      %532 = vmatprep.subr.bf16.mxu0 0
      %533 = vmatpush1.bf16.msra.mxu0 0
      %534 = vmatprep.subr.bf16.mxu0 0
      %535 = vmatpush1.bf16.msra.mxu0 0
      %536 = vmatprep.subr.bf16.mxu0 0
      %537 = vmatpush1.bf16.msra.mxu0 0
      %538 = vmatprep.subr.bf16.mxu0 0
      %539 = vmatpush1.bf16.msra.mxu0 0
      %540 = vmatprep.subr.bf16.mxu0 0
      %541 = vmatpush1.bf16.msra.mxu0 0
      %542 = vmatprep.subr.bf16.mxu0 0
      %543 = vmatpush1.bf16.msra.mxu0 0
      %544 = vmatprep.subr.bf16.mxu0 0
      %545 = vmatpush1.bf16.msra.mxu0 0
      %546 = vmatprep.subr.bf16.mxu0 0
      %547 = vmatpush1.bf16.msra.mxu0 0
      %548 = vmatprep.mubr.bf16.mxu0 0
      %549 = vmatmul.mubr.bf16.gmra.mrb[0].mxu0 %v514
      %v550 = vpop.f32.mrb[0].mxu0
      %v551 = vadd.f32 %v500, %v550
      %v552 = vpop.f32.mrb[0].mxu0
      %v553 = vpop.f32.mrb[0].mxu0
      %v554 = vpop.f32.mrb[0].mxu0
      %555 = vdwg.mxu0
      %v556 = vadd.f32 %v433, %v551
      %v557 = vld [vmem:[%s5] sm:$0x1]
      %v558 = vld [vmem:[%s6] sm:$0x1]
      %vm559 = vcmask 253952
      %v560 = vsel %vm559, %v556, 0.0
      %561 = vadd.xlane.f32.xlu0 %v560
      %v562 = vpop.xlane.xlu0 %561
      %v563 = vrcp.pop 32.0
      %v564 = vmul.f32 %v562, %v563
      %v565 = vsub.f32 %v556, %v564
      %v566 = vmul.f32 %v565, %v565
      %v567 = vsel %vm559, %v566, 0.0
      %568 = vadd.xlane.f32.xlu0 %v567
      %v569 = vpop.xlane.xlu0 %568
      %v570 = vmul.f32 %v569, %v563
      %v571 = vadd.f32 %v570, 1e-05
      %v572 = vrsqrt.pop %v571
      %v573 = vmul.f32 %v565, %v572
      %v574 = vmul.f32 %v573, %v557
      %v575 = vadd.f32 %v574, %v558
      %v576 = vld [vmem:[%s7] sm:$0xf]
      %v577 = vld [vmem:[%s7 + $0x4] sm:$0xf]
      %v578 = vld [vmem:[%s7 + $0x8] sm:$0xf]
      %v579 = vld [vmem:[%s7 + $0xc] sm:$0xf]
      %v580 = vpack.c.bf16 %v575, %v575
      %v581 = vld [vmem:[%s8] sm:$0x1]
      %v586 = vunpack.c.l.b16 %v576
      %v587 = vunpack.c.l.b16 %v577
      %v588 = vunpack.c.l.b16 %v578
      %v589 = vunpack.c.l.b16 %v579
      %v590 = vpack.c.b16 %v587, %v586
      %v591 = vpack.c.b16 %v589, %v588
      %v595 = vsel %vm451, %v580, 0
      %597 = vmatprep.subr.bf16.mxu0 0
      %598 = vmatpush1.bf16.msra.mxu0 %v590
      %599 = vmatprep.subr.bf16.mxu0 0
      %600 = vmatpush1.bf16.msra.mxu0 %v591
      %601 = vmatprep.subr.bf16.mxu0 0
      %602 = vmatpush1.bf16.msra.mxu0 0
      %603 = vmatprep.subr.bf16.mxu0 0
      %604 = vmatpush1.bf16.msra.mxu0 0
      %605 = vmatprep.subr.bf16.mxu0 0
      %606 = vmatpush1.bf16.msra.mxu0 0
      %607 = vmatprep.subr.bf16.mxu0 0
      %608 = vmatpush1.bf16.msra.mxu0 0
      %609 = vmatprep.subr.bf16.mxu0 0
      %610 = vmatpush1.bf16.msra.mxu0 0
      %611 = vmatprep.subr.bf16.mxu0 0
      %612 = vmatpush1.bf16.msra.mxu0 0
      %613 = vmatprep.subr.bf16.mxu0 0
      %614 = vmatpush1.bf16.msra.mxu0 0
      %615 = vmatprep.subr.bf16.mxu0 0
      %616 = vmatpush1.bf16.msra.mxu0 0
      %617 = vmatprep.subr.bf16.mxu0 0
      %618 = vmatpush1.bf16.msra.mxu0 0
      %619 = vmatprep.subr.bf16.mxu0 0
      %620 = vmatpush1.bf16.msra.mxu0 0
      %621 = vmatprep.subr.bf16.mxu0 0
      %622 = vmatpush1.bf16.msra.mxu0 0
      %623 = vmatprep.subr.bf16.mxu0 0
      %624 = vmatpush1.bf16.msra.mxu0 0
      %625 = vmatprep.subr.bf16.mxu0 0
      %626 = vmatpush1.bf16.msra.mxu0 0
      %627 = vmatprep.subr.bf16.mxu0 0
      %628 = vmatpush1.bf16.msra.mxu0 0
      %629 = vmatprep.mubr.bf16.mxu0 0
      %630 = vmatmul.mubr.bf16.gmra.mrb[0].mxu0 %v595
      %v631 = vpop.f32.mrb[0].mxu0
      %v632 = vadd.f32 %v581, %v631
      %v633 = vpop.f32.mrb[0].mxu0
      %v634 = vpop.f32.mrb[0].mxu0
      %v635 = vpop.f32.mrb[0].mxu0
      %636 = vdwg.mxu0
      %v637 = vmul.f32 %v632, 0.5
      %v638 = vmul.f32 %v632, 0.70710677
      %vm639 = vcmp.ge.f32.partialorder %v638, 0.0
      %v640 = vsel %vm639, 1.0, -1.0
      %v641 = vand.u32 2147483647, %v638
      %v642 = vmul.f32 %v641, 0.3275911
      %v643 = vadd.f32 %v642, 1.0
      %v644 = vrcp.pop %v643
      %v645 = vmul.f32 %v643, %v644
      %v646 = vsub.f32 2.0, %v645
      %v647 = vmul.f32 %v644, %v646
      %v648 = vmul.f32 %v647, 1.0614054
      %v649 = vadd.f32 %v648, -1.4531521
      %v650 = vmul.f32 %v649, %v647
      %v651 = vadd.f32 %v650, 1.4214138
      %v652 = vmul.f32 %v651, %v647
      %v653 = vadd.f32 %v652, -0.28449672
      %v654 = vmul.f32 %v653, %v647
      %v655 = vadd.f32 %v654, 0.2548296
      %v656 = vmul.f32 %v655, %v647
      %v657 = vsub.f32 0.0, %v641
      %v658 = vmul.f32 %v657, %v641
      %v659 = vmul.f32 %v658, 1.442695
      %v660 = vpow.pop %v659
      %v661 = vmul.f32 %v656, %v660
      %v662 = vsub.f32 1.0, %v661
      %v663 = vmul.f32 %v640, %v662
      %v664 = vadd.f32 %v663, 1.0
      %v665 = vmul.f32 %v637, %v664
      %v666 = vld [vmem:[%s9] sm:$0xf]
      %v667 = vld [vmem:[%s9 + $0x4] sm:$0xf]
      %v668 = vld [vmem:[%s9 + $0x8] sm:$0xf]
      %v669 = vld [vmem:[%s9 + $0xc] sm:$0xf]
      %v670 = vpack.c.bf16 %v665, %v665
      %v675 = vunpack.c.l.b16 %v666
      %v676 = vunpack.c.l.b16 %v667
      %v677 = vunpack.c.l.b16 %v668
      %v678 = vunpack.c.l.b16 %v669
      %v679 = vpack.c.b16 %v676, %v675
      %v680 = vpack.c.b16 %v678, %v677
      %v684 = vsel %vm451, %v670, 0
      %686 = vmatprep.subr.bf16.mxu0 0
      %687 = vmatpush1.bf16.msra.mxu0 %v679
      %688 = vmatprep.subr.bf16.mxu0 0
      %689 = vmatpush1.bf16.msra.mxu0 %v680
      %690 = vmatprep.subr.bf16.mxu0 0
      %691 = vmatpush1.bf16.msra.mxu0 0
      %692 = vmatprep.subr.bf16.mxu0 0
      %693 = vmatpush1.bf16.msra.mxu0 0
      %694 = vmatprep.subr.bf16.mxu0 0
      %695 = vmatpush1.bf16.msra.mxu0 0
      %696 = vmatprep.subr.bf16.mxu0 0
      %697 = vmatpush1.bf16.msra.mxu0 0
      %698 = vmatprep.subr.bf16.mxu0 0
      %699 = vmatpush1.bf16.msra.mxu0 0
      %700 = vmatprep.subr.bf16.mxu0 0
      %701 = vmatpush1.bf16.msra.mxu0 0
      %702 = vmatprep.subr.bf16.mxu0 0
      %703 = vmatpush1.bf16.msra.mxu0 0
      %704 = vmatprep.subr.bf16.mxu0 0
      %705 = vmatpush1.bf16.msra.mxu0 0
      %706 = vmatprep.subr.bf16.mxu0 0
      %707 = vmatpush1.bf16.msra.mxu0 0
      %708 = vmatprep.subr.bf16.mxu0 0
      %709 = vmatpush1.bf16.msra.mxu0 0
      %710 = vmatprep.subr.bf16.mxu0 0
      %711 = vmatpush1.bf16.msra.mxu0 0
      %712 = vmatprep.subr.bf16.mxu0 0
      %713 = vmatpush1.bf16.msra.mxu0 0
      %714 = vmatprep.subr.bf16.mxu0 0
      %715 = vmatpush1.bf16.msra.mxu0 0
      %716 = vmatprep.subr.bf16.mxu0 0
      %717 = vmatpush1.bf16.msra.mxu0 0
      %718 = vmatprep.mubr.bf16.mxu0 0
      %719 = vmatmul.mubr.bf16.gmra.mrb[0].mxu0 %v684
      %v720 = vpop.f32.mrb[0].mxu0
      %v721 = vadd.f32 0.0, %v720
      %v722 = vpop.f32.mrb[0].mxu0
      %v723 = vpop.f32.mrb[0].mxu0
      %v724 = vpop.f32.mrb[0].mxu0
      %725 = vdwg.mxu0
      %v726 = vadd.f32 %v575, %v721
      %v727 = vld [vmem:[%s10] sm:$0x1]
      %v728 = vadd.f32 %v726, %v727
      %v729 = vld [vmem:[%s11] sm:$0x1]
      %v730 = vld [vmem:[%s12] sm:$0x1]
      %v731 = vsel %vm559, %v728, 0.0
      %732 = vadd.xlane.f32.xlu0 %v731
      %v733 = vpop.xlane.xlu0 %732
      %v734 = vmul.f32 %v733, %v563
      %v735 = vsub.f32 %v728, %v734
      %v736 = vmul.f32 %v735, %v735
      %v737 = vsel %vm559, %v736, 0.0
      %738 = vadd.xlane.f32.xlu0 %v737
      %v739 = vpop.xlane.xlu0 %738
      %v740 = vmul.f32 %v739, %v563
      %v741 = vadd.f32 %v740, 1e-05
      %v742 = vrsqrt.pop %v741
      %v743 = vmul.f32 %v735, %v742
      %v744 = vmul.f32 %v743, %v729
      %v745 = vadd.f32 %v744, %v730
      %v746 = vpack.c.bf16 %v745, %v745
      %vm747 = vcmask 253952
      %vm748 = vsmask.f32 256
      %vm749 = vmand %vm747, %vm748
      %v750 = vld [vmem:[%s430] sm:$0x1]
      %v751 = vsel %vm749, %v746, %v750
      %752 = vst [vmem:[%s430] sm:$0x1] %v751
      %p753 = scmp.lt.s32.totalorder %s24, 1
      %s754 = scalar_select %p753, %s24, 1
      %s755 = scalar_lea.vmem %s13, %s754
      // Predicated region
      $region73: #{dual_stream_forward.9} parent=71 // pred_check
        %p756 = pneg %p320
      $region74: #{dual_stream_forward.9} parent=71 // pred_check_branch
        %758 = sbr.rel (%p756) target = $region76
      $region75: #{dual_stream_forward.9} parent=71 // pred_region
        _
      $region76: #{dual_stream_forward.9} parent=71 // pred_fallthru
        _
    $region72: #{dual_stream_forward.9} parent=5 // pred_fallthru
      _
    %p759 = scmp.le.s32.totalorder 2, %s19
    // Predicated region
    $region77: #{dual_stream_forward.9} parent=5 // pred_check
      %p760 = pneg %p759
    $region78: #{dual_stream_forward.9} parent=5 // pred_check_branch
      %762 = sbr.rel (%p760) target = $region80
    $region79: #{dual_stream_forward.9} parent=5 // pred_region
      %s763 = ssub.s32 %s19, 2
      // Predicated region
      $region81: #{dual_stream_forward.9} parent=79 // pred_check
        %p764 = pneg %p326
      $region82: #{dual_stream_forward.9} parent=79 // pred_check_branch
        %766 = sbr.rel (%p764) target = $region84
      $region83: #{dual_stream_forward.9} parent=79 // pred_region
        %p767 = scmp.lt.s32.totalorder %s25, 1
        %s768 = scalar_select %p767, %s25, 1
        %s769 = scalar_lea.vmem %s13, %s768
      $region84: #{dual_stream_forward.9} parent=79 // pred_fallthru
        _
    $region80: #{dual_stream_forward.9} parent=5 // pred_fallthru
      _
  $region6: #{dual_stream_forward.9} parent=0 // loop_footer
    %s23 = sadd.s32 1, %s19
  $region7: #{dual_stream_forward.9} parent=0 // loop_footer_branch
    %18 = sbr.rel target = $region3
  $region8: #{dual_stream_forward.9} parent=0 // loop_exit
    _

// kernel: dual_stream_forward.11
$region0: #{dual_stream_forward.11}
  #allocation0 [shape = 'u32[]', space=smem, size = 0x4, offset = 0x4, fixed_abs, tag = 'smem constant byte address 0x4 - core index']
  #allocation1 [shape = 'u32[144,128]{1,0:T(1,128)}', space=vmem, size = 0x12000, scoped, tag = 'internal scratch']
  #allocation2 [shape = 'f32[8,32]{1,0:T(8,128)}', space=vmem, size = 0x1000, scoped, tag = 'scratch operand']
  #allocation3 [shape = 'f32[1,1]{1,0:T(1,128)S(1)}', space=vmem, size = 0x200, scoped, tag = 'scoped memory for dual_stream_forward.11']
  %s0 = inlined_call_operand.vmem [shape: bf16[2,8,32], index: 0, kind: input, shape index: {}]
  %s1 = inlined_call_operand.vmem [shape: bf16[2,1,32], index: 1, kind: input, shape index: {}]
  %s2 = inlined_call_operand.<no memory space> [shape: f32[1,1], index: 2, kind: input, shape index: {}]
  %s3 = inlined_call_operand.vmem [shape: f32[1,32], index: 3, kind: input, shape index: {}]
  %s4 = inlined_call_operand.vmem [shape: f32[1,32], index: 4, kind: input, shape index: {}]
  %s5 = inlined_call_operand.vmem [shape: bf16[32,96], index: 5, kind: input, shape index: {}]
  %s6 = inlined_call_operand.vmem [shape: f32[1,96], index: 6, kind: input, shape index: {}]
  %s7 = inlined_call_operand.vmem [shape: bf16[32,32], index: 7, kind: input, shape index: {}]
  %s8 = inlined_call_operand.hbm [shape: f32[1,32], index: 8, kind: input, shape index: {}]
  %s9 = inlined_call_operand.hbm [shape: f32[1,32], index: 9, kind: input, shape index: {}]
  %s10 = inlined_call_operand.hbm [shape: f32[1,32], index: 10, kind: input, shape index: {}]
  %s11 = inlined_call_operand.vmem [shape: bf16[32,32], index: 11, kind: input, shape index: {}]
  %s12 = inlined_call_operand.hbm [shape: f32[1,32], index: 12, kind: input, shape index: {}]
  %s13 = inlined_call_operand.vmem [shape: bf16[32,32], index: 13, kind: input, shape index: {}]
  %s14 = inlined_call_operand.hbm [shape: f32[1,32], index: 14, kind: input, shape index: {}]
  %s15 = inlined_call_operand.vmem [shape: bf16[32,32], index: 15, kind: input, shape index: {}]
  %s16 = inlined_call_operand.vmem [shape: bf16[32,32], index: 16, kind: input, shape index: {}]
  %s17 = inlined_call_operand.hbm [shape: f32[1,32], index: 17, kind: input, shape index: {}]
  %s18 = inlined_call_operand.hbm [shape: f32[1,32], index: 18, kind: input, shape index: {}]
  %s19 = inlined_call_operand.hbm [shape: f32[1,32], index: 19, kind: input, shape index: {}]
  %s20 = inlined_call_operand.hbm [shape: f32[1,32], index: 20, kind: input, shape index: {}]
  %s21 = inlined_call_operand.hbm [shape: f32[1,32], index: 21, kind: input, shape index: {}]
  %s22 = inlined_call_operand.vmem [shape: bf16[32,32], index: 22, kind: input, shape index: {}]
  %s23 = inlined_call_operand.hbm [shape: f32[1,32], index: 23, kind: input, shape index: {}]
  %s24 = inlined_call_operand.vmem [shape: bf16[32,32], index: 24, kind: input, shape index: {}]
  %s25 = inlined_call_operand.hbm [shape: f32[1,32], index: 25, kind: input, shape index: {}]
  %s26 = inlined_call_operand.vmem [shape: bf16[2,8,32], index: 26, kind: output, shape index: {}]
  %s27 = sld [smem:[#allocation0]]
  $region185: #{dual_stream_forward.11} parent=0
    _
  %s29 = ssub.s32 1, %s27
  %s30 = scalar_select 0, %s29, %s27
  %v31 = vstv %s2
  %32 = vst [vmem:[#allocation3] sm:$0x1] %v31
  $region1: #{dual_stream_forward.11} parent=0
    #allocation4 [shape = 'u8[512]{0}', space=vmem, size = 0x400, scoped, tag = 'input window, operand 8, single buffered']
    #allocation5 [shape = 's32[2]{0}', space=sflag, size = 0x8, scoped, tag = 'scoped memory for dual_stream_forward.11']
    #allocation6 [shape = 'u8[512]{0}', space=vmem, size = 0x400, scoped, tag = 'input window, operand 9, single buffered']
    #allocation7 [shape = 's32[1]{0}', space=sflag, size = 0x4, scoped, tag = 'scoped memory for dual_stream_forward.11']
    #allocation8 [shape = 'u8[512]{0}', space=vmem, size = 0x400, scoped, tag = 'input window, operand 10, single buffered']
    #allocation9 [shape = 'u8[512]{0}', space=vmem, size = 0x400, scoped, tag = 'input window, operand 12, single buffered']
    #allocation10 [shape = 's32[1]{0}', space=sflag, size = 0x4, scoped, tag = 'scoped memory for dual_stream_forward.11']
    #allocation11 [shape = 'u8[512]{0}', space=vmem, size = 0x400, scoped, tag = 'input window, operand 14, single buffered']
    #allocation12 [shape = 'u8[512]{0}', space=vmem, size = 0x400, scoped, tag = 'input window, operand 17, single buffered']
    #allocation13 [shape = 's32[1]{0}', space=sflag, size = 0x4, scoped, tag = 'scoped memory for dual_stream_forward.11']
    #allocation14 [shape = 'u8[512]{0}', space=vmem, size = 0x400, scoped, tag = 'input window, operand 18, single buffered']
    #allocation15 [shape = 'u8[512]{0}', space=vmem, size = 0x400, scoped, tag = 'input window, operand 19, single buffered']
    #allocation16 [shape = 's32[1]{0}', space=sflag, size = 0x4, scoped, tag = 'scoped memory for dual_stream_forward.11']
    #allocation17 [shape = 'u8[512]{0}', space=vmem, size = 0x400, scoped, tag = 'input window, operand 20, single buffered']
    #allocation18 [shape = 'u8[512]{0}', space=vmem, size = 0x400, scoped, tag = 'input window, operand 21, single buffered']
    #allocation19 [shape = 's32[1]{0}', space=sflag, size = 0x4, scoped, tag = 'scoped memory for dual_stream_forward.11']
    #allocation20 [shape = 'u8[512]{0}', space=vmem, size = 0x400, scoped, tag = 'input window, operand 23, single buffered']
    #allocation21 [shape = 'u8[512]{0}', space=vmem, size = 0x400, scoped, tag = 'input window, operand 25, single buffered']
    #allocation22 [shape = 's32[1]{0}', space=sflag, size = 0x4, scoped, tag = 'scoped memory for dual_stream_forward.11']
    %33 = vsyncpa [#allocation5], 0
    %34 = vsyncpa [#allocation7], 0
    %35 = vsyncpa [#allocation10], 0
    %36 = vsyncpa [#allocation13], 0
    %37 = vsyncpa [#allocation16], 0
    %38 = vsyncpa [#allocation19], 0
    %39 = vsyncpa [#allocation22], 0
    loop: start=0, step=1, limit=4
    $region2: #{dual_stream_forward.11} parent=1 // loop_pre_header
      _
    $region3: #{dual_stream_forward.11} parent=1 // loop_header
      %s41 = sphi 0, %s45
      %p42 = scmp.ge.s32.totalorder %s41, 4
      %s51 = sphi 0, %s53
      %s54 = sphi 0, %s51
      %s55 = sphi 0, %s54
      %s71 = sphi 0, %s55
      %s77 = sphi 0, %s79
      %s80 = sphi 0, %s77
      %s81 = sphi 0, %s80
      %s97 = sphi 0, %s81
      %s101 = sphi 0, %s101
      %s103 = sphi 0, %s101
      %s104 = sphi 0, %s103
      %s118 = sphi 0, %s104
      %s122 = sphi 0, %s122
      %s124 = sphi 0, %s122
      %s125 = sphi 0, %s124
      %s139 = sphi 0, %s125
      %s143 = sphi 0, %s143
      %s145 = sphi 0, %s143
      %s146 = sphi 0, %s145
      %s160 = sphi 0, %s146
      %s164 = sphi 0, %s164
      %s166 = sphi 0, %s164
      %s167 = sphi 0, %s166
      %s181 = sphi 0, %s167
      %s185 = sphi 0, %s185
      %s187 = sphi 0, %s185
      %s188 = sphi 0, %s187
      %s202 = sphi 0, %s188
      %s206 = sphi 0, %s206
      %s208 = sphi 0, %s206
      %s209 = sphi 0, %s208
      %s223 = sphi 0, %s209
      %s227 = sphi 0, %s227
      %s229 = sphi 0, %s227
      %s230 = sphi 0, %s229
      %s244 = sphi 0, %s230
      %s248 = sphi 0, %s248
      %s250 = sphi 0, %s248
      %s251 = sphi 0, %s250
      %s265 = sphi 0, %s251
      %s269 = sphi 0, %s269
      %s271 = sphi 0, %s269
      %s272 = sphi 0, %s271
      %s286 = sphi 0, %s272
      %s290 = sphi 0, %s290
      %s292 = sphi 0, %s290
      %s293 = sphi 0, %s292
      %s307 = sphi 0, %s293
      %s311 = sphi 0, %s311
      %s313 = sphi 0, %s311
      %s314 = sphi 0, %s313
      %s328 = sphi 0, %s314
      %s332 = sphi 0, %s332
      %s334 = sphi 0, %s332
      %s335 = sphi 0, %s334
      %s349 = sphi 0, %s335
      %s353 = sphi 0, %s353
      %s355 = sphi 0, %s353
      %s356 = sphi 0, %s355
      %s370 = sphi 0, %s356
      %s374 = sphi 0, %s374
      %s376 = sphi 0, %s374
      %s377 = sphi 0, %s376
      %s391 = sphi 0, %s377
      %s395 = sphi 0, %s395
      %s397 = sphi 0, %s395
      %s398 = sphi 0, %s397
      %s412 = sphi 0, %s398
      %s416 = sphi 0, %s416
      %s418 = sphi 0, %s416
      %s419 = sphi 0, %s418
      %s433 = sphi 0, %s419
      %s437 = sphi 0, %s437
      %s439 = sphi 0, %s437
      %s440 = sphi 0, %s439
      %s454 = sphi 0, %s440
      %s458 = sphi 0, %s458
      %s460 = sphi 0, %s458
      %s461 = sphi 0, %s460
      %s475 = sphi 0, %s461
      %s479 = sphi 0, %s479
      %s481 = sphi 0, %s479
      %s482 = sphi 0, %s481
      %s496 = sphi 0, %s482
      %s500 = sphi 0, %s500
      %s502 = sphi 0, %s500
      %s503 = sphi 0, %s502
      %s517 = sphi 0, %s503
      %s521 = sphi 0, %s521
      %s523 = sphi 0, %s521
      %s524 = sphi 0, %s523
      %s538 = sphi 0, %s524
      %s542 = sphi 0, %s542
      %s544 = sphi 0, %s542
      %s545 = sphi 0, %s544
      %s559 = sphi 0, %s545
      %s563 = sphi 0, %s563
      %s565 = sphi 0, %s563
      %s566 = sphi 0, %s565
      %s580 = sphi 0, %s566
      %s584 = sphi 0, %s584
      %s586 = sphi 0, %s584
      %s587 = sphi 0, %s586
      %s601 = sphi 0, %s587
      %s607 = sphi 0, %s609
      %s610 = sphi 0, %s607
      %s611 = sphi 0, %s610
      %s627 = sphi 0, %s611
    $region4: #{dual_stream_forward.11} parent=1 // loop_header_branch
      %44 = sbr.rel (%p42) target = $region8
    $region5: #{dual_stream_forward.11} parent=1 // loop_body
      %s46 = ssub.s32 %s41, 1
      %s47 = ssub.s32 %s41, 2
      %s48 = sadd.s32 %s41, 1
      %s49 = ssub.s32 %s41, %s48
      %p50 = scmp.eq.s32.totalorder %s49, 0
      %s52 = sadd.s32 %s51, 1
      %s53 = scalar_select %p50, %s51, %s52
      %p56 = pneg %p50
      %p57 = scmp.eq.s32.totalorder %s41, 1
      %p58 = por %p56, %p57
      %p59 = scmp.ne.s32.totalorder %s51, %s54
      %p60 = scmp.eq.s32.totalorder %s41, 0
      %p61 = por %p59, %p60
      %p62 = scmp.ne.s32.totalorder %s51, %s54
      %p63 = scmp.eq.s32.totalorder %s46, 1
      %p64 = por %p62, %p63
      %p65 = scmp.ne.s32.totalorder %s54, %s55
      %p66 = scmp.eq.s32.totalorder %s46, 0
      %p67 = por %p65, %p66
      %p68 = scmp.ne.s32.totalorder %s54, %s55
      %p69 = scmp.eq.s32.totalorder %s47, 1
      %p70 = por %p68, %p69
      %p72 = scmp.ne.s32.totalorder %s55, %s71
      %p73 = scmp.eq.s32.totalorder %s47, 0
      %p74 = por %p72, %p73
      %s75 = ssub.s32 %s41, %s48
      %p76 = scmp.eq.s32.totalorder %s75, 0
      %s78 = sadd.s32 %s77, 1
      %s79 = scalar_select %p76, %s77, %s78
      %p82 = pneg %p76
      %p83 = scmp.eq.s32.totalorder %s41, 1
      %p84 = por %p82, %p83
      %p85 = scmp.ne.s32.totalorder %s77, %s80
      %p86 = scmp.eq.s32.totalorder %s41, 0
      %p87 = por %p85, %p86
      %p88 = scmp.ne.s32.totalorder %s77, %s80
      %p89 = scmp.eq.s32.totalorder %s46, 1
      %p90 = por %p88, %p89
      %p91 = scmp.ne.s32.totalorder %s80, %s81
      %p92 = scmp.eq.s32.totalorder %s46, 0
      %p93 = por %p91, %p92
      %p94 = scmp.ne.s32.totalorder %s80, %s81
      %p95 = scmp.eq.s32.totalorder %s47, 1
      %p96 = por %p94, %p95
      %p98 = scmp.ne.s32.totalorder %s81, %s97
      %p99 = scmp.eq.s32.totalorder %s47, 0
      %p100 = por %p98, %p99
      %s102 = sadd.s32 %s101, 1
      %p105 = scmp.eq.s32.totalorder %s41, 1
      %p106 = scmp.ne.s32.totalorder %s101, %s103
      %p107 = scmp.eq.s32.totalorder %s41, 0
      %p108 = por %p106, %p107
      %p109 = scmp.ne.s32.totalorder %s101, %s103
      %p110 = scmp.eq.s32.totalorder %s46, 1
      %p111 = por %p109, %p110
      %p112 = scmp.ne.s32.totalorder %s103, %s104
      %p113 = scmp.eq.s32.totalorder %s46, 0
      %p114 = por %p112, %p113
      %p115 = scmp.ne.s32.totalorder %s103, %s104
      %p116 = scmp.eq.s32.totalorder %s47, 1
      %p117 = por %p115, %p116
      %p119 = scmp.ne.s32.totalorder %s104, %s118
      %p120 = scmp.eq.s32.totalorder %s47, 0
      %p121 = por %p119, %p120
      %s123 = sadd.s32 %s122, 1
      %p126 = scmp.eq.s32.totalorder %s41, 1
      %p127 = scmp.ne.s32.totalorder %s122, %s124
      %p128 = scmp.eq.s32.totalorder %s41, 0
      %p129 = por %p127, %p128
      %p130 = scmp.ne.s32.totalorder %s122, %s124
      %p131 = scmp.eq.s32.totalorder %s46, 1
      %p132 = por %p130, %p131
      %p133 = scmp.ne.s32.totalorder %s124, %s125
      %p134 = scmp.eq.s32.totalorder %s46, 0
      %p135 = por %p133, %p134
      %p136 = scmp.ne.s32.totalorder %s124, %s125
      %p137 = scmp.eq.s32.totalorder %s47, 1
      %p138 = por %p136, %p137
      %p140 = scmp.ne.s32.totalorder %s125, %s139
      %p141 = scmp.eq.s32.totalorder %s47, 0
      %p142 = por %p140, %p141
      %s144 = sadd.s32 %s143, 1
      %p147 = scmp.eq.s32.totalorder %s41, 1
      %p148 = scmp.ne.s32.totalorder %s143, %s145
      %p149 = scmp.eq.s32.totalorder %s41, 0
      %p150 = por %p148, %p149
      %p151 = scmp.ne.s32.totalorder %s143, %s145
      %p152 = scmp.eq.s32.totalorder %s46, 1
      %p153 = por %p151, %p152
      %p154 = scmp.ne.s32.totalorder %s145, %s146
      %p155 = scmp.eq.s32.totalorder %s46, 0
      %p156 = por %p154, %p155
      %p157 = scmp.ne.s32.totalorder %s145, %s146
      %p158 = scmp.eq.s32.totalorder %s47, 1
      %p159 = por %p157, %p158
      %p161 = scmp.ne.s32.totalorder %s146, %s160
      %p162 = scmp.eq.s32.totalorder %s47, 0
      %p163 = por %p161, %p162
      %s165 = sadd.s32 %s164, 1
      %p168 = scmp.eq.s32.totalorder %s41, 1
      %p169 = scmp.ne.s32.totalorder %s164, %s166
      %p170 = scmp.eq.s32.totalorder %s41, 0
      %p171 = por %p169, %p170
      %p172 = scmp.ne.s32.totalorder %s164, %s166
      %p173 = scmp.eq.s32.totalorder %s46, 1
      %p174 = por %p172, %p173
      %p175 = scmp.ne.s32.totalorder %s166, %s167
      %p176 = scmp.eq.s32.totalorder %s46, 0
      %p177 = por %p175, %p176
      %p178 = scmp.ne.s32.totalorder %s166, %s167
      %p179 = scmp.eq.s32.totalorder %s47, 1
      %p180 = por %p178, %p179
      %p182 = scmp.ne.s32.totalorder %s167, %s181
      %p183 = scmp.eq.s32.totalorder %s47, 0
      %p184 = por %p182, %p183
      %s186 = sadd.s32 %s185, 1
      %p189 = scmp.eq.s32.totalorder %s41, 1
      %p190 = scmp.ne.s32.totalorder %s185, %s187
      %p191 = scmp.eq.s32.totalorder %s41, 0
      %p192 = por %p190, %p191
      %p193 = scmp.ne.s32.totalorder %s185, %s187
      %p194 = scmp.eq.s32.totalorder %s46, 1
      %p195 = por %p193, %p194
      %p196 = scmp.ne.s32.totalorder %s187, %s188
      %p197 = scmp.eq.s32.totalorder %s46, 0
      %p198 = por %p196, %p197
      %p199 = scmp.ne.s32.totalorder %s187, %s188
      %p200 = scmp.eq.s32.totalorder %s47, 1
      %p201 = por %p199, %p200
      %p203 = scmp.ne.s32.totalorder %s188, %s202
      %p204 = scmp.eq.s32.totalorder %s47, 0
      %p205 = por %p203, %p204
      %s207 = sadd.s32 %s206, 1
      %p210 = scmp.eq.s32.totalorder %s41, 1
      %p211 = scmp.ne.s32.totalorder %s206, %s208
      %p212 = scmp.eq.s32.totalorder %s41, 0
      %p213 = por %p211, %p212
      %p214 = scmp.ne.s32.totalorder %s206, %s208
      %p215 = scmp.eq.s32.totalorder %s46, 1
      %p216 = por %p214, %p215
      %p217 = scmp.ne.s32.totalorder %s208, %s209
      %p218 = scmp.eq.s32.totalorder %s46, 0
      %p219 = por %p217, %p218
      %p220 = scmp.ne.s32.totalorder %s208, %s209
      %p221 = scmp.eq.s32.totalorder %s47, 1
      %p222 = por %p220, %p221
      %p224 = scmp.ne.s32.totalorder %s209, %s223
      %p225 = scmp.eq.s32.totalorder %s47, 0
      %p226 = por %p224, %p225
      %s228 = sadd.s32 %s227, 1
      %p231 = scmp.eq.s32.totalorder %s41, 1
      %p232 = scmp.ne.s32.totalorder %s227, %s229
      %p233 = scmp.eq.s32.totalorder %s41, 0
      %p234 = por %p232, %p233
      %p235 = scmp.ne.s32.totalorder %s227, %s229
      %p236 = scmp.eq.s32.totalorder %s46, 1
      %p237 = por %p235, %p236
      %p238 = scmp.ne.s32.totalorder %s229, %s230
      %p239 = scmp.eq.s32.totalorder %s46, 0
      %p240 = por %p238, %p239
      %p241 = scmp.ne.s32.totalorder %s229, %s230
      %p242 = scmp.eq.s32.totalorder %s47, 1
      %p243 = por %p241, %p242
      %p245 = scmp.ne.s32.totalorder %s230, %s244
      %p246 = scmp.eq.s32.totalorder %s47, 0
      %p247 = por %p245, %p246
      %s249 = sadd.s32 %s248, 1
      %p252 = scmp.eq.s32.totalorder %s41, 1
      %p253 = scmp.ne.s32.totalorder %s248, %s250
      %p254 = scmp.eq.s32.totalorder %s41, 0
      %p255 = por %p253, %p254
      %p256 = scmp.ne.s32.totalorder %s248, %s250
      %p257 = scmp.eq.s32.totalorder %s46, 1
      %p258 = por %p256, %p257
      %p259 = scmp.ne.s32.totalorder %s250, %s251
      %p260 = scmp.eq.s32.totalorder %s46, 0
      %p261 = por %p259, %p260
      %p262 = scmp.ne.s32.totalorder %s250, %s251
      %p263 = scmp.eq.s32.totalorder %s47, 1
      %p264 = por %p262, %p263
      %p266 = scmp.ne.s32.totalorder %s251, %s265
      %p267 = scmp.eq.s32.totalorder %s47, 0
      %p268 = por %p266, %p267
      %s270 = sadd.s32 %s269, 1
      %p273 = scmp.eq.s32.totalorder %s41, 1
      %p274 = scmp.ne.s32.totalorder %s269, %s271
      %p275 = scmp.eq.s32.totalorder %s41, 0
      %p276 = por %p274, %p275
      %p277 = scmp.ne.s32.totalorder %s269, %s271
      %p278 = scmp.eq.s32.totalorder %s46, 1
      %p279 = por %p277, %p278
      %p280 = scmp.ne.s32.totalorder %s271, %s272
      %p281 = scmp.eq.s32.totalorder %s46, 0
      %p282 = por %p280, %p281
      %p283 = scmp.ne.s32.totalorder %s271, %s272
      %p284 = scmp.eq.s32.totalorder %s47, 1
      %p285 = por %p283, %p284
      %p287 = scmp.ne.s32.totalorder %s272, %s286
      %p288 = scmp.eq.s32.totalorder %s47, 0
      %p289 = por %p287, %p288
      %s291 = sadd.s32 %s290, 1
      %p294 = scmp.eq.s32.totalorder %s41, 1
      %p295 = scmp.ne.s32.totalorder %s290, %s292
      %p296 = scmp.eq.s32.totalorder %s41, 0
      %p297 = por %p295, %p296
      %p298 = scmp.ne.s32.totalorder %s290, %s292
      %p299 = scmp.eq.s32.totalorder %s46, 1
      %p300 = por %p298, %p299
      %p301 = scmp.ne.s32.totalorder %s292, %s293
      %p302 = scmp.eq.s32.totalorder %s46, 0
      %p303 = por %p301, %p302
      %p304 = scmp.ne.s32.totalorder %s292, %s293
      %p305 = scmp.eq.s32.totalorder %s47, 1
      %p306 = por %p304, %p305
      %p308 = scmp.ne.s32.totalorder %s293, %s307
      %p309 = scmp.eq.s32.totalorder %s47, 0
      %p310 = por %p308, %p309
      %s312 = sadd.s32 %s311, 1
      %p315 = scmp.eq.s32.totalorder %s41, 1
      %p316 = scmp.ne.s32.totalorder %s311, %s313
      %p317 = scmp.eq.s32.totalorder %s41, 0
      %p318 = por %p316, %p317
      %p319 = scmp.ne.s32.totalorder %s311, %s313
      %p320 = scmp.eq.s32.totalorder %s46, 1
      %p321 = por %p319, %p320
      %p322 = scmp.ne.s32.totalorder %s313, %s314
      %p323 = scmp.eq.s32.totalorder %s46, 0
      %p324 = por %p322, %p323
      %p325 = scmp.ne.s32.totalorder %s313, %s314
      %p326 = scmp.eq.s32.totalorder %s47, 1
      %p327 = por %p325, %p326
      %p329 = scmp.ne.s32.totalorder %s314, %s328
      %p330 = scmp.eq.s32.totalorder %s47, 0
      %p331 = por %p329, %p330
      %s333 = sadd.s32 %s332, 1
      %p336 = scmp.eq.s32.totalorder %s41, 1
      %p337 = scmp.ne.s32.totalorder %s332, %s334
      %p338 = scmp.eq.s32.totalorder %s41, 0
      %p339 = por %p337, %p338
      %p340 = scmp.ne.s32.totalorder %s332, %s334
      %p341 = scmp.eq.s32.totalorder %s46, 1
      %p342 = por %p340, %p341
      %p343 = scmp.ne.s32.totalorder %s334, %s335
      %p344 = scmp.eq.s32.totalorder %s46, 0
      %p345 = por %p343, %p344
      %p346 = scmp.ne.s32.totalorder %s334, %s335
      %p347 = scmp.eq.s32.totalorder %s47, 1
      %p348 = por %p346, %p347
      %p350 = scmp.ne.s32.totalorder %s335, %s349
      %p351 = scmp.eq.s32.totalorder %s47, 0
      %p352 = por %p350, %p351
      %s354 = sadd.s32 %s353, 1
      %p357 = scmp.eq.s32.totalorder %s41, 1
      %p358 = scmp.ne.s32.totalorder %s353, %s355
      %p359 = scmp.eq.s32.totalorder %s41, 0
      %p360 = por %p358, %p359
      %p361 = scmp.ne.s32.totalorder %s353, %s355
      %p362 = scmp.eq.s32.totalorder %s46, 1
      %p363 = por %p361, %p362
      %p364 = scmp.ne.s32.totalorder %s355, %s356
      %p365 = scmp.eq.s32.totalorder %s46, 0
      %p366 = por %p364, %p365
      %p367 = scmp.ne.s32.totalorder %s355, %s356
      %p368 = scmp.eq.s32.totalorder %s47, 1
      %p369 = por %p367, %p368
      %p371 = scmp.ne.s32.totalorder %s356, %s370
      %p372 = scmp.eq.s32.totalorder %s47, 0
      %p373 = por %p371, %p372
      %s375 = sadd.s32 %s374, 1
      %p378 = scmp.eq.s32.totalorder %s41, 1
      %p379 = scmp.ne.s32.totalorder %s374, %s376
      %p380 = scmp.eq.s32.totalorder %s41, 0
      %p381 = por %p379, %p380
      %p382 = scmp.ne.s32.totalorder %s374, %s376
      %p383 = scmp.eq.s32.totalorder %s46, 1
      %p384 = por %p382, %p383
      %p385 = scmp.ne.s32.totalorder %s376, %s377
      %p386 = scmp.eq.s32.totalorder %s46, 0
      %p387 = por %p385, %p386
      %p388 = scmp.ne.s32.totalorder %s376, %s377
      %p389 = scmp.eq.s32.totalorder %s47, 1
      %p390 = por %p388, %p389
      %p392 = scmp.ne.s32.totalorder %s377, %s391
      %p393 = scmp.eq.s32.totalorder %s47, 0
      %p394 = por %p392, %p393
      %s396 = sadd.s32 %s395, 1
      %p399 = scmp.eq.s32.totalorder %s41, 1
      %p400 = scmp.ne.s32.totalorder %s395, %s397
      %p401 = scmp.eq.s32.totalorder %s41, 0
      %p402 = por %p400, %p401
      %p403 = scmp.ne.s32.totalorder %s395, %s397
      %p404 = scmp.eq.s32.totalorder %s46, 1
      %p405 = por %p403, %p404
      %p406 = scmp.ne.s32.totalorder %s397, %s398
      %p407 = scmp.eq.s32.totalorder %s46, 0
      %p408 = por %p406, %p407
      %p409 = scmp.ne.s32.totalorder %s397, %s398
      %p410 = scmp.eq.s32.totalorder %s47, 1
      %p411 = por %p409, %p410
      %p413 = scmp.ne.s32.totalorder %s398, %s412
      %p414 = scmp.eq.s32.totalorder %s47, 0
      %p415 = por %p413, %p414
      %s417 = sadd.s32 %s416, 1
      %p420 = scmp.eq.s32.totalorder %s41, 1
      %p421 = scmp.ne.s32.totalorder %s416, %s418
      %p422 = scmp.eq.s32.totalorder %s41, 0
      %p423 = por %p421, %p422
      %p424 = scmp.ne.s32.totalorder %s416, %s418
      %p425 = scmp.eq.s32.totalorder %s46, 1
      %p426 = por %p424, %p425
      %p427 = scmp.ne.s32.totalorder %s418, %s419
      %p428 = scmp.eq.s32.totalorder %s46, 0
      %p429 = por %p427, %p428
      %p430 = scmp.ne.s32.totalorder %s418, %s419
      %p431 = scmp.eq.s32.totalorder %s47, 1
      %p432 = por %p430, %p431
      %p434 = scmp.ne.s32.totalorder %s419, %s433
      %p435 = scmp.eq.s32.totalorder %s47, 0
      %p436 = por %p434, %p435
      %s438 = sadd.s32 %s437, 1
      %p441 = scmp.eq.s32.totalorder %s41, 1
      %p442 = scmp.ne.s32.totalorder %s437, %s439
      %p443 = scmp.eq.s32.totalorder %s41, 0
      %p444 = por %p442, %p443
      %p445 = scmp.ne.s32.totalorder %s437, %s439
      %p446 = scmp.eq.s32.totalorder %s46, 1
      %p447 = por %p445, %p446
      %p448 = scmp.ne.s32.totalorder %s439, %s440
      %p449 = scmp.eq.s32.totalorder %s46, 0
      %p450 = por %p448, %p449
      %p451 = scmp.ne.s32.totalorder %s439, %s440
      %p452 = scmp.eq.s32.totalorder %s47, 1
      %p453 = por %p451, %p452
      %p455 = scmp.ne.s32.totalorder %s440, %s454
      %p456 = scmp.eq.s32.totalorder %s47, 0
      %p457 = por %p455, %p456
      %s459 = sadd.s32 %s458, 1
      %p462 = scmp.eq.s32.totalorder %s41, 1
      %p463 = scmp.ne.s32.totalorder %s458, %s460
      %p464 = scmp.eq.s32.totalorder %s41, 0
      %p465 = por %p463, %p464
      %p466 = scmp.ne.s32.totalorder %s458, %s460
      %p467 = scmp.eq.s32.totalorder %s46, 1
      %p468 = por %p466, %p467
      %p469 = scmp.ne.s32.totalorder %s460, %s461
      %p470 = scmp.eq.s32.totalorder %s46, 0
      %p471 = por %p469, %p470
      %p472 = scmp.ne.s32.totalorder %s460, %s461
      %p473 = scmp.eq.s32.totalorder %s47, 1
      %p474 = por %p472, %p473
      %p476 = scmp.ne.s32.totalorder %s461, %s475
      %p477 = scmp.eq.s32.totalorder %s47, 0
      %p478 = por %p476, %p477
      %s480 = sadd.s32 %s479, 1
      %p483 = scmp.eq.s32.totalorder %s41, 1
      %p484 = scmp.ne.s32.totalorder %s479, %s481
      %p485 = scmp.eq.s32.totalorder %s41, 0
      %p486 = por %p484, %p485
      %p487 = scmp.ne.s32.totalorder %s479, %s481
      %p488 = scmp.eq.s32.totalorder %s46, 1
      %p489 = por %p487, %p488
      %p490 = scmp.ne.s32.totalorder %s481, %s482
      %p491 = scmp.eq.s32.totalorder %s46, 0
      %p492 = por %p490, %p491
      %p493 = scmp.ne.s32.totalorder %s481, %s482
      %p494 = scmp.eq.s32.totalorder %s47, 1
      %p495 = por %p493, %p494
      %p497 = scmp.ne.s32.totalorder %s482, %s496
      %p498 = scmp.eq.s32.totalorder %s47, 0
      %p499 = por %p497, %p498
      %s501 = sadd.s32 %s500, 1
      %p504 = scmp.eq.s32.totalorder %s41, 1
      %p505 = scmp.ne.s32.totalorder %s500, %s502
      %p506 = scmp.eq.s32.totalorder %s41, 0
      %p507 = por %p505, %p506
      %p508 = scmp.ne.s32.totalorder %s500, %s502
      %p509 = scmp.eq.s32.totalorder %s46, 1
      %p510 = por %p508, %p509
      %p511 = scmp.ne.s32.totalorder %s502, %s503
      %p512 = scmp.eq.s32.totalorder %s46, 0
      %p513 = por %p511, %p512
      %p514 = scmp.ne.s32.totalorder %s502, %s503
      %p515 = scmp.eq.s32.totalorder %s47, 1
      %p516 = por %p514, %p515
      %p518 = scmp.ne.s32.totalorder %s503, %s517
      %p519 = scmp.eq.s32.totalorder %s47, 0
      %p520 = por %p518, %p519
      %s522 = sadd.s32 %s521, 1
      %p525 = scmp.eq.s32.totalorder %s41, 1
      %p526 = scmp.ne.s32.totalorder %s521, %s523
      %p527 = scmp.eq.s32.totalorder %s41, 0
      %p528 = por %p526, %p527
      %p529 = scmp.ne.s32.totalorder %s521, %s523
      %p530 = scmp.eq.s32.totalorder %s46, 1
      %p531 = por %p529, %p530
      %p532 = scmp.ne.s32.totalorder %s523, %s524
      %p533 = scmp.eq.s32.totalorder %s46, 0
      %p534 = por %p532, %p533
      %p535 = scmp.ne.s32.totalorder %s523, %s524
      %p536 = scmp.eq.s32.totalorder %s47, 1
      %p537 = por %p535, %p536
      %p539 = scmp.ne.s32.totalorder %s524, %s538
      %p540 = scmp.eq.s32.totalorder %s47, 0
      %p541 = por %p539, %p540
      %s543 = sadd.s32 %s542, 1
      %p546 = scmp.eq.s32.totalorder %s41, 1
      %p547 = scmp.ne.s32.totalorder %s542, %s544
      %p548 = scmp.eq.s32.totalorder %s41, 0
      %p549 = por %p547, %p548
      %p550 = scmp.ne.s32.totalorder %s542, %s544
      %p551 = scmp.eq.s32.totalorder %s46, 1
      %p552 = por %p550, %p551
      %p553 = scmp.ne.s32.totalorder %s544, %s545
      %p554 = scmp.eq.s32.totalorder %s46, 0
      %p555 = por %p553, %p554
      %p556 = scmp.ne.s32.totalorder %s544, %s545
      %p557 = scmp.eq.s32.totalorder %s47, 1
      %p558 = por %p556, %p557
      %p560 = scmp.ne.s32.totalorder %s545, %s559
      %p561 = scmp.eq.s32.totalorder %s47, 0
      %p562 = por %p560, %p561
      %s564 = sadd.s32 %s563, 1
      %p567 = scmp.eq.s32.totalorder %s41, 1
      %p568 = scmp.ne.s32.totalorder %s563, %s565
      %p569 = scmp.eq.s32.totalorder %s41, 0
      %p570 = por %p568, %p569
      %p571 = scmp.ne.s32.totalorder %s563, %s565
      %p572 = scmp.eq.s32.totalorder %s46, 1
      %p573 = por %p571, %p572
      %p574 = scmp.ne.s32.totalorder %s565, %s566
      %p575 = scmp.eq.s32.totalorder %s46, 0
      %p576 = por %p574, %p575
      %p577 = scmp.ne.s32.totalorder %s565, %s566
      %p578 = scmp.eq.s32.totalorder %s47, 1
      %p579 = por %p577, %p578
      %p581 = scmp.ne.s32.totalorder %s566, %s580
      %p582 = scmp.eq.s32.totalorder %s47, 0
      %p583 = por %p581, %p582
      %s585 = sadd.s32 %s584, 1
      %p588 = scmp.eq.s32.totalorder %s41, 1
      %p589 = scmp.ne.s32.totalorder %s584, %s586
      %p590 = scmp.eq.s32.totalorder %s41, 0
      %p591 = por %p589, %p590
      %p592 = scmp.ne.s32.totalorder %s584, %s586
      %p593 = scmp.eq.s32.totalorder %s46, 1
      %p594 = por %p592, %p593
      %p595 = scmp.ne.s32.totalorder %s586, %s587
      %p596 = scmp.eq.s32.totalorder %s46, 0
      %p597 = por %p595, %p596
      %p598 = scmp.ne.s32.totalorder %s586, %s587
      %p599 = scmp.eq.s32.totalorder %s47, 1
      %p600 = por %p598, %p599
      %p602 = scmp.ne.s32.totalorder %s587, %s601
      %p603 = scmp.eq.s32.totalorder %s47, 0
      %p604 = por %p602, %p603
      %s605 = ssub.s32 %s41, %s48
      %p606 = scmp.eq.s32.totalorder %s605, 0
      %s608 = sadd.s32 %s607, 1
      %s609 = scalar_select %p606, %s607, %s608
      %p612 = pneg %p606
      %p613 = scmp.eq.s32.totalorder %s41, 1
      %p614 = por %p612, %p613
      %p615 = scmp.ne.s32.totalorder %s607, %s610
      %p616 = scmp.eq.s32.totalorder %s41, 0
      %p617 = por %p615, %p616
      %p618 = scmp.ne.s32.totalorder %s607, %s610
      %p619 = scmp.eq.s32.totalorder %s46, 1
      %p620 = por %p618, %p619
      %p621 = scmp.ne.s32.totalorder %s610, %s611
      %p622 = scmp.eq.s32.totalorder %s46, 0
      %p623 = por %p621, %p622
      %p624 = scmp.ne.s32.totalorder %s610, %s611
      %p625 = scmp.eq.s32.totalorder %s47, 1
      %p626 = por %p624, %p625
      %p628 = scmp.ne.s32.totalorder %s611, %s627
      %p629 = scmp.eq.s32.totalorder %s47, 0
      %p630 = por %p628, %p629
      %p631 = scmp.le.s32.totalorder 1, %s41
      %p632 = scmp.lt.s32.totalorder %s41, 3
      %p633 = pnand %p631, %p632
      %p634 = pneg %p633
      // Predicated region
      $region9: #{dual_stream_forward.11} parent=5 // pred_check
        _
      $region10: #{dual_stream_forward.11} parent=5 // pred_check_branch
        %636 = sbr.rel (%p633) target = $region12
      $region11: #{dual_stream_forward.11} parent=5 // pred_region
        %s637 = ssub.s32 %s41, 1
        // Predicated region
        $region13: #{dual_stream_forward.11} parent=11 // pred_check
          %p638 = pneg %p114
        $region14: #{dual_stream_forward.11} parent=11 // pred_check_branch
          %640 = sbr.rel (%p638) target = $region16
        $region15: #{dual_stream_forward.11} parent=11 // pred_region
          _
        $region16: #{dual_stream_forward.11} parent=11 // pred_fallthru
          _
        // Predicated region
        $region17: #{dual_stream_forward.11} parent=11 // pred_check
          %p641 = pneg %p135
        $region18: #{dual_stream_forward.11} parent=11 // pred_check_branch
          %643 = sbr.rel (%p641) target = $region20
        $region19: #{dual_stream_forward.11} parent=11 // pred_region
          _
        $region20: #{dual_stream_forward.11} parent=11 // pred_fallthru
          _
        // Predicated region
        $region21: #{dual_stream_forward.11} parent=11 // pred_check
          %p644 = pneg %p156
        $region22: #{dual_stream_forward.11} parent=11 // pred_check_branch
          %646 = sbr.rel (%p644) target = $region24
        $region23: #{dual_stream_forward.11} parent=11 // pred_region
          _
        $region24: #{dual_stream_forward.11} parent=11 // pred_fallthru
          _
        // Predicated region
        $region25: #{dual_stream_forward.11} parent=11 // pred_check
          %p647 = pneg %p177
        $region26: #{dual_stream_forward.11} parent=11 // pred_check_branch
          %649 = sbr.rel (%p647) target = $region28
        $region27: #{dual_stream_forward.11} parent=11 // pred_region
          _
        $region28: #{dual_stream_forward.11} parent=11 // pred_fallthru
          _
        // Predicated region
        $region29: #{dual_stream_forward.11} parent=11 // pred_check
          %p650 = pneg %p198
        $region30: #{dual_stream_forward.11} parent=11 // pred_check_branch
          %652 = sbr.rel (%p650) target = $region32
        $region31: #{dual_stream_forward.11} parent=11 // pred_region
          _
        $region32: #{dual_stream_forward.11} parent=11 // pred_fallthru
          _
        // Predicated region
        $region33: #{dual_stream_forward.11} parent=11 // pred_check
          %p653 = pneg %p219
        $region34: #{dual_stream_forward.11} parent=11 // pred_check_branch
          %655 = sbr.rel (%p653) target = $region36
        $region35: #{dual_stream_forward.11} parent=11 // pred_region
          _
        $region36: #{dual_stream_forward.11} parent=11 // pred_fallthru
          _
        // Predicated region
        $region37: #{dual_stream_forward.11} parent=11 // pred_check
          %p656 = pneg %p240
        $region38: #{dual_stream_forward.11} parent=11 // pred_check_branch
          %658 = sbr.rel (%p656) target = $region40
        $region39: #{dual_stream_forward.11} parent=11 // pred_region
          %s660 = ssub.s32 16, 16
          %661 = vsyncadd [#allocation5], %s660
          %s663 = sshll.u32 [#allocation4], 4
          %s664 = int_to_ptr.vmem [resolvable:$true] %s663
          %666 = dma.hbm_to_vmem [thread:$0]  %s8, 16, %s664, [#allocation5]
        $region40: #{dual_stream_forward.11} parent=11 // pred_fallthru
          _
        // Predicated region
        $region41: #{dual_stream_forward.11} parent=11 // pred_check
          %p667 = pneg %p261
        $region42: #{dual_stream_forward.11} parent=11 // pred_check_branch
          %669 = sbr.rel (%p667) target = $region44
        $region43: #{dual_stream_forward.11} parent=11 // pred_region
          %s671 = ssub.s32 16, 16
          %672 = vsyncadd [#allocation7], %s671
          %s674 = sshll.u32 [#allocation6], 4
          %s675 = int_to_ptr.vmem [resolvable:$true] %s674
          %677 = dma.hbm_to_vmem [thread:$0]  %s9, 16, %s675, [#allocation7]
        $region44: #{dual_stream_forward.11} parent=11 // pred_fallthru
          _
        // Predicated region
        $region45: #{dual_stream_forward.11} parent=11 // pred_check
          %p678 = pneg %p282
        $region46: #{dual_stream_forward.11} parent=11 // pred_check_branch
          %680 = sbr.rel (%p678) target = $region48
        $region47: #{dual_stream_forward.11} parent=11 // pred_region
          %s682 = ssub.s32 16, 16
          %683 = vsyncadd [#allocation7], %s682
          %s685 = sshll.u32 [#allocation8], 4
          %s686 = int_to_ptr.vmem [resolvable:$true] %s685
          %688 = dma.hbm_to_vmem [thread:$0]  %s10, 16, %s686, [#allocation7]
        $region48: #{dual_stream_forward.11} parent=11 // pred_fallthru
          _
        // Predicated region
        $region49: #{dual_stream_forward.11} parent=11 // pred_check
          %p689 = pneg %p303
        $region50: #{dual_stream_forward.11} parent=11 // pred_check_branch
          %691 = sbr.rel (%p689) target = $region52
        $region51: #{dual_stream_forward.11} parent=11 // pred_region
          _
        $region52: #{dual_stream_forward.11} parent=11 // pred_fallthru
          _
        // Predicated region
        $region53: #{dual_stream_forward.11} parent=11 // pred_check
          %p692 = pneg %p324
        $region54: #{dual_stream_forward.11} parent=11 // pred_check_branch
          %694 = sbr.rel (%p692) target = $region56
        $region55: #{dual_stream_forward.11} parent=11 // pred_region
          %s696 = ssub.s32 16, 16
          %697 = vsyncadd [#allocation10], %s696
          %s699 = sshll.u32 [#allocation9], 4
          %s700 = int_to_ptr.vmem [resolvable:$true] %s699
          %702 = dma.hbm_to_vmem [thread:$0]  %s12, 16, %s700, [#allocation10]
        $region56: #{dual_stream_forward.11} parent=11 // pred_fallthru
          _
        // Predicated region
        $region57: #{dual_stream_forward.11} parent=11 // pred_check
          %p703 = pneg %p345
        $region58: #{dual_stream_forward.11} parent=11 // pred_check_branch
          %705 = sbr.rel (%p703) target = $region60
        $region59: #{dual_stream_forward.11} parent=11 // pred_region
          _
        $region60: #{dual_stream_forward.11} parent=11 // pred_fallthru
          _
        // Predicated region
        $region61: #{dual_stream_forward.11} parent=11 // pred_check
          %p706 = pneg %p366
        $region62: #{dual_stream_forward.11} parent=11 // pred_check_branch
          %708 = sbr.rel (%p706) target = $region64
        $region63: #{dual_stream_forward.11} parent=11 // pred_region
          %s710 = ssub.s32 16, 16
          %711 = vsyncadd [#allocation10], %s710
          %s713 = sshll.u32 [#allocation11], 4
          %s714 = int_to_ptr.vmem [resolvable:$true] %s713
          %716 = dma.hbm_to_vmem [thread:$0]  %s14, 16, %s714, [#allocation10]
        $region64: #{dual_stream_forward.11} parent=11 // pred_fallthru
          _
        // Predicated region
        $region65: #{dual_stream_forward.11} parent=11 // pred_check
          %p717 = pneg %p387
        $region66: #{dual_stream_forward.11} parent=11 // pred_check_branch
          %719 = sbr.rel (%p717) target = $region68
        $region67: #{dual_stream_forward.11} parent=11 // pred_region
          _
        $region68: #{dual_stream_forward.11} parent=11 // pred_fallthru
          _
        // Predicated region
        $region69: #{dual_stream_forward.11} parent=11 // pred_check
          %p720 = pneg %p408
        $region70: #{dual_stream_forward.11} parent=11 // pred_check_branch
          %722 = sbr.rel (%p720) target = $region72
        $region71: #{dual_stream_forward.11} parent=11 // pred_region
          _
        $region72: #{dual_stream_forward.11} parent=11 // pred_fallthru
          _
        // Predicated region
        $region73: #{dual_stream_forward.11} parent=11 // pred_check
          %p723 = pneg %p429
        $region74: #{dual_stream_forward.11} parent=11 // pred_check_branch
          %725 = sbr.rel (%p723) target = $region76
        $region75: #{dual_stream_forward.11} parent=11 // pred_region
          %s727 = ssub.s32 16, 16
          %728 = vsyncadd [#allocation13], %s727
          %s730 = sshll.u32 [#allocation12], 4
          %s731 = int_to_ptr.vmem [resolvable:$true] %s730
          %733 = dma.hbm_to_vmem [thread:$0]  %s17, 16, %s731, [#allocation13]
        $region76: #{dual_stream_forward.11} parent=11 // pred_fallthru
          _
        // Predicated region
        $region77: #{dual_stream_forward.11} parent=11 // pred_check
          %p734 = pneg %p450
        $region78: #{dual_stream_forward.11} parent=11 // pred_check_branch
          %736 = sbr.rel (%p734) target = $region80
        $region79: #{dual_stream_forward.11} parent=11 // pred_region
          %s738 = ssub.s32 16, 16
          %739 = vsyncadd [#allocation13], %s738
          %s741 = sshll.u32 [#allocation14], 4
          %s742 = int_to_ptr.vmem [resolvable:$true] %s741
          %744 = dma.hbm_to_vmem [thread:$0]  %s18, 16, %s742, [#allocation13]
        $region80: #{dual_stream_forward.11} parent=11 // pred_fallthru
          _
        // Predicated region
        $region81: #{dual_stream_forward.11} parent=11 // pred_check
          %p745 = pneg %p471
        $region82: #{dual_stream_forward.11} parent=11 // pred_check_branch
          %747 = sbr.rel (%p745) target = $region84
        $region83: #{dual_stream_forward.11} parent=11 // pred_region
          %s749 = ssub.s32 16, 16
          %750 = vsyncadd [#allocation16], %s749
          %s752 = sshll.u32 [#allocation15], 4
          %s753 = int_to_ptr.vmem [resolvable:$true] %s752
          %755 = dma.hbm_to_vmem [thread:$0]  %s19, 16, %s753, [#allocation16]
        $region84: #{dual_stream_forward.11} parent=11 // pred_fallthru
          _
        // Predicated region
        $region85: #{dual_stream_forward.11} parent=11 // pred_check
          %p756 = pneg %p492
        $region86: #{dual_stream_forward.11} parent=11 // pred_check_branch
          %758 = sbr.rel (%p756) target = $region88
        $region87: #{dual_stream_forward.11} parent=11 // pred_region
          %s760 = ssub.s32 16, 16
          %761 = vsyncadd [#allocation16], %s760
          %s763 = sshll.u32 [#allocation17], 4
          %s764 = int_to_ptr.vmem [resolvable:$true] %s763
          %766 = dma.hbm_to_vmem [thread:$0]  %s20, 16, %s764, [#allocation16]
        $region88: #{dual_stream_forward.11} parent=11 // pred_fallthru
          _
        // Predicated region
        $region89: #{dual_stream_forward.11} parent=11 // pred_check
          %p767 = pneg %p513
        $region90: #{dual_stream_forward.11} parent=11 // pred_check_branch
          %769 = sbr.rel (%p767) target = $region92
        $region91: #{dual_stream_forward.11} parent=11 // pred_region
          %s771 = ssub.s32 16, 16
          %772 = vsyncadd [#allocation19], %s771
          %s774 = sshll.u32 [#allocation18], 4
          %s775 = int_to_ptr.vmem [resolvable:$true] %s774
          %777 = dma.hbm_to_vmem [thread:$0]  %s21, 16, %s775, [#allocation19]
        $region92: #{dual_stream_forward.11} parent=11 // pred_fallthru
          _
        // Predicated region
        $region93: #{dual_stream_forward.11} parent=11 // pred_check
          %p778 = pneg %p534
        $region94: #{dual_stream_forward.11} parent=11 // pred_check_branch
          %780 = sbr.rel (%p778) target = $region96
        $region95: #{dual_stream_forward.11} parent=11 // pred_region
          _
        $region96: #{dual_stream_forward.11} parent=11 // pred_fallthru
          _
        // Predicated region
        $region97: #{dual_stream_forward.11} parent=11 // pred_check
          %p781 = pneg %p555
        $region98: #{dual_stream_forward.11} parent=11 // pred_check_branch
          %783 = sbr.rel (%p781) target = $region100
        $region99: #{dual_stream_forward.11} parent=11 // pred_region
          %s785 = ssub.s32 16, 16
          %786 = vsyncadd [#allocation19], %s785
          %s788 = sshll.u32 [#allocation20], 4
          %s789 = int_to_ptr.vmem [resolvable:$true] %s788
          %791 = dma.hbm_to_vmem [thread:$0]  %s23, 16, %s789, [#allocation19]
        $region100: #{dual_stream_forward.11} parent=11 // pred_fallthru
          _
        // Predicated region
        $region101: #{dual_stream_forward.11} parent=11 // pred_check
          %p792 = pneg %p576
        $region102: #{dual_stream_forward.11} parent=11 // pred_check_branch
          %794 = sbr.rel (%p792) target = $region104
        $region103: #{dual_stream_forward.11} parent=11 // pred_region
          _
        $region104: #{dual_stream_forward.11} parent=11 // pred_fallthru
          _
        // Predicated region
        $region105: #{dual_stream_forward.11} parent=11 // pred_check
          %p795 = pneg %p597
        $region106: #{dual_stream_forward.11} parent=11 // pred_check_branch
          %797 = sbr.rel (%p795) target = $region108
        $region107: #{dual_stream_forward.11} parent=11 // pred_region
          %s799 = ssub.s32 16, 16
          %800 = vsyncadd [#allocation22], %s799
          %s802 = sshll.u32 [#allocation21], 4
          %s803 = int_to_ptr.vmem [resolvable:$true] %s802
          %805 = dma.hbm_to_vmem [thread:$0]  %s25, 16, %s803, [#allocation22]
        $region108: #{dual_stream_forward.11} parent=11 // pred_fallthru
          _
      $region12: #{dual_stream_forward.11} parent=5 // pred_fallthru
        _
      %p806 = scmp.lt.s32.totalorder %s41, 2
      // Predicated region
      $region109: #{dual_stream_forward.11} parent=5 // pred_check
        %p807 = pneg %p806
      $region110: #{dual_stream_forward.11} parent=5 // pred_check_branch
        %809 = sbr.rel (%p807) target = $region112
      $region111: #{dual_stream_forward.11} parent=5 // pred_region
        // Predicated region
        $region113: #{dual_stream_forward.11} parent=111 // pred_check
          %p810 = pneg %p61
        $region114: #{dual_stream_forward.11} parent=111 // pred_check_branch
          %812 = sbr.rel (%p810) target = $region116
        $region115: #{dual_stream_forward.11} parent=111 // pred_region
          %p813 = scmp.lt.s32.totalorder %s41, 1
          %s814 = scalar_select %p813, %s41, 1
          %s815 = smul.addr %s814, 4
          %s816 = scalar_lea.vmem %s0, %s815
        $region116: #{dual_stream_forward.11} parent=111 // pred_fallthru
          _
        // Predicated region
        $region117: #{dual_stream_forward.11} parent=111 // pred_check
          %p817 = pneg %p87
        $region118: #{dual_stream_forward.11} parent=111 // pred_check_branch
          %819 = sbr.rel (%p817) target = $region120
        $region119: #{dual_stream_forward.11} parent=111 // pred_region
          %p820 = scmp.lt.s32.totalorder %s41, 1
          %s821 = scalar_select %p820, %s41, 1
          %s822 = scalar_lea.vmem %s1, %s821
        $region120: #{dual_stream_forward.11} parent=111 // pred_fallthru
          _
      $region112: #{dual_stream_forward.11} parent=5 // pred_fallthru
        _
      %p823 = scmp.le.s32.totalorder 1, %s41
      %p824 = scmp.lt.s32.totalorder %s41, 3
      %p825 = pnand %p823, %p824
      %p826 = pneg %p825
      // Predicated region
      $region121: #{dual_stream_forward.11} parent=5 // pred_check
        _
      $region122: #{dual_stream_forward.11} parent=5 // pred_check_branch
        %828 = sbr.rel (%p825) target = $region124
      $region123: #{dual_stream_forward.11} parent=5 // pred_region
        %s829 = ssub.s32 %s41, 1
        // Predicated region
        $region125: #{dual_stream_forward.11} parent=123 // pred_check
          %p830 = pneg %p240
        $region126: #{dual_stream_forward.11} parent=123 // pred_check_branch
          %832 = sbr.rel (%p830) target = $region128
        $region127: #{dual_stream_forward.11} parent=123 // pred_region
          %833 = dma.done [#allocation5], 16
        $region128: #{dual_stream_forward.11} parent=123 // pred_fallthru
          _
        // Predicated region
        $region129: #{dual_stream_forward.11} parent=123 // pred_check
          %p834 = pneg %p261
        $region130: #{dual_stream_forward.11} parent=123 // pred_check_branch
          %836 = sbr.rel (%p834) target = $region132
        $region131: #{dual_stream_forward.11} parent=123 // pred_region
          %837 = dma.done [#allocation7], 16
        $region132: #{dual_stream_forward.11} parent=123 // pred_fallthru
          _
        // Predicated region
        $region133: #{dual_stream_forward.11} parent=123 // pred_check
          %p838 = pneg %p282
        $region134: #{dual_stream_forward.11} parent=123 // pred_check_branch
          %840 = sbr.rel (%p838) target = $region136
        $region135: #{dual_stream_forward.11} parent=123 // pred_region
          %841 = dma.done [#allocation7], 16
        $region136: #{dual_stream_forward.11} parent=123 // pred_fallthru
          _
        // Predicated region
        $region137: #{dual_stream_forward.11} parent=123 // pred_check
          %p842 = pneg %p324
        $region138: #{dual_stream_forward.11} parent=123 // pred_check_branch
          %844 = sbr.rel (%p842) target = $region140
        $region139: #{dual_stream_forward.11} parent=123 // pred_region
          %845 = dma.done [#allocation10], 16
        $region140: #{dual_stream_forward.11} parent=123 // pred_fallthru
          _
        // Predicated region
        $region141: #{dual_stream_forward.11} parent=123 // pred_check
          %p846 = pneg %p366
        $region142: #{dual_stream_forward.11} parent=123 // pred_check_branch
          %848 = sbr.rel (%p846) target = $region144
        $region143: #{dual_stream_forward.11} parent=123 // pred_region
          %849 = dma.done [#allocation10], 16
        $region144: #{dual_stream_forward.11} parent=123 // pred_fallthru
          _
        // Predicated region
        $region145: #{dual_stream_forward.11} parent=123 // pred_check
          %p850 = pneg %p429
        $region146: #{dual_stream_forward.11} parent=123 // pred_check_branch
          %852 = sbr.rel (%p850) target = $region148
        $region147: #{dual_stream_forward.11} parent=123 // pred_region
          %853 = dma.done [#allocation13], 16
        $region148: #{dual_stream_forward.11} parent=123 // pred_fallthru
          _
        // Predicated region
        $region149: #{dual_stream_forward.11} parent=123 // pred_check
          %p854 = pneg %p450
        $region150: #{dual_stream_forward.11} parent=123 // pred_check_branch
          %856 = sbr.rel (%p854) target = $region152
        $region151: #{dual_stream_forward.11} parent=123 // pred_region
          %857 = dma.done [#allocation13], 16
        $region152: #{dual_stream_forward.11} parent=123 // pred_fallthru
          _
        // Predicated region
        $region153: #{dual_stream_forward.11} parent=123 // pred_check
          %p858 = pneg %p471
        $region154: #{dual_stream_forward.11} parent=123 // pred_check_branch
          %860 = sbr.rel (%p858) target = $region156
        $region155: #{dual_stream_forward.11} parent=123 // pred_region
          %861 = dma.done [#allocation16], 16
        $region156: #{dual_stream_forward.11} parent=123 // pred_fallthru
          _
        // Predicated region
        $region157: #{dual_stream_forward.11} parent=123 // pred_check
          %p862 = pneg %p492
        $region158: #{dual_stream_forward.11} parent=123 // pred_check_branch
          %864 = sbr.rel (%p862) target = $region160
        $region159: #{dual_stream_forward.11} parent=123 // pred_region
          %865 = dma.done [#allocation16], 16
        $region160: #{dual_stream_forward.11} parent=123 // pred_fallthru
          _
        // Predicated region
        $region161: #{dual_stream_forward.11} parent=123 // pred_check
          %p866 = pneg %p513
        $region162: #{dual_stream_forward.11} parent=123 // pred_check_branch
          %868 = sbr.rel (%p866) target = $region164
        $region163: #{dual_stream_forward.11} parent=123 // pred_region
          %869 = dma.done [#allocation19], 16
        $region164: #{dual_stream_forward.11} parent=123 // pred_fallthru
          _
        // Predicated region
        $region165: #{dual_stream_forward.11} parent=123 // pred_check
          %p870 = pneg %p555
        $region166: #{dual_stream_forward.11} parent=123 // pred_check_branch
          %872 = sbr.rel (%p870) target = $region168
        $region167: #{dual_stream_forward.11} parent=123 // pred_region
          %873 = dma.done [#allocation19], 16
        $region168: #{dual_stream_forward.11} parent=123 // pred_fallthru
          _
        // Predicated region
        $region169: #{dual_stream_forward.11} parent=123 // pred_check
          %p874 = pneg %p597
        $region170: #{dual_stream_forward.11} parent=123 // pred_check_branch
          %876 = sbr.rel (%p874) target = $region172
        $region171: #{dual_stream_forward.11} parent=123 // pred_region
          %877 = dma.done [#allocation22], 16
        $region172: #{dual_stream_forward.11} parent=123 // pred_fallthru
          _
        %p878 = scmp.lt.s32.totalorder %s46, 1
        %s879 = scalar_select %p878, %s46, 1
        %s880 = smul.addr %s879, 4
        %s881 = scalar_lea.vmem %s0, %s880
        %p882 = pneg %p67
        %p883 = pneg %p64
        %p884 = scmp.lt.s32.totalorder %s46, 1
        %s885 = scalar_select %p884, %s46, 1
        %s886 = scalar_lea.vmem %s1, %s885
        %p887 = pneg %p93
        %p888 = pneg %p90
        %p889 = pneg %p114
        %p890 = pneg %p111
        %p891 = pneg %p135
        %p892 = pneg %p132
        %p893 = pneg %p156
        %p894 = pneg %p153
        %p895 = pneg %p177
        %p896 = pneg %p174
        %p897 = pneg %p198
        %p898 = pneg %p195
        %p899 = pneg %p219
        %p900 = pneg %p216
        %p901 = pneg %p240
        %p902 = pneg %p237
        %p903 = pneg %p261
        %p904 = pneg %p258
        %p905 = pneg %p282
        %p906 = pneg %p279
        %p907 = pneg %p303
        %p908 = pneg %p300
        %p909 = pneg %p324
        %p910 = pneg %p321
        %p911 = pneg %p345
        %p912 = pneg %p342
        %p913 = pneg %p366
        %p914 = pneg %p363
        %p915 = pneg %p387
        %p916 = pneg %p384
        %p917 = pneg %p408
        %p918 = pneg %p405
        %p919 = pneg %p429
        %p920 = pneg %p426
        %p921 = pneg %p450
        %p922 = pneg %p447
        %p923 = pneg %p471
        %p924 = pneg %p468
        %p925 = pneg %p492
        %p926 = pneg %p489
        %p927 = pneg %p513
        %p928 = pneg %p510
        %p929 = pneg %p534
        %p930 = pneg %p531
        %p931 = pneg %p555
        %p932 = pneg %p552
        %p933 = pneg %p576
        %p934 = pneg %p573
        %p935 = pneg %p597
        %p936 = pneg %p594
        %p937 = pneg %p623
        %p938 = pneg %p620
        %p939 = scmp.lt.s32.totalorder %s46, 1
        %s940 = scalar_select %p939, %s46, 1
        %s941 = smul.addr %s940, 4
        %s942 = scalar_lea.vmem %s26, %s941
        %p943 = scmp.lt.s32.totalorder %s46, 1
        %s944 = scalar_select %p943, %s46, 1
        %s945 = smul.addr %s944, 4
        %s946 = scalar_lea.vmem %s0, %s945
        %p947 = scmp.lt.s32.totalorder %s46, 1
        %s948 = scalar_select %p947, %s46, 1
        %s949 = scalar_lea.vmem %s1, %s948
        %p950 = scmp.lt.s32.totalorder %s46, 1
        %s951 = scalar_select %p950, %s46, 1
        %s952 = smul.addr %s951, 4
        %s953 = scalar_lea.vmem %s26, %s952
        %v955 = vld [vmem:[%s946] sm:$0xf]
        %v956 = vunpack.c.l.bf16 %v955
        %v957 = vld [vmem:[%s949] sm:$0x1]
        %v958 = vld [vmem:[%s3] sm:$0x1]
        %v959 = vld [vmem:[%s4] sm:$0x1]
        %vm960 = vcmask 261120
        %v961 = vsel %vm960, %v956, 0.0
        %962 = vadd.xlane.f32.xlu0 %v961
        %v963 = vpop.xlane.xlu0 %962
        %v964 = vrcp.pop 32.0
        %v965 = vmul.f32 %v963, %v964
        %v966 = vsub.f32 %v956, %v965
        %v967 = vmul.f32 %v966, %v966
        %v968 = vsel %vm960, %v967, 0.0
        %969 = vadd.xlane.f32.xlu0 %v968
        %v970 = vpop.xlane.xlu0 %969
        %v971 = vmul.f32 %v970, %v964
        %v972 = vadd.f32 %v971, 1e-05
        %v973 = vrsqrt.pop %v972
        %v974 = vmul.f32 %v966, %v973
        %v976 = vlaneseq
        %v977 = vshrl.u32 %v976, 7
        %v978 = vsub.s32 0, %v977
        %v979 = vrot.slane %v958, %v978
        %v981 = vmul.f32 %v974, %v979
        %v983 = vlaneseq
        %v984 = vshrl.u32 %v983, 7
        %v985 = vsub.s32 0, %v984
        %v986 = vrot.slane %v959, %v985
        %v988 = vadd.f32 %v981, %v986
        %v989 = vld [vmem:[%s5] sm:$0xf]
        %v990 = vld [vmem:[%s5 + $0x4] sm:$0xf]
        %v991 = vld [vmem:[%s5 + $0x8] sm:$0xf]
        %v992 = vld [vmem:[%s5 + $0xc] sm:$0xf]
        %v993 = vpack.c.bf16 %v988, %v988
        %v994 = vld [vmem:[%s6] sm:$0x1]
        %v996 = vlaneseq
        %v997 = vshrl.u32 %v996, 7
        %v998 = vsub.s32 0, %v997
        %v999 = vrot.slane %v994, %v998
        %v1005 = vunpack.c.l.b16 %v989
        %v1006 = vunpack.c.l.b16 %v990
        %v1007 = vunpack.c.l.b16 %v991
        %v1008 = vunpack.c.l.b16 %v992
        %v1009 = vpack.c.b16 %v1006, %v1005
        %v1010 = vpack.c.b16 %v1008, %v1007
        %v1014 = vsel %vm960, %v993, 0
        %1016 = vmatprep.subr.bf16.mxu0 0
        %1017 = vmatpush1.bf16.msra.mxu0 %v1009
        %1018 = vmatprep.subr.bf16.mxu0 0
        %1019 = vmatpush1.bf16.msra.mxu0 %v1010
        %1020 = vmatprep.subr.bf16.mxu0 0
        %1021 = vmatpush1.bf16.msra.mxu0 0
        %1022 = vmatprep.subr.bf16.mxu0 0
        %1023 = vmatpush1.bf16.msra.mxu0 0
        %1024 = vmatprep.subr.bf16.mxu0 0
        %1025 = vmatpush1.bf16.msra.mxu0 0
        %1026 = vmatprep.subr.bf16.mxu0 0
        %1027 = vmatpush1.bf16.msra.mxu0 0
        %1028 = vmatprep.subr.bf16.mxu0 0
        %1029 = vmatpush1.bf16.msra.mxu0 0
        %1030 = vmatprep.subr.bf16.mxu0 0
        %1031 = vmatpush1.bf16.msra.mxu0 0
        %1032 = vmatprep.subr.bf16.mxu0 0
        %1033 = vmatpush1.bf16.msra.mxu0 0
        %1034 = vmatprep.subr.bf16.mxu0 0
        %1035 = vmatpush1.bf16.msra.mxu0 0
        %1036 = vmatprep.subr.bf16.mxu0 0
        %1037 = vmatpush1.bf16.msra.mxu0 0
        %1038 = vmatprep.subr.bf16.mxu0 0
        %1039 = vmatpush1.bf16.msra.mxu0 0
        %1040 = vmatprep.subr.bf16.mxu0 0
        %1041 = vmatpush1.bf16.msra.mxu0 0
        %1042 = vmatprep.subr.bf16.mxu0 0
        %1043 = vmatpush1.bf16.msra.mxu0 0
        %1044 = vmatprep.subr.bf16.mxu0 0
        %1045 = vmatpush1.bf16.msra.mxu0 0
        %1046 = vmatprep.subr.bf16.mxu0 0
        %1047 = vmatpush1.bf16.msra.mxu0 0
        %1048 = vmatprep.mubr.bf16.mxu0 0
        %1049 = vmatmul.mubr.bf16.gmra.mrb[0].mxu0 %v1014
        %v1050 = vpop.f32.mrb[0].mxu0
        %v1051 = vadd.f32 %v999, %v1050
        %v1052 = vpop.f32.mrb[0].mxu0
        %v1053 = vpop.f32.mrb[0].mxu0
        %v1054 = vpop.f32.mrb[0].mxu0
        %1055 = vdwg.mxu0
        %v1056 = vlaneseq
        %v1057 = vshrl.u32 %v1056, 7
        %v1058 = vlaneseq
        %v1059 = vand.u32 %v1058, 127
        %vm1060 = vcmp.gt.s32.totalorder %v1059, %v1057
        %v1061 = vmul.f32 %v1051, 0.35355338
        %v1062 = vpack.c.bf16 %v1061, %v1061
        %v1063 = vpack.c.bf16 %v1051, %v1051
        %1065 = vrot.lane.b32.xlu0 %v1063, 96
        %v1066 = vpop.permute.xlu0 %1065
        %vm1067 = vcmask 64512
        %v1069 = vsel %vm1067, %v1062, 0
        %v1072 = vsel %vm1067, %v1066, 0
        %1074 = vmatprep.subr.bf16.mxu0 0
        %1075 = vmatpush1.bf16.xpose.msra.mxu0 %v1072
        %1076 = vmatprep.subr.bf16.mxu0 0
        %1077 = vmatpush1.bf16.xpose.msra.mxu0 0
        %1078 = vmatprep.subr.bf16.mxu0 0
        %1079 = vmatpush1.bf16.xpose.msra.mxu0 0
        %1080 = vmatprep.subr.bf16.mxu0 0
        %1081 = vmatpush1.bf16.xpose.msra.mxu0 0
        %1082 = vmatprep.subr.bf16.mxu0 0
        %1083 = vmatpush1.bf16.xpose.msra.mxu0 0
        %1084 = vmatprep.subr.bf16.mxu0 0
        %1085 = vmatpush1.bf16.xpose.msra.mxu0 0
        %1086 = vmatprep.subr.bf16.mxu0 0
        %1087 = vmatpush1.bf16.xpose.msra.mxu0 0
        %1088 = vmatprep.subr.bf16.mxu0 0
        %1089 = vmatpush1.bf16.xpose.msra.mxu0 0
        %1090 = vmatprep.subr.bf16.mxu0 0
        %1091 = vmatpush1.bf16.xpose.msra.mxu0 0
        %1092 = vmatprep.subr.bf16.mxu0 0
        %1093 = vmatpush1.bf16.xpose.msra.mxu0 0
        %1094 = vmatprep.subr.bf16.mxu0 0
        %1095 = vmatpush1.bf16.xpose.msra.mxu0 0
        %1096 = vmatprep.subr.bf16.mxu0 0
        %1097 = vmatpush1.bf16.xpose.msra.mxu0 0
        %1098 = vmatprep.subr.bf16.mxu0 0
        %1099 = vmatpush1.bf16.xpose.msra.mxu0 0
        %1100 = vmatprep.subr.bf16.mxu0 0
        %1101 = vmatpush1.bf16.xpose.msra.mxu0 0
        %1102 = vmatprep.subr.bf16.mxu0 0
        %1103 = vmatpush1.bf16.xpose.msra.mxu0 0
        %1104 = vmatprep.subr.bf16.mxu0 0
        %1105 = vmatpush1.bf16.xpose.msra.mxu0 0
        %1106 = vmatprep.mubr.bf16.mxu0 0
        %1107 = vmatmul.mubr.bf16.gmra.mrb[0].mxu0 %v1069
        %v1108 = vpop.f32.mrb[0].mxu0
        %v1109 = vadd.f32 0.0, %v1108
        %v1110 = vpop.f32.mrb[0].mxu0
        %v1111 = vpop.f32.mrb[0].mxu0
        %v1112 = vpop.f32.mrb[0].mxu0
        %1113 = vdwg.mxu0
        %v1114 = vsel %vm1060, -1e+30, %v1109
        %v1115 = vsel %vm1067, %v1114, -inf
        %1116 = vmax.xlane.f32.xlu0 %v1115
        %v1117 = vpop.xlane.xlu0 %1116
        %v1118 = vsub.f32 %v1114, %v1117
        %v1119 = vmul.f32 %v1118, 1.442695
        %v1120 = vpow.pop %v1119
        %v1121 = vsel %vm1067, %v1120, 0.0
        %1122 = vadd.xlane.f32.xlu0 %v1121
        %v1123 = vpop.xlane.xlu0 %1122
        %v1124 = vrcp.pop %v1123
        %v1125 = vmul.f32 %v1123, %v1124
        %v1126 = vsub.f32 2.0, %v1125
        %v1127 = vmul.f32 %v1124, %v1126
        %v1128 = vmul.f32 %v1120, %v1127
        %v1129 = vpack.c.bf16 %v1128, %v1128
        %1130 = vrot.lane.b32.xlu0 %v1063, 64
        %v1131 = vpop.permute.xlu0 %1130
        %v1133 = vsel %vm1067, %v1129, 0
        %vm1135 = vcmask 1043456
        %v1137 = vsel %vm1135, %v1131, 0
        %1139 = vmatprep.subr.bf16.mxu0 0
        %1140 = vmatpush1.bf16.msra.mxu0 %v1137
        %1141 = vmatprep.subr.bf16.mxu0 0
        %1142 = vmatpush1.bf16.msra.mxu0 0
        %1143 = vmatprep.subr.bf16.mxu0 0
        %1144 = vmatpush1.bf16.msra.mxu0 0
        %1145 = vmatprep.subr.bf16.mxu0 0
        %1146 = vmatpush1.bf16.msra.mxu0 0
        %1147 = vmatprep.subr.bf16.mxu0 0
        %1148 = vmatpush1.bf16.msra.mxu0 0
        %1149 = vmatprep.subr.bf16.mxu0 0
        %1150 = vmatpush1.bf16.msra.mxu0 0
        %1151 = vmatprep.subr.bf16.mxu0 0
        %1152 = vmatpush1.bf16.msra.mxu0 0
        %1153 = vmatprep.subr.bf16.mxu0 0
        %1154 = vmatpush1.bf16.msra.mxu0 0
        %1155 = vmatprep.subr.bf16.mxu0 0
        %1156 = vmatpush1.bf16.msra.mxu0 0
        %1157 = vmatprep.subr.bf16.mxu0 0
        %1158 = vmatpush1.bf16.msra.mxu0 0
        %1159 = vmatprep.subr.bf16.mxu0 0
        %1160 = vmatpush1.bf16.msra.mxu0 0
        %1161 = vmatprep.subr.bf16.mxu0 0
        %1162 = vmatpush1.bf16.msra.mxu0 0
        %1163 = vmatprep.subr.bf16.mxu0 0
        %1164 = vmatpush1.bf16.msra.mxu0 0
        %1165 = vmatprep.subr.bf16.mxu0 0
        %1166 = vmatpush1.bf16.msra.mxu0 0
        %1167 = vmatprep.subr.bf16.mxu0 0
        %1168 = vmatpush1.bf16.msra.mxu0 0
        %1169 = vmatprep.subr.bf16.mxu0 0
        %1170 = vmatpush1.bf16.msra.mxu0 0
        %1171 = vmatprep.mubr.bf16.mxu0 0
        %1172 = vmatmul.mubr.bf16.gmra.mrb[0].mxu0 %v1133
        %v1173 = vpop.f32.mrb[0].mxu0
        %v1174 = vadd.f32 0.0, %v1173
        %v1175 = vpop.f32.mrb[0].mxu0
        %v1176 = vpop.f32.mrb[0].mxu0
        %v1177 = vpop.f32.mrb[0].mxu0
        %1178 = vdwg.mxu0
        %1179 = vst.msk [vmem:[#allocation2] sm:$0xff] %vm1067, %v1174
        %1181 = vrot.lane.b32.xlu0 %v1062, 120
        %v1182 = vpop.permute.xlu0 %1181
        %1183 = vrot.lane.b32.xlu0 %v1063, 88
        %v1184 = vpop.permute.xlu0 %1183
        %v1186 = vsel %vm1067, %v1182, 0
        %v1189 = vsel %vm1067, %v1184, 0
        %1191 = vmatprep.subr.bf16.mxu0 0
        %1192 = vmatpush1.bf16.xpose.msra.mxu0 %v1189
        %1193 = vmatprep.subr.bf16.mxu0 0
        %1194 = vmatpush1.bf16.xpose.msra.mxu0 0
        %1195 = vmatprep.subr.bf16.mxu0 0
        %1196 = vmatpush1.bf16.xpose.msra.mxu0 0
        %1197 = vmatprep.subr.bf16.mxu0 0
        %1198 = vmatpush1.bf16.xpose.msra.mxu0 0
        %1199 = vmatprep.subr.bf16.mxu0 0
        %1200 = vmatpush1.bf16.xpose.msra.mxu0 0
        %1201 = vmatprep.subr.bf16.mxu0 0
        %1202 = vmatpush1.bf16.xpose.msra.mxu0 0
        %1203 = vmatprep.subr.bf16.mxu0 0
        %1204 = vmatpush1.bf16.xpose.msra.mxu0 0
        %1205 = vmatprep.subr.bf16.mxu0 0
        %1206 = vmatpush1.bf16.xpose.msra.mxu0 0
        %1207 = vmatprep.subr.bf16.mxu0 0
        %1208 = vmatpush1.bf16.xpose.msra.mxu0 0
        %1209 = vmatprep.subr.bf16.mxu0 0
        %1210 = vmatpush1.bf16.xpose.msra.mxu0 0
        %1211 = vmatprep.subr.bf16.mxu0 0
        %1212 = vmatpush1.bf16.xpose.msra.mxu0 0
        %1213 = vmatprep.subr.bf16.mxu0 0
        %1214 = vmatpush1.bf16.xpose.msra.mxu0 0
        %1215 = vmatprep.subr.bf16.mxu0 0
        %1216 = vmatpush1.bf16.xpose.msra.mxu0 0
        %1217 = vmatprep.subr.bf16.mxu0 0
        %1218 = vmatpush1.bf16.xpose.msra.mxu0 0
        %1219 = vmatprep.subr.bf16.mxu0 0
        %1220 = vmatpush1.bf16.xpose.msra.mxu0 0
        %1221 = vmatprep.subr.bf16.mxu0 0
        %1222 = vmatpush1.bf16.xpose.msra.mxu0 0
        %1223 = vmatprep.mubr.bf16.mxu0 0
        %1224 = vmatmul.mubr.bf16.gmra.mrb[0].mxu0 %v1186
        %v1225 = vpop.f32.mrb[0].mxu0
        %v1226 = vadd.f32 0.0, %v1225
        %v1227 = vpop.f32.mrb[0].mxu0
        %v1228 = vpop.f32.mrb[0].mxu0
        %v1229 = vpop.f32.mrb[0].mxu0
        %1230 = vdwg.mxu0
        %v1231 = vsel %vm1060, -1e+30, %v1226
        %v1232 = vsel %vm1067, %v1231, -inf
        %1233 = vmax.xlane.f32.xlu0 %v1232
        %v1234 = vpop.xlane.xlu0 %1233
        %v1235 = vsub.f32 %v1231, %v1234
        %v1236 = vmul.f32 %v1235, 1.442695
        %v1237 = vpow.pop %v1236
        %v1238 = vsel %vm1067, %v1237, 0.0
        %1239 = vadd.xlane.f32.xlu0 %v1238
        %v1240 = vpop.xlane.xlu0 %1239
        %v1241 = vrcp.pop %v1240
        %v1242 = vmul.f32 %v1240, %v1241
        %v1243 = vsub.f32 2.0, %v1242
        %v1244 = vmul.f32 %v1241, %v1243
        %v1245 = vmul.f32 %v1237, %v1244
        %v1246 = vpack.c.bf16 %v1245, %v1245
        %1247 = vrot.lane.b32.xlu0 %v1063, 56
        %v1248 = vpop.permute.xlu0 %1247
        %v1250 = vsel %vm1067, %v1246, 0
        %v1253 = vsel %vm1135, %v1248, 0
        %1255 = vmatprep.subr.bf16.mxu0 0
        %1256 = vmatpush1.bf16.msra.mxu0 %v1253
        %1257 = vmatprep.subr.bf16.mxu0 0
        %1258 = vmatpush1.bf16.msra.mxu0 0
        %1259 = vmatprep.subr.bf16.mxu0 0
        %1260 = vmatpush1.bf16.msra.mxu0 0
        %1261 = vmatprep.subr.bf16.mxu0 0
        %1262 = vmatpush1.bf16.msra.mxu0 0
        %1263 = vmatprep.subr.bf16.mxu0 0
        %1264 = vmatpush1.bf16.msra.mxu0 0
        %1265 = vmatprep.subr.bf16.mxu0 0
        %1266 = vmatpush1.bf16.msra.mxu0 0
        %1267 = vmatprep.subr.bf16.mxu0 0
        %1268 = vmatpush1.bf16.msra.mxu0 0
        %1269 = vmatprep.subr.bf16.mxu0 0
        %1270 = vmatpush1.bf16.msra.mxu0 0
        %1271 = vmatprep.subr.bf16.mxu0 0
        %1272 = vmatpush1.bf16.msra.mxu0 0
        %1273 = vmatprep.subr.bf16.mxu0 0
        %1274 = vmatpush1.bf16.msra.mxu0 0
        %1275 = vmatprep.subr.bf16.mxu0 0
        %1276 = vmatpush1.bf16.msra.mxu0 0
        %1277 = vmatprep.subr.bf16.mxu0 0
        %1278 = vmatpush1.bf16.msra.mxu0 0
        %1279 = vmatprep.subr.bf16.mxu0 0
        %1280 = vmatpush1.bf16.msra.mxu0 0
        %1281 = vmatprep.subr.bf16.mxu0 0
        %1282 = vmatpush1.bf16.msra.mxu0 0
        %1283 = vmatprep.subr.bf16.mxu0 0
        %1284 = vmatpush1.bf16.msra.mxu0 0
        %1285 = vmatprep.subr.bf16.mxu0 0
        %1286 = vmatpush1.bf16.msra.mxu0 0
        %1287 = vmatprep.mubr.bf16.mxu0 0
        %1288 = vmatmul.mubr.bf16.gmra.mrb[0].mxu0 %v1250
        %v1289 = vpop.f32.mrb[0].mxu0
        %v1290 = vadd.f32 0.0, %v1289
        %v1291 = vpop.f32.mrb[0].mxu0
        %v1292 = vpop.f32.mrb[0].mxu0
        %v1293 = vpop.f32.mrb[0].mxu0
        %1294 = vdwg.mxu0
        %1296 = vrot.lane.b32.xlu0 %v1290, 8
        %v1297 = vpop.permute.xlu0 %1296
        %vm1299 = vcmask 130112
        %1300 = vst.msk [vmem:[#allocation2] sm:$0xff] %vm1299, %v1297
        %1301 = vrot.lane.b32.xlu0 %v1062, 112
        %v1302 = vpop.permute.xlu0 %1301
        %1303 = vrot.lane.b32.xlu0 %v1063, 80
        %v1304 = vpop.permute.xlu0 %1303
        %v1306 = vsel %vm1067, %v1302, 0
        %v1309 = vsel %vm1067, %v1304, 0
        %1311 = vmatprep.subr.bf16.mxu0 0
        %1312 = vmatpush1.bf16.xpose.msra.mxu0 %v1309
        %1313 = vmatprep.subr.bf16.mxu0 0
        %1314 = vmatpush1.bf16.xpose.msra.mxu0 0
        %1315 = vmatprep.subr.bf16.mxu0 0
        %1316 = vmatpush1.bf16.xpose.msra.mxu0 0
        %1317 = vmatprep.subr.bf16.mxu0 0
        %1318 = vmatpush1.bf16.xpose.msra.mxu0 0
        %1319 = vmatprep.subr.bf16.mxu0 0
        %1320 = vmatpush1.bf16.xpose.msra.mxu0 0
        %1321 = vmatprep.subr.bf16.mxu0 0
        %1322 = vmatpush1.bf16.xpose.msra.mxu0 0
        %1323 = vmatprep.subr.bf16.mxu0 0
        %1324 = vmatpush1.bf16.xpose.msra.mxu0 0
        %1325 = vmatprep.subr.bf16.mxu0 0
        %1326 = vmatpush1.bf16.xpose.msra.mxu0 0
        %1327 = vmatprep.subr.bf16.mxu0 0
        %1328 = vmatpush1.bf16.xpose.msra.mxu0 0
        %1329 = vmatprep.subr.bf16.mxu0 0
        %1330 = vmatpush1.bf16.xpose.msra.mxu0 0
        %1331 = vmatprep.subr.bf16.mxu0 0
        %1332 = vmatpush1.bf16.xpose.msra.mxu0 0
        %1333 = vmatprep.subr.bf16.mxu0 0
        %1334 = vmatpush1.bf16.xpose.msra.mxu0 0
        %1335 = vmatprep.subr.bf16.mxu0 0
        %1336 = vmatpush1.bf16.xpose.msra.mxu0 0
        %1337 = vmatprep.subr.bf16.mxu0 0
        %1338 = vmatpush1.bf16.xpose.msra.mxu0 0
        %1339 = vmatprep.subr.bf16.mxu0 0
        %1340 = vmatpush1.bf16.xpose.msra.mxu0 0
        %1341 = vmatprep.subr.bf16.mxu0 0
        %1342 = vmatpush1.bf16.xpose.msra.mxu0 0
        %1343 = vmatprep.mubr.bf16.mxu0 0
        %1344 = vmatmul.mubr.bf16.gmra.mrb[0].mxu0 %v1306
        %v1345 = vpop.f32.mrb[0].mxu0
        %v1346 = vadd.f32 0.0, %v1345
        %v1347 = vpop.f32.mrb[0].mxu0
        %v1348 = vpop.f32.mrb[0].mxu0
        %v1349 = vpop.f32.mrb[0].mxu0
        %1350 = vdwg.mxu0
        %v1351 = vsel %vm1060, -1e+30, %v1346
        %v1352 = vsel %vm1067, %v1351, -inf
        %1353 = vmax.xlane.f32.xlu0 %v1352
        %v1354 = vpop.xlane.xlu0 %1353
        %v1355 = vsub.f32 %v1351, %v1354
        %v1356 = vmul.f32 %v1355, 1.442695
        %v1357 = vpow.pop %v1356
        %v1358 = vsel %vm1067, %v1357, 0.0
        %1359 = vadd.xlane.f32.xlu0 %v1358
        %v1360 = vpop.xlane.xlu0 %1359
        %v1361 = vrcp.pop %v1360
        %v1362 = vmul.f32 %v1360, %v1361
        %v1363 = vsub.f32 2.0, %v1362
        %v1364 = vmul.f32 %v1361, %v1363
        %v1365 = vmul.f32 %v1357, %v1364
        %v1366 = vpack.c.bf16 %v1365, %v1365
        %1367 = vrot.lane.b32.xlu0 %v1063, 48
        %v1368 = vpop.permute.xlu0 %1367
        %v1370 = vsel %vm1067, %v1366, 0
        %v1373 = vsel %vm1135, %v1368, 0
        %1375 = vmatprep.subr.bf16.mxu0 0
        %1376 = vmatpush1.bf16.msra.mxu0 %v1373
        %1377 = vmatprep.subr.bf16.mxu0 0
        %1378 = vmatpush1.bf16.msra.mxu0 0
        %1379 = vmatprep.subr.bf16.mxu0 0
        %1380 = vmatpush1.bf16.msra.mxu0 0
        %1381 = vmatprep.subr.bf16.mxu0 0
        %1382 = vmatpush1.bf16.msra.mxu0 0
        %1383 = vmatprep.subr.bf16.mxu0 0
        %1384 = vmatpush1.bf16.msra.mxu0 0
        %1385 = vmatprep.subr.bf16.mxu0 0
        %1386 = vmatpush1.bf16.msra.mxu0 0
        %1387 = vmatprep.subr.bf16.mxu0 0
        %1388 = vmatpush1.bf16.msra.mxu0 0
        %1389 = vmatprep.subr.bf16.mxu0 0
        %1390 = vmatpush1.bf16.msra.mxu0 0
        %1391 = vmatprep.subr.bf16.mxu0 0
        %1392 = vmatpush1.bf16.msra.mxu0 0
        %1393 = vmatprep.subr.bf16.mxu0 0
        %1394 = vmatpush1.bf16.msra.mxu0 0
        %1395 = vmatprep.subr.bf16.mxu0 0
        %1396 = vmatpush1.bf16.msra.mxu0 0
        %1397 = vmatprep.subr.bf16.mxu0 0
        %1398 = vmatpush1.bf16.msra.mxu0 0
        %1399 = vmatprep.subr.bf16.mxu0 0
        %1400 = vmatpush1.bf16.msra.mxu0 0
        %1401 = vmatprep.subr.bf16.mxu0 0
        %1402 = vmatpush1.bf16.msra.mxu0 0
        %1403 = vmatprep.subr.bf16.mxu0 0
        %1404 = vmatpush1.bf16.msra.mxu0 0
        %1405 = vmatprep.subr.bf16.mxu0 0
        %1406 = vmatpush1.bf16.msra.mxu0 0
        %1407 = vmatprep.mubr.bf16.mxu0 0
        %1408 = vmatmul.mubr.bf16.gmra.mrb[0].mxu0 %v1370
        %v1409 = vpop.f32.mrb[0].mxu0
        %v1410 = vadd.f32 0.0, %v1409
        %v1411 = vpop.f32.mrb[0].mxu0
        %v1412 = vpop.f32.mrb[0].mxu0
        %v1413 = vpop.f32.mrb[0].mxu0
        %1414 = vdwg.mxu0
        %1416 = vrot.lane.b32.xlu0 %v1410, 16
        %v1417 = vpop.permute.xlu0 %1416
        %vm1419 = vcmask 195712
        %1420 = vst.msk [vmem:[#allocation2] sm:$0xff] %vm1419, %v1417
        %1421 = vrot.lane.b32.xlu0 %v1062, 104
        %v1422 = vpop.permute.xlu0 %1421
        %1423 = vrot.lane.b32.xlu0 %v1063, 72
        %v1424 = vpop.permute.xlu0 %1423
        %v1426 = vsel %vm1067, %v1422, 0
        %v1429 = vsel %vm1067, %v1424, 0
        %1431 = vmatprep.subr.bf16.mxu0 0
        %1432 = vmatpush1.bf16.xpose.msra.mxu0 %v1429
        %1433 = vmatprep.subr.bf16.mxu0 0
        %1434 = vmatpush1.bf16.xpose.msra.mxu0 0
        %1435 = vmatprep.subr.bf16.mxu0 0
        %1436 = vmatpush1.bf16.xpose.msra.mxu0 0
        %1437 = vmatprep.subr.bf16.mxu0 0
        %1438 = vmatpush1.bf16.xpose.msra.mxu0 0
        %1439 = vmatprep.subr.bf16.mxu0 0
        %1440 = vmatpush1.bf16.xpose.msra.mxu0 0
        %1441 = vmatprep.subr.bf16.mxu0 0
        %1442 = vmatpush1.bf16.xpose.msra.mxu0 0
        %1443 = vmatprep.subr.bf16.mxu0 0
        %1444 = vmatpush1.bf16.xpose.msra.mxu0 0
        %1445 = vmatprep.subr.bf16.mxu0 0
        %1446 = vmatpush1.bf16.xpose.msra.mxu0 0
        %1447 = vmatprep.subr.bf16.mxu0 0
        %1448 = vmatpush1.bf16.xpose.msra.mxu0 0
        %1449 = vmatprep.subr.bf16.mxu0 0
        %1450 = vmatpush1.bf16.xpose.msra.mxu0 0
        %1451 = vmatprep.subr.bf16.mxu0 0
        %1452 = vmatpush1.bf16.xpose.msra.mxu0 0
        %1453 = vmatprep.subr.bf16.mxu0 0
        %1454 = vmatpush1.bf16.xpose.msra.mxu0 0
        %1455 = vmatprep.subr.bf16.mxu0 0
        %1456 = vmatpush1.bf16.xpose.msra.mxu0 0
        %1457 = vmatprep.subr.bf16.mxu0 0
        %1458 = vmatpush1.bf16.xpose.msra.mxu0 0
        %1459 = vmatprep.subr.bf16.mxu0 0
        %1460 = vmatpush1.bf16.xpose.msra.mxu0 0
        %1461 = vmatprep.subr.bf16.mxu0 0
        %1462 = vmatpush1.bf16.xpose.msra.mxu0 0
        %1463 = vmatprep.mubr.bf16.mxu0 0
        %1464 = vmatmul.mubr.bf16.gmra.mrb[0].mxu0 %v1426
        %v1465 = vpop.f32.mrb[0].mxu0
        %v1466 = vadd.f32 0.0, %v1465
        %v1467 = vpop.f32.mrb[0].mxu0
        %v1468 = vpop.f32.mrb[0].mxu0
        %v1469 = vpop.f32.mrb[0].mxu0
        %1470 = vdwg.mxu0
        %v1471 = vsel %vm1060, -1e+30, %v1466
        %v1472 = vsel %vm1067, %v1471, -inf
        %1473 = vmax.xlane.f32.xlu0 %v1472
        %v1474 = vpop.xlane.xlu0 %1473
        %v1475 = vsub.f32 %v1471, %v1474
        %v1476 = vmul.f32 %v1475, 1.442695
        %v1477 = vpow.pop %v1476
        %v1478 = vsel %vm1067, %v1477, 0.0
        %1479 = vadd.xlane.f32.xlu0 %v1478
        %v1480 = vpop.xlane.xlu0 %1479
        %v1481 = vrcp.pop %v1480
        %v1482 = vmul.f32 %v1480, %v1481
        %v1483 = vsub.f32 2.0, %v1482
        %v1484 = vmul.f32 %v1481, %v1483
        %v1485 = vmul.f32 %v1477, %v1484
        %v1486 = vpack.c.bf16 %v1485, %v1485
        %1487 = vrot.lane.b32.xlu0 %v1063, 40
        %v1488 = vpop.permute.xlu0 %1487
        %v1490 = vsel %vm1067, %v1486, 0
        %v1493 = vsel %vm1135, %v1488, 0
        %1495 = vmatprep.subr.bf16.mxu0 0
        %1496 = vmatpush1.bf16.msra.mxu0 %v1493
        %1497 = vmatprep.subr.bf16.mxu0 0
        %1498 = vmatpush1.bf16.msra.mxu0 0
        %1499 = vmatprep.subr.bf16.mxu0 0
        %1500 = vmatpush1.bf16.msra.mxu0 0
        %1501 = vmatprep.subr.bf16.mxu0 0
        %1502 = vmatpush1.bf16.msra.mxu0 0
        %1503 = vmatprep.subr.bf16.mxu0 0
        %1504 = vmatpush1.bf16.msra.mxu0 0
        %1505 = vmatprep.subr.bf16.mxu0 0
        %1506 = vmatpush1.bf16.msra.mxu0 0
        %1507 = vmatprep.subr.bf16.mxu0 0
        %1508 = vmatpush1.bf16.msra.mxu0 0
        %1509 = vmatprep.subr.bf16.mxu0 0
        %1510 = vmatpush1.bf16.msra.mxu0 0
        %1511 = vmatprep.subr.bf16.mxu0 0
        %1512 = vmatpush1.bf16.msra.mxu0 0
        %1513 = vmatprep.subr.bf16.mxu0 0
        %1514 = vmatpush1.bf16.msra.mxu0 0
        %1515 = vmatprep.subr.bf16.mxu0 0
        %1516 = vmatpush1.bf16.msra.mxu0 0
        %1517 = vmatprep.subr.bf16.mxu0 0
        %1518 = vmatpush1.bf16.msra.mxu0 0
        %1519 = vmatprep.subr.bf16.mxu0 0
        %1520 = vmatpush1.bf16.msra.mxu0 0
        %1521 = vmatprep.subr.bf16.mxu0 0
        %1522 = vmatpush1.bf16.msra.mxu0 0
        %1523 = vmatprep.subr.bf16.mxu0 0
        %1524 = vmatpush1.bf16.msra.mxu0 0
        %1525 = vmatprep.subr.bf16.mxu0 0
        %1526 = vmatpush1.bf16.msra.mxu0 0
        %1527 = vmatprep.mubr.bf16.mxu0 0
        %1528 = vmatmul.mubr.bf16.gmra.mrb[0].mxu0 %v1490
        %v1529 = vpop.f32.mrb[0].mxu0
        %v1530 = vadd.f32 0.0, %v1529
        %v1531 = vpop.f32.mrb[0].mxu0
        %v1532 = vpop.f32.mrb[0].mxu0
        %v1533 = vpop.f32.mrb[0].mxu0
        %1534 = vdwg.mxu0
        %1536 = vrot.lane.b32.xlu0 %v1530, 24
        %v1537 = vpop.permute.xlu0 %1536
        %vm1539 = vcmask 261312
        %1540 = vst.msk [vmem:[#allocation2] sm:$0xff] %vm1539, %v1537
        %v1541 = vld [vmem:[#allocation2] sm:$0xff]
        %v1542 = vld [vmem:[%s7] sm:$0xf]
        %v1543 = vld [vmem:[%s7 + $0x4] sm:$0xf]
        %v1544 = vld [vmem:[%s7 + $0x8] sm:$0xf]
        %v1545 = vld [vmem:[%s7 + $0xc] sm:$0xf]
        %v1546 = vpack.c.bf16 %v1541, %v1541
        %v1551 = vunpack.c.l.b16 %v1542
        %v1552 = vunpack.c.l.b16 %v1543
        %v1553 = vunpack.c.l.b16 %v1544
        %v1554 = vunpack.c.l.b16 %v1545
        %v1555 = vpack.c.b16 %v1552, %v1551
        %v1556 = vpack.c.b16 %v1554, %v1553
        %v1560 = vsel %vm960, %v1546, 0
        %1562 = vmatprep.subr.bf16.mxu0 0
        %1563 = vmatpush1.bf16.msra.mxu0 %v1555
        %1564 = vmatprep.subr.bf16.mxu0 0
        %1565 = vmatpush1.bf16.msra.mxu0 %v1556
        %1566 = vmatprep.subr.bf16.mxu0 0
        %1567 = vmatpush1.bf16.msra.mxu0 0
        %1568 = vmatprep.subr.bf16.mxu0 0
        %1569 = vmatpush1.bf16.msra.mxu0 0
        %1570 = vmatprep.subr.bf16.mxu0 0
        %1571 = vmatpush1.bf16.msra.mxu0 0
        %1572 = vmatprep.subr.bf16.mxu0 0
        %1573 = vmatpush1.bf16.msra.mxu0 0
        %1574 = vmatprep.subr.bf16.mxu0 0
        %1575 = vmatpush1.bf16.msra.mxu0 0
        %1576 = vmatprep.subr.bf16.mxu0 0
        %1577 = vmatpush1.bf16.msra.mxu0 0
        %1578 = vmatprep.subr.bf16.mxu0 0
        %1579 = vmatpush1.bf16.msra.mxu0 0
        %1580 = vmatprep.subr.bf16.mxu0 0
        %1581 = vmatpush1.bf16.msra.mxu0 0
        %1582 = vmatprep.subr.bf16.mxu0 0
        %1583 = vmatpush1.bf16.msra.mxu0 0
        %1584 = vmatprep.subr.bf16.mxu0 0
        %1585 = vmatpush1.bf16.msra.mxu0 0
        %1586 = vmatprep.subr.bf16.mxu0 0
        %1587 = vmatpush1.bf16.msra.mxu0 0
        %1588 = vmatprep.subr.bf16.mxu0 0
        %1589 = vmatpush1.bf16.msra.mxu0 0
        %1590 = vmatprep.subr.bf16.mxu0 0
        %1591 = vmatpush1.bf16.msra.mxu0 0
        %1592 = vmatprep.subr.bf16.mxu0 0
        %1593 = vmatpush1.bf16.msra.mxu0 0
        %1594 = vmatprep.mubr.bf16.mxu0 0
        %1595 = vmatmul.mubr.bf16.gmra.mrb[0].mxu0 %v1560
        %v1596 = vpop.f32.mrb[0].mxu0
        %v1597 = vadd.f32 0.0, %v1596
        %v1598 = vpop.f32.mrb[0].mxu0
        %v1599 = vpop.f32.mrb[0].mxu0
        %v1600 = vpop.f32.mrb[0].mxu0
        %1601 = vdwg.mxu0
        %v1602 = vadd.f32 %v956, %v1597
        %v1603 = vld [vmem:[#allocation4] sm:$0x1]
        %v1605 = vlaneseq
        %v1606 = vshrl.u32 %v1605, 7
        %v1607 = vsub.s32 0, %v1606
        %v1608 = vrot.slane %v1603, %v1607
        %v1610 = vadd.f32 %v1602, %v1608
        %v1611 = vld [vmem:[#allocation6] sm:$0x1]
        %v1612 = vld [vmem:[#allocation8] sm:$0x1]
        %v1613 = vsel %vm960, %v1610, 0.0
        %1614 = vadd.xlane.f32.xlu0 %v1613
        %v1615 = vpop.xlane.xlu0 %1614
        %v1616 = vmul.f32 %v1615, %v964
        %v1617 = vsub.f32 %v1610, %v1616
        %v1618 = vmul.f32 %v1617, %v1617
        %v1619 = vsel %vm960, %v1618, 0.0
        %1620 = vadd.xlane.f32.xlu0 %v1619
        %v1621 = vpop.xlane.xlu0 %1620
        %v1622 = vmul.f32 %v1621, %v964
        %v1623 = vadd.f32 %v1622, 1e-05
        %v1624 = vrsqrt.pop %v1623
        %v1625 = vmul.f32 %v1617, %v1624
        %v1627 = vlaneseq
        %v1628 = vshrl.u32 %v1627, 7
        %v1629 = vsub.s32 0, %v1628
        %v1630 = vrot.slane %v1611, %v1629
        %v1632 = vmul.f32 %v1625, %v1630
        %v1634 = vlaneseq
        %v1635 = vshrl.u32 %v1634, 7
        %v1636 = vsub.s32 0, %v1635
        %v1637 = vrot.slane %v1612, %v1636
        %v1639 = vadd.f32 %v1632, %v1637
        %v1640 = vld [vmem:[%s11] sm:$0xf]
        %v1641 = vld [vmem:[%s11 + $0x4] sm:$0xf]
        %v1642 = vld [vmem:[%s11 + $0x8] sm:$0xf]
        %v1643 = vld [vmem:[%s11 + $0xc] sm:$0xf]
        %v1644 = vld [vmem:[#allocation9] sm:$0x1]
        %v1649 = vunpack.c.l.b16 %v1640
        %v1650 = vunpack.c.l.b16 %v1641
        %v1651 = vunpack.c.l.b16 %v1642
        %v1652 = vunpack.c.l.b16 %v1643
        %v1653 = vpack.c.b16 %v1650, %v1649
        %v1654 = vpack.c.b16 %v1652, %v1651
        %v1658 = vsel %vm960, %v957, 0
        %1660 = vmatprep.subr.bf16.mxu0 0
        %1661 = vmatpush1.bf16.msra.mxu0 %v1653
        %1662 = vmatprep.subr.bf16.mxu0 0
        %1663 = vmatpush1.bf16.msra.mxu0 %v1654
        %1664 = vmatprep.subr.bf16.mxu0 0
        %1665 = vmatpush1.bf16.msra.mxu0 0
        %1666 = vmatprep.subr.bf16.mxu0 0
        %1667 = vmatpush1.bf16.msra.mxu0 0
        %1668 = vmatprep.subr.bf16.mxu0 0
        %1669 = vmatpush1.bf16.msra.mxu0 0
        %1670 = vmatprep.subr.bf16.mxu0 0
        %1671 = vmatpush1.bf16.msra.mxu0 0
        %1672 = vmatprep.subr.bf16.mxu0 0
        %1673 = vmatpush1.bf16.msra.mxu0 0
        %1674 = vmatprep.subr.bf16.mxu0 0
        %1675 = vmatpush1.bf16.msra.mxu0 0
        %1676 = vmatprep.subr.bf16.mxu0 0
        %1677 = vmatpush1.bf16.msra.mxu0 0
        %1678 = vmatprep.subr.bf16.mxu0 0
        %1679 = vmatpush1.bf16.msra.mxu0 0
        %1680 = vmatprep.subr.bf16.mxu0 0
        %1681 = vmatpush1.bf16.msra.mxu0 0
        %1682 = vmatprep.subr.bf16.mxu0 0
        %1683 = vmatpush1.bf16.msra.mxu0 0
        %1684 = vmatprep.subr.bf16.mxu0 0
        %1685 = vmatpush1.bf16.msra.mxu0 0
        %1686 = vmatprep.subr.bf16.mxu0 0
        %1687 = vmatpush1.bf16.msra.mxu0 0
        %1688 = vmatprep.subr.bf16.mxu0 0
        %1689 = vmatpush1.bf16.msra.mxu0 0
        %1690 = vmatprep.subr.bf16.mxu0 0
        %1691 = vmatpush1.bf16.msra.mxu0 0
        %1692 = vmatprep.mubr.bf16.mxu0 0
        %1693 = vmatmul.mubr.bf16.gmra.mrb[0].mxu0 %v1658
        %v1694 = vpop.f32.mrb[0].mxu0
        %v1695 = vadd.f32 %v1644, %v1694
        %v1696 = vpop.f32.mrb[0].mxu0
        %v1697 = vpop.f32.mrb[0].mxu0
        %v1698 = vpop.f32.mrb[0].mxu0
        %1699 = vdwg.mxu0
        %v1700 = vld [vmem:[%s13] sm:$0xf]
        %v1701 = vld [vmem:[%s13 + $0x4] sm:$0xf]
        %v1702 = vld [vmem:[%s13 + $0x8] sm:$0xf]
        %v1703 = vld [vmem:[%s13 + $0xc] sm:$0xf]
        %v1704 = vpack.c.bf16 %v1695, %v1695
        %v1705 = vld [vmem:[#allocation11] sm:$0x1]
        %v1710 = vunpack.c.l.b16 %v1700
        %v1711 = vunpack.c.l.b16 %v1701
        %v1712 = vunpack.c.l.b16 %v1702
        %v1713 = vunpack.c.l.b16 %v1703
        %v1714 = vpack.c.b16 %v1711, %v1710
        %v1715 = vpack.c.b16 %v1713, %v1712
        %v1719 = vsel %vm960, %v1704, 0
        %1721 = vmatprep.subr.bf16.mxu0 0
        %1722 = vmatpush1.bf16.msra.mxu0 %v1714
        %1723 = vmatprep.subr.bf16.mxu0 0
        %1724 = vmatpush1.bf16.msra.mxu0 %v1715
        %1725 = vmatprep.subr.bf16.mxu0 0
        %1726 = vmatpush1.bf16.msra.mxu0 0
        %1727 = vmatprep.subr.bf16.mxu0 0
        %1728 = vmatpush1.bf16.msra.mxu0 0
        %1729 = vmatprep.subr.bf16.mxu0 0
        %1730 = vmatpush1.bf16.msra.mxu0 0
        %1731 = vmatprep.subr.bf16.mxu0 0
        %1732 = vmatpush1.bf16.msra.mxu0 0
        %1733 = vmatprep.subr.bf16.mxu0 0
        %1734 = vmatpush1.bf16.msra.mxu0 0
        %1735 = vmatprep.subr.bf16.mxu0 0
        %1736 = vmatpush1.bf16.msra.mxu0 0
        %1737 = vmatprep.subr.bf16.mxu0 0
        %1738 = vmatpush1.bf16.msra.mxu0 0
        %1739 = vmatprep.subr.bf16.mxu0 0
        %1740 = vmatpush1.bf16.msra.mxu0 0
        %1741 = vmatprep.subr.bf16.mxu0 0
        %1742 = vmatpush1.bf16.msra.mxu0 0
        %1743 = vmatprep.subr.bf16.mxu0 0
        %1744 = vmatpush1.bf16.msra.mxu0 0
        %1745 = vmatprep.subr.bf16.mxu0 0
        %1746 = vmatpush1.bf16.msra.mxu0 0
        %1747 = vmatprep.subr.bf16.mxu0 0
        %1748 = vmatpush1.bf16.msra.mxu0 0
        %1749 = vmatprep.subr.bf16.mxu0 0
        %1750 = vmatpush1.bf16.msra.mxu0 0
        %1751 = vmatprep.subr.bf16.mxu0 0
        %1752 = vmatpush1.bf16.msra.mxu0 0
        %1753 = vmatprep.mubr.bf16.mxu0 0
        %1754 = vmatmul.mubr.bf16.gmra.mrb[0].mxu0 %v1719
        %v1755 = vpop.f32.mrb[0].mxu0
        %v1756 = vadd.f32 %v1705, %v1755
        %v1757 = vpop.f32.mrb[0].mxu0
        %v1758 = vpop.f32.mrb[0].mxu0
        %v1759 = vpop.f32.mrb[0].mxu0
        %1760 = vdwg.mxu0
        %v1761 = vld [vmem:[%s15] sm:$0xf]
        %v1762 = vld [vmem:[%s15 + $0x4] sm:$0xf]
        %v1763 = vld [vmem:[%s15 + $0x8] sm:$0xf]
        %v1764 = vld [vmem:[%s15 + $0xc] sm:$0xf]
        %v1765 = vpack.c.bf16 %v1639, %v1639
        %v1766 = vld [vmem:[%s16] sm:$0xf]
        %v1767 = vld [vmem:[%s16 + $0x4] sm:$0xf]
        %v1768 = vld [vmem:[%s16 + $0x8] sm:$0xf]
        %v1769 = vld [vmem:[%s16 + $0xc] sm:$0xf]
        %v1770 = vpack.c.bf16 %v1756, %v1756
        %v1775 = vunpack.c.l.b16 %v1766
        %v1776 = vunpack.c.l.b16 %v1767
        %v1777 = vunpack.c.l.b16 %v1768
        %v1778 = vunpack.c.l.b16 %v1769
        %v1779 = vpack.c.b16 %v1776, %v1775
        %v1780 = vpack.c.b16 %v1778, %v1777
        %v1784 = vsel %vm960, %v1770, 0
        %1786 = vmatprep.subr.bf16.mxu0 0
        %1787 = vmatpush1.bf16.msra.mxu0 %v1779
        %1788 = vmatprep.subr.bf16.mxu0 0
        %1789 = vmatpush1.bf16.msra.mxu0 %v1780
        %1790 = vmatprep.subr.bf16.mxu0 0
        %1791 = vmatpush1.bf16.msra.mxu0 0
        %1792 = vmatprep.subr.bf16.mxu0 0
        %1793 = vmatpush1.bf16.msra.mxu0 0
        %1794 = vmatprep.subr.bf16.mxu0 0
        %1795 = vmatpush1.bf16.msra.mxu0 0
        %1796 = vmatprep.subr.bf16.mxu0 0
        %1797 = vmatpush1.bf16.msra.mxu0 0
        %1798 = vmatprep.subr.bf16.mxu0 0
        %1799 = vmatpush1.bf16.msra.mxu0 0
        %1800 = vmatprep.subr.bf16.mxu0 0
        %1801 = vmatpush1.bf16.msra.mxu0 0
        %1802 = vmatprep.subr.bf16.mxu0 0
        %1803 = vmatpush1.bf16.msra.mxu0 0
        %1804 = vmatprep.subr.bf16.mxu0 0
        %1805 = vmatpush1.bf16.msra.mxu0 0
        %1806 = vmatprep.subr.bf16.mxu0 0
        %1807 = vmatpush1.bf16.msra.mxu0 0
        %1808 = vmatprep.subr.bf16.mxu0 0
        %1809 = vmatpush1.bf16.msra.mxu0 0
        %1810 = vmatprep.subr.bf16.mxu0 0
        %1811 = vmatpush1.bf16.msra.mxu0 0
        %1812 = vmatprep.subr.bf16.mxu0 0
        %1813 = vmatpush1.bf16.msra.mxu0 0
        %1814 = vmatprep.subr.bf16.mxu0 0
        %1815 = vmatpush1.bf16.msra.mxu0 0
        %1816 = vmatprep.subr.bf16.mxu0 0
        %1817 = vmatpush1.bf16.msra.mxu0 0
        %1818 = vmatprep.mubr.bf16.mxu0 0
        %1819 = vmatmul.mubr.bf16.gmra.mrb[0].mxu0 %v1784
        %v1820 = vpop.f32.mrb[0].mxu0
        %v1821 = vadd.f32 0.0, %v1820
        %v1822 = vpop.f32.mrb[0].mxu0
        %v1823 = vpop.f32.mrb[0].mxu0
        %v1824 = vpop.f32.mrb[0].mxu0
        %1825 = vdwg.mxu0
        %v1826 = vlaneseq
        %v1827 = vshrl.u32 %v1826, 7
        %v1828 = vsub.s32 0, %v1827
        %v1829 = vrot.slane %v1821, %v1828
        %v1834 = vunpack.c.l.b16 %v1761
        %v1835 = vunpack.c.l.b16 %v1762
        %v1836 = vunpack.c.l.b16 %v1763
        %v1837 = vunpack.c.l.b16 %v1764
        %v1838 = vpack.c.b16 %v1835, %v1834
        %v1839 = vpack.c.b16 %v1837, %v1836
        %v1843 = vsel %vm960, %v1765, 0
        %1845 = vmatprep.subr.bf16.mxu0 0
        %1846 = vmatpush1.bf16.msra.mxu0 %v1838
        %1847 = vmatprep.subr.bf16.mxu0 0
        %1848 = vmatpush1.bf16.msra.mxu0 %v1839
        %1849 = vmatprep.subr.bf16.mxu0 0
        %1850 = vmatpush1.bf16.msra.mxu0 0
        %1851 = vmatprep.subr.bf16.mxu0 0
        %1852 = vmatpush1.bf16.msra.mxu0 0
        %1853 = vmatprep.subr.bf16.mxu0 0
        %1854 = vmatpush1.bf16.msra.mxu0 0
        %1855 = vmatprep.subr.bf16.mxu0 0
        %1856 = vmatpush1.bf16.msra.mxu0 0
        %1857 = vmatprep.subr.bf16.mxu0 0
        %1858 = vmatpush1.bf16.msra.mxu0 0
        %1859 = vmatprep.subr.bf16.mxu0 0
        %1860 = vmatpush1.bf16.msra.mxu0 0
        %1861 = vmatprep.subr.bf16.mxu0 0
        %1862 = vmatpush1.bf16.msra.mxu0 0
        %1863 = vmatprep.subr.bf16.mxu0 0
        %1864 = vmatpush1.bf16.msra.mxu0 0
        %1865 = vmatprep.subr.bf16.mxu0 0
        %1866 = vmatpush1.bf16.msra.mxu0 0
        %1867 = vmatprep.subr.bf16.mxu0 0
        %1868 = vmatpush1.bf16.msra.mxu0 0
        %1869 = vmatprep.subr.bf16.mxu0 0
        %1870 = vmatpush1.bf16.msra.mxu0 0
        %1871 = vmatprep.subr.bf16.mxu0 0
        %1872 = vmatpush1.bf16.msra.mxu0 0
        %1873 = vmatprep.subr.bf16.mxu0 0
        %1874 = vmatpush1.bf16.msra.mxu0 0
        %1875 = vmatprep.subr.bf16.mxu0 0
        %1876 = vmatpush1.bf16.msra.mxu0 0
        %1877 = vmatprep.mubr.bf16.mxu0 0
        %1878 = vmatmul.mubr.bf16.gmra.mrb[0].mxu0 %v1843
        %v1879 = vpop.f32.mrb[0].mxu0
        %v1880 = vadd.f32 %v1829, %v1879
        %v1881 = vpop.f32.mrb[0].mxu0
        %v1882 = vpop.f32.mrb[0].mxu0
        %v1883 = vpop.f32.mrb[0].mxu0
        %1884 = vdwg.mxu0
        %v1885 = vld [vmem:[#allocation12] sm:$0x1]
        %v1887 = vlaneseq
        %v1888 = vshrl.u32 %v1887, 7
        %v1889 = vsub.s32 0, %v1888
        %v1890 = vrot.slane %v1885, %v1889
        %v1892 = vadd.f32 %v1880, %v1890
        %v1893 = vxor.u32 %v1892, 2147483648
        %v1894 = vmul.f32 %v1893, 1.442695
        %v1895 = vpow.pop %v1894
        %v1896 = vadd.f32 %v1895, 1.0
        %v1897 = vrcp.pop %v1896
        %v1898 = vmul.f32 1.0, %v1897
        %v1899 = vmul.f32 %v1898, %v1639
        %v1900 = vsub.f32 1.0, %v1898
        %v1901 = vlaneseq
        %v1902 = vshrl.u32 %v1901, 7
        %v1903 = vsub.s32 0, %v1902
        %v1904 = vrot.slane %v1756, %v1903
        %v1905 = vmul.f32 %v1900, %v1904
        %v1906 = vadd.f32 %v1899, %v1905
        %v1907 = vld [vmem:[#allocation3] sm:$0x1]
        %v1908 = vld [vmem:[#allocation14] sm:$0x1]
        %v1909 = vld [vmem:[#allocation15] sm:$0x1]
        %v1910 = vsel %vm960, %v1906, 0.0
        %1911 = vadd.xlane.f32.xlu0 %v1910
        %v1912 = vpop.xlane.xlu0 %1911
        %v1913 = vmul.f32 %v1912, %v964
        %v1914 = vsub.f32 %v1906, %v1913
        %v1915 = vmul.f32 %v1914, %v1914
        %v1916 = vsel %vm960, %v1915, 0.0
        %1917 = vadd.xlane.f32.xlu0 %v1916
        %v1918 = vpop.xlane.xlu0 %1917
        %v1919 = vmul.f32 %v1918, %v964
        %v1920 = vadd.f32 %v1919, 1e-05
        %v1921 = vrsqrt.pop %v1920
        %v1922 = vmul.f32 %v1914, %v1921
        %v1924 = vlaneseq
        %v1925 = vshrl.u32 %v1924, 7
        %v1926 = vsub.s32 0, %v1925
        %v1927 = vrot.slane %v1908, %v1926
        %v1929 = vmul.f32 %v1922, %v1927
        %v1931 = vlaneseq
        %v1932 = vshrl.u32 %v1931, 7
        %v1933 = vsub.s32 0, %v1932
        %v1934 = vrot.slane %v1909, %v1933
        %v1936 = vadd.f32 %v1929, %v1934
        %v1938 = vlaneseq
        %v1939 = vshrl.u32 %v1938, 7
        %v1940 = vsub.s32 0, %v1939
        %v1941 = vrot.slane %v1907, %v1940
        %1942 = vset.pattern.permute.xlu0 0
        %1943 = vperm.xlu0 %1942, %v1941
        %v1944 = vpop.permute.xlu0 %1943
        %v1946 = vmul.f32 %v1944, %v1936
        %v1947 = vadd.f32 %v1610, %v1946
        %v1948 = vld [vmem:[#allocation17] sm:$0x1]
        %v1949 = vld [vmem:[#allocation18] sm:$0x1]
        %v1950 = vsel %vm960, %v1947, 0.0
        %1951 = vadd.xlane.f32.xlu0 %v1950
        %v1952 = vpop.xlane.xlu0 %1951
        %v1953 = vmul.f32 %v1952, %v964
        %v1954 = vsub.f32 %v1947, %v1953
        %v1955 = vmul.f32 %v1954, %v1954
        %v1956 = vsel %vm960, %v1955, 0.0
        %1957 = vadd.xlane.f32.xlu0 %v1956
        %v1958 = vpop.xlane.xlu0 %1957
        %v1959 = vmul.f32 %v1958, %v964
        %v1960 = vadd.f32 %v1959, 1e-05
        %v1961 = vrsqrt.pop %v1960
        %v1962 = vmul.f32 %v1954, %v1961
        %v1964 = vlaneseq
        %v1965 = vshrl.u32 %v1964, 7
        %v1966 = vsub.s32 0, %v1965
        %v1967 = vrot.slane %v1948, %v1966
        %v1969 = vmul.f32 %v1962, %v1967
        %v1971 = vlaneseq
        %v1972 = vshrl.u32 %v1971, 7
        %v1973 = vsub.s32 0, %v1972
        %v1974 = vrot.slane %v1949, %v1973
        %v1976 = vadd.f32 %v1969, %v1974
        %v1977 = vld [vmem:[%s22] sm:$0xf]
        %v1978 = vld [vmem:[%s22 + $0x4] sm:$0xf]
        %v1979 = vld [vmem:[%s22 + $0x8] sm:$0xf]
        %v1980 = vld [vmem:[%s22 + $0xc] sm:$0xf]
        %v1981 = vpack.c.bf16 %v1976, %v1976
        %v1982 = vld [vmem:[#allocation20] sm:$0x1]
        %v1984 = vlaneseq
        %v1985 = vshrl.u32 %v1984, 7
        %v1986 = vsub.s32 0, %v1985
        %v1987 = vrot.slane %v1982, %v1986
        %v1993 = vunpack.c.l.b16 %v1977
        %v1994 = vunpack.c.l.b16 %v1978
        %v1995 = vunpack.c.l.b16 %v1979
        %v1996 = vunpack.c.l.b16 %v1980
        %v1997 = vpack.c.b16 %v1994, %v1993
        %v1998 = vpack.c.b16 %v1996, %v1995
        %v2002 = vsel %vm960, %v1981, 0
        %2004 = vmatprep.subr.bf16.mxu0 0
        %2005 = vmatpush1.bf16.msra.mxu0 %v1997
        %2006 = vmatprep.subr.bf16.mxu0 0
        %2007 = vmatpush1.bf16.msra.mxu0 %v1998
        %2008 = vmatprep.subr.bf16.mxu0 0
        %2009 = vmatpush1.bf16.msra.mxu0 0
        %2010 = vmatprep.subr.bf16.mxu0 0
        %2011 = vmatpush1.bf16.msra.mxu0 0
        %2012 = vmatprep.subr.bf16.mxu0 0
        %2013 = vmatpush1.bf16.msra.mxu0 0
        %2014 = vmatprep.subr.bf16.mxu0 0
        %2015 = vmatpush1.bf16.msra.mxu0 0
        %2016 = vmatprep.subr.bf16.mxu0 0
        %2017 = vmatpush1.bf16.msra.mxu0 0
        %2018 = vmatprep.subr.bf16.mxu0 0
        %2019 = vmatpush1.bf16.msra.mxu0 0
        %2020 = vmatprep.subr.bf16.mxu0 0
        %2021 = vmatpush1.bf16.msra.mxu0 0
        %2022 = vmatprep.subr.bf16.mxu0 0
        %2023 = vmatpush1.bf16.msra.mxu0 0
        %2024 = vmatprep.subr.bf16.mxu0 0
        %2025 = vmatpush1.bf16.msra.mxu0 0
        %2026 = vmatprep.subr.bf16.mxu0 0
        %2027 = vmatpush1.bf16.msra.mxu0 0
        %2028 = vmatprep.subr.bf16.mxu0 0
        %2029 = vmatpush1.bf16.msra.mxu0 0
        %2030 = vmatprep.subr.bf16.mxu0 0
        %2031 = vmatpush1.bf16.msra.mxu0 0
        %2032 = vmatprep.subr.bf16.mxu0 0
        %2033 = vmatpush1.bf16.msra.mxu0 0
        %2034 = vmatprep.subr.bf16.mxu0 0
        %2035 = vmatpush1.bf16.msra.mxu0 0
        %2036 = vmatprep.mubr.bf16.mxu0 0
        %2037 = vmatmul.mubr.bf16.gmra.mrb[0].mxu0 %v2002
        %v2038 = vpop.f32.mrb[0].mxu0
        %v2039 = vadd.f32 %v1987, %v2038
        %v2040 = vpop.f32.mrb[0].mxu0
        %v2041 = vpop.f32.mrb[0].mxu0
        %v2042 = vpop.f32.mrb[0].mxu0
        %2043 = vdwg.mxu0
        %v2044 = vmul.f32 %v2039, 0.5
        %v2045 = vmul.f32 %v2039, 0.70710677
        %vm2046 = vcmp.ge.f32.partialorder %v2045, 0.0
        %v2047 = vsel %vm2046, 1.0, -1.0
        %v2048 = vand.u32 2147483647, %v2045
        %v2049 = vmul.f32 %v2048, 0.3275911
        %v2050 = vadd.f32 %v2049, 1.0
        %v2051 = vrcp.pop %v2050
        %v2052 = vmul.f32 %v2050, %v2051
        %v2053 = vsub.f32 2.0, %v2052
        %v2054 = vmul.f32 %v2051, %v2053
        %v2055 = vmul.f32 %v2054, 1.0614054
        %v2056 = vadd.f32 %v2055, -1.4531521
        %v2057 = vmul.f32 %v2056, %v2054
        %v2058 = vadd.f32 %v2057, 1.4214138
        %v2059 = vmul.f32 %v2058, %v2054
        %v2060 = vadd.f32 %v2059, -0.28449672
        %v2061 = vmul.f32 %v2060, %v2054
        %v2062 = vadd.f32 %v2061, 0.2548296
        %v2063 = vmul.f32 %v2062, %v2054
        %v2064 = vsub.f32 0.0, %v2048
        %v2065 = vmul.f32 %v2064, %v2048
        %v2066 = vmul.f32 %v2065, 1.442695
        %v2067 = vpow.pop %v2066
        %v2068 = vmul.f32 %v2063, %v2067
        %v2069 = vsub.f32 1.0, %v2068
        %v2070 = vmul.f32 %v2047, %v2069
        %v2071 = vadd.f32 %v2070, 1.0
        %v2072 = vmul.f32 %v2044, %v2071
        %v2073 = vld [vmem:[%s24] sm:$0xf]
        %v2074 = vld [vmem:[%s24 + $0x4] sm:$0xf]
        %v2075 = vld [vmem:[%s24 + $0x8] sm:$0xf]
        %v2076 = vld [vmem:[%s24 + $0xc] sm:$0xf]
        %v2077 = vpack.c.bf16 %v2072, %v2072
        %v2082 = vunpack.c.l.b16 %v2073
        %v2083 = vunpack.c.l.b16 %v2074
        %v2084 = vunpack.c.l.b16 %v2075
        %v2085 = vunpack.c.l.b16 %v2076
        %v2086 = vpack.c.b16 %v2083, %v2082
        %v2087 = vpack.c.b16 %v2085, %v2084
        %v2091 = vsel %vm960, %v2077, 0
        %2093 = vmatprep.subr.bf16.mxu0 0
        %2094 = vmatpush1.bf16.msra.mxu0 %v2086
        %2095 = vmatprep.subr.bf16.mxu0 0
        %2096 = vmatpush1.bf16.msra.mxu0 %v2087
        %2097 = vmatprep.subr.bf16.mxu0 0
        %2098 = vmatpush1.bf16.msra.mxu0 0
        %2099 = vmatprep.subr.bf16.mxu0 0
        %2100 = vmatpush1.bf16.msra.mxu0 0
        %2101 = vmatprep.subr.bf16.mxu0 0
        %2102 = vmatpush1.bf16.msra.mxu0 0
        %2103 = vmatprep.subr.bf16.mxu0 0
        %2104 = vmatpush1.bf16.msra.mxu0 0
        %2105 = vmatprep.subr.bf16.mxu0 0
        %2106 = vmatpush1.bf16.msra.mxu0 0
        %2107 = vmatprep.subr.bf16.mxu0 0
        %2108 = vmatpush1.bf16.msra.mxu0 0
        %2109 = vmatprep.subr.bf16.mxu0 0
        %2110 = vmatpush1.bf16.msra.mxu0 0
        %2111 = vmatprep.subr.bf16.mxu0 0
        %2112 = vmatpush1.bf16.msra.mxu0 0
        %2113 = vmatprep.subr.bf16.mxu0 0
        %2114 = vmatpush1.bf16.msra.mxu0 0
        %2115 = vmatprep.subr.bf16.mxu0 0
        %2116 = vmatpush1.bf16.msra.mxu0 0
        %2117 = vmatprep.subr.bf16.mxu0 0
        %2118 = vmatpush1.bf16.msra.mxu0 0
        %2119 = vmatprep.subr.bf16.mxu0 0
        %2120 = vmatpush1.bf16.msra.mxu0 0
        %2121 = vmatprep.subr.bf16.mxu0 0
        %2122 = vmatpush1.bf16.msra.mxu0 0
        %2123 = vmatprep.subr.bf16.mxu0 0
        %2124 = vmatpush1.bf16.msra.mxu0 0
        %2125 = vmatprep.mubr.bf16.mxu0 0
        %2126 = vmatmul.mubr.bf16.gmra.mrb[0].mxu0 %v2091
        %v2127 = vpop.f32.mrb[0].mxu0
        %v2128 = vadd.f32 0.0, %v2127
        %v2129 = vpop.f32.mrb[0].mxu0
        %v2130 = vpop.f32.mrb[0].mxu0
        %v2131 = vpop.f32.mrb[0].mxu0
        %2132 = vdwg.mxu0
        %v2133 = vadd.f32 %v1947, %v2128
        %v2134 = vld [vmem:[#allocation21] sm:$0x1]
        %v2136 = vlaneseq
        %v2137 = vshrl.u32 %v2136, 7
        %v2138 = vsub.s32 0, %v2137
        %v2139 = vrot.slane %v2134, %v2138
        %v2141 = vadd.f32 %v2133, %v2139
        %v2142 = vpack.c.bf16 %v2141, %v2141
        %vm2143 = vcmask 257024
        %2144 = vst.msk [vmem:[%s953] sm:$0xf] %vm2143, %v2142
        %p2145 = scmp.lt.s32.totalorder %s46, 1
        %s2146 = scalar_select %p2145, %s46, 1
        %s2147 = smul.addr %s2146, 4
        %s2148 = scalar_lea.vmem %s26, %s2147
        // Predicated region
        $region173: #{dual_stream_forward.11} parent=123 // pred_check
          %p2149 = pneg %p620
        $region174: #{dual_stream_forward.11} parent=123 // pred_check_branch
          %2151 = sbr.rel (%p2149) target = $region176
        $region175: #{dual_stream_forward.11} parent=123 // pred_region
          _
        $region176: #{dual_stream_forward.11} parent=123 // pred_fallthru
          _
      $region124: #{dual_stream_forward.11} parent=5 // pred_fallthru
        _
      %p2152 = scmp.le.s32.totalorder 2, %s41
      // Predicated region
      $region177: #{dual_stream_forward.11} parent=5 // pred_check
        %p2153 = pneg %p2152
      $region178: #{dual_stream_forward.11} parent=5 // pred_check_branch
        %2155 = sbr.rel (%p2153) target = $region180
      $region179: #{dual_stream_forward.11} parent=5 // pred_region
        %s2156 = ssub.s32 %s41, 2
        // Predicated region
        $region181: #{dual_stream_forward.11} parent=179 // pred_check
          %p2157 = pneg %p626
        $region182: #{dual_stream_forward.11} parent=179 // pred_check_branch
          %2159 = sbr.rel (%p2157) target = $region184
        $region183: #{dual_stream_forward.11} parent=179 // pred_region
          %p2160 = scmp.lt.s32.totalorder %s47, 1
          %s2161 = scalar_select %p2160, %s47, 1
          %s2162 = smul.addr %s2161, 4
          %s2163 = scalar_lea.vmem %s26, %s2162
        $region184: #{dual_stream_forward.11} parent=179 // pred_fallthru
          _
      $region180: #{dual_stream_forward.11} parent=5 // pred_fallthru
        _
    $region6: #{dual_stream_forward.11} parent=1 // loop_footer
      %s45 = sadd.s32 1, %s41
    $region7: #{dual_stream_forward.11} parent=1 // loop_footer_branch
      %40 = sbr.rel target = $region3
    $region8: #{dual_stream_forward.11} parent=1 // loop_exit
      _
    %2164 = vsyncpa [#allocation5], 1
    %s2165 = scalar_lea.sflag [#allocation5], 1
    %2166 = vsyncpa %s2165, 1
    %2167 = vsyncpa [#allocation7], 1
    %2168 = vsyncpa [#allocation10], 1
    %2169 = vsyncpa [#allocation13], 1
    %2170 = vsyncpa [#allocation16], 1
    %2171 = vsyncpa [#allocation19], 1
    %2172 = vsyncpa [#allocation22], 1

// kernel: dual_stream_forward.13
$region0: #{dual_stream_forward.13}
  #allocation0 [shape = 'u32[]', space=smem, size = 0x4, offset = 0x4, fixed_abs, tag = 'smem constant byte address 0x4 - core index']
  #allocation1 [shape = 'u32[144,128]{1,0:T(1,128)}', space=vmem, size = 0x12000, scoped, tag = 'internal scratch']
  %s0 = inlined_call_operand.vmem [shape: bf16[16,32], index: 0, kind: input, shape index: {}]
  %s1 = inlined_call_operand.vmem [shape: bf16[32,64], index: 1, kind: input, shape index: {}]
  %s2 = inlined_call_operand.vmem [shape: f32[1,64], index: 2, kind: input, shape index: {}]
  %s3 = inlined_call_operand.hbm [shape: f32[16,64], index: 3, kind: output, shape index: {}]
  %s4 = sld [smem:[#allocation0]]
  $region22: #{dual_stream_forward.13} parent=0
    _
  %s6 = ssub.s32 1, %s4
  %s7 = scalar_select 0, %s6, %s4
  $region1: #{dual_stream_forward.13} parent=0
    #allocation2 [shape = 'u8[8192]{0}', space=vmem, size = 0x2000, scoped, tag = 'output window, operand 0, single buffered']
    #allocation3 [shape = 's32[1]{0}', space=sflag, size = 0x4, scoped, tag = 'scoped memory for dual_stream_forward.13']
    %8 = vsyncpa [#allocation3], 0
    // Predicated region
    $region2: #{dual_stream_forward.13} parent=1 // pred_check
      _
    $region3: #{dual_stream_forward.13} parent=1 // pred_check_branch
      %10 = sbr.rel (0) target = $region5
    $region4: #{dual_stream_forward.13} parent=1 // pred_region
      _
    $region5: #{dual_stream_forward.13} parent=1 // pred_fallthru
      _
    // Predicated region
    $region6: #{dual_stream_forward.13} parent=1 // pred_check
      _
    $region7: #{dual_stream_forward.13} parent=1 // pred_check_branch
      %12 = sbr.rel (0) target = $region9
    $region8: #{dual_stream_forward.13} parent=1 // pred_region
      _
    $region9: #{dual_stream_forward.13} parent=1 // pred_fallthru
      _
    // Predicated region
    $region10: #{dual_stream_forward.13} parent=1 // pred_check
      _
    $region11: #{dual_stream_forward.13} parent=1 // pred_check_branch
      %14 = sbr.rel (0) target = $region13
    $region12: #{dual_stream_forward.13} parent=1 // pred_region
      _
    $region13: #{dual_stream_forward.13} parent=1 // pred_fallthru
      _
    %v16 = vld [vmem:[%s0] sm:$0xf]
    %v17 = vld [vmem:[%s0 + $0x4] sm:$0xf]
    %v18 = vld [vmem:[%s1] sm:$0xf]
    %v19 = vld [vmem:[%s1 + $0x4] sm:$0xf]
    %v20 = vld [vmem:[%s1 + $0x8] sm:$0xf]
    %v21 = vld [vmem:[%s1 + $0xc] sm:$0xf]
    %v22 = vld [vmem:[%s2] sm:$0x1]
    %v24 = vlaneseq
    %v25 = vshrl.u32 %v24, 7
    %v26 = vsub.s32 0, %v25
    %v27 = vrot.slane %v22, %v26
    %v31 = vunpack.c.l.b16 %v16
    %v32 = vunpack.c.l.b16 %v17
    %v33 = vpack.c.b16 %v32, %v31
    %v38 = vunpack.c.l.b16 %v18
    %v39 = vunpack.c.l.b16 %v19
    %v40 = vunpack.c.l.b16 %v20
    %v41 = vunpack.c.l.b16 %v21
    %v42 = vpack.c.b16 %v39, %v38
    %v43 = vpack.c.b16 %v41, %v40
    %vm46 = vcmask 261120
    %v48 = vsel %vm46, %v33, 0
    %50 = vmatprep.subr.bf16.mxu0 0
    %51 = vmatpush1.bf16.msra.mxu0 %v42
    %52 = vmatprep.subr.bf16.mxu0 0
    %53 = vmatpush1.bf16.msra.mxu0 %v43
    %54 = vmatprep.subr.bf16.mxu0 0
    %55 = vmatpush1.bf16.msra.mxu0 0
    %56 = vmatprep.subr.bf16.mxu0 0
    %57 = vmatpush1.bf16.msra.mxu0 0
    %58 = vmatprep.subr.bf16.mxu0 0
    %59 = vmatpush1.bf16.msra.mxu0 0
    %60 = vmatprep.subr.bf16.mxu0 0
    %61 = vmatpush1.bf16.msra.mxu0 0
    %62 = vmatprep.subr.bf16.mxu0 0
    %63 = vmatpush1.bf16.msra.mxu0 0
    %64 = vmatprep.subr.bf16.mxu0 0
    %65 = vmatpush1.bf16.msra.mxu0 0
    %66 = vmatprep.subr.bf16.mxu0 0
    %67 = vmatpush1.bf16.msra.mxu0 0
    %68 = vmatprep.subr.bf16.mxu0 0
    %69 = vmatpush1.bf16.msra.mxu0 0
    %70 = vmatprep.subr.bf16.mxu0 0
    %71 = vmatpush1.bf16.msra.mxu0 0
    %72 = vmatprep.subr.bf16.mxu0 0
    %73 = vmatpush1.bf16.msra.mxu0 0
    %74 = vmatprep.subr.bf16.mxu0 0
    %75 = vmatpush1.bf16.msra.mxu0 0
    %76 = vmatprep.subr.bf16.mxu0 0
    %77 = vmatpush1.bf16.msra.mxu0 0
    %78 = vmatprep.subr.bf16.mxu0 0
    %79 = vmatpush1.bf16.msra.mxu0 0
    %80 = vmatprep.subr.bf16.mxu0 0
    %81 = vmatpush1.bf16.msra.mxu0 0
    %82 = vmatprep.mubr.bf16.mxu0 0
    %83 = vmatmul.mubr.bf16.gmra.mrb[0].mxu0 %v48
    %v84 = vpop.f32.mrb[0].mxu0
    %v85 = vadd.f32 %v27, %v84
    %v86 = vpop.f32.mrb[0].mxu0
    %v87 = vpop.f32.mrb[0].mxu0
    %v88 = vadd.f32 %v27, %v87
    %v89 = vpop.f32.mrb[0].mxu0
    %90 = vdwg.mxu0
    %vm91 = vcmask 523264
    %92 = vst.msk [vmem:[#allocation2] sm:$0xff] %vm91, %v85
    %93 = vst.msk [vmem:[#allocation2 + $0x8] sm:$0xff] %vm91, %v88
    // Predicated region
    $region14: #{dual_stream_forward.13} parent=1 // pred_check
      _
    $region15: #{dual_stream_forward.13} parent=1 // pred_check_branch
      %95 = sbr.rel (0) target = $region17
    $region16: #{dual_stream_forward.13} parent=1 // pred_region
      %s97 = ssub.s32 256, 256
      %98 = vsyncadd [#allocation3], %s97
      %s99 = sshll.u32 [#allocation2], 4
      %s100 = int_to_ptr.vmem [resolvable:$true] %s99
      %105 = dma.vmem_to_hbm [thread:$0]  %s100, 256, %s3, [#allocation3], 128, 128, 8
    $region17: #{dual_stream_forward.13} parent=1 // pred_fallthru
      _
    // Predicated region
    $region18: #{dual_stream_forward.13} parent=1 // pred_check
      _
    $region19: #{dual_stream_forward.13} parent=1 // pred_check_branch
      %107 = sbr.rel (0) target = $region21
    $region20: #{dual_stream_forward.13} parent=1 // pred_region
      %108 = dma.done [#allocation3], 256
    $region21: #{dual_stream_forward.13} parent=1 // pred_fallthru
      _
    %109 = vsyncpa [#allocation3], 1

// kernel: dual_stream_forward.12
$region0: #{dual_stream_forward.12}
  #allocation0 [shape = 'u32[]', space=smem, size = 0x4, offset = 0x4, fixed_abs, tag = 'smem constant byte address 0x4 - core index']
  #allocation1 [shape = 'u32[144,128]{1,0:T(1,128)}', space=vmem, size = 0x12000, scoped, tag = 'internal scratch']
  #allocation2 [shape = 'f32[8,32]{1,0:T(8,128)}', space=vmem, size = 0x1000, scoped, tag = 'scratch operand']
  #allocation3 [shape = 'f32[1,1]{1,0:T(1,128)S(1)}', space=vmem, size = 0x200, scoped, tag = 'scoped memory for dual_stream_forward.12']
  %s0 = inlined_call_operand.vmem [shape: bf16[2,8,32], index: 0, kind: input, shape index: {}]
  %s1 = inlined_call_operand.vmem [shape: bf16[2,1,32], index: 1, kind: input, shape index: {}]
  %s2 = inlined_call_operand.<no memory space> [shape: f32[1,1], index: 2, kind: input, shape index: {}]
  %s3 = inlined_call_operand.vmem [shape: f32[1,32], index: 3, kind: input, shape index: {}]
  %s4 = inlined_call_operand.vmem [shape: f32[1,32], index: 4, kind: input, shape index: {}]
  %s5 = inlined_call_operand.vmem [shape: bf16[32,96], index: 5, kind: input, shape index: {}]
  %s6 = inlined_call_operand.vmem [shape: f32[1,96], index: 6, kind: input, shape index: {}]
  %s7 = inlined_call_operand.vmem [shape: bf16[32,32], index: 7, kind: input, shape index: {}]
  %s8 = inlined_call_operand.vmem [shape: f32[1,32], index: 8, kind: input, shape index: {}]
  %s9 = inlined_call_operand.vmem [shape: f32[1,32], index: 9, kind: input, shape index: {}]
  %s10 = inlined_call_operand.vmem [shape: f32[1,32], index: 10, kind: input, shape index: {}]
  %s11 = inlined_call_operand.vmem [shape: bf16[32,32], index: 11, kind: input, shape index: {}]
  %s12 = inlined_call_operand.vmem [shape: f32[1,32], index: 12, kind: input, shape index: {}]
  %s13 = inlined_call_operand.vmem [shape: bf16[32,32], index: 13, kind: input, shape index: {}]
  %s14 = inlined_call_operand.vmem [shape: f32[1,32], index: 14, kind: input, shape index: {}]
  %s15 = inlined_call_operand.vmem [shape: bf16[32,32], index: 15, kind: input, shape index: {}]
  %s16 = inlined_call_operand.vmem [shape: bf16[32,32], index: 16, kind: input, shape index: {}]
  %s17 = inlined_call_operand.vmem [shape: f32[1,32], index: 17, kind: input, shape index: {}]
  %s18 = inlined_call_operand.vmem [shape: f32[1,32], index: 18, kind: input, shape index: {}]
  %s19 = inlined_call_operand.vmem [shape: f32[1,32], index: 19, kind: input, shape index: {}]
  %s20 = inlined_call_operand.vmem [shape: f32[1,32], index: 20, kind: input, shape index: {}]
  %s21 = inlined_call_operand.vmem [shape: f32[1,32], index: 21, kind: input, shape index: {}]
  %s22 = inlined_call_operand.vmem [shape: bf16[32,32], index: 22, kind: input, shape index: {}]
  %s23 = inlined_call_operand.vmem [shape: f32[1,32], index: 23, kind: input, shape index: {}]
  %s24 = inlined_call_operand.vmem [shape: bf16[32,32], index: 24, kind: input, shape index: {}]
  %s25 = inlined_call_operand.vmem [shape: f32[1,32], index: 25, kind: input, shape index: {}]
  %s26 = inlined_call_operand.vmem [shape: bf16[2,8,32], index: 26, kind: output, shape index: {}]
  %s27 = sld [smem:[#allocation0]]
  $region137: #{dual_stream_forward.12} parent=0
    _
  %s29 = ssub.s32 1, %s27
  %s30 = scalar_select 0, %s29, %s27
  %v31 = vstv %s2
  %32 = vst [vmem:[#allocation3] sm:$0x1] %v31
  loop: start=0, step=1, limit=4
  $region2: #{dual_stream_forward.12} parent=0 // loop_pre_header
    _
  $region3: #{dual_stream_forward.12} parent=0 // loop_header
    %s34 = sphi 0, %s38
    %p35 = scmp.ge.s32.totalorder %s34, 4
    %s44 = sphi 0, %s46
    %s47 = sphi 0, %s44
    %s48 = sphi 0, %s47
    %s64 = sphi 0, %s48
    %s70 = sphi 0, %s72
    %s73 = sphi 0, %s70
    %s74 = sphi 0, %s73
    %s90 = sphi 0, %s74
    %s94 = sphi 0, %s94
    %s96 = sphi 0, %s94
    %s97 = sphi 0, %s96
    %s111 = sphi 0, %s97
    %s115 = sphi 0, %s115
    %s117 = sphi 0, %s115
    %s118 = sphi 0, %s117
    %s132 = sphi 0, %s118
    %s136 = sphi 0, %s136
    %s138 = sphi 0, %s136
    %s139 = sphi 0, %s138
    %s153 = sphi 0, %s139
    %s157 = sphi 0, %s157
    %s159 = sphi 0, %s157
    %s160 = sphi 0, %s159
    %s174 = sphi 0, %s160
    %s178 = sphi 0, %s178
    %s180 = sphi 0, %s178
    %s181 = sphi 0, %s180
    %s195 = sphi 0, %s181
    %s199 = sphi 0, %s199
    %s201 = sphi 0, %s199
    %s202 = sphi 0, %s201
    %s216 = sphi 0, %s202
    %s220 = sphi 0, %s220
    %s222 = sphi 0, %s220
    %s223 = sphi 0, %s222
    %s237 = sphi 0, %s223
    %s241 = sphi 0, %s241
    %s243 = sphi 0, %s241
    %s244 = sphi 0, %s243
    %s258 = sphi 0, %s244
    %s262 = sphi 0, %s262
    %s264 = sphi 0, %s262
    %s265 = sphi 0, %s264
    %s279 = sphi 0, %s265
    %s283 = sphi 0, %s283
    %s285 = sphi 0, %s283
    %s286 = sphi 0, %s285
    %s300 = sphi 0, %s286
    %s304 = sphi 0, %s304
    %s306 = sphi 0, %s304
    %s307 = sphi 0, %s306
    %s321 = sphi 0, %s307
    %s325 = sphi 0, %s325
    %s327 = sphi 0, %s325
    %s328 = sphi 0, %s327
    %s342 = sphi 0, %s328
    %s346 = sphi 0, %s346
    %s348 = sphi 0, %s346
    %s349 = sphi 0, %s348
    %s363 = sphi 0, %s349
    %s367 = sphi 0, %s367
    %s369 = sphi 0, %s367
    %s370 = sphi 0, %s369
    %s384 = sphi 0, %s370
    %s388 = sphi 0, %s388
    %s390 = sphi 0, %s388
    %s391 = sphi 0, %s390
    %s405 = sphi 0, %s391
    %s409 = sphi 0, %s409
    %s411 = sphi 0, %s409
    %s412 = sphi 0, %s411
    %s426 = sphi 0, %s412
    %s430 = sphi 0, %s430
    %s432 = sphi 0, %s430
    %s433 = sphi 0, %s432
    %s447 = sphi 0, %s433
    %s451 = sphi 0, %s451
    %s453 = sphi 0, %s451
    %s454 = sphi 0, %s453
    %s468 = sphi 0, %s454
    %s472 = sphi 0, %s472
    %s474 = sphi 0, %s472
    %s475 = sphi 0, %s474
    %s489 = sphi 0, %s475
    %s493 = sphi 0, %s493
    %s495 = sphi 0, %s493
    %s496 = sphi 0, %s495
    %s510 = sphi 0, %s496
    %s514 = sphi 0, %s514
    %s516 = sphi 0, %s514
    %s517 = sphi 0, %s516
    %s531 = sphi 0, %s517
    %s535 = sphi 0, %s535
    %s537 = sphi 0, %s535
    %s538 = sphi 0, %s537
    %s552 = sphi 0, %s538
    %s556 = sphi 0, %s556
    %s558 = sphi 0, %s556
    %s559 = sphi 0, %s558
    %s573 = sphi 0, %s559
    %s577 = sphi 0, %s577
    %s579 = sphi 0, %s577
    %s580 = sphi 0, %s579
    %s594 = sphi 0, %s580
    %s600 = sphi 0, %s602
    %s603 = sphi 0, %s600
    %s604 = sphi 0, %s603
    %s620 = sphi 0, %s604
  $region4: #{dual_stream_forward.12} parent=0 // loop_header_branch
    %37 = sbr.rel (%p35) target = $region8
  $region5: #{dual_stream_forward.12} parent=0 // loop_body
    %s39 = ssub.s32 %s34, 1
    %s40 = ssub.s32 %s34, 2
    %s41 = sadd.s32 %s34, 1
    %s42 = ssub.s32 %s34, %s41
    %p43 = scmp.eq.s32.totalorder %s42, 0
    %s45 = sadd.s32 %s44, 1
    %s46 = scalar_select %p43, %s44, %s45
    %p49 = pneg %p43
    %p50 = scmp.eq.s32.totalorder %s34, 1
    %p51 = por %p49, %p50
    %p52 = scmp.ne.s32.totalorder %s44, %s47
    %p53 = scmp.eq.s32.totalorder %s34, 0
    %p54 = por %p52, %p53
    %p55 = scmp.ne.s32.totalorder %s44, %s47
    %p56 = scmp.eq.s32.totalorder %s39, 1
    %p57 = por %p55, %p56
    %p58 = scmp.ne.s32.totalorder %s47, %s48
    %p59 = scmp.eq.s32.totalorder %s39, 0
    %p60 = por %p58, %p59
    %p61 = scmp.ne.s32.totalorder %s47, %s48
    %p62 = scmp.eq.s32.totalorder %s40, 1
    %p63 = por %p61, %p62
    %p65 = scmp.ne.s32.totalorder %s48, %s64
    %p66 = scmp.eq.s32.totalorder %s40, 0
    %p67 = por %p65, %p66
    %s68 = ssub.s32 %s34, %s41
    %p69 = scmp.eq.s32.totalorder %s68, 0
    %s71 = sadd.s32 %s70, 1
    %s72 = scalar_select %p69, %s70, %s71
    %p75 = pneg %p69
    %p76 = scmp.eq.s32.totalorder %s34, 1
    %p77 = por %p75, %p76
    %p78 = scmp.ne.s32.totalorder %s70, %s73
    %p79 = scmp.eq.s32.totalorder %s34, 0
    %p80 = por %p78, %p79
    %p81 = scmp.ne.s32.totalorder %s70, %s73
    %p82 = scmp.eq.s32.totalorder %s39, 1
    %p83 = por %p81, %p82
    %p84 = scmp.ne.s32.totalorder %s73, %s74
    %p85 = scmp.eq.s32.totalorder %s39, 0
    %p86 = por %p84, %p85
    %p87 = scmp.ne.s32.totalorder %s73, %s74
    %p88 = scmp.eq.s32.totalorder %s40, 1
    %p89 = por %p87, %p88
    %p91 = scmp.ne.s32.totalorder %s74, %s90
    %p92 = scmp.eq.s32.totalorder %s40, 0
    %p93 = por %p91, %p92
    %s95 = sadd.s32 %s94, 1
    %p98 = scmp.eq.s32.totalorder %s34, 1
    %p99 = scmp.ne.s32.totalorder %s94, %s96
    %p100 = scmp.eq.s32.totalorder %s34, 0
    %p101 = por %p99, %p100
    %p102 = scmp.ne.s32.totalorder %s94, %s96
    %p103 = scmp.eq.s32.totalorder %s39, 1
    %p104 = por %p102, %p103
    %p105 = scmp.ne.s32.totalorder %s96, %s97
    %p106 = scmp.eq.s32.totalorder %s39, 0
    %p107 = por %p105, %p106
    %p108 = scmp.ne.s32.totalorder %s96, %s97
    %p109 = scmp.eq.s32.totalorder %s40, 1
    %p110 = por %p108, %p109
    %p112 = scmp.ne.s32.totalorder %s97, %s111
    %p113 = scmp.eq.s32.totalorder %s40, 0
    %p114 = por %p112, %p113
    %s116 = sadd.s32 %s115, 1
    %p119 = scmp.eq.s32.totalorder %s34, 1
    %p120 = scmp.ne.s32.totalorder %s115, %s117
    %p121 = scmp.eq.s32.totalorder %s34, 0
    %p122 = por %p120, %p121
    %p123 = scmp.ne.s32.totalorder %s115, %s117
    %p124 = scmp.eq.s32.totalorder %s39, 1
    %p125 = por %p123, %p124
    %p126 = scmp.ne.s32.totalorder %s117, %s118
    %p127 = scmp.eq.s32.totalorder %s39, 0
    %p128 = por %p126, %p127
    %p129 = scmp.ne.s32.totalorder %s117, %s118
    %p130 = scmp.eq.s32.totalorder %s40, 1
    %p131 = por %p129, %p130
    %p133 = scmp.ne.s32.totalorder %s118, %s132
    %p134 = scmp.eq.s32.totalorder %s40, 0
    %p135 = por %p133, %p134
    %s137 = sadd.s32 %s136, 1
    %p140 = scmp.eq.s32.totalorder %s34, 1
    %p141 = scmp.ne.s32.totalorder %s136, %s138
    %p142 = scmp.eq.s32.totalorder %s34, 0
    %p143 = por %p141, %p142
    %p144 = scmp.ne.s32.totalorder %s136, %s138
    %p145 = scmp.eq.s32.totalorder %s39, 1
    %p146 = por %p144, %p145
    %p147 = scmp.ne.s32.totalorder %s138, %s139
    %p148 = scmp.eq.s32.totalorder %s39, 0
    %p149 = por %p147, %p148
    %p150 = scmp.ne.s32.totalorder %s138, %s139
    %p151 = scmp.eq.s32.totalorder %s40, 1
    %p152 = por %p150, %p151
    %p154 = scmp.ne.s32.totalorder %s139, %s153
    %p155 = scmp.eq.s32.totalorder %s40, 0
    %p156 = por %p154, %p155
    %s158 = sadd.s32 %s157, 1
    %p161 = scmp.eq.s32.totalorder %s34, 1
    %p162 = scmp.ne.s32.totalorder %s157, %s159
    %p163 = scmp.eq.s32.totalorder %s34, 0
    %p164 = por %p162, %p163
    %p165 = scmp.ne.s32.totalorder %s157, %s159
    %p166 = scmp.eq.s32.totalorder %s39, 1
    %p167 = por %p165, %p166
    %p168 = scmp.ne.s32.totalorder %s159, %s160
    %p169 = scmp.eq.s32.totalorder %s39, 0
    %p170 = por %p168, %p169
    %p171 = scmp.ne.s32.totalorder %s159, %s160
    %p172 = scmp.eq.s32.totalorder %s40, 1
    %p173 = por %p171, %p172
    %p175 = scmp.ne.s32.totalorder %s160, %s174
    %p176 = scmp.eq.s32.totalorder %s40, 0
    %p177 = por %p175, %p176
    %s179 = sadd.s32 %s178, 1
    %p182 = scmp.eq.s32.totalorder %s34, 1
    %p183 = scmp.ne.s32.totalorder %s178, %s180
    %p184 = scmp.eq.s32.totalorder %s34, 0
    %p185 = por %p183, %p184
    %p186 = scmp.ne.s32.totalorder %s178, %s180
    %p187 = scmp.eq.s32.totalorder %s39, 1
    %p188 = por %p186, %p187
    %p189 = scmp.ne.s32.totalorder %s180, %s181
    %p190 = scmp.eq.s32.totalorder %s39, 0
    %p191 = por %p189, %p190
    %p192 = scmp.ne.s32.totalorder %s180, %s181
    %p193 = scmp.eq.s32.totalorder %s40, 1
    %p194 = por %p192, %p193
    %p196 = scmp.ne.s32.totalorder %s181, %s195
    %p197 = scmp.eq.s32.totalorder %s40, 0
    %p198 = por %p196, %p197
    %s200 = sadd.s32 %s199, 1
    %p203 = scmp.eq.s32.totalorder %s34, 1
    %p204 = scmp.ne.s32.totalorder %s199, %s201
    %p205 = scmp.eq.s32.totalorder %s34, 0
    %p206 = por %p204, %p205
    %p207 = scmp.ne.s32.totalorder %s199, %s201
    %p208 = scmp.eq.s32.totalorder %s39, 1
    %p209 = por %p207, %p208
    %p210 = scmp.ne.s32.totalorder %s201, %s202
    %p211 = scmp.eq.s32.totalorder %s39, 0
    %p212 = por %p210, %p211
    %p213 = scmp.ne.s32.totalorder %s201, %s202
    %p214 = scmp.eq.s32.totalorder %s40, 1
    %p215 = por %p213, %p214
    %p217 = scmp.ne.s32.totalorder %s202, %s216
    %p218 = scmp.eq.s32.totalorder %s40, 0
    %p219 = por %p217, %p218
    %s221 = sadd.s32 %s220, 1
    %p224 = scmp.eq.s32.totalorder %s34, 1
    %p225 = scmp.ne.s32.totalorder %s220, %s222
    %p226 = scmp.eq.s32.totalorder %s34, 0
    %p227 = por %p225, %p226
    %p228 = scmp.ne.s32.totalorder %s220, %s222
    %p229 = scmp.eq.s32.totalorder %s39, 1
    %p230 = por %p228, %p229
    %p231 = scmp.ne.s32.totalorder %s222, %s223
    %p232 = scmp.eq.s32.totalorder %s39, 0
    %p233 = por %p231, %p232
    %p234 = scmp.ne.s32.totalorder %s222, %s223
    %p235 = scmp.eq.s32.totalorder %s40, 1
    %p236 = por %p234, %p235
    %p238 = scmp.ne.s32.totalorder %s223, %s237
    %p239 = scmp.eq.s32.totalorder %s40, 0
    %p240 = por %p238, %p239
    %s242 = sadd.s32 %s241, 1
    %p245 = scmp.eq.s32.totalorder %s34, 1
    %p246 = scmp.ne.s32.totalorder %s241, %s243
    %p247 = scmp.eq.s32.totalorder %s34, 0
    %p248 = por %p246, %p247
    %p249 = scmp.ne.s32.totalorder %s241, %s243
    %p250 = scmp.eq.s32.totalorder %s39, 1
    %p251 = por %p249, %p250
    %p252 = scmp.ne.s32.totalorder %s243, %s244
    %p253 = scmp.eq.s32.totalorder %s39, 0
    %p254 = por %p252, %p253
    %p255 = scmp.ne.s32.totalorder %s243, %s244
    %p256 = scmp.eq.s32.totalorder %s40, 1
    %p257 = por %p255, %p256
    %p259 = scmp.ne.s32.totalorder %s244, %s258
    %p260 = scmp.eq.s32.totalorder %s40, 0
    %p261 = por %p259, %p260
    %s263 = sadd.s32 %s262, 1
    %p266 = scmp.eq.s32.totalorder %s34, 1
    %p267 = scmp.ne.s32.totalorder %s262, %s264
    %p268 = scmp.eq.s32.totalorder %s34, 0
    %p269 = por %p267, %p268
    %p270 = scmp.ne.s32.totalorder %s262, %s264
    %p271 = scmp.eq.s32.totalorder %s39, 1
    %p272 = por %p270, %p271
    %p273 = scmp.ne.s32.totalorder %s264, %s265
    %p274 = scmp.eq.s32.totalorder %s39, 0
    %p275 = por %p273, %p274
    %p276 = scmp.ne.s32.totalorder %s264, %s265
    %p277 = scmp.eq.s32.totalorder %s40, 1
    %p278 = por %p276, %p277
    %p280 = scmp.ne.s32.totalorder %s265, %s279
    %p281 = scmp.eq.s32.totalorder %s40, 0
    %p282 = por %p280, %p281
    %s284 = sadd.s32 %s283, 1
    %p287 = scmp.eq.s32.totalorder %s34, 1
    %p288 = scmp.ne.s32.totalorder %s283, %s285
    %p289 = scmp.eq.s32.totalorder %s34, 0
    %p290 = por %p288, %p289
    %p291 = scmp.ne.s32.totalorder %s283, %s285
    %p292 = scmp.eq.s32.totalorder %s39, 1
    %p293 = por %p291, %p292
    %p294 = scmp.ne.s32.totalorder %s285, %s286
    %p295 = scmp.eq.s32.totalorder %s39, 0
    %p296 = por %p294, %p295
    %p297 = scmp.ne.s32.totalorder %s285, %s286
    %p298 = scmp.eq.s32.totalorder %s40, 1
    %p299 = por %p297, %p298
    %p301 = scmp.ne.s32.totalorder %s286, %s300
    %p302 = scmp.eq.s32.totalorder %s40, 0
    %p303 = por %p301, %p302
    %s305 = sadd.s32 %s304, 1
    %p308 = scmp.eq.s32.totalorder %s34, 1
    %p309 = scmp.ne.s32.totalorder %s304, %s306
    %p310 = scmp.eq.s32.totalorder %s34, 0
    %p311 = por %p309, %p310
    %p312 = scmp.ne.s32.totalorder %s304, %s306
    %p313 = scmp.eq.s32.totalorder %s39, 1
    %p314 = por %p312, %p313
    %p315 = scmp.ne.s32.totalorder %s306, %s307
    %p316 = scmp.eq.s32.totalorder %s39, 0
    %p317 = por %p315, %p316
    %p318 = scmp.ne.s32.totalorder %s306, %s307
    %p319 = scmp.eq.s32.totalorder %s40, 1
    %p320 = por %p318, %p319
    %p322 = scmp.ne.s32.totalorder %s307, %s321
    %p323 = scmp.eq.s32.totalorder %s40, 0
    %p324 = por %p322, %p323
    %s326 = sadd.s32 %s325, 1
    %p329 = scmp.eq.s32.totalorder %s34, 1
    %p330 = scmp.ne.s32.totalorder %s325, %s327
    %p331 = scmp.eq.s32.totalorder %s34, 0
    %p332 = por %p330, %p331
    %p333 = scmp.ne.s32.totalorder %s325, %s327
    %p334 = scmp.eq.s32.totalorder %s39, 1
    %p335 = por %p333, %p334
    %p336 = scmp.ne.s32.totalorder %s327, %s328
    %p337 = scmp.eq.s32.totalorder %s39, 0
    %p338 = por %p336, %p337
    %p339 = scmp.ne.s32.totalorder %s327, %s328
    %p340 = scmp.eq.s32.totalorder %s40, 1
    %p341 = por %p339, %p340
    %p343 = scmp.ne.s32.totalorder %s328, %s342
    %p344 = scmp.eq.s32.totalorder %s40, 0
    %p345 = por %p343, %p344
    %s347 = sadd.s32 %s346, 1
    %p350 = scmp.eq.s32.totalorder %s34, 1
    %p351 = scmp.ne.s32.totalorder %s346, %s348
    %p352 = scmp.eq.s32.totalorder %s34, 0
    %p353 = por %p351, %p352
    %p354 = scmp.ne.s32.totalorder %s346, %s348
    %p355 = scmp.eq.s32.totalorder %s39, 1
    %p356 = por %p354, %p355
    %p357 = scmp.ne.s32.totalorder %s348, %s349
    %p358 = scmp.eq.s32.totalorder %s39, 0
    %p359 = por %p357, %p358
    %p360 = scmp.ne.s32.totalorder %s348, %s349
    %p361 = scmp.eq.s32.totalorder %s40, 1
    %p362 = por %p360, %p361
    %p364 = scmp.ne.s32.totalorder %s349, %s363
    %p365 = scmp.eq.s32.totalorder %s40, 0
    %p366 = por %p364, %p365
    %s368 = sadd.s32 %s367, 1
    %p371 = scmp.eq.s32.totalorder %s34, 1
    %p372 = scmp.ne.s32.totalorder %s367, %s369
    %p373 = scmp.eq.s32.totalorder %s34, 0
    %p374 = por %p372, %p373
    %p375 = scmp.ne.s32.totalorder %s367, %s369
    %p376 = scmp.eq.s32.totalorder %s39, 1
    %p377 = por %p375, %p376
    %p378 = scmp.ne.s32.totalorder %s369, %s370
    %p379 = scmp.eq.s32.totalorder %s39, 0
    %p380 = por %p378, %p379
    %p381 = scmp.ne.s32.totalorder %s369, %s370
    %p382 = scmp.eq.s32.totalorder %s40, 1
    %p383 = por %p381, %p382
    %p385 = scmp.ne.s32.totalorder %s370, %s384
    %p386 = scmp.eq.s32.totalorder %s40, 0
    %p387 = por %p385, %p386
    %s389 = sadd.s32 %s388, 1
    %p392 = scmp.eq.s32.totalorder %s34, 1
    %p393 = scmp.ne.s32.totalorder %s388, %s390
    %p394 = scmp.eq.s32.totalorder %s34, 0
    %p395 = por %p393, %p394
    %p396 = scmp.ne.s32.totalorder %s388, %s390
    %p397 = scmp.eq.s32.totalorder %s39, 1
    %p398 = por %p396, %p397
    %p399 = scmp.ne.s32.totalorder %s390, %s391
    %p400 = scmp.eq.s32.totalorder %s39, 0
    %p401 = por %p399, %p400
    %p402 = scmp.ne.s32.totalorder %s390, %s391
    %p403 = scmp.eq.s32.totalorder %s40, 1
    %p404 = por %p402, %p403
    %p406 = scmp.ne.s32.totalorder %s391, %s405
    %p407 = scmp.eq.s32.totalorder %s40, 0
    %p408 = por %p406, %p407
    %s410 = sadd.s32 %s409, 1
    %p413 = scmp.eq.s32.totalorder %s34, 1
    %p414 = scmp.ne.s32.totalorder %s409, %s411
    %p415 = scmp.eq.s32.totalorder %s34, 0
    %p416 = por %p414, %p415
    %p417 = scmp.ne.s32.totalorder %s409, %s411
    %p418 = scmp.eq.s32.totalorder %s39, 1
    %p419 = por %p417, %p418
    %p420 = scmp.ne.s32.totalorder %s411, %s412
    %p421 = scmp.eq.s32.totalorder %s39, 0
    %p422 = por %p420, %p421
    %p423 = scmp.ne.s32.totalorder %s411, %s412
    %p424 = scmp.eq.s32.totalorder %s40, 1
    %p425 = por %p423, %p424
    %p427 = scmp.ne.s32.totalorder %s412, %s426
    %p428 = scmp.eq.s32.totalorder %s40, 0
    %p429 = por %p427, %p428
    %s431 = sadd.s32 %s430, 1
    %p434 = scmp.eq.s32.totalorder %s34, 1
    %p435 = scmp.ne.s32.totalorder %s430, %s432
    %p436 = scmp.eq.s32.totalorder %s34, 0
    %p437 = por %p435, %p436
    %p438 = scmp.ne.s32.totalorder %s430, %s432
    %p439 = scmp.eq.s32.totalorder %s39, 1
    %p440 = por %p438, %p439
    %p441 = scmp.ne.s32.totalorder %s432, %s433
    %p442 = scmp.eq.s32.totalorder %s39, 0
    %p443 = por %p441, %p442
    %p444 = scmp.ne.s32.totalorder %s432, %s433
    %p445 = scmp.eq.s32.totalorder %s40, 1
    %p446 = por %p444, %p445
    %p448 = scmp.ne.s32.totalorder %s433, %s447
    %p449 = scmp.eq.s32.totalorder %s40, 0
    %p450 = por %p448, %p449
    %s452 = sadd.s32 %s451, 1
    %p455 = scmp.eq.s32.totalorder %s34, 1
    %p456 = scmp.ne.s32.totalorder %s451, %s453
    %p457 = scmp.eq.s32.totalorder %s34, 0
    %p458 = por %p456, %p457
    %p459 = scmp.ne.s32.totalorder %s451, %s453
    %p460 = scmp.eq.s32.totalorder %s39, 1
    %p461 = por %p459, %p460
    %p462 = scmp.ne.s32.totalorder %s453, %s454
    %p463 = scmp.eq.s32.totalorder %s39, 0
    %p464 = por %p462, %p463
    %p465 = scmp.ne.s32.totalorder %s453, %s454
    %p466 = scmp.eq.s32.totalorder %s40, 1
    %p467 = por %p465, %p466
    %p469 = scmp.ne.s32.totalorder %s454, %s468
    %p470 = scmp.eq.s32.totalorder %s40, 0
    %p471 = por %p469, %p470
    %s473 = sadd.s32 %s472, 1
    %p476 = scmp.eq.s32.totalorder %s34, 1
    %p477 = scmp.ne.s32.totalorder %s472, %s474
    %p478 = scmp.eq.s32.totalorder %s34, 0
    %p479 = por %p477, %p478
    %p480 = scmp.ne.s32.totalorder %s472, %s474
    %p481 = scmp.eq.s32.totalorder %s39, 1
    %p482 = por %p480, %p481
    %p483 = scmp.ne.s32.totalorder %s474, %s475
    %p484 = scmp.eq.s32.totalorder %s39, 0
    %p485 = por %p483, %p484
    %p486 = scmp.ne.s32.totalorder %s474, %s475
    %p487 = scmp.eq.s32.totalorder %s40, 1
    %p488 = por %p486, %p487
    %p490 = scmp.ne.s32.totalorder %s475, %s489
    %p491 = scmp.eq.s32.totalorder %s40, 0
    %p492 = por %p490, %p491
    %s494 = sadd.s32 %s493, 1
    %p497 = scmp.eq.s32.totalorder %s34, 1
    %p498 = scmp.ne.s32.totalorder %s493, %s495
    %p499 = scmp.eq.s32.totalorder %s34, 0
    %p500 = por %p498, %p499
    %p501 = scmp.ne.s32.totalorder %s493, %s495
    %p502 = scmp.eq.s32.totalorder %s39, 1
    %p503 = por %p501, %p502
    %p504 = scmp.ne.s32.totalorder %s495, %s496
    %p505 = scmp.eq.s32.totalorder %s39, 0
    %p506 = por %p504, %p505
    %p507 = scmp.ne.s32.totalorder %s495, %s496
    %p508 = scmp.eq.s32.totalorder %s40, 1
    %p509 = por %p507, %p508
    %p511 = scmp.ne.s32.totalorder %s496, %s510
    %p512 = scmp.eq.s32.totalorder %s40, 0
    %p513 = por %p511, %p512
    %s515 = sadd.s32 %s514, 1
    %p518 = scmp.eq.s32.totalorder %s34, 1
    %p519 = scmp.ne.s32.totalorder %s514, %s516
    %p520 = scmp.eq.s32.totalorder %s34, 0
    %p521 = por %p519, %p520
    %p522 = scmp.ne.s32.totalorder %s514, %s516
    %p523 = scmp.eq.s32.totalorder %s39, 1
    %p524 = por %p522, %p523
    %p525 = scmp.ne.s32.totalorder %s516, %s517
    %p526 = scmp.eq.s32.totalorder %s39, 0
    %p527 = por %p525, %p526
    %p528 = scmp.ne.s32.totalorder %s516, %s517
    %p529 = scmp.eq.s32.totalorder %s40, 1
    %p530 = por %p528, %p529
    %p532 = scmp.ne.s32.totalorder %s517, %s531
    %p533 = scmp.eq.s32.totalorder %s40, 0
    %p534 = por %p532, %p533
    %s536 = sadd.s32 %s535, 1
    %p539 = scmp.eq.s32.totalorder %s34, 1
    %p540 = scmp.ne.s32.totalorder %s535, %s537
    %p541 = scmp.eq.s32.totalorder %s34, 0
    %p542 = por %p540, %p541
    %p543 = scmp.ne.s32.totalorder %s535, %s537
    %p544 = scmp.eq.s32.totalorder %s39, 1
    %p545 = por %p543, %p544
    %p546 = scmp.ne.s32.totalorder %s537, %s538
    %p547 = scmp.eq.s32.totalorder %s39, 0
    %p548 = por %p546, %p547
    %p549 = scmp.ne.s32.totalorder %s537, %s538
    %p550 = scmp.eq.s32.totalorder %s40, 1
    %p551 = por %p549, %p550
    %p553 = scmp.ne.s32.totalorder %s538, %s552
    %p554 = scmp.eq.s32.totalorder %s40, 0
    %p555 = por %p553, %p554
    %s557 = sadd.s32 %s556, 1
    %p560 = scmp.eq.s32.totalorder %s34, 1
    %p561 = scmp.ne.s32.totalorder %s556, %s558
    %p562 = scmp.eq.s32.totalorder %s34, 0
    %p563 = por %p561, %p562
    %p564 = scmp.ne.s32.totalorder %s556, %s558
    %p565 = scmp.eq.s32.totalorder %s39, 1
    %p566 = por %p564, %p565
    %p567 = scmp.ne.s32.totalorder %s558, %s559
    %p568 = scmp.eq.s32.totalorder %s39, 0
    %p569 = por %p567, %p568
    %p570 = scmp.ne.s32.totalorder %s558, %s559
    %p571 = scmp.eq.s32.totalorder %s40, 1
    %p572 = por %p570, %p571
    %p574 = scmp.ne.s32.totalorder %s559, %s573
    %p575 = scmp.eq.s32.totalorder %s40, 0
    %p576 = por %p574, %p575
    %s578 = sadd.s32 %s577, 1
    %p581 = scmp.eq.s32.totalorder %s34, 1
    %p582 = scmp.ne.s32.totalorder %s577, %s579
    %p583 = scmp.eq.s32.totalorder %s34, 0
    %p584 = por %p582, %p583
    %p585 = scmp.ne.s32.totalorder %s577, %s579
    %p586 = scmp.eq.s32.totalorder %s39, 1
    %p587 = por %p585, %p586
    %p588 = scmp.ne.s32.totalorder %s579, %s580
    %p589 = scmp.eq.s32.totalorder %s39, 0
    %p590 = por %p588, %p589
    %p591 = scmp.ne.s32.totalorder %s579, %s580
    %p592 = scmp.eq.s32.totalorder %s40, 1
    %p593 = por %p591, %p592
    %p595 = scmp.ne.s32.totalorder %s580, %s594
    %p596 = scmp.eq.s32.totalorder %s40, 0
    %p597 = por %p595, %p596
    %s598 = ssub.s32 %s34, %s41
    %p599 = scmp.eq.s32.totalorder %s598, 0
    %s601 = sadd.s32 %s600, 1
    %s602 = scalar_select %p599, %s600, %s601
    %p605 = pneg %p599
    %p606 = scmp.eq.s32.totalorder %s34, 1
    %p607 = por %p605, %p606
    %p608 = scmp.ne.s32.totalorder %s600, %s603
    %p609 = scmp.eq.s32.totalorder %s34, 0
    %p610 = por %p608, %p609
    %p611 = scmp.ne.s32.totalorder %s600, %s603
    %p612 = scmp.eq.s32.totalorder %s39, 1
    %p613 = por %p611, %p612
    %p614 = scmp.ne.s32.totalorder %s603, %s604
    %p615 = scmp.eq.s32.totalorder %s39, 0
    %p616 = por %p614, %p615
    %p617 = scmp.ne.s32.totalorder %s603, %s604
    %p618 = scmp.eq.s32.totalorder %s40, 1
    %p619 = por %p617, %p618
    %p621 = scmp.ne.s32.totalorder %s604, %s620
    %p622 = scmp.eq.s32.totalorder %s40, 0
    %p623 = por %p621, %p622
    %p624 = scmp.le.s32.totalorder 1, %s34
    %p625 = scmp.lt.s32.totalorder %s34, 3
    %p626 = pnand %p624, %p625
    %p627 = pneg %p626
    // Predicated region
    $region9: #{dual_stream_forward.12} parent=5 // pred_check
      _
    $region10: #{dual_stream_forward.12} parent=5 // pred_check_branch
      %629 = sbr.rel (%p626) target = $region12
    $region11: #{dual_stream_forward.12} parent=5 // pred_region
      %s630 = ssub.s32 %s34, 1
      // Predicated region
      $region13: #{dual_stream_forward.12} parent=11 // pred_check
        %p631 = pneg %p107
      $region14: #{dual_stream_forward.12} parent=11 // pred_check_branch
        %633 = sbr.rel (%p631) target = $region16
      $region15: #{dual_stream_forward.12} parent=11 // pred_region
        _
      $region16: #{dual_stream_forward.12} parent=11 // pred_fallthru
        _
      // Predicated region
      $region17: #{dual_stream_forward.12} parent=11 // pred_check
        %p634 = pneg %p128
      $region18: #{dual_stream_forward.12} parent=11 // pred_check_branch
        %636 = sbr.rel (%p634) target = $region20
      $region19: #{dual_stream_forward.12} parent=11 // pred_region
        _
      $region20: #{dual_stream_forward.12} parent=11 // pred_fallthru
        _
      // Predicated region
      $region21: #{dual_stream_forward.12} parent=11 // pred_check
        %p637 = pneg %p149
      $region22: #{dual_stream_forward.12} parent=11 // pred_check_branch
        %639 = sbr.rel (%p637) target = $region24
      $region23: #{dual_stream_forward.12} parent=11 // pred_region
        _
      $region24: #{dual_stream_forward.12} parent=11 // pred_fallthru
        _
      // Predicated region
      $region25: #{dual_stream_forward.12} parent=11 // pred_check
        %p640 = pneg %p170
      $region26: #{dual_stream_forward.12} parent=11 // pred_check_branch
        %642 = sbr.rel (%p640) target = $region28
      $region27: #{dual_stream_forward.12} parent=11 // pred_region
        _
      $region28: #{dual_stream_forward.12} parent=11 // pred_fallthru
        _
      // Predicated region
      $region29: #{dual_stream_forward.12} parent=11 // pred_check
        %p643 = pneg %p191
      $region30: #{dual_stream_forward.12} parent=11 // pred_check_branch
        %645 = sbr.rel (%p643) target = $region32
      $region31: #{dual_stream_forward.12} parent=11 // pred_region
        _
      $region32: #{dual_stream_forward.12} parent=11 // pred_fallthru
        _
      // Predicated region
      $region33: #{dual_stream_forward.12} parent=11 // pred_check
        %p646 = pneg %p212
      $region34: #{dual_stream_forward.12} parent=11 // pred_check_branch
        %648 = sbr.rel (%p646) target = $region36
      $region35: #{dual_stream_forward.12} parent=11 // pred_region
        _
      $region36: #{dual_stream_forward.12} parent=11 // pred_fallthru
        _
      // Predicated region
      $region37: #{dual_stream_forward.12} parent=11 // pred_check
        %p649 = pneg %p233
      $region38: #{dual_stream_forward.12} parent=11 // pred_check_branch
        %651 = sbr.rel (%p649) target = $region40
      $region39: #{dual_stream_forward.12} parent=11 // pred_region
        _
      $region40: #{dual_stream_forward.12} parent=11 // pred_fallthru
        _
      // Predicated region
      $region41: #{dual_stream_forward.12} parent=11 // pred_check
        %p652 = pneg %p254
      $region42: #{dual_stream_forward.12} parent=11 // pred_check_branch
        %654 = sbr.rel (%p652) target = $region44
      $region43: #{dual_stream_forward.12} parent=11 // pred_region
        _
      $region44: #{dual_stream_forward.12} parent=11 // pred_fallthru
        _
      // Predicated region
      $region45: #{dual_stream_forward.12} parent=11 // pred_check
        %p655 = pneg %p275
      $region46: #{dual_stream_forward.12} parent=11 // pred_check_branch
        %657 = sbr.rel (%p655) target = $region48
      $region47: #{dual_stream_forward.12} parent=11 // pred_region
        _
      $region48: #{dual_stream_forward.12} parent=11 // pred_fallthru
        _
      // Predicated region
      $region49: #{dual_stream_forward.12} parent=11 // pred_check
        %p658 = pneg %p296
      $region50: #{dual_stream_forward.12} parent=11 // pred_check_branch
        %660 = sbr.rel (%p658) target = $region52
      $region51: #{dual_stream_forward.12} parent=11 // pred_region
        _
      $region52: #{dual_stream_forward.12} parent=11 // pred_fallthru
        _
      // Predicated region
      $region53: #{dual_stream_forward.12} parent=11 // pred_check
        %p661 = pneg %p317
      $region54: #{dual_stream_forward.12} parent=11 // pred_check_branch
        %663 = sbr.rel (%p661) target = $region56
      $region55: #{dual_stream_forward.12} parent=11 // pred_region
        _
      $region56: #{dual_stream_forward.12} parent=11 // pred_fallthru
        _
      // Predicated region
      $region57: #{dual_stream_forward.12} parent=11 // pred_check
        %p664 = pneg %p338
      $region58: #{dual_stream_forward.12} parent=11 // pred_check_branch
        %666 = sbr.rel (%p664) target = $region60
      $region59: #{dual_stream_forward.12} parent=11 // pred_region
        _
      $region60: #{dual_stream_forward.12} parent=11 // pred_fallthru
        _
      // Predicated region
      $region61: #{dual_stream_forward.12} parent=11 // pred_check
        %p667 = pneg %p359
      $region62: #{dual_stream_forward.12} parent=11 // pred_check_branch
        %669 = sbr.rel (%p667) target = $region64
      $region63: #{dual_stream_forward.12} parent=11 // pred_region
        _
      $region64: #{dual_stream_forward.12} parent=11 // pred_fallthru
        _
      // Predicated region
      $region65: #{dual_stream_forward.12} parent=11 // pred_check
        %p670 = pneg %p380
      $region66: #{dual_stream_forward.12} parent=11 // pred_check_branch
        %672 = sbr.rel (%p670) target = $region68
      $region67: #{dual_stream_forward.12} parent=11 // pred_region
        _
      $region68: #{dual_stream_forward.12} parent=11 // pred_fallthru
        _
      // Predicated region
      $region69: #{dual_stream_forward.12} parent=11 // pred_check
        %p673 = pneg %p401
      $region70: #{dual_stream_forward.12} parent=11 // pred_check_branch
        %675 = sbr.rel (%p673) target = $region72
      $region71: #{dual_stream_forward.12} parent=11 // pred_region
        _
      $region72: #{dual_stream_forward.12} parent=11 // pred_fallthru
        _
      // Predicated region
      $region73: #{dual_stream_forward.12} parent=11 // pred_check
        %p676 = pneg %p422
      $region74: #{dual_stream_forward.12} parent=11 // pred_check_branch
        %678 = sbr.rel (%p676) target = $region76
      $region75: #{dual_stream_forward.12} parent=11 // pred_region
        _
      $region76: #{dual_stream_forward.12} parent=11 // pred_fallthru
        _
      // Predicated region
      $region77: #{dual_stream_forward.12} parent=11 // pred_check
        %p679 = pneg %p443
      $region78: #{dual_stream_forward.12} parent=11 // pred_check_branch
        %681 = sbr.rel (%p679) target = $region80
      $region79: #{dual_stream_forward.12} parent=11 // pred_region
        _
      $region80: #{dual_stream_forward.12} parent=11 // pred_fallthru
        _
      // Predicated region
      $region81: #{dual_stream_forward.12} parent=11 // pred_check
        %p682 = pneg %p464
      $region82: #{dual_stream_forward.12} parent=11 // pred_check_branch
        %684 = sbr.rel (%p682) target = $region84
      $region83: #{dual_stream_forward.12} parent=11 // pred_region
        _
      $region84: #{dual_stream_forward.12} parent=11 // pred_fallthru
        _
      // Predicated region
      $region85: #{dual_stream_forward.12} parent=11 // pred_check
        %p685 = pneg %p485
      $region86: #{dual_stream_forward.12} parent=11 // pred_check_branch
        %687 = sbr.rel (%p685) target = $region88
      $region87: #{dual_stream_forward.12} parent=11 // pred_region
        _
      $region88: #{dual_stream_forward.12} parent=11 // pred_fallthru
        _
      // Predicated region
      $region89: #{dual_stream_forward.12} parent=11 // pred_check
        %p688 = pneg %p506
      $region90: #{dual_stream_forward.12} parent=11 // pred_check_branch
        %690 = sbr.rel (%p688) target = $region92
      $region91: #{dual_stream_forward.12} parent=11 // pred_region
        _
      $region92: #{dual_stream_forward.12} parent=11 // pred_fallthru
        _
      // Predicated region
      $region93: #{dual_stream_forward.12} parent=11 // pred_check
        %p691 = pneg %p527
      $region94: #{dual_stream_forward.12} parent=11 // pred_check_branch
        %693 = sbr.rel (%p691) target = $region96
      $region95: #{dual_stream_forward.12} parent=11 // pred_region
        _
      $region96: #{dual_stream_forward.12} parent=11 // pred_fallthru
        _
      // Predicated region
      $region97: #{dual_stream_forward.12} parent=11 // pred_check
        %p694 = pneg %p548
      $region98: #{dual_stream_forward.12} parent=11 // pred_check_branch
        %696 = sbr.rel (%p694) target = $region100
      $region99: #{dual_stream_forward.12} parent=11 // pred_region
        _
      $region100: #{dual_stream_forward.12} parent=11 // pred_fallthru
        _
      // Predicated region
      $region101: #{dual_stream_forward.12} parent=11 // pred_check
        %p697 = pneg %p569
      $region102: #{dual_stream_forward.12} parent=11 // pred_check_branch
        %699 = sbr.rel (%p697) target = $region104
      $region103: #{dual_stream_forward.12} parent=11 // pred_region
        _
      $region104: #{dual_stream_forward.12} parent=11 // pred_fallthru
        _
      // Predicated region
      $region105: #{dual_stream_forward.12} parent=11 // pred_check
        %p700 = pneg %p590
      $region106: #{dual_stream_forward.12} parent=11 // pred_check_branch
        %702 = sbr.rel (%p700) target = $region108
      $region107: #{dual_stream_forward.12} parent=11 // pred_region
        _
      $region108: #{dual_stream_forward.12} parent=11 // pred_fallthru
        _
    $region12: #{dual_stream_forward.12} parent=5 // pred_fallthru
      _
    %p703 = scmp.lt.s32.totalorder %s34, 2
    // Predicated region
    $region109: #{dual_stream_forward.12} parent=5 // pred_check
      %p704 = pneg %p703
    $region110: #{dual_stream_forward.12} parent=5 // pred_check_branch
      %706 = sbr.rel (%p704) target = $region112
    $region111: #{dual_stream_forward.12} parent=5 // pred_region
      // Predicated region
      $region113: #{dual_stream_forward.12} parent=111 // pred_check
        %p707 = pneg %p54
      $region114: #{dual_stream_forward.12} parent=111 // pred_check_branch
        %709 = sbr.rel (%p707) target = $region116
      $region115: #{dual_stream_forward.12} parent=111 // pred_region
        %p710 = scmp.lt.s32.totalorder %s34, 1
        %s711 = scalar_select %p710, %s34, 1
        %s712 = smul.addr %s711, 4
        %s713 = scalar_lea.vmem %s0, %s712
      $region116: #{dual_stream_forward.12} parent=111 // pred_fallthru
        _
      // Predicated region
      $region117: #{dual_stream_forward.12} parent=111 // pred_check
        %p714 = pneg %p80
      $region118: #{dual_stream_forward.12} parent=111 // pred_check_branch
        %716 = sbr.rel (%p714) target = $region120
      $region119: #{dual_stream_forward.12} parent=111 // pred_region
        %p717 = scmp.lt.s32.totalorder %s34, 1
        %s718 = scalar_select %p717, %s34, 1
        %s719 = scalar_lea.vmem %s1, %s718
      $region120: #{dual_stream_forward.12} parent=111 // pred_fallthru
        _
    $region112: #{dual_stream_forward.12} parent=5 // pred_fallthru
      _
    %p720 = scmp.le.s32.totalorder 1, %s34
    %p721 = scmp.lt.s32.totalorder %s34, 3
    %p722 = pnand %p720, %p721
    %p723 = pneg %p722
    // Predicated region
    $region121: #{dual_stream_forward.12} parent=5 // pred_check
      _
    $region122: #{dual_stream_forward.12} parent=5 // pred_check_branch
      %725 = sbr.rel (%p722) target = $region124
    $region123: #{dual_stream_forward.12} parent=5 // pred_region
      %s726 = ssub.s32 %s34, 1
      %p727 = scmp.lt.s32.totalorder %s39, 1
      %s728 = scalar_select %p727, %s39, 1
      %s729 = smul.addr %s728, 4
      %s730 = scalar_lea.vmem %s0, %s729
      %p731 = pneg %p60
      %p732 = pneg %p57
      %p733 = scmp.lt.s32.totalorder %s39, 1
      %s734 = scalar_select %p733, %s39, 1
      %s735 = scalar_lea.vmem %s1, %s734
      %p736 = pneg %p86
      %p737 = pneg %p83
      %p738 = pneg %p107
      %p739 = pneg %p104
      %p740 = pneg %p128
      %p741 = pneg %p125
      %p742 = pneg %p149
      %p743 = pneg %p146
      %p744 = pneg %p170
      %p745 = pneg %p167
      %p746 = pneg %p191
      %p747 = pneg %p188
      %p748 = pneg %p212
      %p749 = pneg %p209
      %p750 = pneg %p233
      %p751 = pneg %p230
      %p752 = pneg %p254
      %p753 = pneg %p251
      %p754 = pneg %p275
      %p755 = pneg %p272
      %p756 = pneg %p296
      %p757 = pneg %p293
      %p758 = pneg %p317
      %p759 = pneg %p314
      %p760 = pneg %p338
      %p761 = pneg %p335
      %p762 = pneg %p359
      %p763 = pneg %p356
      %p764 = pneg %p380
      %p765 = pneg %p377
      %p766 = pneg %p401
      %p767 = pneg %p398
      %p768 = pneg %p422
      %p769 = pneg %p419
      %p770 = pneg %p443
      %p771 = pneg %p440
      %p772 = pneg %p464
      %p773 = pneg %p461
      %p774 = pneg %p485
      %p775 = pneg %p482
      %p776 = pneg %p506
      %p777 = pneg %p503
      %p778 = pneg %p527
      %p779 = pneg %p524
      %p780 = pneg %p548
      %p781 = pneg %p545
      %p782 = pneg %p569
      %p783 = pneg %p566
      %p784 = pneg %p590
      %p785 = pneg %p587
      %p786 = pneg %p616
      %p787 = pneg %p613
      %p788 = scmp.lt.s32.totalorder %s39, 1
      %s789 = scalar_select %p788, %s39, 1
      %s790 = smul.addr %s789, 4
      %s791 = scalar_lea.vmem %s26, %s790
      %p792 = scmp.lt.s32.totalorder %s39, 1
      %s793 = scalar_select %p792, %s39, 1
      %s794 = smul.addr %s793, 4
      %s795 = scalar_lea.vmem %s0, %s794
      %p796 = scmp.lt.s32.totalorder %s39, 1
      %s797 = scalar_select %p796, %s39, 1
      %s798 = scalar_lea.vmem %s1, %s797
      %p799 = scmp.lt.s32.totalorder %s39, 1
      %s800 = scalar_select %p799, %s39, 1
      %s801 = smul.addr %s800, 4
      %s802 = scalar_lea.vmem %s26, %s801
      %v804 = vld [vmem:[%s795] sm:$0xf]
      %v805 = vunpack.c.l.bf16 %v804
      %v806 = vld [vmem:[%s798] sm:$0x1]
      %v807 = vld [vmem:[%s3] sm:$0x1]
      %v808 = vld [vmem:[%s4] sm:$0x1]
      %vm809 = vcmask 261120
      %v810 = vsel %vm809, %v805, 0.0
      %811 = vadd.xlane.f32.xlu0 %v810
      %v812 = vpop.xlane.xlu0 %811
      %v813 = vrcp.pop 32.0
      %v814 = vmul.f32 %v812, %v813
      %v815 = vsub.f32 %v805, %v814
      %v816 = vmul.f32 %v815, %v815
      %v817 = vsel %vm809, %v816, 0.0
      %818 = vadd.xlane.f32.xlu0 %v817
      %v819 = vpop.xlane.xlu0 %818
      %v820 = vmul.f32 %v819, %v813
      %v821 = vadd.f32 %v820, 1e-05
      %v822 = vrsqrt.pop %v821
      %v823 = vmul.f32 %v815, %v822
      %v825 = vlaneseq
      %v826 = vshrl.u32 %v825, 7
      %v827 = vsub.s32 0, %v826
      %v828 = vrot.slane %v807, %v827
      %v830 = vmul.f32 %v823, %v828
      %v832 = vlaneseq
      %v833 = vshrl.u32 %v832, 7
      %v834 = vsub.s32 0, %v833
      %v835 = vrot.slane %v808, %v834
      %v837 = vadd.f32 %v830, %v835
      %v838 = vld [vmem:[%s5] sm:$0xf]
      %v839 = vld [vmem:[%s5 + $0x4] sm:$0xf]
      %v840 = vld [vmem:[%s5 + $0x8] sm:$0xf]
      %v841 = vld [vmem:[%s5 + $0xc] sm:$0xf]
      %v842 = vpack.c.bf16 %v837, %v837
      %v843 = vld [vmem:[%s6] sm:$0x1]
      %v845 = vlaneseq
      %v846 = vshrl.u32 %v845, 7
      %v847 = vsub.s32 0, %v846
      %v848 = vrot.slane %v843, %v847
      %v854 = vunpack.c.l.b16 %v838
      %v855 = vunpack.c.l.b16 %v839
      %v856 = vunpack.c.l.b16 %v840
      %v857 = vunpack.c.l.b16 %v841
      %v858 = vpack.c.b16 %v855, %v854
      %v859 = vpack.c.b16 %v857, %v856
      %v863 = vsel %vm809, %v842, 0
      %865 = vmatprep.subr.bf16.mxu0 0
      %866 = vmatpush1.bf16.msra.mxu0 %v858
      %867 = vmatprep.subr.bf16.mxu0 0
      %868 = vmatpush1.bf16.msra.mxu0 %v859
      %869 = vmatprep.subr.bf16.mxu0 0
      %870 = vmatpush1.bf16.msra.mxu0 0
      %871 = vmatprep.subr.bf16.mxu0 0
      %872 = vmatpush1.bf16.msra.mxu0 0
      %873 = vmatprep.subr.bf16.mxu0 0
      %874 = vmatpush1.bf16.msra.mxu0 0
      %875 = vmatprep.subr.bf16.mxu0 0
      %876 = vmatpush1.bf16.msra.mxu0 0
      %877 = vmatprep.subr.bf16.mxu0 0
      %878 = vmatpush1.bf16.msra.mxu0 0
      %879 = vmatprep.subr.bf16.mxu0 0
      %880 = vmatpush1.bf16.msra.mxu0 0
      %881 = vmatprep.subr.bf16.mxu0 0
      %882 = vmatpush1.bf16.msra.mxu0 0
      %883 = vmatprep.subr.bf16.mxu0 0
      %884 = vmatpush1.bf16.msra.mxu0 0
      %885 = vmatprep.subr.bf16.mxu0 0
      %886 = vmatpush1.bf16.msra.mxu0 0
      %887 = vmatprep.subr.bf16.mxu0 0
      %888 = vmatpush1.bf16.msra.mxu0 0
      %889 = vmatprep.subr.bf16.mxu0 0
      %890 = vmatpush1.bf16.msra.mxu0 0
      %891 = vmatprep.subr.bf16.mxu0 0
      %892 = vmatpush1.bf16.msra.mxu0 0
      %893 = vmatprep.subr.bf16.mxu0 0
      %894 = vmatpush1.bf16.msra.mxu0 0
      %895 = vmatprep.subr.bf16.mxu0 0
      %896 = vmatpush1.bf16.msra.mxu0 0
      %897 = vmatprep.mubr.bf16.mxu0 0
      %898 = vmatmul.mubr.bf16.gmra.mrb[0].mxu0 %v863
      %v899 = vpop.f32.mrb[0].mxu0
      %v900 = vadd.f32 %v848, %v899
      %v901 = vpop.f32.mrb[0].mxu0
      %v902 = vpop.f32.mrb[0].mxu0
      %v903 = vpop.f32.mrb[0].mxu0
      %904 = vdwg.mxu0
      %v905 = vlaneseq
      %v906 = vshrl.u32 %v905, 7
      %v907 = vlaneseq
      %v908 = vand.u32 %v907, 127
      %vm909 = vcmp.gt.s32.totalorder %v908, %v906
      %v910 = vmul.f32 %v900, 0.35355338
      %v911 = vpack.c.bf16 %v910, %v910
      %v912 = vpack.c.bf16 %v900, %v900
      %914 = vrot.lane.b32.xlu0 %v912, 96
      %v915 = vpop.permute.xlu0 %914
      %vm916 = vcmask 64512
      %v918 = vsel %vm916, %v911, 0
      %v921 = vsel %vm916, %v915, 0
      %923 = vmatprep.subr.bf16.mxu0 0
      %924 = vmatpush1.bf16.xpose.msra.mxu0 %v921
      %925 = vmatprep.subr.bf16.mxu0 0
      %926 = vmatpush1.bf16.xpose.msra.mxu0 0
      %927 = vmatprep.subr.bf16.mxu0 0
      %928 = vmatpush1.bf16.xpose.msra.mxu0 0
      %929 = vmatprep.subr.bf16.mxu0 0
      %930 = vmatpush1.bf16.xpose.msra.mxu0 0
      %931 = vmatprep.subr.bf16.mxu0 0
      %932 = vmatpush1.bf16.xpose.msra.mxu0 0
      %933 = vmatprep.subr.bf16.mxu0 0
      %934 = vmatpush1.bf16.xpose.msra.mxu0 0
      %935 = vmatprep.subr.bf16.mxu0 0
      %936 = vmatpush1.bf16.xpose.msra.mxu0 0
      %937 = vmatprep.subr.bf16.mxu0 0
      %938 = vmatpush1.bf16.xpose.msra.mxu0 0
      %939 = vmatprep.subr.bf16.mxu0 0
      %940 = vmatpush1.bf16.xpose.msra.mxu0 0
      %941 = vmatprep.subr.bf16.mxu0 0
      %942 = vmatpush1.bf16.xpose.msra.mxu0 0
      %943 = vmatprep.subr.bf16.mxu0 0
      %944 = vmatpush1.bf16.xpose.msra.mxu0 0
      %945 = vmatprep.subr.bf16.mxu0 0
      %946 = vmatpush1.bf16.xpose.msra.mxu0 0
      %947 = vmatprep.subr.bf16.mxu0 0
      %948 = vmatpush1.bf16.xpose.msra.mxu0 0
      %949 = vmatprep.subr.bf16.mxu0 0
      %950 = vmatpush1.bf16.xpose.msra.mxu0 0
      %951 = vmatprep.subr.bf16.mxu0 0
      %952 = vmatpush1.bf16.xpose.msra.mxu0 0
      %953 = vmatprep.subr.bf16.mxu0 0
      %954 = vmatpush1.bf16.xpose.msra.mxu0 0
      %955 = vmatprep.mubr.bf16.mxu0 0
      %956 = vmatmul.mubr.bf16.gmra.mrb[0].mxu0 %v918
      %v957 = vpop.f32.mrb[0].mxu0
      %v958 = vadd.f32 0.0, %v957
      %v959 = vpop.f32.mrb[0].mxu0
      %v960 = vpop.f32.mrb[0].mxu0
      %v961 = vpop.f32.mrb[0].mxu0
      %962 = vdwg.mxu0
      %v963 = vsel %vm909, -1e+30, %v958
      %v964 = vsel %vm916, %v963, -inf
      %965 = vmax.xlane.f32.xlu0 %v964
      %v966 = vpop.xlane.xlu0 %965
      %v967 = vsub.f32 %v963, %v966
      %v968 = vmul.f32 %v967, 1.442695
      %v969 = vpow.pop %v968
      %v970 = vsel %vm916, %v969, 0.0
      %971 = vadd.xlane.f32.xlu0 %v970
      %v972 = vpop.xlane.xlu0 %971
      %v973 = vrcp.pop %v972
      %v974 = vmul.f32 %v972, %v973
      %v975 = vsub.f32 2.0, %v974
      %v976 = vmul.f32 %v973, %v975
      %v977 = vmul.f32 %v969, %v976
      %v978 = vpack.c.bf16 %v977, %v977
      %979 = vrot.lane.b32.xlu0 %v912, 64
      %v980 = vpop.permute.xlu0 %979
      %v982 = vsel %vm916, %v978, 0
      %vm984 = vcmask 1043456
      %v986 = vsel %vm984, %v980, 0
      %988 = vmatprep.subr.bf16.mxu0 0
      %989 = vmatpush1.bf16.msra.mxu0 %v986
      %990 = vmatprep.subr.bf16.mxu0 0
      %991 = vmatpush1.bf16.msra.mxu0 0
      %992 = vmatprep.subr.bf16.mxu0 0
      %993 = vmatpush1.bf16.msra.mxu0 0
      %994 = vmatprep.subr.bf16.mxu0 0
      %995 = vmatpush1.bf16.msra.mxu0 0
      %996 = vmatprep.subr.bf16.mxu0 0
      %997 = vmatpush1.bf16.msra.mxu0 0
      %998 = vmatprep.subr.bf16.mxu0 0
      %999 = vmatpush1.bf16.msra.mxu0 0
      %1000 = vmatprep.subr.bf16.mxu0 0
      %1001 = vmatpush1.bf16.msra.mxu0 0
      %1002 = vmatprep.subr.bf16.mxu0 0
      %1003 = vmatpush1.bf16.msra.mxu0 0
      %1004 = vmatprep.subr.bf16.mxu0 0
      %1005 = vmatpush1.bf16.msra.mxu0 0
      %1006 = vmatprep.subr.bf16.mxu0 0
      %1007 = vmatpush1.bf16.msra.mxu0 0
      %1008 = vmatprep.subr.bf16.mxu0 0
      %1009 = vmatpush1.bf16.msra.mxu0 0
      %1010 = vmatprep.subr.bf16.mxu0 0
      %1011 = vmatpush1.bf16.msra.mxu0 0
      %1012 = vmatprep.subr.bf16.mxu0 0
      %1013 = vmatpush1.bf16.msra.mxu0 0
      %1014 = vmatprep.subr.bf16.mxu0 0
      %1015 = vmatpush1.bf16.msra.mxu0 0
      %1016 = vmatprep.subr.bf16.mxu0 0
      %1017 = vmatpush1.bf16.msra.mxu0 0
      %1018 = vmatprep.subr.bf16.mxu0 0
      %1019 = vmatpush1.bf16.msra.mxu0 0
      %1020 = vmatprep.mubr.bf16.mxu0 0
      %1021 = vmatmul.mubr.bf16.gmra.mrb[0].mxu0 %v982
      %v1022 = vpop.f32.mrb[0].mxu0
      %v1023 = vadd.f32 0.0, %v1022
      %v1024 = vpop.f32.mrb[0].mxu0
      %v1025 = vpop.f32.mrb[0].mxu0
      %v1026 = vpop.f32.mrb[0].mxu0
      %1027 = vdwg.mxu0
      %1028 = vst.msk [vmem:[#allocation2] sm:$0xff] %vm916, %v1023
      %1030 = vrot.lane.b32.xlu0 %v911, 120
      %v1031 = vpop.permute.xlu0 %1030
      %1032 = vrot.lane.b32.xlu0 %v912, 88
      %v1033 = vpop.permute.xlu0 %1032
      %v1035 = vsel %vm916, %v1031, 0
      %v1038 = vsel %vm916, %v1033, 0
      %1040 = vmatprep.subr.bf16.mxu0 0
      %1041 = vmatpush1.bf16.xpose.msra.mxu0 %v1038
      %1042 = vmatprep.subr.bf16.mxu0 0
      %1043 = vmatpush1.bf16.xpose.msra.mxu0 0
      %1044 = vmatprep.subr.bf16.mxu0 0
      %1045 = vmatpush1.bf16.xpose.msra.mxu0 0
      %1046 = vmatprep.subr.bf16.mxu0 0
      %1047 = vmatpush1.bf16.xpose.msra.mxu0 0
      %1048 = vmatprep.subr.bf16.mxu0 0
      %1049 = vmatpush1.bf16.xpose.msra.mxu0 0
      %1050 = vmatprep.subr.bf16.mxu0 0
      %1051 = vmatpush1.bf16.xpose.msra.mxu0 0
      %1052 = vmatprep.subr.bf16.mxu0 0
      %1053 = vmatpush1.bf16.xpose.msra.mxu0 0
      %1054 = vmatprep.subr.bf16.mxu0 0
      %1055 = vmatpush1.bf16.xpose.msra.mxu0 0
      %1056 = vmatprep.subr.bf16.mxu0 0
      %1057 = vmatpush1.bf16.xpose.msra.mxu0 0
      %1058 = vmatprep.subr.bf16.mxu0 0
      %1059 = vmatpush1.bf16.xpose.msra.mxu0 0
      %1060 = vmatprep.subr.bf16.mxu0 0
      %1061 = vmatpush1.bf16.xpose.msra.mxu0 0
      %1062 = vmatprep.subr.bf16.mxu0 0
      %1063 = vmatpush1.bf16.xpose.msra.mxu0 0
      %1064 = vmatprep.subr.bf16.mxu0 0
      %1065 = vmatpush1.bf16.xpose.msra.mxu0 0
      %1066 = vmatprep.subr.bf16.mxu0 0
      %1067 = vmatpush1.bf16.xpose.msra.mxu0 0
      %1068 = vmatprep.subr.bf16.mxu0 0
      %1069 = vmatpush1.bf16.xpose.msra.mxu0 0
      %1070 = vmatprep.subr.bf16.mxu0 0
      %1071 = vmatpush1.bf16.xpose.msra.mxu0 0
      %1072 = vmatprep.mubr.bf16.mxu0 0
      %1073 = vmatmul.mubr.bf16.gmra.mrb[0].mxu0 %v1035
      %v1074 = vpop.f32.mrb[0].mxu0
      %v1075 = vadd.f32 0.0, %v1074
      %v1076 = vpop.f32.mrb[0].mxu0
      %v1077 = vpop.f32.mrb[0].mxu0
      %v1078 = vpop.f32.mrb[0].mxu0
      %1079 = vdwg.mxu0
      %v1080 = vsel %vm909, -1e+30, %v1075
      %v1081 = vsel %vm916, %v1080, -inf
      %1082 = vmax.xlane.f32.xlu0 %v1081
      %v1083 = vpop.xlane.xlu0 %1082
      %v1084 = vsub.f32 %v1080, %v1083
      %v1085 = vmul.f32 %v1084, 1.442695
      %v1086 = vpow.pop %v1085
      %v1087 = vsel %vm916, %v1086, 0.0
      %1088 = vadd.xlane.f32.xlu0 %v1087
      %v1089 = vpop.xlane.xlu0 %1088
      %v1090 = vrcp.pop %v1089
      %v1091 = vmul.f32 %v1089, %v1090
      %v1092 = vsub.f32 2.0, %v1091
      %v1093 = vmul.f32 %v1090, %v1092
      %v1094 = vmul.f32 %v1086, %v1093
      %v1095 = vpack.c.bf16 %v1094, %v1094
      %1096 = vrot.lane.b32.xlu0 %v912, 56
      %v1097 = vpop.permute.xlu0 %1096
      %v1099 = vsel %vm916, %v1095, 0
      %v1102 = vsel %vm984, %v1097, 0
      %1104 = vmatprep.subr.bf16.mxu0 0
      %1105 = vmatpush1.bf16.msra.mxu0 %v1102
      %1106 = vmatprep.subr.bf16.mxu0 0
      %1107 = vmatpush1.bf16.msra.mxu0 0
      %1108 = vmatprep.subr.bf16.mxu0 0
      %1109 = vmatpush1.bf16.msra.mxu0 0
      %1110 = vmatprep.subr.bf16.mxu0 0
      %1111 = vmatpush1.bf16.msra.mxu0 0
      %1112 = vmatprep.subr.bf16.mxu0 0
      %1113 = vmatpush1.bf16.msra.mxu0 0
      %1114 = vmatprep.subr.bf16.mxu0 0
      %1115 = vmatpush1.bf16.msra.mxu0 0
      %1116 = vmatprep.subr.bf16.mxu0 0
      %1117 = vmatpush1.bf16.msra.mxu0 0
      %1118 = vmatprep.subr.bf16.mxu0 0
      %1119 = vmatpush1.bf16.msra.mxu0 0
      %1120 = vmatprep.subr.bf16.mxu0 0
      %1121 = vmatpush1.bf16.msra.mxu0 0
      %1122 = vmatprep.subr.bf16.mxu0 0
      %1123 = vmatpush1.bf16.msra.mxu0 0
      %1124 = vmatprep.subr.bf16.mxu0 0
      %1125 = vmatpush1.bf16.msra.mxu0 0
      %1126 = vmatprep.subr.bf16.mxu0 0
      %1127 = vmatpush1.bf16.msra.mxu0 0
      %1128 = vmatprep.subr.bf16.mxu0 0
      %1129 = vmatpush1.bf16.msra.mxu0 0
      %1130 = vmatprep.subr.bf16.mxu0 0
      %1131 = vmatpush1.bf16.msra.mxu0 0
      %1132 = vmatprep.subr.bf16.mxu0 0
      %1133 = vmatpush1.bf16.msra.mxu0 0
      %1134 = vmatprep.subr.bf16.mxu0 0
      %1135 = vmatpush1.bf16.msra.mxu0 0
      %1136 = vmatprep.mubr.bf16.mxu0 0
      %1137 = vmatmul.mubr.bf16.gmra.mrb[0].mxu0 %v1099
      %v1138 = vpop.f32.mrb[0].mxu0
      %v1139 = vadd.f32 0.0, %v1138
      %v1140 = vpop.f32.mrb[0].mxu0
      %v1141 = vpop.f32.mrb[0].mxu0
      %v1142 = vpop.f32.mrb[0].mxu0
      %1143 = vdwg.mxu0
      %1145 = vrot.lane.b32.xlu0 %v1139, 8
      %v1146 = vpop.permute.xlu0 %1145
      %vm1148 = vcmask 130112
      %1149 = vst.msk [vmem:[#allocation2] sm:$0xff] %vm1148, %v1146
      %1150 = vrot.lane.b32.xlu0 %v911, 112
      %v1151 = vpop.permute.xlu0 %1150
      %1152 = vrot.lane.b32.xlu0 %v912, 80
      %v1153 = vpop.permute.xlu0 %1152
      %v1155 = vsel %vm916, %v1151, 0
      %v1158 = vsel %vm916, %v1153, 0
      %1160 = vmatprep.subr.bf16.mxu0 0
      %1161 = vmatpush1.bf16.xpose.msra.mxu0 %v1158
      %1162 = vmatprep.subr.bf16.mxu0 0
      %1163 = vmatpush1.bf16.xpose.msra.mxu0 0
      %1164 = vmatprep.subr.bf16.mxu0 0
      %1165 = vmatpush1.bf16.xpose.msra.mxu0 0
      %1166 = vmatprep.subr.bf16.mxu0 0
      %1167 = vmatpush1.bf16.xpose.msra.mxu0 0
      %1168 = vmatprep.subr.bf16.mxu0 0
      %1169 = vmatpush1.bf16.xpose.msra.mxu0 0
      %1170 = vmatprep.subr.bf16.mxu0 0
      %1171 = vmatpush1.bf16.xpose.msra.mxu0 0
      %1172 = vmatprep.subr.bf16.mxu0 0
      %1173 = vmatpush1.bf16.xpose.msra.mxu0 0
      %1174 = vmatprep.subr.bf16.mxu0 0
      %1175 = vmatpush1.bf16.xpose.msra.mxu0 0
      %1176 = vmatprep.subr.bf16.mxu0 0
      %1177 = vmatpush1.bf16.xpose.msra.mxu0 0
      %1178 = vmatprep.subr.bf16.mxu0 0
      %1179 = vmatpush1.bf16.xpose.msra.mxu0 0
      %1180 = vmatprep.subr.bf16.mxu0 0
      %1181 = vmatpush1.bf16.xpose.msra.mxu0 0
      %1182 = vmatprep.subr.bf16.mxu0 0
      %1183 = vmatpush1.bf16.xpose.msra.mxu0 0
      %1184 = vmatprep.subr.bf16.mxu0 0
      %1185 = vmatpush1.bf16.xpose.msra.mxu0 0
      %1186 = vmatprep.subr.bf16.mxu0 0
      %1187 = vmatpush1.bf16.xpose.msra.mxu0 0
      %1188 = vmatprep.subr.bf16.mxu0 0
      %1189 = vmatpush1.bf16.xpose.msra.mxu0 0
      %1190 = vmatprep.subr.bf16.mxu0 0
      %1191 = vmatpush1.bf16.xpose.msra.mxu0 0
      %1192 = vmatprep.mubr.bf16.mxu0 0
      %1193 = vmatmul.mubr.bf16.gmra.mrb[0].mxu0 %v1155
      %v1194 = vpop.f32.mrb[0].mxu0
      %v1195 = vadd.f32 0.0, %v1194
      %v1196 = vpop.f32.mrb[0].mxu0
      %v1197 = vpop.f32.mrb[0].mxu0
      %v1198 = vpop.f32.mrb[0].mxu0
      %1199 = vdwg.mxu0
      %v1200 = vsel %vm909, -1e+30, %v1195
      %v1201 = vsel %vm916, %v1200, -inf
      %1202 = vmax.xlane.f32.xlu0 %v1201
      %v1203 = vpop.xlane.xlu0 %1202
      %v1204 = vsub.f32 %v1200, %v1203
      %v1205 = vmul.f32 %v1204, 1.442695
      %v1206 = vpow.pop %v1205
      %v1207 = vsel %vm916, %v1206, 0.0
      %1208 = vadd.xlane.f32.xlu0 %v1207
      %v1209 = vpop.xlane.xlu0 %1208
      %v1210 = vrcp.pop %v1209
      %v1211 = vmul.f32 %v1209, %v1210
      %v1212 = vsub.f32 2.0, %v1211
      %v1213 = vmul.f32 %v1210, %v1212
      %v1214 = vmul.f32 %v1206, %v1213
      %v1215 = vpack.c.bf16 %v1214, %v1214
      %1216 = vrot.lane.b32.xlu0 %v912, 48
      %v1217 = vpop.permute.xlu0 %1216
      %v1219 = vsel %vm916, %v1215, 0
      %v1222 = vsel %vm984, %v1217, 0
      %1224 = vmatprep.subr.bf16.mxu0 0
      %1225 = vmatpush1.bf16.msra.mxu0 %v1222
      %1226 = vmatprep.subr.bf16.mxu0 0
      %1227 = vmatpush1.bf16.msra.mxu0 0
      %1228 = vmatprep.subr.bf16.mxu0 0
      %1229 = vmatpush1.bf16.msra.mxu0 0
      %1230 = vmatprep.subr.bf16.mxu0 0
      %1231 = vmatpush1.bf16.msra.mxu0 0
      %1232 = vmatprep.subr.bf16.mxu0 0
      %1233 = vmatpush1.bf16.msra.mxu0 0
      %1234 = vmatprep.subr.bf16.mxu0 0
      %1235 = vmatpush1.bf16.msra.mxu0 0
      %1236 = vmatprep.subr.bf16.mxu0 0
      %1237 = vmatpush1.bf16.msra.mxu0 0
      %1238 = vmatprep.subr.bf16.mxu0 0
      %1239 = vmatpush1.bf16.msra.mxu0 0
      %1240 = vmatprep.subr.bf16.mxu0 0
      %1241 = vmatpush1.bf16.msra.mxu0 0
      %1242 = vmatprep.subr.bf16.mxu0 0
      %1243 = vmatpush1.bf16.msra.mxu0 0
      %1244 = vmatprep.subr.bf16.mxu0 0
      %1245 = vmatpush1.bf16.msra.mxu0 0
      %1246 = vmatprep.subr.bf16.mxu0 0
      %1247 = vmatpush1.bf16.msra.mxu0 0
      %1248 = vmatprep.subr.bf16.mxu0 0
      %1249 = vmatpush1.bf16.msra.mxu0 0
      %1250 = vmatprep.subr.bf16.mxu0 0
      %1251 = vmatpush1.bf16.msra.mxu0 0
      %1252 = vmatprep.subr.bf16.mxu0 0
      %1253 = vmatpush1.bf16.msra.mxu0 0
      %1254 = vmatprep.subr.bf16.mxu0 0
      %1255 = vmatpush1.bf16.msra.mxu0 0
      %1256 = vmatprep.mubr.bf16.mxu0 0
      %1257 = vmatmul.mubr.bf16.gmra.mrb[0].mxu0 %v1219
      %v1258 = vpop.f32.mrb[0].mxu0
      %v1259 = vadd.f32 0.0, %v1258
      %v1260 = vpop.f32.mrb[0].mxu0
      %v1261 = vpop.f32.mrb[0].mxu0
      %v1262 = vpop.f32.mrb[0].mxu0
      %1263 = vdwg.mxu0
      %1265 = vrot.lane.b32.xlu0 %v1259, 16
      %v1266 = vpop.permute.xlu0 %1265
      %vm1268 = vcmask 195712
      %1269 = vst.msk [vmem:[#allocation2] sm:$0xff] %vm1268, %v1266
      %1270 = vrot.lane.b32.xlu0 %v911, 104
      %v1271 = vpop.permute.xlu0 %1270
      %1272 = vrot.lane.b32.xlu0 %v912, 72
      %v1273 = vpop.permute.xlu0 %1272
      %v1275 = vsel %vm916, %v1271, 0
      %v1278 = vsel %vm916, %v1273, 0
      %1280 = vmatprep.subr.bf16.mxu0 0
      %1281 = vmatpush1.bf16.xpose.msra.mxu0 %v1278
      %1282 = vmatprep.subr.bf16.mxu0 0
      %1283 = vmatpush1.bf16.xpose.msra.mxu0 0
      %1284 = vmatprep.subr.bf16.mxu0 0
      %1285 = vmatpush1.bf16.xpose.msra.mxu0 0
      %1286 = vmatprep.subr.bf16.mxu0 0
      %1287 = vmatpush1.bf16.xpose.msra.mxu0 0
      %1288 = vmatprep.subr.bf16.mxu0 0
      %1289 = vmatpush1.bf16.xpose.msra.mxu0 0
      %1290 = vmatprep.subr.bf16.mxu0 0
      %1291 = vmatpush1.bf16.xpose.msra.mxu0 0
      %1292 = vmatprep.subr.bf16.mxu0 0
      %1293 = vmatpush1.bf16.xpose.msra.mxu0 0
      %1294 = vmatprep.subr.bf16.mxu0 0
      %1295 = vmatpush1.bf16.xpose.msra.mxu0 0
      %1296 = vmatprep.subr.bf16.mxu0 0
      %1297 = vmatpush1.bf16.xpose.msra.mxu0 0
      %1298 = vmatprep.subr.bf16.mxu0 0
      %1299 = vmatpush1.bf16.xpose.msra.mxu0 0
      %1300 = vmatprep.subr.bf16.mxu0 0
      %1301 = vmatpush1.bf16.xpose.msra.mxu0 0
      %1302 = vmatprep.subr.bf16.mxu0 0
      %1303 = vmatpush1.bf16.xpose.msra.mxu0 0
      %1304 = vmatprep.subr.bf16.mxu0 0
      %1305 = vmatpush1.bf16.xpose.msra.mxu0 0
      %1306 = vmatprep.subr.bf16.mxu0 0
      %1307 = vmatpush1.bf16.xpose.msra.mxu0 0
      %1308 = vmatprep.subr.bf16.mxu0 0
      %1309 = vmatpush1.bf16.xpose.msra.mxu0 0
      %1310 = vmatprep.subr.bf16.mxu0 0
      %1311 = vmatpush1.bf16.xpose.msra.mxu0 0
      %1312 = vmatprep.mubr.bf16.mxu0 0
      %1313 = vmatmul.mubr.bf16.gmra.mrb[0].mxu0 %v1275
      %v1314 = vpop.f32.mrb[0].mxu0
      %v1315 = vadd.f32 0.0, %v1314
      %v1316 = vpop.f32.mrb[0].mxu0
      %v1317 = vpop.f32.mrb[0].mxu0
      %v1318 = vpop.f32.mrb[0].mxu0
      %1319 = vdwg.mxu0
      %v1320 = vsel %vm909, -1e+30, %v1315
      %v1321 = vsel %vm916, %v1320, -inf
      %1322 = vmax.xlane.f32.xlu0 %v1321
      %v1323 = vpop.xlane.xlu0 %1322
      %v1324 = vsub.f32 %v1320, %v1323
      %v1325 = vmul.f32 %v1324, 1.442695
      %v1326 = vpow.pop %v1325
      %v1327 = vsel %vm916, %v1326, 0.0
      %1328 = vadd.xlane.f32.xlu0 %v1327
      %v1329 = vpop.xlane.xlu0 %1328
      %v1330 = vrcp.pop %v1329
      %v1331 = vmul.f32 %v1329, %v1330
      %v1332 = vsub.f32 2.0, %v1331
      %v1333 = vmul.f32 %v1330, %v1332
      %v1334 = vmul.f32 %v1326, %v1333
      %v1335 = vpack.c.bf16 %v1334, %v1334
      %1336 = vrot.lane.b32.xlu0 %v912, 40
      %v1337 = vpop.permute.xlu0 %1336
      %v1339 = vsel %vm916, %v1335, 0
      %v1342 = vsel %vm984, %v1337, 0
      %1344 = vmatprep.subr.bf16.mxu0 0
      %1345 = vmatpush1.bf16.msra.mxu0 %v1342
      %1346 = vmatprep.subr.bf16.mxu0 0
      %1347 = vmatpush1.bf16.msra.mxu0 0
      %1348 = vmatprep.subr.bf16.mxu0 0
      %1349 = vmatpush1.bf16.msra.mxu0 0
      %1350 = vmatprep.subr.bf16.mxu0 0
      %1351 = vmatpush1.bf16.msra.mxu0 0
      %1352 = vmatprep.subr.bf16.mxu0 0
      %1353 = vmatpush1.bf16.msra.mxu0 0
      %1354 = vmatprep.subr.bf16.mxu0 0
      %1355 = vmatpush1.bf16.msra.mxu0 0
      %1356 = vmatprep.subr.bf16.mxu0 0
      %1357 = vmatpush1.bf16.msra.mxu0 0
      %1358 = vmatprep.subr.bf16.mxu0 0
      %1359 = vmatpush1.bf16.msra.mxu0 0
      %1360 = vmatprep.subr.bf16.mxu0 0
      %1361 = vmatpush1.bf16.msra.mxu0 0
      %1362 = vmatprep.subr.bf16.mxu0 0
      %1363 = vmatpush1.bf16.msra.mxu0 0
      %1364 = vmatprep.subr.bf16.mxu0 0
      %1365 = vmatpush1.bf16.msra.mxu0 0
      %1366 = vmatprep.subr.bf16.mxu0 0
      %1367 = vmatpush1.bf16.msra.mxu0 0
      %1368 = vmatprep.subr.bf16.mxu0 0
      %1369 = vmatpush1.bf16.msra.mxu0 0
      %1370 = vmatprep.subr.bf16.mxu0 0
      %1371 = vmatpush1.bf16.msra.mxu0 0
      %1372 = vmatprep.subr.bf16.mxu0 0
      %1373 = vmatpush1.bf16.msra.mxu0 0
      %1374 = vmatprep.subr.bf16.mxu0 0
      %1375 = vmatpush1.bf16.msra.mxu0 0
      %1376 = vmatprep.mubr.bf16.mxu0 0
      %1377 = vmatmul.mubr.bf16.gmra.mrb[0].mxu0 %v1339
      %v1378 = vpop.f32.mrb[0].mxu0
      %v1379 = vadd.f32 0.0, %v1378
      %v1380 = vpop.f32.mrb[0].mxu0
      %v1381 = vpop.f32.mrb[0].mxu0
      %v1382 = vpop.f32.mrb[0].mxu0
      %1383 = vdwg.mxu0
      %1385 = vrot.lane.b32.xlu0 %v1379, 24
      %v1386 = vpop.permute.xlu0 %1385
      %vm1388 = vcmask 261312
      %1389 = vst.msk [vmem:[#allocation2] sm:$0xff] %vm1388, %v1386
      %v1390 = vld [vmem:[#allocation2] sm:$0xff]
      %v1391 = vld [vmem:[%s7] sm:$0xf]
      %v1392 = vld [vmem:[%s7 + $0x4] sm:$0xf]
      %v1393 = vld [vmem:[%s7 + $0x8] sm:$0xf]
      %v1394 = vld [vmem:[%s7 + $0xc] sm:$0xf]
      %v1395 = vpack.c.bf16 %v1390, %v1390
      %v1400 = vunpack.c.l.b16 %v1391
      %v1401 = vunpack.c.l.b16 %v1392
      %v1402 = vunpack.c.l.b16 %v1393
      %v1403 = vunpack.c.l.b16 %v1394
      %v1404 = vpack.c.b16 %v1401, %v1400
      %v1405 = vpack.c.b16 %v1403, %v1402
      %v1409 = vsel %vm809, %v1395, 0
      %1411 = vmatprep.subr.bf16.mxu0 0
      %1412 = vmatpush1.bf16.msra.mxu0 %v1404
      %1413 = vmatprep.subr.bf16.mxu0 0
      %1414 = vmatpush1.bf16.msra.mxu0 %v1405
      %1415 = vmatprep.subr.bf16.mxu0 0
      %1416 = vmatpush1.bf16.msra.mxu0 0
      %1417 = vmatprep.subr.bf16.mxu0 0
      %1418 = vmatpush1.bf16.msra.mxu0 0
      %1419 = vmatprep.subr.bf16.mxu0 0
      %1420 = vmatpush1.bf16.msra.mxu0 0
      %1421 = vmatprep.subr.bf16.mxu0 0
      %1422 = vmatpush1.bf16.msra.mxu0 0
      %1423 = vmatprep.subr.bf16.mxu0 0
      %1424 = vmatpush1.bf16.msra.mxu0 0
      %1425 = vmatprep.subr.bf16.mxu0 0
      %1426 = vmatpush1.bf16.msra.mxu0 0
      %1427 = vmatprep.subr.bf16.mxu0 0
      %1428 = vmatpush1.bf16.msra.mxu0 0
      %1429 = vmatprep.subr.bf16.mxu0 0
      %1430 = vmatpush1.bf16.msra.mxu0 0
      %1431 = vmatprep.subr.bf16.mxu0 0
      %1432 = vmatpush1.bf16.msra.mxu0 0
      %1433 = vmatprep.subr.bf16.mxu0 0
      %1434 = vmatpush1.bf16.msra.mxu0 0
      %1435 = vmatprep.subr.bf16.mxu0 0
      %1436 = vmatpush1.bf16.msra.mxu0 0
      %1437 = vmatprep.subr.bf16.mxu0 0
      %1438 = vmatpush1.bf16.msra.mxu0 0
      %1439 = vmatprep.subr.bf16.mxu0 0
      %1440 = vmatpush1.bf16.msra.mxu0 0
      %1441 = vmatprep.subr.bf16.mxu0 0
      %1442 = vmatpush1.bf16.msra.mxu0 0
      %1443 = vmatprep.mubr.bf16.mxu0 0
      %1444 = vmatmul.mubr.bf16.gmra.mrb[0].mxu0 %v1409
      %v1445 = vpop.f32.mrb[0].mxu0
      %v1446 = vadd.f32 0.0, %v1445
      %v1447 = vpop.f32.mrb[0].mxu0
      %v1448 = vpop.f32.mrb[0].mxu0
      %v1449 = vpop.f32.mrb[0].mxu0
      %1450 = vdwg.mxu0
      %v1451 = vadd.f32 %v805, %v1446
      %v1452 = vld [vmem:[%s8] sm:$0x1]
      %v1454 = vlaneseq
      %v1455 = vshrl.u32 %v1454, 7
      %v1456 = vsub.s32 0, %v1455
      %v1457 = vrot.slane %v1452, %v1456
      %v1459 = vadd.f32 %v1451, %v1457
      %v1460 = vld [vmem:[%s9] sm:$0x1]
      %v1461 = vld [vmem:[%s10] sm:$0x1]
      %v1462 = vsel %vm809, %v1459, 0.0
      %1463 = vadd.xlane.f32.xlu0 %v1462
      %v1464 = vpop.xlane.xlu0 %1463
      %v1465 = vmul.f32 %v1464, %v813
      %v1466 = vsub.f32 %v1459, %v1465
      %v1467 = vmul.f32 %v1466, %v1466
      %v1468 = vsel %vm809, %v1467, 0.0
      %1469 = vadd.xlane.f32.xlu0 %v1468
      %v1470 = vpop.xlane.xlu0 %1469
      %v1471 = vmul.f32 %v1470, %v813
      %v1472 = vadd.f32 %v1471, 1e-05
      %v1473 = vrsqrt.pop %v1472
      %v1474 = vmul.f32 %v1466, %v1473
      %v1476 = vlaneseq
      %v1477 = vshrl.u32 %v1476, 7
      %v1478 = vsub.s32 0, %v1477
      %v1479 = vrot.slane %v1460, %v1478
      %v1481 = vmul.f32 %v1474, %v1479
      %v1483 = vlaneseq
      %v1484 = vshrl.u32 %v1483, 7
      %v1485 = vsub.s32 0, %v1484
      %v1486 = vrot.slane %v1461, %v1485
      %v1488 = vadd.f32 %v1481, %v1486
      %v1489 = vld [vmem:[%s11] sm:$0xf]
      %v1490 = vld [vmem:[%s11 + $0x4] sm:$0xf]
      %v1491 = vld [vmem:[%s11 + $0x8] sm:$0xf]
      %v1492 = vld [vmem:[%s11 + $0xc] sm:$0xf]
      %v1493 = vld [vmem:[%s12] sm:$0x1]
      %v1498 = vunpack.c.l.b16 %v1489
      %v1499 = vunpack.c.l.b16 %v1490
      %v1500 = vunpack.c.l.b16 %v1491
      %v1501 = vunpack.c.l.b16 %v1492
      %v1502 = vpack.c.b16 %v1499, %v1498
      %v1503 = vpack.c.b16 %v1501, %v1500
      %v1507 = vsel %vm809, %v806, 0
      %1509 = vmatprep.subr.bf16.mxu0 0
      %1510 = vmatpush1.bf16.msra.mxu0 %v1502
      %1511 = vmatprep.subr.bf16.mxu0 0
      %1512 = vmatpush1.bf16.msra.mxu0 %v1503
      %1513 = vmatprep.subr.bf16.mxu0 0
      %1514 = vmatpush1.bf16.msra.mxu0 0
      %1515 = vmatprep.subr.bf16.mxu0 0
      %1516 = vmatpush1.bf16.msra.mxu0 0
      %1517 = vmatprep.subr.bf16.mxu0 0
      %1518 = vmatpush1.bf16.msra.mxu0 0
      %1519 = vmatprep.subr.bf16.mxu0 0
      %1520 = vmatpush1.bf16.msra.mxu0 0
      %1521 = vmatprep.subr.bf16.mxu0 0
      %1522 = vmatpush1.bf16.msra.mxu0 0
      %1523 = vmatprep.subr.bf16.mxu0 0
      %1524 = vmatpush1.bf16.msra.mxu0 0
      %1525 = vmatprep.subr.bf16.mxu0 0
      %1526 = vmatpush1.bf16.msra.mxu0 0
      %1527 = vmatprep.subr.bf16.mxu0 0
      %1528 = vmatpush1.bf16.msra.mxu0 0
      %1529 = vmatprep.subr.bf16.mxu0 0
      %1530 = vmatpush1.bf16.msra.mxu0 0
      %1531 = vmatprep.subr.bf16.mxu0 0
      %1532 = vmatpush1.bf16.msra.mxu0 0
      %1533 = vmatprep.subr.bf16.mxu0 0
      %1534 = vmatpush1.bf16.msra.mxu0 0
      %1535 = vmatprep.subr.bf16.mxu0 0
      %1536 = vmatpush1.bf16.msra.mxu0 0
      %1537 = vmatprep.subr.bf16.mxu0 0
      %1538 = vmatpush1.bf16.msra.mxu0 0
      %1539 = vmatprep.subr.bf16.mxu0 0
      %1540 = vmatpush1.bf16.msra.mxu0 0
      %1541 = vmatprep.mubr.bf16.mxu0 0
      %1542 = vmatmul.mubr.bf16.gmra.mrb[0].mxu0 %v1507
      %v1543 = vpop.f32.mrb[0].mxu0
      %v1544 = vadd.f32 %v1493, %v1543
      %v1545 = vpop.f32.mrb[0].mxu0
      %v1546 = vpop.f32.mrb[0].mxu0
      %v1547 = vpop.f32.mrb[0].mxu0
      %1548 = vdwg.mxu0
      %v1549 = vld [vmem:[%s13] sm:$0xf]
      %v1550 = vld [vmem:[%s13 + $0x4] sm:$0xf]
      %v1551 = vld [vmem:[%s13 + $0x8] sm:$0xf]
      %v1552 = vld [vmem:[%s13 + $0xc] sm:$0xf]
      %v1553 = vpack.c.bf16 %v1544, %v1544
      %v1554 = vld [vmem:[%s14] sm:$0x1]
      %v1559 = vunpack.c.l.b16 %v1549
      %v1560 = vunpack.c.l.b16 %v1550
      %v1561 = vunpack.c.l.b16 %v1551
      %v1562 = vunpack.c.l.b16 %v1552
      %v1563 = vpack.c.b16 %v1560, %v1559
      %v1564 = vpack.c.b16 %v1562, %v1561
      %v1568 = vsel %vm809, %v1553, 0
      %1570 = vmatprep.subr.bf16.mxu0 0
      %1571 = vmatpush1.bf16.msra.mxu0 %v1563
      %1572 = vmatprep.subr.bf16.mxu0 0
      %1573 = vmatpush1.bf16.msra.mxu0 %v1564
      %1574 = vmatprep.subr.bf16.mxu0 0
      %1575 = vmatpush1.bf16.msra.mxu0 0
      %1576 = vmatprep.subr.bf16.mxu0 0
      %1577 = vmatpush1.bf16.msra.mxu0 0
      %1578 = vmatprep.subr.bf16.mxu0 0
      %1579 = vmatpush1.bf16.msra.mxu0 0
      %1580 = vmatprep.subr.bf16.mxu0 0
      %1581 = vmatpush1.bf16.msra.mxu0 0
      %1582 = vmatprep.subr.bf16.mxu0 0
      %1583 = vmatpush1.bf16.msra.mxu0 0
      %1584 = vmatprep.subr.bf16.mxu0 0
      %1585 = vmatpush1.bf16.msra.mxu0 0
      %1586 = vmatprep.subr.bf16.mxu0 0
      %1587 = vmatpush1.bf16.msra.mxu0 0
      %1588 = vmatprep.subr.bf16.mxu0 0
      %1589 = vmatpush1.bf16.msra.mxu0 0
      %1590 = vmatprep.subr.bf16.mxu0 0
      %1591 = vmatpush1.bf16.msra.mxu0 0
      %1592 = vmatprep.subr.bf16.mxu0 0
      %1593 = vmatpush1.bf16.msra.mxu0 0
      %1594 = vmatprep.subr.bf16.mxu0 0
      %1595 = vmatpush1.bf16.msra.mxu0 0
      %1596 = vmatprep.subr.bf16.mxu0 0
      %1597 = vmatpush1.bf16.msra.mxu0 0
      %1598 = vmatprep.subr.bf16.mxu0 0
      %1599 = vmatpush1.bf16.msra.mxu0 0
      %1600 = vmatprep.subr.bf16.mxu0 0
      %1601 = vmatpush1.bf16.msra.mxu0 0
      %1602 = vmatprep.mubr.bf16.mxu0 0
      %1603 = vmatmul.mubr.bf16.gmra.mrb[0].mxu0 %v1568
      %v1604 = vpop.f32.mrb[0].mxu0
      %v1605 = vadd.f32 %v1554, %v1604
      %v1606 = vpop.f32.mrb[0].mxu0
      %v1607 = vpop.f32.mrb[0].mxu0
      %v1608 = vpop.f32.mrb[0].mxu0
      %1609 = vdwg.mxu0
      %v1610 = vld [vmem:[%s15] sm:$0xf]
      %v1611 = vld [vmem:[%s15 + $0x4] sm:$0xf]
      %v1612 = vld [vmem:[%s15 + $0x8] sm:$0xf]
      %v1613 = vld [vmem:[%s15 + $0xc] sm:$0xf]
      %v1614 = vpack.c.bf16 %v1488, %v1488
      %v1615 = vld [vmem:[%s16] sm:$0xf]
      %v1616 = vld [vmem:[%s16 + $0x4] sm:$0xf]
      %v1617 = vld [vmem:[%s16 + $0x8] sm:$0xf]
      %v1618 = vld [vmem:[%s16 + $0xc] sm:$0xf]
      %v1619 = vpack.c.bf16 %v1605, %v1605
      %v1624 = vunpack.c.l.b16 %v1615
      %v1625 = vunpack.c.l.b16 %v1616
      %v1626 = vunpack.c.l.b16 %v1617
      %v1627 = vunpack.c.l.b16 %v1618
      %v1628 = vpack.c.b16 %v1625, %v1624
      %v1629 = vpack.c.b16 %v1627, %v1626
      %v1633 = vsel %vm809, %v1619, 0
      %1635 = vmatprep.subr.bf16.mxu0 0
      %1636 = vmatpush1.bf16.msra.mxu0 %v1628
      %1637 = vmatprep.subr.bf16.mxu0 0
      %1638 = vmatpush1.bf16.msra.mxu0 %v1629
      %1639 = vmatprep.subr.bf16.mxu0 0
      %1640 = vmatpush1.bf16.msra.mxu0 0
      %1641 = vmatprep.subr.bf16.mxu0 0
      %1642 = vmatpush1.bf16.msra.mxu0 0
      %1643 = vmatprep.subr.bf16.mxu0 0
      %1644 = vmatpush1.bf16.msra.mxu0 0
      %1645 = vmatprep.subr.bf16.mxu0 0
      %1646 = vmatpush1.bf16.msra.mxu0 0
      %1647 = vmatprep.subr.bf16.mxu0 0
      %1648 = vmatpush1.bf16.msra.mxu0 0
      %1649 = vmatprep.subr.bf16.mxu0 0
      %1650 = vmatpush1.bf16.msra.mxu0 0
      %1651 = vmatprep.subr.bf16.mxu0 0
      %1652 = vmatpush1.bf16.msra.mxu0 0
      %1653 = vmatprep.subr.bf16.mxu0 0
      %1654 = vmatpush1.bf16.msra.mxu0 0
      %1655 = vmatprep.subr.bf16.mxu0 0
      %1656 = vmatpush1.bf16.msra.mxu0 0
      %1657 = vmatprep.subr.bf16.mxu0 0
      %1658 = vmatpush1.bf16.msra.mxu0 0
      %1659 = vmatprep.subr.bf16.mxu0 0
      %1660 = vmatpush1.bf16.msra.mxu0 0
      %1661 = vmatprep.subr.bf16.mxu0 0
      %1662 = vmatpush1.bf16.msra.mxu0 0
      %1663 = vmatprep.subr.bf16.mxu0 0
      %1664 = vmatpush1.bf16.msra.mxu0 0
      %1665 = vmatprep.subr.bf16.mxu0 0
      %1666 = vmatpush1.bf16.msra.mxu0 0
      %1667 = vmatprep.mubr.bf16.mxu0 0
      %1668 = vmatmul.mubr.bf16.gmra.mrb[0].mxu0 %v1633
      %v1669 = vpop.f32.mrb[0].mxu0
      %v1670 = vadd.f32 0.0, %v1669
      %v1671 = vpop.f32.mrb[0].mxu0
      %v1672 = vpop.f32.mrb[0].mxu0
      %v1673 = vpop.f32.mrb[0].mxu0
      %1674 = vdwg.mxu0
      %v1675 = vlaneseq
      %v1676 = vshrl.u32 %v1675, 7
      %v1677 = vsub.s32 0, %v1676
      %v1678 = vrot.slane %v1670, %v1677
      %v1683 = vunpack.c.l.b16 %v1610
      %v1684 = vunpack.c.l.b16 %v1611
      %v1685 = vunpack.c.l.b16 %v1612
      %v1686 = vunpack.c.l.b16 %v1613
      %v1687 = vpack.c.b16 %v1684, %v1683
      %v1688 = vpack.c.b16 %v1686, %v1685
      %v1692 = vsel %vm809, %v1614, 0
      %1694 = vmatprep.subr.bf16.mxu0 0
      %1695 = vmatpush1.bf16.msra.mxu0 %v1687
      %1696 = vmatprep.subr.bf16.mxu0 0
      %1697 = vmatpush1.bf16.msra.mxu0 %v1688
      %1698 = vmatprep.subr.bf16.mxu0 0
      %1699 = vmatpush1.bf16.msra.mxu0 0
      %1700 = vmatprep.subr.bf16.mxu0 0
      %1701 = vmatpush1.bf16.msra.mxu0 0
      %1702 = vmatprep.subr.bf16.mxu0 0
      %1703 = vmatpush1.bf16.msra.mxu0 0
      %1704 = vmatprep.subr.bf16.mxu0 0
      %1705 = vmatpush1.bf16.msra.mxu0 0
      %1706 = vmatprep.subr.bf16.mxu0 0
      %1707 = vmatpush1.bf16.msra.mxu0 0
      %1708 = vmatprep.subr.bf16.mxu0 0
      %1709 = vmatpush1.bf16.msra.mxu0 0
      %1710 = vmatprep.subr.bf16.mxu0 0
      %1711 = vmatpush1.bf16.msra.mxu0 0
      %1712 = vmatprep.subr.bf16.mxu0 0
      %1713 = vmatpush1.bf16.msra.mxu0 0
      %1714 = vmatprep.subr.bf16.mxu0 0
      %1715 = vmatpush1.bf16.msra.mxu0 0
      %1716 = vmatprep.subr.bf16.mxu0 0
      %1717 = vmatpush1.bf16.msra.mxu0 0
      %1718 = vmatprep.subr.bf16.mxu0 0
      %1719 = vmatpush1.bf16.msra.mxu0 0
      %1720 = vmatprep.subr.bf16.mxu0 0
      %1721 = vmatpush1.bf16.msra.mxu0 0
      %1722 = vmatprep.subr.bf16.mxu0 0
      %1723 = vmatpush1.bf16.msra.mxu0 0
      %1724 = vmatprep.subr.bf16.mxu0 0
      %1725 = vmatpush1.bf16.msra.mxu0 0
      %1726 = vmatprep.mubr.bf16.mxu0 0
      %1727 = vmatmul.mubr.bf16.gmra.mrb[0].mxu0 %v1692
      %v1728 = vpop.f32.mrb[0].mxu0
      %v1729 = vadd.f32 %v1678, %v1728
      %v1730 = vpop.f32.mrb[0].mxu0
      %v1731 = vpop.f32.mrb[0].mxu0
      %v1732 = vpop.f32.mrb[0].mxu0
      %1733 = vdwg.mxu0
      %v1734 = vld [vmem:[%s17] sm:$0x1]
      %v1736 = vlaneseq
      %v1737 = vshrl.u32 %v1736, 7
      %v1738 = vsub.s32 0, %v1737
      %v1739 = vrot.slane %v1734, %v1738
      %v1741 = vadd.f32 %v1729, %v1739
      %v1742 = vxor.u32 %v1741, 2147483648
      %v1743 = vmul.f32 %v1742, 1.442695
      %v1744 = vpow.pop %v1743
      %v1745 = vadd.f32 %v1744, 1.0
      %v1746 = vrcp.pop %v1745
      %v1747 = vmul.f32 1.0, %v1746
      %v1748 = vmul.f32 %v1747, %v1488
      %v1749 = vsub.f32 1.0, %v1747
      %v1750 = vlaneseq
      %v1751 = vshrl.u32 %v1750, 7
      %v1752 = vsub.s32 0, %v1751
      %v1753 = vrot.slane %v1605, %v1752
      %v1754 = vmul.f32 %v1749, %v1753
      %v1755 = vadd.f32 %v1748, %v1754
      %v1756 = vld [vmem:[#allocation3] sm:$0x1]
      %v1757 = vld [vmem:[%s18] sm:$0x1]
      %v1758 = vld [vmem:[%s19] sm:$0x1]
      %v1759 = vsel %vm809, %v1755, 0.0
      %1760 = vadd.xlane.f32.xlu0 %v1759
      %v1761 = vpop.xlane.xlu0 %1760
      %v1762 = vmul.f32 %v1761, %v813
      %v1763 = vsub.f32 %v1755, %v1762
      %v1764 = vmul.f32 %v1763, %v1763
      %v1765 = vsel %vm809, %v1764, 0.0
      %1766 = vadd.xlane.f32.xlu0 %v1765
      %v1767 = vpop.xlane.xlu0 %1766
      %v1768 = vmul.f32 %v1767, %v813
      %v1769 = vadd.f32 %v1768, 1e-05
      %v1770 = vrsqrt.pop %v1769
      %v1771 = vmul.f32 %v1763, %v1770
      %v1773 = vlaneseq
      %v1774 = vshrl.u32 %v1773, 7
      %v1775 = vsub.s32 0, %v1774
      %v1776 = vrot.slane %v1757, %v1775
      %v1778 = vmul.f32 %v1771, %v1776
      %v1780 = vlaneseq
      %v1781 = vshrl.u32 %v1780, 7
      %v1782 = vsub.s32 0, %v1781
      %v1783 = vrot.slane %v1758, %v1782
      %v1785 = vadd.f32 %v1778, %v1783
      %v1787 = vlaneseq
      %v1788 = vshrl.u32 %v1787, 7
      %v1789 = vsub.s32 0, %v1788
      %v1790 = vrot.slane %v1756, %v1789
      %1791 = vset.pattern.permute.xlu0 0
      %1792 = vperm.xlu0 %1791, %v1790
      %v1793 = vpop.permute.xlu0 %1792
      %v1795 = vmul.f32 %v1793, %v1785
      %v1796 = vadd.f32 %v1459, %v1795
      %v1797 = vld [vmem:[%s20] sm:$0x1]
      %v1798 = vld [vmem:[%s21] sm:$0x1]
      %v1799 = vsel %vm809, %v1796, 0.0
      %1800 = vadd.xlane.f32.xlu0 %v1799
      %v1801 = vpop.xlane.xlu0 %1800
      %v1802 = vmul.f32 %v1801, %v813
      %v1803 = vsub.f32 %v1796, %v1802
      %v1804 = vmul.f32 %v1803, %v1803
      %v1805 = vsel %vm809, %v1804, 0.0
      %1806 = vadd.xlane.f32.xlu0 %v1805
      %v1807 = vpop.xlane.xlu0 %1806
      %v1808 = vmul.f32 %v1807, %v813
      %v1809 = vadd.f32 %v1808, 1e-05
      %v1810 = vrsqrt.pop %v1809
      %v1811 = vmul.f32 %v1803, %v1810
      %v1813 = vlaneseq
      %v1814 = vshrl.u32 %v1813, 7
      %v1815 = vsub.s32 0, %v1814
      %v1816 = vrot.slane %v1797, %v1815
      %v1818 = vmul.f32 %v1811, %v1816
      %v1820 = vlaneseq
      %v1821 = vshrl.u32 %v1820, 7
      %v1822 = vsub.s32 0, %v1821
      %v1823 = vrot.slane %v1798, %v1822
      %v1825 = vadd.f32 %v1818, %v1823
      %v1826 = vld [vmem:[%s22] sm:$0xf]
      %v1827 = vld [vmem:[%s22 + $0x4] sm:$0xf]
      %v1828 = vld [vmem:[%s22 + $0x8] sm:$0xf]
      %v1829 = vld [vmem:[%s22 + $0xc] sm:$0xf]
      %v1830 = vpack.c.bf16 %v1825, %v1825
      %v1831 = vld [vmem:[%s23] sm:$0x1]
      %v1833 = vlaneseq
      %v1834 = vshrl.u32 %v1833, 7
      %v1835 = vsub.s32 0, %v1834
      %v1836 = vrot.slane %v1831, %v1835
      %v1842 = vunpack.c.l.b16 %v1826
      %v1843 = vunpack.c.l.b16 %v1827
      %v1844 = vunpack.c.l.b16 %v1828
      %v1845 = vunpack.c.l.b16 %v1829
      %v1846 = vpack.c.b16 %v1843, %v1842
      %v1847 = vpack.c.b16 %v1845, %v1844
      %v1851 = vsel %vm809, %v1830, 0
      %1853 = vmatprep.subr.bf16.mxu0 0
      %1854 = vmatpush1.bf16.msra.mxu0 %v1846
      %1855 = vmatprep.subr.bf16.mxu0 0
      %1856 = vmatpush1.bf16.msra.mxu0 %v1847
      %1857 = vmatprep.subr.bf16.mxu0 0
      %1858 = vmatpush1.bf16.msra.mxu0 0
      %1859 = vmatprep.subr.bf16.mxu0 0
      %1860 = vmatpush1.bf16.msra.mxu0 0
      %1861 = vmatprep.subr.bf16.mxu0 0
      %1862 = vmatpush1.bf16.msra.mxu0 0
      %1863 = vmatprep.subr.bf16.mxu0 0
      %1864 = vmatpush1.bf16.msra.mxu0 0
      %1865 = vmatprep.subr.bf16.mxu0 0
      %1866 = vmatpush1.bf16.msra.mxu0 0
      %1867 = vmatprep.subr.bf16.mxu0 0
      %1868 = vmatpush1.bf16.msra.mxu0 0
      %1869 = vmatprep.subr.bf16.mxu0 0
      %1870 = vmatpush1.bf16.msra.mxu0 0
      %1871 = vmatprep.subr.bf16.mxu0 0
      %1872 = vmatpush1.bf16.msra.mxu0 0
      %1873 = vmatprep.subr.bf16.mxu0 0
      %1874 = vmatpush1.bf16.msra.mxu0 0
      %1875 = vmatprep.subr.bf16.mxu0 0
      %1876 = vmatpush1.bf16.msra.mxu0 0
      %1877 = vmatprep.subr.bf16.mxu0 0
      %1878 = vmatpush1.bf16.msra.mxu0 0
      %1879 = vmatprep.subr.bf16.mxu0 0
      %1880 = vmatpush1.bf16.msra.mxu0 0
      %1881 = vmatprep.subr.bf16.mxu0 0
      %1882 = vmatpush1.bf16.msra.mxu0 0
      %1883 = vmatprep.subr.bf16.mxu0 0
      %1884 = vmatpush1.bf16.msra.mxu0 0
      %1885 = vmatprep.mubr.bf16.mxu0 0
      %1886 = vmatmul.mubr.bf16.gmra.mrb[0].mxu0 %v1851
      %v1887 = vpop.f32.mrb[0].mxu0
      %v1888 = vadd.f32 %v1836, %v1887
      %v1889 = vpop.f32.mrb[0].mxu0
      %v1890 = vpop.f32.mrb[0].mxu0
      %v1891 = vpop.f32.mrb[0].mxu0
      %1892 = vdwg.mxu0
      %v1893 = vmul.f32 %v1888, 0.5
      %v1894 = vmul.f32 %v1888, 0.70710677
      %vm1895 = vcmp.ge.f32.partialorder %v1894, 0.0
      %v1896 = vsel %vm1895, 1.0, -1.0
      %v1897 = vand.u32 2147483647, %v1894
      %v1898 = vmul.f32 %v1897, 0.3275911
      %v1899 = vadd.f32 %v1898, 1.0
      %v1900 = vrcp.pop %v1899
      %v1901 = vmul.f32 %v1899, %v1900
      %v1902 = vsub.f32 2.0, %v1901
      %v1903 = vmul.f32 %v1900, %v1902
      %v1904 = vmul.f32 %v1903, 1.0614054
      %v1905 = vadd.f32 %v1904, -1.4531521
      %v1906 = vmul.f32 %v1905, %v1903
      %v1907 = vadd.f32 %v1906, 1.4214138
      %v1908 = vmul.f32 %v1907, %v1903
      %v1909 = vadd.f32 %v1908, -0.28449672
      %v1910 = vmul.f32 %v1909, %v1903
      %v1911 = vadd.f32 %v1910, 0.2548296
      %v1912 = vmul.f32 %v1911, %v1903
      %v1913 = vsub.f32 0.0, %v1897
      %v1914 = vmul.f32 %v1913, %v1897
      %v1915 = vmul.f32 %v1914, 1.442695
      %v1916 = vpow.pop %v1915
      %v1917 = vmul.f32 %v1912, %v1916
      %v1918 = vsub.f32 1.0, %v1917
      %v1919 = vmul.f32 %v1896, %v1918
      %v1920 = vadd.f32 %v1919, 1.0
      %v1921 = vmul.f32 %v1893, %v1920
      %v1922 = vld [vmem:[%s24] sm:$0xf]
      %v1923 = vld [vmem:[%s24 + $0x4] sm:$0xf]
      %v1924 = vld [vmem:[%s24 + $0x8] sm:$0xf]
      %v1925 = vld [vmem:[%s24 + $0xc] sm:$0xf]
      %v1926 = vpack.c.bf16 %v1921, %v1921
      %v1931 = vunpack.c.l.b16 %v1922
      %v1932 = vunpack.c.l.b16 %v1923
      %v1933 = vunpack.c.l.b16 %v1924
      %v1934 = vunpack.c.l.b16 %v1925
      %v1935 = vpack.c.b16 %v1932, %v1931
      %v1936 = vpack.c.b16 %v1934, %v1933
      %v1940 = vsel %vm809, %v1926, 0
      %1942 = vmatprep.subr.bf16.mxu0 0
      %1943 = vmatpush1.bf16.msra.mxu0 %v1935
      %1944 = vmatprep.subr.bf16.mxu0 0
      %1945 = vmatpush1.bf16.msra.mxu0 %v1936
      %1946 = vmatprep.subr.bf16.mxu0 0
      %1947 = vmatpush1.bf16.msra.mxu0 0
      %1948 = vmatprep.subr.bf16.mxu0 0
      %1949 = vmatpush1.bf16.msra.mxu0 0
      %1950 = vmatprep.subr.bf16.mxu0 0
      %1951 = vmatpush1.bf16.msra.mxu0 0
      %1952 = vmatprep.subr.bf16.mxu0 0
      %1953 = vmatpush1.bf16.msra.mxu0 0
      %1954 = vmatprep.subr.bf16.mxu0 0
      %1955 = vmatpush1.bf16.msra.mxu0 0
      %1956 = vmatprep.subr.bf16.mxu0 0
      %1957 = vmatpush1.bf16.msra.mxu0 0
      %1958 = vmatprep.subr.bf16.mxu0 0
      %1959 = vmatpush1.bf16.msra.mxu0 0
      %1960 = vmatprep.subr.bf16.mxu0 0
      %1961 = vmatpush1.bf16.msra.mxu0 0
      %1962 = vmatprep.subr.bf16.mxu0 0
      %1963 = vmatpush1.bf16.msra.mxu0 0
      %1964 = vmatprep.subr.bf16.mxu0 0
      %1965 = vmatpush1.bf16.msra.mxu0 0
      %1966 = vmatprep.subr.bf16.mxu0 0
      %1967 = vmatpush1.bf16.msra.mxu0 0
      %1968 = vmatprep.subr.bf16.mxu0 0
      %1969 = vmatpush1.bf16.msra.mxu0 0
      %1970 = vmatprep.subr.bf16.mxu0 0
      %1971 = vmatpush1.bf16.msra.mxu0 0
      %1972 = vmatprep.subr.bf16.mxu0 0
      %1973 = vmatpush1.bf16.msra.mxu0 0
      %1974 = vmatprep.mubr.bf16.mxu0 0
      %1975 = vmatmul.mubr.bf16.gmra.mrb[0].mxu0 %v1940
      %v1976 = vpop.f32.mrb[0].mxu0
      %v1977 = vadd.f32 0.0, %v1976
      %v1978 = vpop.f32.mrb[0].mxu0
      %v1979 = vpop.f32.mrb[0].mxu0
      %v1980 = vpop.f32.mrb[0].mxu0
      %1981 = vdwg.mxu0
      %v1982 = vadd.f32 %v1796, %v1977
      %v1983 = vld [vmem:[%s25] sm:$0x1]
      %v1985 = vlaneseq
      %v1986 = vshrl.u32 %v1985, 7
      %v1987 = vsub.s32 0, %v1986
      %v1988 = vrot.slane %v1983, %v1987
      %v1990 = vadd.f32 %v1982, %v1988
      %v1991 = vpack.c.bf16 %v1990, %v1990
      %vm1992 = vcmask 257024
      %1993 = vst.msk [vmem:[%s802] sm:$0xf] %vm1992, %v1991
      %p1994 = scmp.lt.s32.totalorder %s39, 1
      %s1995 = scalar_select %p1994, %s39, 1
      %s1996 = smul.addr %s1995, 4
      %s1997 = scalar_lea.vmem %s26, %s1996
      // Predicated region
      $region125: #{dual_stream_forward.12} parent=123 // pred_check
        %p1998 = pneg %p613
      $region126: #{dual_stream_forward.12} parent=123 // pred_check_branch
        %2000 = sbr.rel (%p1998) target = $region128
      $region127: #{dual_stream_forward.12} parent=123 // pred_region
        _
      $region128: #{dual_stream_forward.12} parent=123 // pred_fallthru
        _
    $region124: #{dual_stream_forward.12} parent=5 // pred_fallthru
      _
    %p2001 = scmp.le.s32.totalorder 2, %s34
    // Predicated region
    $region129: #{dual_stream_forward.12} parent=5 // pred_check
      %p2002 = pneg %p2001
    $region130: #{dual_stream_forward.12} parent=5 // pred_check_branch
      %2004 = sbr.rel (%p2002) target = $region132
    $region131: #{dual_stream_forward.12} parent=5 // pred_region
      %s2005 = ssub.s32 %s34, 2
      // Predicated region
      $region133: #{dual_stream_forward.12} parent=131 // pred_check
        %p2006 = pneg %p619
      $region134: #{dual_stream_forward.12} parent=131 // pred_check_branch
        %2008 = sbr.rel (%p2006) target = $region136
      $region135: #{dual_stream_forward.12} parent=131 // pred_region
        %p2009 = scmp.lt.s32.totalorder %s40, 1
        %s2010 = scalar_select %p2009, %s40, 1
        %s2011 = smul.addr %s2010, 4
        %s2012 = scalar_lea.vmem %s26, %s2011
      $region136: #{dual_stream_forward.12} parent=131 // pred_fallthru
        _
    $region132: #{dual_stream_forward.12} parent=5 // pred_fallthru
      _
  $region6: #{dual_stream_forward.12} parent=0 // loop_footer
    %s38 = sadd.s32 1, %s34
  $region7: #{dual_stream_forward.12} parent=0 // loop_footer_branch
    %33 = sbr.rel target = $region3
  $region8: #{dual_stream_forward.12} parent=0 // loop_exit
    _

</llo_original>
